<compile_context>
chip_gen: v6e
topology: v6e:2x2x1
jax: 0.10.0
libtpu: 0.0.40
codegen_flags: <defaults>
</compile_context>

<pallas_src>
import jax
import jax.numpy as jnp
from jax.experimental import pallas as pl
from jax.experimental.pallas import tpu as pltpu

LATENT = 32
IN_FEATS = 1200
HID = 512
TILE_M = 512                            # batch-tile rows (multiple of 128)
VMEM_LIMIT_BYTES = 48 * 1024 * 1024     # explicit scoped VMEM limit (fits v7x 64 MiB)


def ae_kernel(x_ref, w1_ref, b1_ref, w2_ref, b2_ref,
              w3_ref, b3_ref, w4_ref, b4_ref, out_ref):
    """One (tile_m, 1200) batch tile through the whole autoencoder in VMEM."""
    cdt = w1_ref.dtype                               # bf16 compute dtype
    x = x_ref[...].astype(cdt)

    # --- Encoder ---
    h1 = jnp.dot(x, w1_ref[...], preferred_element_type=jnp.float32) + b1_ref[...]
    h1 = jnp.maximum(h1, 0.0).astype(cdt)            # relu
    z = jnp.dot(h1, w2_ref[...], preferred_element_type=jnp.float32) + b2_ref[...]

    # --- Decoder ---
    h2 = jnp.dot(z.astype(cdt), w3_ref[...],
                 preferred_element_type=jnp.float32) + b3_ref[...]
    h2 = jnp.maximum(h2, 0.0).astype(cdt)            # relu
    y = jnp.dot(h2, w4_ref[...], preferred_element_type=jnp.float32) + b4_ref[...]

    # sigmoid(y) == 0.5*(tanh(y/2)+1); tanh runs on the EUP slot instead of the
    # VALU f32 divide inside jax.nn.sigmoid.
    out_ref[...] = 0.5 * (jnp.tanh(0.5 * y) + 1.0)


def _round_up(x, m):
    return ((x + m - 1) // m) * m


def _pick_tile(batch, tile_m):
    if batch >= tile_m:
        return tile_m
    # Small batch: aim for ~4 grid steps (keeps the x/out DMA pipeline and the
    # second TensorCore on v7x busy); rows stay a multiple of 8 (sublanes).
    return max(8, min(tile_m, _round_up(pl.cdiv(batch, 4), 8)))


def _call(x2d, params, tile_m, single_buffer_weights):
    B = x2d.shape[0]
    grid = (pl.cdiv(B, tile_m),)        # ragged last tile handled by Pallas

    # x / out: one (tile_m, 1200) slab per grid step (double-buffered by Pallas
    # so its DMA overlaps compute).
    row_spec = pl.BlockSpec((tile_m, IN_FEATS), lambda i: (i, 0))

    # Weights / biases: whole array, constant block index -> DMA'd once,
    # resident in VMEM; optionally single-buffered to save ~2.5 MB.
    def resident(arr):
        idx = lambda i: (0,) * arr.ndim
        if single_buffer_weights:
            return pl.BlockSpec(arr.shape, idx, pipeline_mode=pl.Buffered(1))
        return pl.BlockSpec(arr.shape, idx)

    w1, b1, w2, b2, w3, b3, w4, b4 = params
    weight_elems = IN_FEATS * HID + HID * LATENT + LATENT * HID + HID * IN_FEATS
    bias_elems = HID + LATENT + HID + IN_FEATS
    wbytes = jnp.dtype(w1.dtype).itemsize
    cost = pl.CostEstimate(
        flops=2 * B * weight_elems,
        transcendentals=B * IN_FEATS,                   # one tanh per output
        bytes_accessed=(weight_elems * wbytes + bias_elems * 4
                        + 2 * B * IN_FEATS * 4),        # x in + y out, f32
    )

    return pl.pallas_call(
        ae_kernel,
        out_shape=jax.ShapeDtypeStruct((B, IN_FEATS), jnp.float32),
        grid=grid,
        in_specs=[row_spec,
                  resident(w1), resident(b1),
                  resident(w2), resident(b2),
                  resident(w3), resident(b3),
                  resident(w4), resident(b4)],
        out_specs=row_spec,
        compiler_params=pltpu.CompilerParams(
            dimension_semantics=("parallel",),          # megacore split on v7x
            vmem_limit_bytes=VMEM_LIMIT_BYTES,
        ),
        cost_estimate=cost,
    )(x2d, w1, b1, w2, b2, w3, b3, w4, b4)


def autoencoder_forward(x, params, tile_m=TILE_M):
    """x: (B, 1, 1200) float32 -> (B//100, 1, 100, 1200) float32."""
    B = x.shape[0]
    x2d = x.reshape(B, -1)                      # torch.flatten(x, start_dim=1)
    assert x2d.shape[1] == IN_FEATS, "flattened feature dim must be 1200"
    assert B % 100 == 0, "final reshape(-1, 1, 100, 1200) requires B % 100 == 0"

    tile_m = _pick_tile(B, tile_m)
    try:
        out2d = _call(x2d, params, tile_m, single_buffer_weights=True)
    except Exception:
        # pl.Buffered(1) unsupported in this jax build -> default buffering.
        out2d = _call(x2d, params, tile_m, single_buffer_weights=False)

    # z.reshape((-1, 1, 100, 1200)) in the PyTorch Decoder
    return out2d.reshape(-1, 1, 100, IN_FEATS)


def init_params(key, latent=LATENT):
    """PyTorch-style (uniform +/- 1/sqrt(fan_in)) init; weights bf16, biases f32."""
    ks = jax.random.split(key, 8)

    def lin(kw, kb, fan_in, fan_out):
        bound = 1.0 / float(fan_in) ** 0.5
        w = jax.random.uniform(kw, (fan_in, fan_out), jnp.float32, -bound, bound)
        b = jax.random.uniform(kb, (1, fan_out), jnp.float32, -bound, bound)
        return w.astype(jnp.bfloat16), b

    w1, b1 = lin(ks[0], ks[1], IN_FEATS, HID)      # encoder.linear1
    w2, b2 = lin(ks[2], ks[3], HID, latent)        # encoder.linear2
    w3, b3 = lin(ks[4], ks[5], latent, HID)        # decoder.linear1
    w4, b4 = lin(ks[6], ks[7], HID, IN_FEATS)      # decoder.linear2
    return (w1, b1, w2, b2, w3, b3, w4, b4)


def reference_forward(x, params):
    """Pure-JAX reference mirroring the kernel's bf16/f32-accumulate math."""
    w1, b1, w2, b2, w3, b3, w4, b4 = params
    cdt = jnp.bfloat16
    x2d = x.reshape(x.shape[0], -1).astype(cdt)
    h1 = jnp.maximum(jnp.dot(x2d, w1, preferred_element_type=jnp.float32) + b1, 0.0)
    z = jnp.dot(h1.astype(cdt), w2, preferred_element_type=jnp.float32) + b2
    h2 = jnp.maximum(jnp.dot(z.astype(cdt), w3,
                             preferred_element_type=jnp.float32) + b3, 0.0)
    y = jnp.dot(h2.astype(cdt), w4, preferred_element_type=jnp.float32) + b4
    return jax.nn.sigmoid(y).reshape(-1, 1, 100, IN_FEATS)


if __name__ == "__main__":
    key = jax.random.PRNGKey(0)
    kx, kp = jax.random.split(key)

    # Decoder reshape (-1, 1, 100, 1200) requires batch % 100 == 0; B=100 is
    # the smallest shape consistent with the module.
    B = 100
    x = jax.random.normal(kx, (B, 1, IN_FEATS), jnp.float32)
    params = init_params(kp)

    out = autoencoder_forward(x, params)
    out = jax.block_until_ready(out)
    assert out.shape == (B // 100, 1, 100, IN_FEATS), out.shape

    ref = jax.block_until_ready(reference_forward(x, params))
    assert jnp.allclose(out, ref, atol=2e-2, rtol=2e-2), (
        "mismatch vs reference: max abs diff %e" % float(jnp.max(jnp.abs(out - ref))))

    print("KERNEL_OK")
</pallas_src>

<mosaic_0001>
module attributes {stable_mosaic.version = 11 : i64} {
  func.func @ae_kernel(%arg0: i32, %arg1: memref<32x1200xf32, #tpu.memory_space<vmem>>, %arg2: memref<1200x512xbf16, #tpu.memory_space<vmem>>, %arg3: memref<1x512xf32, #tpu.memory_space<vmem>>, %arg4: memref<512x32xbf16, #tpu.memory_space<vmem>>, %arg5: memref<1x32xf32, #tpu.memory_space<vmem>>, %arg6: memref<32x512xbf16, #tpu.memory_space<vmem>>, %arg7: memref<1x512xf32, #tpu.memory_space<vmem>>, %arg8: memref<512x1200xbf16, #tpu.memory_space<vmem>>, %arg9: memref<1x1200xf32, #tpu.memory_space<vmem>>, %arg10: memref<32x1200xf32, #tpu.memory_space<vmem>>) attributes {dimension_semantics = [#tpu.dimension_semantics<parallel>], iteration_bounds = array<i64: 4>, scalar_prefetch = 0 : i64, scratch_operands = 0 : i64, tpu.core_type = #tpu.core_type<tc>, window_params = [{transform_indices = @transform_0, window_bounds = array<i64: 32, 1200>}, {pipeline_mode = #tpu.pipeline_mode<synchronous>, transform_indices = @transform_1, window_bounds = array<i64: 1200, 512>}, {pipeline_mode = #tpu.pipeline_mode<synchronous>, transform_indices = @transform_2, window_bounds = array<i64: 1, 512>}, {pipeline_mode = #tpu.pipeline_mode<synchronous>, transform_indices = @transform_3, window_bounds = array<i64: 512, 32>}, {pipeline_mode = #tpu.pipeline_mode<synchronous>, transform_indices = @transform_4, window_bounds = array<i64: 1, 32>}, {pipeline_mode = #tpu.pipeline_mode<synchronous>, transform_indices = @transform_5, window_bounds = array<i64: 32, 512>}, {pipeline_mode = #tpu.pipeline_mode<synchronous>, transform_indices = @transform_6, window_bounds = array<i64: 1, 512>}, {pipeline_mode = #tpu.pipeline_mode<synchronous>, transform_indices = @transform_7, window_bounds = array<i64: 512, 1200>}, {pipeline_mode = #tpu.pipeline_mode<synchronous>, transform_indices = @transform_8, window_bounds = array<i64: 1, 1200>}, {transform_indices = @transform_9, window_bounds = array<i64: 32, 1200>}]} {
    %c0 = arith.constant 0 : index
    %c0_0 = arith.constant 0 : index
    %0 = vector.load %arg1[%c0, %c0_0] : memref<32x1200xf32, #tpu.memory_space<vmem>>, vector<32x1200xf32>
    %1 = arith.truncf %0 : vector<32x1200xf32> to vector<32x1200xbf16>
    %c0_1 = arith.constant 0 : index
    %c0_2 = arith.constant 0 : index
    %2 = vector.load %arg2[%c0_1, %c0_2] : memref<1200x512xbf16, #tpu.memory_space<vmem>>, vector<1200x512xbf16>
    %cst = arith.constant dense<0.000000e+00> : vector<32x512xf32>
    %3 = tpu.matmul %1, %2, %cst {dimension_numbers = #tpu.dot_dimension_numbers<[1], [0], [0], [1], [0, 0, 1, 1], [], []>} : vector<32x1200xbf16>, vector<1200x512xbf16>, vector<32x512xf32> -> vector<32x512xf32>
    %c0_3 = arith.constant 0 : index
    %c0_4 = arith.constant 0 : index
    %4 = vector.load %arg3[%c0_3, %c0_4] : memref<1x512xf32, #tpu.memory_space<vmem>>, vector<1x512xf32>
    %5 = vector.broadcast %4 : vector<1x512xf32> to vector<32x512xf32>
    %6 = arith.addf %3, %5 : vector<32x512xf32>
    %cst_5 = arith.constant 0.000000e+00 : f32
    %7 = vector.broadcast %cst_5 : f32 to vector<32x512xf32>
    %8 = arith.maximumf %6, %7 : vector<32x512xf32>
    %9 = arith.truncf %8 : vector<32x512xf32> to vector<32x512xbf16>
    %c0_6 = arith.constant 0 : index
    %c0_7 = arith.constant 0 : index
    %10 = vector.load %arg4[%c0_6, %c0_7] : memref<512x32xbf16, #tpu.memory_space<vmem>>, vector<512x32xbf16>
    %cst_8 = arith.constant dense<0.000000e+00> : vector<32x32xf32>
    %11 = tpu.matmul %9, %10, %cst_8 {dimension_numbers = #tpu.dot_dimension_numbers<[1], [0], [0], [1], [0, 0, 1, 1], [], []>} : vector<32x512xbf16>, vector<512x32xbf16>, vector<32x32xf32> -> vector<32x32xf32>
    %c0_9 = arith.constant 0 : index
    %c0_10 = arith.constant 0 : index
    %12 = vector.load %arg5[%c0_9, %c0_10] : memref<1x32xf32, #tpu.memory_space<vmem>>, vector<1x32xf32>
    %13 = vector.broadcast %12 : vector<1x32xf32> to vector<32x32xf32>
    %14 = arith.addf %11, %13 : vector<32x32xf32>
    %15 = arith.truncf %14 : vector<32x32xf32> to vector<32x32xbf16>
    %c0_11 = arith.constant 0 : index
    %c0_12 = arith.constant 0 : index
    %16 = vector.load %arg6[%c0_11, %c0_12] : memref<32x512xbf16, #tpu.memory_space<vmem>>, vector<32x512xbf16>
    %cst_13 = arith.constant dense<0.000000e+00> : vector<32x512xf32>
    %17 = tpu.matmul %15, %16, %cst_13 {dimension_numbers = #tpu.dot_dimension_numbers<[1], [0], [0], [1], [0, 0, 1, 1], [], []>} : vector<32x32xbf16>, vector<32x512xbf16>, vector<32x512xf32> -> vector<32x512xf32>
    %c0_14 = arith.constant 0 : index
    %c0_15 = arith.constant 0 : index
    %18 = vector.load %arg7[%c0_14, %c0_15] : memref<1x512xf32, #tpu.memory_space<vmem>>, vector<1x512xf32>
    %19 = vector.broadcast %18 : vector<1x512xf32> to vector<32x512xf32>
    %20 = arith.addf %17, %19 : vector<32x512xf32>
    %cst_16 = arith.constant 0.000000e+00 : f32
    %21 = vector.broadcast %cst_16 : f32 to vector<32x512xf32>
    %22 = arith.maximumf %20, %21 : vector<32x512xf32>
    %23 = arith.truncf %22 : vector<32x512xf32> to vector<32x512xbf16>
    %c0_17 = arith.constant 0 : index
    %c0_18 = arith.constant 0 : index
    %24 = vector.load %arg8[%c0_17, %c0_18] : memref<512x1200xbf16, #tpu.memory_space<vmem>>, vector<512x1200xbf16>
    %cst_19 = arith.constant dense<0.000000e+00> : vector<32x1200xf32>
    %25 = tpu.matmul %23, %24, %cst_19 {dimension_numbers = #tpu.dot_dimension_numbers<[1], [0], [0], [1], [0, 0, 1, 1], [], []>} : vector<32x512xbf16>, vector<512x1200xbf16>, vector<32x1200xf32> -> vector<32x1200xf32>
    %c0_20 = arith.constant 0 : index
    %c0_21 = arith.constant 0 : index
    %26 = vector.load %arg9[%c0_20, %c0_21] : memref<1x1200xf32, #tpu.memory_space<vmem>>, vector<1x1200xf32>
    %27 = vector.broadcast %26 : vector<1x1200xf32> to vector<32x1200xf32>
    %28 = arith.addf %25, %27 : vector<32x1200xf32>
    %cst_22 = arith.constant 5.000000e-01 : f32
    %29 = vector.broadcast %cst_22 : f32 to vector<32x1200xf32>
    %30 = arith.mulf %29, %28 : vector<32x1200xf32>
    %31 = math.tanh %30 : vector<32x1200xf32>
    %cst_23 = arith.constant 1.000000e+00 : f32
    %32 = vector.broadcast %cst_23 : f32 to vector<32x1200xf32>
    %33 = arith.addf %31, %32 : vector<32x1200xf32>
    %cst_24 = arith.constant 5.000000e-01 : f32
    %34 = vector.broadcast %cst_24 : f32 to vector<32x1200xf32>
    %35 = arith.mulf %34, %33 : vector<32x1200xf32>
    %c0_25 = arith.constant 0 : index
    %c0_26 = arith.constant 0 : index
    %36 = vector.load %arg10[%c0_25, %c0_26] : memref<32x1200xf32, #tpu.memory_space<vmem>>, vector<32x1200xf32>
    tpu.vector_store %arg10[%c0_25, %c0_26], %35 {strides = array<i32>} : memref<32x1200xf32, #tpu.memory_space<vmem>>, vector<32x1200xf32>,
    return
  }
  func.func @transform_0(%arg0: i32) -> (i32, i32) {
    %c0_i32 = arith.constant 0 : i32
    %c0_i32_0 = arith.constant 0 : i32
    return %arg0, %c0_i32 : i32, i32
  }
  func.func @transform_1(%arg0: i32) -> (i32, i32) {
    %c0_i32 = arith.constant 0 : i32
    %c0_i32_0 = arith.constant 0 : i32
    %c0_i32_1 = arith.constant 0 : i32
    return %c0_i32, %c0_i32_0 : i32, i32
  }
  func.func @transform_2(%arg0: i32) -> (i32, i32) {
    %c0_i32 = arith.constant 0 : i32
    %c0_i32_0 = arith.constant 0 : i32
    %c0_i32_1 = arith.constant 0 : i32
    return %c0_i32, %c0_i32_0 : i32, i32
  }
  func.func @transform_3(%arg0: i32) -> (i32, i32) {
    %c0_i32 = arith.constant 0 : i32
    %c0_i32_0 = arith.constant 0 : i32
    %c0_i32_1 = arith.constant 0 : i32
    return %c0_i32, %c0_i32_0 : i32, i32
  }
  func.func @transform_4(%arg0: i32) -> (i32, i32) {
    %c0_i32 = arith.constant 0 : i32
    %c0_i32_0 = arith.constant 0 : i32
    %c0_i32_1 = arith.constant 0 : i32
    return %c0_i32, %c0_i32_0 : i32, i32
  }
  func.func @transform_5(%arg0: i32) -> (i32, i32) {
    %c0_i32 = arith.constant 0 : i32
    %c0_i32_0 = arith.constant 0 : i32
    %c0_i32_1 = arith.constant 0 : i32
    return %c0_i32, %c0_i32_0 : i32, i32
  }
  func.func @transform_6(%arg0: i32) -> (i32, i32) {
    %c0_i32 = arith.constant 0 : i32
    %c0_i32_0 = arith.constant 0 : i32
    %c0_i32_1 = arith.constant 0 : i32
    return %c0_i32, %c0_i32_0 : i32, i32
  }
  func.func @transform_7(%arg0: i32) -> (i32, i32) {
    %c0_i32 = arith.constant 0 : i32
    %c0_i32_0 = arith.constant 0 : i32
    %c0_i32_1 = arith.constant 0 : i32
    return %c0_i32, %c0_i32_0 : i32, i32
  }
  func.func @transform_8(%arg0: i32) -> (i32, i32) {
    %c0_i32 = arith.constant 0 : i32
    %c0_i32_0 = arith.constant 0 : i32
    %c0_i32_1 = arith.constant 0 : i32
    return %c0_i32, %c0_i32_0 : i32, i32
  }
  func.func @transform_9(%arg0: i32) -> (i32, i32) {
    %c0_i32 = arith.constant 0 : i32
    %c0_i32_0 = arith.constant 0 : i32
    return %arg0, %c0_i32 : i32, i32
  }
}

module attributes {stable_mosaic.version = 11 : i64} {
  func.func @ae_kernel(%arg0: i32, %arg1: memref<32x1200xf32, #tpu.memory_space<vmem>>, %arg2: memref<1200x512xbf16, #tpu.memory_space<vmem>>, %arg3: memref<1x512xf32, #tpu.memory_space<vmem>>, %arg4: memref<512x32xbf16, #tpu.memory_space<vmem>>, %arg5: memref<1x32xf32, #tpu.memory_space<vmem>>, %arg6: memref<32x512xbf16, #tpu.memory_space<vmem>>, %arg7: memref<1x512xf32, #tpu.memory_space<vmem>>, %arg8: memref<512x1200xbf16, #tpu.memory_space<vmem>>, %arg9: memref<1x1200xf32, #tpu.memory_space<vmem>>, %arg10: memref<32x1200xf32, #tpu.memory_space<vmem>>) attributes {dimension_semantics = [#tpu.dimension_semantics<parallel>], iteration_bounds = array<i64: 4>, scalar_prefetch = 0 : i64, scratch_operands = 0 : i64, tpu.core_type = #tpu.core_type<tc>, window_params = [{transform_indices = @transform_0, window_bounds = array<i64: 32, 1200>}, {pipeline_mode = #tpu.pipeline_mode<synchronous>, transform_indices = @transform_1, window_bounds = array<i64: 1200, 512>}, {pipeline_mode = #tpu.pipeline_mode<synchronous>, transform_indices = @transform_2, window_bounds = array<i64: 1, 512>}, {pipeline_mode = #tpu.pipeline_mode<synchronous>, transform_indices = @transform_3, window_bounds = array<i64: 512, 32>}, {pipeline_mode = #tpu.pipeline_mode<synchronous>, transform_indices = @transform_4, window_bounds = array<i64: 1, 32>}, {pipeline_mode = #tpu.pipeline_mode<synchronous>, transform_indices = @transform_5, window_bounds = array<i64: 32, 512>}, {pipeline_mode = #tpu.pipeline_mode<synchronous>, transform_indices = @transform_6, window_bounds = array<i64: 1, 512>}, {pipeline_mode = #tpu.pipeline_mode<synchronous>, transform_indices = @transform_7, window_bounds = array<i64: 512, 1200>}, {pipeline_mode = #tpu.pipeline_mode<synchronous>, transform_indices = @transform_8, window_bounds = array<i64: 1, 1200>}, {transform_indices = @transform_9, window_bounds = array<i64: 32, 1200>}]} {
    %c0 = arith.constant 0 : index
    %c0_0 = arith.constant 0 : index
    %0 = vector.load %arg1[%c0, %c0_0] : memref<32x1200xf32, #tpu.memory_space<vmem>>, vector<32x1200xf32>
    %1 = arith.truncf %0 : vector<32x1200xf32> to vector<32x1200xbf16>
    %c0_1 = arith.constant 0 : index
    %c0_2 = arith.constant 0 : index
    %2 = vector.load %arg2[%c0_1, %c0_2] : memref<1200x512xbf16, #tpu.memory_space<vmem>>, vector<1200x512xbf16>
    %cst = arith.constant dense<0.000000e+00> : vector<32x512xf32>
    %3 = tpu.matmul %1, %2, %cst {dimension_numbers = #tpu.dot_dimension_numbers<[1], [0], [0], [1], [0, 0, 1, 1], [], []>} : vector<32x1200xbf16>, vector<1200x512xbf16>, vector<32x512xf32> -> vector<32x512xf32>
    %c0_3 = arith.constant 0 : index
    %c0_4 = arith.constant 0 : index
    %4 = vector.load %arg3[%c0_3, %c0_4] : memref<1x512xf32, #tpu.memory_space<vmem>>, vector<1x512xf32>
    %5 = vector.broadcast %4 : vector<1x512xf32> to vector<32x512xf32>
    %6 = arith.addf %3, %5 : vector<32x512xf32>
    %cst_5 = arith.constant 0.000000e+00 : f32
    %7 = vector.broadcast %cst_5 : f32 to vector<32x512xf32>
    %8 = arith.maximumf %6, %7 : vector<32x512xf32>
    %9 = arith.truncf %8 : vector<32x512xf32> to vector<32x512xbf16>
    %c0_6 = arith.constant 0 : index
    %c0_7 = arith.constant 0 : index
    %10 = vector.load %arg4[%c0_6, %c0_7] : memref<512x32xbf16, #tpu.memory_space<vmem>>, vector<512x32xbf16>
    %cst_8 = arith.constant dense<0.000000e+00> : vector<32x32xf32>
    %11 = tpu.matmul %9, %10, %cst_8 {dimension_numbers = #tpu.dot_dimension_numbers<[1], [0], [0], [1], [0, 0, 1, 1], [], []>} : vector<32x512xbf16>, vector<512x32xbf16>, vector<32x32xf32> -> vector<32x32xf32>
    %c0_9 = arith.constant 0 : index
    %c0_10 = arith.constant 0 : index
    %12 = vector.load %arg5[%c0_9, %c0_10] : memref<1x32xf32, #tpu.memory_space<vmem>>, vector<1x32xf32>
    %13 = vector.broadcast %12 : vector<1x32xf32> to vector<32x32xf32>
    %14 = arith.addf %11, %13 : vector<32x32xf32>
    %15 = arith.truncf %14 : vector<32x32xf32> to vector<32x32xbf16>
    %c0_11 = arith.constant 0 : index
    %c0_12 = arith.constant 0 : index
    %16 = vector.load %arg6[%c0_11, %c0_12] : memref<32x512xbf16, #tpu.memory_space<vmem>>, vector<32x512xbf16>
    %cst_13 = arith.constant dense<0.000000e+00> : vector<32x512xf32>
    %17 = tpu.matmul %15, %16, %cst_13 {dimension_numbers = #tpu.dot_dimension_numbers<[1], [0], [0], [1], [0, 0, 1, 1], [], []>} : vector<32x32xbf16>, vector<32x512xbf16>, vector<32x512xf32> -> vector<32x512xf32>
    %c0_14 = arith.constant 0 : index
    %c0_15 = arith.constant 0 : index
    %18 = vector.load %arg7[%c0_14, %c0_15] : memref<1x512xf32, #tpu.memory_space<vmem>>, vector<1x512xf32>
    %19 = vector.broadcast %18 : vector<1x512xf32> to vector<32x512xf32>
    %20 = arith.addf %17, %19 : vector<32x512xf32>
    %cst_16 = arith.constant 0.000000e+00 : f32
    %21 = vector.broadcast %cst_16 : f32 to vector<32x512xf32>
    %22 = arith.maximumf %20, %21 : vector<32x512xf32>
    %23 = arith.truncf %22 : vector<32x512xf32> to vector<32x512xbf16>
    %c0_17 = arith.constant 0 : index
    %c0_18 = arith.constant 0 : index
    %24 = vector.load %arg8[%c0_17, %c0_18] : memref<512x1200xbf16, #tpu.memory_space<vmem>>, vector<512x1200xbf16>
    %cst_19 = arith.constant dense<0.000000e+00> : vector<32x1200xf32>
    %25 = tpu.matmul %23, %24, %cst_19 {dimension_numbers = #tpu.dot_dimension_numbers<[1], [0], [0], [1], [0, 0, 1, 1], [], []>} : vector<32x512xbf16>, vector<512x1200xbf16>, vector<32x1200xf32> -> vector<32x1200xf32>
    %c0_20 = arith.constant 0 : index
    %c0_21 = arith.constant 0 : index
    %26 = vector.load %arg9[%c0_20, %c0_21] : memref<1x1200xf32, #tpu.memory_space<vmem>>, vector<1x1200xf32>
    %27 = vector.broadcast %26 : vector<1x1200xf32> to vector<32x1200xf32>
    %28 = arith.addf %25, %27 : vector<32x1200xf32>
    %cst_22 = arith.constant 5.000000e-01 : f32
    %29 = vector.broadcast %cst_22 : f32 to vector<32x1200xf32>
    %30 = arith.mulf %29, %28 : vector<32x1200xf32>
    %31 = math.tanh %30 : vector<32x1200xf32>
    %cst_23 = arith.constant 1.000000e+00 : f32
    %32 = vector.broadcast %cst_23 : f32 to vector<32x1200xf32>
    %33 = arith.addf %31, %32 : vector<32x1200xf32>
    %cst_24 = arith.constant 5.000000e-01 : f32
    %34 = vector.broadcast %cst_24 : f32 to vector<32x1200xf32>
    %35 = arith.mulf %34, %33 : vector<32x1200xf32>
    %c0_25 = arith.constant 0 : index
    %c0_26 = arith.constant 0 : index
    %36 = vector.load %arg10[%c0_25, %c0_26] : memref<32x1200xf32, #tpu.memory_space<vmem>>, vector<32x1200xf32>
    tpu.vector_store %arg10[%c0_25, %c0_26], %35 {strides = array<i32>} : memref<32x1200xf32, #tpu.memory_space<vmem>>, vector<32x1200xf32>,
    return
  }
  func.func @transform_0(%arg0: i32) -> (i32, i32) {
    %c0_i32 = arith.constant 0 : i32
    %c0_i32_0 = arith.constant 0 : i32
    return %arg0, %c0_i32 : i32, i32
  }
  func.func @transform_1(%arg0: i32) -> (i32, i32) {
    %c0_i32 = arith.constant 0 : i32
    %c0_i32_0 = arith.constant 0 : i32
    %c0_i32_1 = arith.constant 0 : i32
    return %c0_i32, %c0_i32_0 : i32, i32
  }
  func.func @transform_2(%arg0: i32) -> (i32, i32) {
    %c0_i32 = arith.constant 0 : i32
    %c0_i32_0 = arith.constant 0 : i32
    %c0_i32_1 = arith.constant 0 : i32
    return %c0_i32, %c0_i32_0 : i32, i32
  }
  func.func @transform_3(%arg0: i32) -> (i32, i32) {
    %c0_i32 = arith.constant 0 : i32
    %c0_i32_0 = arith.constant 0 : i32
    %c0_i32_1 = arith.constant 0 : i32
    return %c0_i32, %c0_i32_0 : i32, i32
  }
  func.func @transform_4(%arg0: i32) -> (i32, i32) {
    %c0_i32 = arith.constant 0 : i32
    %c0_i32_0 = arith.constant 0 : i32
    %c0_i32_1 = arith.constant 0 : i32
    return %c0_i32, %c0_i32_0 : i32, i32
  }
  func.func @transform_5(%arg0: i32) -> (i32, i32) {
    %c0_i32 = arith.constant 0 : i32
    %c0_i32_0 = arith.constant 0 : i32
    %c0_i32_1 = arith.constant 0 : i32
    return %c0_i32, %c0_i32_0 : i32, i32
  }
  func.func @transform_6(%arg0: i32) -> (i32, i32) {
    %c0_i32 = arith.constant 0 : i32
    %c0_i32_0 = arith.constant 0 : i32
    %c0_i32_1 = arith.constant 0 : i32
    return %c0_i32, %c0_i32_0 : i32, i32
  }
  func.func @transform_7(%arg0: i32) -> (i32, i32) {
    %c0_i32 = arith.constant 0 : i32
    %c0_i32_0 = arith.constant 0 : i32
    %c0_i32_1 = arith.constant 0 : i32
    return %c0_i32, %c0_i32_0 : i32, i32
  }
  func.func @transform_8(%arg0: i32) -> (i32, i32) {
    %c0_i32 = arith.constant 0 : i32
    %c0_i32_0 = arith.constant 0 : i32
    %c0_i32_1 = arith.constant 0 : i32
    return %c0_i32, %c0_i32_0 : i32, i32
  }
  func.func @transform_9(%arg0: i32) -> (i32, i32) {
    %c0_i32 = arith.constant 0 : i32
    %c0_i32_0 = arith.constant 0 : i32
    return %arg0, %c0_i32 : i32, i32
  }
}

</mosaic_0001>

<llo_original>
// kernel: tpu_custom_call.1
$region0: #{tpu_custom_call.1}
  #allocation0 [shape = 'u32[]', space=smem, size = 0x4, offset = 0x4, fixed_abs, tag = 'smem constant byte address 0x4 - core index']
  #allocation1 [shape = 'u32[144,128]{1,0:T(1,128)}', space=vmem, size = 0x12000, scoped, tag = 'internal scratch']
  %s0 = inlined_call_operand.vmem [shape: f32[100,1200], index: 0, kind: input, shape index: {}]
  %s1 = inlined_call_operand.vmem [shape: bf16[1200,512], index: 1, kind: input, shape index: {}]
  %s2 = inlined_call_operand.vmem [shape: f32[1,512], index: 2, kind: input, shape index: {}]
  %s3 = inlined_call_operand.vmem [shape: bf16[512,32], index: 3, kind: input, shape index: {}]
  %s4 = inlined_call_operand.vmem [shape: f32[1,32], index: 4, kind: input, shape index: {}]
  %s5 = inlined_call_operand.vmem [shape: bf16[32,512], index: 5, kind: input, shape index: {}]
  %s6 = inlined_call_operand.vmem [shape: f32[1,512], index: 6, kind: input, shape index: {}]
  %s7 = inlined_call_operand.vmem [shape: bf16[512,1200], index: 7, kind: input, shape index: {}]
  %s8 = inlined_call_operand.vmem [shape: f32[1,1200], index: 8, kind: input, shape index: {}]
  %s9 = inlined_call_operand.hbm [shape: f32[100,1200], index: 9, kind: output, shape index: {}]
  %s10 = sld [smem:[#allocation0]]
  $region69: #{tpu_custom_call.1} parent=0
    _
  %s12 = ssub.s32 1, %s10
  %s13 = scalar_select 0, %s12, %s10
  $region1: #{tpu_custom_call.1} parent=0
    #allocation2 [shape = 'u8[327680]{0}', space=vmem, size = 0x50000, scoped, tag = 'output window, operand 0']
    #allocation3 [shape = 's32[2]{0}', space=sflag, size = 0x8, scoped, tag = 'scoped memory for tpu_custom_call.1']
    %14 = vsyncpa [#allocation3], 0
    %s15 = scalar_lea.sflag [#allocation3], 1
    %16 = vsyncpa %s15, 0
    loop: start=0, step=1, limit=6
    $region2: #{tpu_custom_call.1} parent=1 // loop_pre_header
      _
    $region3: #{tpu_custom_call.1} parent=1 // loop_header
      %s18 = sphi 0, %s22
      %p19 = scmp.ge.s32.totalorder %s18, 6
      %s28 = sphi 0, %s30
      %s31 = sphi 0, %s28
      %s32 = sphi 0, %s31
      %s48 = sphi 0, %s32
      %s52 = sphi 0, %s52
      %s54 = sphi 0, %s52
      %s55 = sphi 0, %s54
      %s69 = sphi 0, %s55
      %s73 = sphi 0, %s73
      %s75 = sphi 0, %s73
      %s76 = sphi 0, %s75
      %s90 = sphi 0, %s76
      %s94 = sphi 0, %s94
      %s96 = sphi 0, %s94
      %s97 = sphi 0, %s96
      %s111 = sphi 0, %s97
      %s115 = sphi 0, %s115
      %s117 = sphi 0, %s115
      %s118 = sphi 0, %s117
      %s132 = sphi 0, %s118
      %s136 = sphi 0, %s136
      %s138 = sphi 0, %s136
      %s139 = sphi 0, %s138
      %s153 = sphi 0, %s139
      %s157 = sphi 0, %s157
      %s159 = sphi 0, %s157
      %s160 = sphi 0, %s159
      %s174 = sphi 0, %s160
      %s178 = sphi 0, %s178
      %s180 = sphi 0, %s178
      %s181 = sphi 0, %s180
      %s195 = sphi 0, %s181
      %s199 = sphi 0, %s199
      %s201 = sphi 0, %s199
      %s202 = sphi 0, %s201
      %s216 = sphi 0, %s202
      %s222 = sphi 0, %s224
      %s225 = sphi 0, %s222
      %s226 = sphi 0, %s225
      %s242 = sphi 0, %s226
    $region4: #{tpu_custom_call.1} parent=1 // loop_header_branch
      %21 = sbr.rel (%p19) target = $region8
    $region5: #{tpu_custom_call.1} parent=1 // loop_body
      %s23 = ssub.s32 %s18, 1
      %s24 = ssub.s32 %s18, 2
      %s25 = sadd.s32 %s18, 1
      %s26 = ssub.s32 %s18, %s25
      %p27 = scmp.eq.s32.totalorder %s26, 0
      %s29 = sadd.s32 %s28, 1
      %s30 = scalar_select %p27, %s28, %s29
      %p33 = pneg %p27
      %p34 = scmp.eq.s32.totalorder %s18, 3
      %p35 = por %p33, %p34
      %p36 = scmp.ne.s32.totalorder %s28, %s31
      %p37 = scmp.eq.s32.totalorder %s18, 0
      %p38 = por %p36, %p37
      %p39 = scmp.ne.s32.totalorder %s28, %s31
      %p40 = scmp.eq.s32.totalorder %s23, 3
      %p41 = por %p39, %p40
      %p42 = scmp.ne.s32.totalorder %s31, %s32
      %p43 = scmp.eq.s32.totalorder %s23, 0
      %p44 = por %p42, %p43
      %p45 = scmp.ne.s32.totalorder %s31, %s32
      %p46 = scmp.eq.s32.totalorder %s24, 3
      %p47 = por %p45, %p46
      %p49 = scmp.ne.s32.totalorder %s32, %s48
      %p50 = scmp.eq.s32.totalorder %s24, 0
      %p51 = por %p49, %p50
      %s53 = sadd.s32 %s52, 1
      %p56 = scmp.eq.s32.totalorder %s18, 3
      %p57 = scmp.ne.s32.totalorder %s52, %s54
      %p58 = scmp.eq.s32.totalorder %s18, 0
      %p59 = por %p57, %p58
      %p60 = scmp.ne.s32.totalorder %s52, %s54
      %p61 = scmp.eq.s32.totalorder %s23, 3
      %p62 = por %p60, %p61
      %p63 = scmp.ne.s32.totalorder %s54, %s55
      %p64 = scmp.eq.s32.totalorder %s23, 0
      %p65 = por %p63, %p64
      %p66 = scmp.ne.s32.totalorder %s54, %s55
      %p67 = scmp.eq.s32.totalorder %s24, 3
      %p68 = por %p66, %p67
      %p70 = scmp.ne.s32.totalorder %s55, %s69
      %p71 = scmp.eq.s32.totalorder %s24, 0
      %p72 = por %p70, %p71
      %s74 = sadd.s32 %s73, 1
      %p77 = scmp.eq.s32.totalorder %s18, 3
      %p78 = scmp.ne.s32.totalorder %s73, %s75
      %p79 = scmp.eq.s32.totalorder %s18, 0
      %p80 = por %p78, %p79
      %p81 = scmp.ne.s32.totalorder %s73, %s75
      %p82 = scmp.eq.s32.totalorder %s23, 3
      %p83 = por %p81, %p82
      %p84 = scmp.ne.s32.totalorder %s75, %s76
      %p85 = scmp.eq.s32.totalorder %s23, 0
      %p86 = por %p84, %p85
      %p87 = scmp.ne.s32.totalorder %s75, %s76
      %p88 = scmp.eq.s32.totalorder %s24, 3
      %p89 = por %p87, %p88
      %p91 = scmp.ne.s32.totalorder %s76, %s90
      %p92 = scmp.eq.s32.totalorder %s24, 0
      %p93 = por %p91, %p92
      %s95 = sadd.s32 %s94, 1
      %p98 = scmp.eq.s32.totalorder %s18, 3
      %p99 = scmp.ne.s32.totalorder %s94, %s96
      %p100 = scmp.eq.s32.totalorder %s18, 0
      %p101 = por %p99, %p100
      %p102 = scmp.ne.s32.totalorder %s94, %s96
      %p103 = scmp.eq.s32.totalorder %s23, 3
      %p104 = por %p102, %p103
      %p105 = scmp.ne.s32.totalorder %s96, %s97
      %p106 = scmp.eq.s32.totalorder %s23, 0
      %p107 = por %p105, %p106
      %p108 = scmp.ne.s32.totalorder %s96, %s97
      %p109 = scmp.eq.s32.totalorder %s24, 3
      %p110 = por %p108, %p109
      %p112 = scmp.ne.s32.totalorder %s97, %s111
      %p113 = scmp.eq.s32.totalorder %s24, 0
      %p114 = por %p112, %p113
      %s116 = sadd.s32 %s115, 1
      %p119 = scmp.eq.s32.totalorder %s18, 3
      %p120 = scmp.ne.s32.totalorder %s115, %s117
      %p121 = scmp.eq.s32.totalorder %s18, 0
      %p122 = por %p120, %p121
      %p123 = scmp.ne.s32.totalorder %s115, %s117
      %p124 = scmp.eq.s32.totalorder %s23, 3
      %p125 = por %p123, %p124
      %p126 = scmp.ne.s32.totalorder %s117, %s118
      %p127 = scmp.eq.s32.totalorder %s23, 0
      %p128 = por %p126, %p127
      %p129 = scmp.ne.s32.totalorder %s117, %s118
      %p130 = scmp.eq.s32.totalorder %s24, 3
      %p131 = por %p129, %p130
      %p133 = scmp.ne.s32.totalorder %s118, %s132
      %p134 = scmp.eq.s32.totalorder %s24, 0
      %p135 = por %p133, %p134
      %s137 = sadd.s32 %s136, 1
      %p140 = scmp.eq.s32.totalorder %s18, 3
      %p141 = scmp.ne.s32.totalorder %s136, %s138
      %p142 = scmp.eq.s32.totalorder %s18, 0
      %p143 = por %p141, %p142
      %p144 = scmp.ne.s32.totalorder %s136, %s138
      %p145 = scmp.eq.s32.totalorder %s23, 3
      %p146 = por %p144, %p145
      %p147 = scmp.ne.s32.totalorder %s138, %s139
      %p148 = scmp.eq.s32.totalorder %s23, 0
      %p149 = por %p147, %p148
      %p150 = scmp.ne.s32.totalorder %s138, %s139
      %p151 = scmp.eq.s32.totalorder %s24, 3
      %p152 = por %p150, %p151
      %p154 = scmp.ne.s32.totalorder %s139, %s153
      %p155 = scmp.eq.s32.totalorder %s24, 0
      %p156 = por %p154, %p155
      %s158 = sadd.s32 %s157, 1
      %p161 = scmp.eq.s32.totalorder %s18, 3
      %p162 = scmp.ne.s32.totalorder %s157, %s159
      %p163 = scmp.eq.s32.totalorder %s18, 0
      %p164 = por %p162, %p163
      %p165 = scmp.ne.s32.totalorder %s157, %s159
      %p166 = scmp.eq.s32.totalorder %s23, 3
      %p167 = por %p165, %p166
      %p168 = scmp.ne.s32.totalorder %s159, %s160
      %p169 = scmp.eq.s32.totalorder %s23, 0
      %p170 = por %p168, %p169
      %p171 = scmp.ne.s32.totalorder %s159, %s160
      %p172 = scmp.eq.s32.totalorder %s24, 3
      %p173 = por %p171, %p172
      %p175 = scmp.ne.s32.totalorder %s160, %s174
      %p176 = scmp.eq.s32.totalorder %s24, 0
      %p177 = por %p175, %p176
      %s179 = sadd.s32 %s178, 1
      %p182 = scmp.eq.s32.totalorder %s18, 3
      %p183 = scmp.ne.s32.totalorder %s178, %s180
      %p184 = scmp.eq.s32.totalorder %s18, 0
      %p185 = por %p183, %p184
      %p186 = scmp.ne.s32.totalorder %s178, %s180
      %p187 = scmp.eq.s32.totalorder %s23, 3
      %p188 = por %p186, %p187
      %p189 = scmp.ne.s32.totalorder %s180, %s181
      %p190 = scmp.eq.s32.totalorder %s23, 0
      %p191 = por %p189, %p190
      %p192 = scmp.ne.s32.totalorder %s180, %s181
      %p193 = scmp.eq.s32.totalorder %s24, 3
      %p194 = por %p192, %p193
      %p196 = scmp.ne.s32.totalorder %s181, %s195
      %p197 = scmp.eq.s32.totalorder %s24, 0
      %p198 = por %p196, %p197
      %s200 = sadd.s32 %s199, 1
      %p203 = scmp.eq.s32.totalorder %s18, 3
      %p204 = scmp.ne.s32.totalorder %s199, %s201
      %p205 = scmp.eq.s32.totalorder %s18, 0
      %p206 = por %p204, %p205
      %p207 = scmp.ne.s32.totalorder %s199, %s201
      %p208 = scmp.eq.s32.totalorder %s23, 3
      %p209 = por %p207, %p208
      %p210 = scmp.ne.s32.totalorder %s201, %s202
      %p211 = scmp.eq.s32.totalorder %s23, 0
      %p212 = por %p210, %p211
      %p213 = scmp.ne.s32.totalorder %s201, %s202
      %p214 = scmp.eq.s32.totalorder %s24, 3
      %p215 = por %p213, %p214
      %p217 = scmp.ne.s32.totalorder %s202, %s216
      %p218 = scmp.eq.s32.totalorder %s24, 0
      %p219 = por %p217, %p218
      %s220 = ssub.s32 %s18, %s25
      %p221 = scmp.eq.s32.totalorder %s220, 0
      %s223 = sadd.s32 %s222, 1
      %s224 = scalar_select %p221, %s222, %s223
      %p227 = pneg %p221
      %p228 = scmp.eq.s32.totalorder %s18, 3
      %p229 = por %p227, %p228
      %p230 = scmp.ne.s32.totalorder %s222, %s225
      %p231 = scmp.eq.s32.totalorder %s18, 0
      %p232 = por %p230, %p231
      %p233 = scmp.ne.s32.totalorder %s222, %s225
      %p234 = scmp.eq.s32.totalorder %s23, 3
      %p235 = por %p233, %p234
      %p236 = scmp.ne.s32.totalorder %s225, %s226
      %p237 = scmp.eq.s32.totalorder %s23, 0
      %p238 = por %p236, %p237
      %p239 = scmp.ne.s32.totalorder %s225, %s226
      %p240 = scmp.eq.s32.totalorder %s24, 3
      %p241 = por %p239, %p240
      %p243 = scmp.ne.s32.totalorder %s226, %s242
      %p244 = scmp.eq.s32.totalorder %s24, 0
      %p245 = por %p243, %p244
      %p246 = scmp.le.s32.totalorder 1, %s18
      %p247 = scmp.lt.s32.totalorder %s18, 5
      %p248 = pnand %p246, %p247
      %p249 = pneg %p248
      // Predicated region
      $region9: #{tpu_custom_call.1} parent=5 // pred_check
        _
      $region10: #{tpu_custom_call.1} parent=5 // pred_check_branch
        %251 = sbr.rel (%p248) target = $region12
      $region11: #{tpu_custom_call.1} parent=5 // pred_region
        %s252 = ssub.s32 %s18, 1
        // Predicated region
        $region13: #{tpu_custom_call.1} parent=11 // pred_check
          %p253 = pneg %p65
        $region14: #{tpu_custom_call.1} parent=11 // pred_check_branch
          %255 = sbr.rel (%p253) target = $region16
        $region15: #{tpu_custom_call.1} parent=11 // pred_region
          _
        $region16: #{tpu_custom_call.1} parent=11 // pred_fallthru
          _
        // Predicated region
        $region17: #{tpu_custom_call.1} parent=11 // pred_check
          %p256 = pneg %p86
        $region18: #{tpu_custom_call.1} parent=11 // pred_check_branch
          %258 = sbr.rel (%p256) target = $region20
        $region19: #{tpu_custom_call.1} parent=11 // pred_region
          _
        $region20: #{tpu_custom_call.1} parent=11 // pred_fallthru
          _
        // Predicated region
        $region21: #{tpu_custom_call.1} parent=11 // pred_check
          %p259 = pneg %p107
        $region22: #{tpu_custom_call.1} parent=11 // pred_check_branch
          %261 = sbr.rel (%p259) target = $region24
        $region23: #{tpu_custom_call.1} parent=11 // pred_region
          _
        $region24: #{tpu_custom_call.1} parent=11 // pred_fallthru
          _
        // Predicated region
        $region25: #{tpu_custom_call.1} parent=11 // pred_check
          %p262 = pneg %p128
        $region26: #{tpu_custom_call.1} parent=11 // pred_check_branch
          %264 = sbr.rel (%p262) target = $region28
        $region27: #{tpu_custom_call.1} parent=11 // pred_region
          _
        $region28: #{tpu_custom_call.1} parent=11 // pred_fallthru
          _
        // Predicated region
        $region29: #{tpu_custom_call.1} parent=11 // pred_check
          %p265 = pneg %p149
        $region30: #{tpu_custom_call.1} parent=11 // pred_check_branch
          %267 = sbr.rel (%p265) target = $region32
        $region31: #{tpu_custom_call.1} parent=11 // pred_region
          _
        $region32: #{tpu_custom_call.1} parent=11 // pred_fallthru
          _
        // Predicated region
        $region33: #{tpu_custom_call.1} parent=11 // pred_check
          %p268 = pneg %p170
        $region34: #{tpu_custom_call.1} parent=11 // pred_check_branch
          %270 = sbr.rel (%p268) target = $region36
        $region35: #{tpu_custom_call.1} parent=11 // pred_region
          _
        $region36: #{tpu_custom_call.1} parent=11 // pred_fallthru
          _
        // Predicated region
        $region37: #{tpu_custom_call.1} parent=11 // pred_check
          %p271 = pneg %p191
        $region38: #{tpu_custom_call.1} parent=11 // pred_check_branch
          %273 = sbr.rel (%p271) target = $region40
        $region39: #{tpu_custom_call.1} parent=11 // pred_region
          _
        $region40: #{tpu_custom_call.1} parent=11 // pred_fallthru
          _
        // Predicated region
        $region41: #{tpu_custom_call.1} parent=11 // pred_check
          %p274 = pneg %p212
        $region42: #{tpu_custom_call.1} parent=11 // pred_check_branch
          %276 = sbr.rel (%p274) target = $region44
        $region43: #{tpu_custom_call.1} parent=11 // pred_region
          _
        $region44: #{tpu_custom_call.1} parent=11 // pred_fallthru
          _
      $region12: #{tpu_custom_call.1} parent=5 // pred_fallthru
        _
      %p277 = scmp.lt.s32.totalorder %s18, 4
      // Predicated region
      $region45: #{tpu_custom_call.1} parent=5 // pred_check
        %p278 = pneg %p277
      $region46: #{tpu_custom_call.1} parent=5 // pred_check_branch
        %280 = sbr.rel (%p278) target = $region48
      $region47: #{tpu_custom_call.1} parent=5 // pred_region
        // Predicated region
        $region49: #{tpu_custom_call.1} parent=47 // pred_check
          %p281 = pneg %p38
        $region50: #{tpu_custom_call.1} parent=47 // pred_check_branch
          %283 = sbr.rel (%p281) target = $region52
        $region51: #{tpu_custom_call.1} parent=47 // pred_region
          %s284 = smul.u32 4, %s18
          %s285 = ssub.s32 13, %s284
          %p286 = scmp.lt.s32.totalorder %s285, 4
          %s287 = scalar_select %p286, %s285, 4
          %s288 = smul.u32 128, %s287
          %s289 = smul.u32 %s288, 10
          %p290 = scmp.lt.s32.totalorder %s284, 12
          %s291 = scalar_select %p290, %s284, 12
          %s292 = smul.addr %s291, 10
          %s293 = smul.addr %s292, 8
          %s294 = scalar_lea.vmem %s0, %s293
          %s295 = smul.u32 4, %s18
          %s296 = ssub.s32 13, %s295
          %p297 = scmp.lt.s32.totalorder %s296, 4
          %s298 = scalar_select %p297, %s296, 4
          %s299 = smul.u32 128, %s298
          %s300 = smul.u32 %s299, 10
        $region52: #{tpu_custom_call.1} parent=47 // pred_fallthru
          _
      $region48: #{tpu_custom_call.1} parent=5 // pred_fallthru
        _
      %p301 = scmp.le.s32.totalorder 1, %s18
      %p302 = scmp.lt.s32.totalorder %s18, 5
      %p303 = pnand %p301, %p302
      %p304 = pneg %p303
      // Predicated region
      $region53: #{tpu_custom_call.1} parent=5 // pred_check
        _
      $region54: #{tpu_custom_call.1} parent=5 // pred_check_branch
        %306 = sbr.rel (%p303) target = $region56
      $region55: #{tpu_custom_call.1} parent=5 // pred_region
        %s307 = ssub.s32 %s18, 1
        %s308 = smul.u32 4, %s23
        %s309 = ssub.s32 13, %s308
        %p310 = scmp.lt.s32.totalorder %s309, 4
        %s311 = scalar_select %p310, %s309, 4
        %s312 = smul.u32 128, %s311
        %s313 = smul.u32 %s312, 10
        %p314 = scmp.lt.s32.totalorder %s308, 12
        %s315 = scalar_select %p314, %s308, 12
        %s316 = smul.addr %s315, 10
        %s317 = smul.addr %s316, 8
        %s318 = scalar_lea.vmem %s0, %s317
        %p319 = pneg %p44
        %p320 = pneg %p41
        %p321 = pneg %p65
        %p322 = pneg %p62
        %p323 = pneg %p86
        %p324 = pneg %p83
        %p325 = pneg %p107
        %p326 = pneg %p104
        %p327 = pneg %p128
        %p328 = pneg %p125
        %p329 = pneg %p149
        %p330 = pneg %p146
        %p331 = pneg %p170
        %p332 = pneg %p167
        %p333 = pneg %p191
        %p334 = pneg %p188
        %p335 = pneg %p212
        %p336 = pneg %p209
        %p337 = pneg %p238
        %p338 = pneg %p235
        %s339 = sand.u32 %s225, 1
        %s340 = scalar_lea.sflag [#allocation3], %s339
        %s341 = sand.u32 %s225, 1
        %s342 = smul.addr %s341, 320
        %s343 = scalar_lea.vmem [#allocation2], %s342
        %s344 = smul.u32 4, %s23
        %s345 = ssub.s32 13, %s344
        %p346 = scmp.lt.s32.totalorder %s345, 4
        %s347 = scalar_select %p346, %s345, 4
        %s348 = smul.u32 128, %s347
        %s349 = smul.u32 %s348, 10
        %p350 = scmp.lt.s32.totalorder %s344, 12
        %s351 = scalar_select %p350, %s344, 12
        %s352 = smul.addr %s351, 10
        %s353 = smul.addr %s352, 8
        %s354 = scalar_lea.vmem %s0, %s353
        %s355 = smul.u32 4, %s23
        %s356 = ssub.s32 13, %s355
        %p357 = scmp.lt.s32.totalorder %s356, 4
        %s358 = scalar_select %p357, %s356, 4
        %s359 = smul.u32 128, %s358
        %s360 = smul.u32 %s359, 10
        %s361 = smul.u32 4, %s23
        %s362 = ssub.s32 13, %s361
        %p363 = scmp.lt.s32.totalorder %s362, 4
        %s364 = scalar_select %p363, %s362, 4
        %s365 = smul.u32 128, %s364
        %s366 = smul.u32 %s365, 10
        %v368 = vld [vmem:[%s354] sm:$0xff]
        %v369 = vld [vmem:[%s354 + $0x8] sm:$0xff]
        %v370 = vld [vmem:[%s354 + $0x10] sm:$0xff]
        %v371 = vld [vmem:[%s354 + $0x18] sm:$0xff]
        %v372 = vld [vmem:[%s354 + $0x20] sm:$0xff]
        %v373 = vld [vmem:[%s354 + $0x28] sm:$0xff]
        %v374 = vld [vmem:[%s354 + $0x30] sm:$0xff]
        %v375 = vld [vmem:[%s354 + $0x38] sm:$0xff]
        %v376 = vld [vmem:[%s354 + $0x40] sm:$0xff]
        %v377 = vld [vmem:[%s354 + $0x48] sm:$0xff]
        %v378 = vld [vmem:[%s354 + $0x50] sm:$0xff]
        %v379 = vld [vmem:[%s354 + $0x58] sm:$0xff]
        %v380 = vld [vmem:[%s354 + $0x60] sm:$0xff]
        %v381 = vld [vmem:[%s354 + $0x68] sm:$0xff]
        %v382 = vld [vmem:[%s354 + $0x70] sm:$0xff]
        %v383 = vld [vmem:[%s354 + $0x78] sm:$0xff]
        %v384 = vld [vmem:[%s354 + $0x80] sm:$0xff]
        %v385 = vld [vmem:[%s354 + $0x88] sm:$0xff]
        %v386 = vld [vmem:[%s354 + $0x90] sm:$0xff]
        %v387 = vld [vmem:[%s354 + $0x98] sm:$0xff]
        %v388 = vld [vmem:[%s354 + $0xa0] sm:$0xff]
        %v389 = vld [vmem:[%s354 + $0xa8] sm:$0xff]
        %v390 = vld [vmem:[%s354 + $0xb0] sm:$0xff]
        %v391 = vld [vmem:[%s354 + $0xb8] sm:$0xff]
        %v392 = vld [vmem:[%s354 + $0xc0] sm:$0xff]
        %v393 = vld [vmem:[%s354 + $0xc8] sm:$0xff]
        %v394 = vld [vmem:[%s354 + $0xd0] sm:$0xff]
        %v395 = vld [vmem:[%s354 + $0xd8] sm:$0xff]
        %v396 = vld [vmem:[%s354 + $0xe0] sm:$0xff]
        %v397 = vld [vmem:[%s354 + $0xe8] sm:$0xff]
        %v398 = vld [vmem:[%s354 + $0xf0] sm:$0xff]
        %v399 = vld [vmem:[%s354 + $0xf8] sm:$0xff]
        %v400 = vld [vmem:[%s354 + $0x100] sm:$0xff]
        %v401 = vld [vmem:[%s354 + $0x108] sm:$0xff]
        %v402 = vld [vmem:[%s354 + $0x110] sm:$0xff]
        %v403 = vld [vmem:[%s354 + $0x118] sm:$0xff]
        %v404 = vld [vmem:[%s354 + $0x120] sm:$0xff]
        %v405 = vld [vmem:[%s354 + $0x128] sm:$0xff]
        %v406 = vld [vmem:[%s354 + $0x130] sm:$0xff]
        %v407 = vld [vmem:[%s354 + $0x138] sm:$0xff]
        %v408 = vpack.c.bf16 %v378, %v368
        %v409 = vpack.c.bf16 %v379, %v369
        %v410 = vpack.c.bf16 %v380, %v370
        %v411 = vpack.c.bf16 %v381, %v371
        %v412 = vpack.c.bf16 %v382, %v372
        %v413 = vpack.c.bf16 %v383, %v373
        %v414 = vpack.c.bf16 %v384, %v374
        %v415 = vpack.c.bf16 %v385, %v375
        %v416 = vpack.c.bf16 %v386, %v376
        %v417 = vpack.c.bf16 %v387, %v377
        %v418 = vpack.c.bf16 %v398, %v388
        %v419 = vpack.c.bf16 %v399, %v389
        %v420 = vpack.c.bf16 %v400, %v390
        %v421 = vpack.c.bf16 %v401, %v391
        %v422 = vpack.c.bf16 %v402, %v392
        %v423 = vpack.c.bf16 %v403, %v393
        %v424 = vpack.c.bf16 %v404, %v394
        %v425 = vpack.c.bf16 %v405, %v395
        %v426 = vpack.c.bf16 %v406, %v396
        %v427 = vpack.c.bf16 %v407, %v397
        %v428 = vld [vmem:[%s1] sm:$0xff]
        %v429 = vld [vmem:[%s1 + $0x8] sm:$0xff]
        %v430 = vld [vmem:[%s1 + $0x10] sm:$0xff]
        %v431 = vld [vmem:[%s1 + $0x18] sm:$0xff]
        %v432 = vld [vmem:[%s1 + $0x20] sm:$0xff]
        %v433 = vld [vmem:[%s1 + $0x28] sm:$0xff]
        %v434 = vld [vmem:[%s1 + $0x30] sm:$0xff]
        %v435 = vld [vmem:[%s1 + $0x38] sm:$0xff]
        %v436 = vld [vmem:[%s1 + $0x40] sm:$0xff]
        %v437 = vld [vmem:[%s1 + $0x48] sm:$0xff]
        %v438 = vld [vmem:[%s1 + $0x50] sm:$0xff]
        %v439 = vld [vmem:[%s1 + $0x58] sm:$0xff]
        %v440 = vld [vmem:[%s1 + $0x60] sm:$0xff]
        %v441 = vld [vmem:[%s1 + $0x68] sm:$0xff]
        %v442 = vld [vmem:[%s1 + $0x70] sm:$0xff]
        %v443 = vld [vmem:[%s1 + $0x78] sm:$0xff]
        %v444 = vld [vmem:[%s1 + $0x80] sm:$0xff]
        %v445 = vld [vmem:[%s1 + $0x88] sm:$0xff]
        %v446 = vld [vmem:[%s1 + $0x90] sm:$0xff]
        %v447 = vld [vmem:[%s1 + $0x98] sm:$0xff]
        %v448 = vld [vmem:[%s1 + $0xa0] sm:$0xff]
        %v449 = vld [vmem:[%s1 + $0xa8] sm:$0xff]
        %v450 = vld [vmem:[%s1 + $0xb0] sm:$0xff]
        %v451 = vld [vmem:[%s1 + $0xb8] sm:$0xff]
        %v452 = vld [vmem:[%s1 + $0xc0] sm:$0xff]
        %v453 = vld [vmem:[%s1 + $0xc8] sm:$0xff]
        %v454 = vld [vmem:[%s1 + $0xd0] sm:$0xff]
        %v455 = vld [vmem:[%s1 + $0xd8] sm:$0xff]
        %v456 = vld [vmem:[%s1 + $0xe0] sm:$0xff]
        %v457 = vld [vmem:[%s1 + $0xe8] sm:$0xff]
        %v458 = vld [vmem:[%s1 + $0xf0] sm:$0xff]
        %v459 = vld [vmem:[%s1 + $0xf8] sm:$0xff]
        %v460 = vld [vmem:[%s1 + $0x100] sm:$0xff]
        %v461 = vld [vmem:[%s1 + $0x108] sm:$0xff]
        %v462 = vld [vmem:[%s1 + $0x110] sm:$0xff]
        %v463 = vld [vmem:[%s1 + $0x118] sm:$0xff]
        %v464 = vld [vmem:[%s1 + $0x120] sm:$0xff]
        %v465 = vld [vmem:[%s1 + $0x128] sm:$0xff]
        %v466 = vld [vmem:[%s1 + $0x130] sm:$0xff]
        %v467 = vld [vmem:[%s1 + $0x138] sm:$0xff]
        %v468 = vld [vmem:[%s1 + $0x140] sm:$0xff]
        %v469 = vld [vmem:[%s1 + $0x148] sm:$0xff]
        %v470 = vld [vmem:[%s1 + $0x150] sm:$0xff]
        %v471 = vld [vmem:[%s1 + $0x158] sm:$0xff]
        %v472 = vld [vmem:[%s1 + $0x160] sm:$0xff]
        %v473 = vld [vmem:[%s1 + $0x168] sm:$0xff]
        %v474 = vld [vmem:[%s1 + $0x170] sm:$0xff]
        %v475 = vld [vmem:[%s1 + $0x178] sm:$0xff]
        %v476 = vld [vmem:[%s1 + $0x180] sm:$0xff]
        %v477 = vld [vmem:[%s1 + $0x188] sm:$0xff]
        %v478 = vld [vmem:[%s1 + $0x190] sm:$0xff]
        %v479 = vld [vmem:[%s1 + $0x198] sm:$0xff]
        %v480 = vld [vmem:[%s1 + $0x1a0] sm:$0xff]
        %v481 = vld [vmem:[%s1 + $0x1a8] sm:$0xff]
        %v482 = vld [vmem:[%s1 + $0x1b0] sm:$0xff]
        %v483 = vld [vmem:[%s1 + $0x1b8] sm:$0xff]
        %v484 = vld [vmem:[%s1 + $0x1c0] sm:$0xff]
        %v485 = vld [vmem:[%s1 + $0x1c8] sm:$0xff]
        %v486 = vld [vmem:[%s1 + $0x1d0] sm:$0xff]
        %v487 = vld [vmem:[%s1 + $0x1d8] sm:$0xff]
        %v488 = vld [vmem:[%s1 + $0x1e0] sm:$0xff]
        %v489 = vld [vmem:[%s1 + $0x1e8] sm:$0xff]
        %v490 = vld [vmem:[%s1 + $0x1f0] sm:$0xff]
        %v491 = vld [vmem:[%s1 + $0x1f8] sm:$0xff]
        %v492 = vld [vmem:[%s1 + $0x200] sm:$0xff]
        %v493 = vld [vmem:[%s1 + $0x208] sm:$0xff]
        %v494 = vld [vmem:[%s1 + $0x210] sm:$0xff]
        %v495 = vld [vmem:[%s1 + $0x218] sm:$0xff]
        %v496 = vld [vmem:[%s1 + $0x220] sm:$0xff]
        %v497 = vld [vmem:[%s1 + $0x228] sm:$0xff]
        %v498 = vld [vmem:[%s1 + $0x230] sm:$0xff]
        %v499 = vld [vmem:[%s1 + $0x238] sm:$0xff]
        %v500 = vld [vmem:[%s1 + $0x240] sm:$0xff]
        %v501 = vld [vmem:[%s1 + $0x248] sm:$0xff]
        %v502 = vld [vmem:[%s1 + $0x250] sm:$0xff]
        %v503 = vld [vmem:[%s1 + $0x258] sm:$0xff]
        %v504 = vld [vmem:[%s1 + $0x260] sm:$0xff]
        %v505 = vld [vmem:[%s1 + $0x268] sm:$0xff]
        %v506 = vld [vmem:[%s1 + $0x270] sm:$0xff]
        %v507 = vld [vmem:[%s1 + $0x278] sm:$0xff]
        %v508 = vld [vmem:[%s1 + $0x280] sm:$0xff]
        %v509 = vld [vmem:[%s1 + $0x288] sm:$0xff]
        %v510 = vld [vmem:[%s1 + $0x290] sm:$0xff]
        %v511 = vld [vmem:[%s1 + $0x298] sm:$0xff]
        %v512 = vld [vmem:[%s1 + $0x2a0] sm:$0xff]
        %v513 = vld [vmem:[%s1 + $0x2a8] sm:$0xff]
        %v514 = vld [vmem:[%s1 + $0x2b0] sm:$0xff]
        %v515 = vld [vmem:[%s1 + $0x2b8] sm:$0xff]
        %v516 = vld [vmem:[%s1 + $0x2c0] sm:$0xff]
        %v517 = vld [vmem:[%s1 + $0x2c8] sm:$0xff]
        %v518 = vld [vmem:[%s1 + $0x2d0] sm:$0xff]
        %v519 = vld [vmem:[%s1 + $0x2d8] sm:$0xff]
        %v520 = vld [vmem:[%s1 + $0x2e0] sm:$0xff]
        %v521 = vld [vmem:[%s1 + $0x2e8] sm:$0xff]
        %v522 = vld [vmem:[%s1 + $0x2f0] sm:$0xff]
        %v523 = vld [vmem:[%s1 + $0x2f8] sm:$0xff]
        %v524 = vld [vmem:[%s1 + $0x300] sm:$0xff]
        %v525 = vld [vmem:[%s1 + $0x308] sm:$0xff]
        %v526 = vld [vmem:[%s1 + $0x310] sm:$0xff]
        %v527 = vld [vmem:[%s1 + $0x318] sm:$0xff]
        %v528 = vld [vmem:[%s1 + $0x320] sm:$0xff]
        %v529 = vld [vmem:[%s1 + $0x328] sm:$0xff]
        %v530 = vld [vmem:[%s1 + $0x330] sm:$0xff]
        %v531 = vld [vmem:[%s1 + $0x338] sm:$0xff]
        %v532 = vld [vmem:[%s1 + $0x340] sm:$0xff]
        %v533 = vld [vmem:[%s1 + $0x348] sm:$0xff]
        %v534 = vld [vmem:[%s1 + $0x350] sm:$0xff]
        %v535 = vld [vmem:[%s1 + $0x358] sm:$0xff]
        %v536 = vld [vmem:[%s1 + $0x360] sm:$0xff]
        %v537 = vld [vmem:[%s1 + $0x368] sm:$0xff]
        %v538 = vld [vmem:[%s1 + $0x370] sm:$0xff]
        %v539 = vld [vmem:[%s1 + $0x378] sm:$0xff]
        %v540 = vld [vmem:[%s1 + $0x380] sm:$0xff]
        %v541 = vld [vmem:[%s1 + $0x388] sm:$0xff]
        %v542 = vld [vmem:[%s1 + $0x390] sm:$0xff]
        %v543 = vld [vmem:[%s1 + $0x398] sm:$0xff]
        %v544 = vld [vmem:[%s1 + $0x3a0] sm:$0xff]
        %v545 = vld [vmem:[%s1 + $0x3a8] sm:$0xff]
        %v546 = vld [vmem:[%s1 + $0x3b0] sm:$0xff]
        %v547 = vld [vmem:[%s1 + $0x3b8] sm:$0xff]
        %v548 = vld [vmem:[%s1 + $0x3c0] sm:$0xff]
        %v549 = vld [vmem:[%s1 + $0x3c8] sm:$0xff]
        %v550 = vld [vmem:[%s1 + $0x3d0] sm:$0xff]
        %v551 = vld [vmem:[%s1 + $0x3d8] sm:$0xff]
        %v552 = vld [vmem:[%s1 + $0x3e0] sm:$0xff]
        %v553 = vld [vmem:[%s1 + $0x3e8] sm:$0xff]
        %v554 = vld [vmem:[%s1 + $0x3f0] sm:$0xff]
        %v555 = vld [vmem:[%s1 + $0x3f8] sm:$0xff]
        %v556 = vld [vmem:[%s1 + $0x400] sm:$0xff]
        %v557 = vld [vmem:[%s1 + $0x408] sm:$0xff]
        %v558 = vld [vmem:[%s1 + $0x410] sm:$0xff]
        %v559 = vld [vmem:[%s1 + $0x418] sm:$0xff]
        %v560 = vld [vmem:[%s1 + $0x420] sm:$0xff]
        %v561 = vld [vmem:[%s1 + $0x428] sm:$0xff]
        %v562 = vld [vmem:[%s1 + $0x430] sm:$0xff]
        %v563 = vld [vmem:[%s1 + $0x438] sm:$0xff]
        %v564 = vld [vmem:[%s1 + $0x440] sm:$0xff]
        %v565 = vld [vmem:[%s1 + $0x448] sm:$0xff]
        %v566 = vld [vmem:[%s1 + $0x450] sm:$0xff]
        %v567 = vld [vmem:[%s1 + $0x458] sm:$0xff]
        %v568 = vld [vmem:[%s1 + $0x460] sm:$0xff]
        %v569 = vld [vmem:[%s1 + $0x468] sm:$0xff]
        %v570 = vld [vmem:[%s1 + $0x470] sm:$0xff]
        %v571 = vld [vmem:[%s1 + $0x478] sm:$0xff]
        %v572 = vld [vmem:[%s1 + $0x480] sm:$0xff]
        %v573 = vld [vmem:[%s1 + $0x488] sm:$0xff]
        %v574 = vld [vmem:[%s1 + $0x490] sm:$0xff]
        %v575 = vld [vmem:[%s1 + $0x498] sm:$0xff]
        %v576 = vld [vmem:[%s1 + $0x4a0] sm:$0xff]
        %v577 = vld [vmem:[%s1 + $0x4a8] sm:$0xff]
        %v578 = vld [vmem:[%s1 + $0x4b0] sm:$0xff]
        %v579 = vld [vmem:[%s1 + $0x4b8] sm:$0xff]
        %v580 = vld [vmem:[%s1 + $0x4c0] sm:$0xff]
        %v581 = vld [vmem:[%s1 + $0x4c8] sm:$0xff]
        %v582 = vld [vmem:[%s1 + $0x4d0] sm:$0xff]
        %v583 = vld [vmem:[%s1 + $0x4d8] sm:$0xff]
        %v584 = vld [vmem:[%s1 + $0x4e0] sm:$0xff]
        %v585 = vld [vmem:[%s1 + $0x4e8] sm:$0xff]
        %v586 = vld [vmem:[%s1 + $0x4f0] sm:$0xff]
        %v587 = vld [vmem:[%s1 + $0x4f8] sm:$0xff]
        %v588 = vld [vmem:[%s1 + $0x500] sm:$0xff]
        %v589 = vld [vmem:[%s1 + $0x508] sm:$0xff]
        %v590 = vld [vmem:[%s1 + $0x510] sm:$0xff]
        %v591 = vld [vmem:[%s1 + $0x518] sm:$0xff]
        %v592 = vld [vmem:[%s1 + $0x520] sm:$0xff]
        %v593 = vld [vmem:[%s1 + $0x528] sm:$0xff]
        %v594 = vld [vmem:[%s1 + $0x530] sm:$0xff]
        %v595 = vld [vmem:[%s1 + $0x538] sm:$0xff]
        %v596 = vld [vmem:[%s1 + $0x540] sm:$0xff]
        %v597 = vld [vmem:[%s1 + $0x548] sm:$0xff]
        %v598 = vld [vmem:[%s1 + $0x550] sm:$0xff]
        %v599 = vld [vmem:[%s1 + $0x558] sm:$0xff]
        %v600 = vld [vmem:[%s1 + $0x560] sm:$0xff]
        %v601 = vld [vmem:[%s1 + $0x568] sm:$0xff]
        %v602 = vld [vmem:[%s1 + $0x570] sm:$0xff]
        %v603 = vld [vmem:[%s1 + $0x578] sm:$0xff]
        %v604 = vld [vmem:[%s1 + $0x580] sm:$0xff]
        %v605 = vld [vmem:[%s1 + $0x588] sm:$0xff]
        %v606 = vld [vmem:[%s1 + $0x590] sm:$0xff]
        %v607 = vld [vmem:[%s1 + $0x598] sm:$0xff]
        %v608 = vld [vmem:[%s1 + $0x5a0] sm:$0xff]
        %v609 = vld [vmem:[%s1 + $0x5a8] sm:$0xff]
        %v610 = vld [vmem:[%s1 + $0x5b0] sm:$0xff]
        %v611 = vld [vmem:[%s1 + $0x5b8] sm:$0xff]
        %v612 = vld [vmem:[%s1 + $0x5c0] sm:$0xff]
        %v613 = vld [vmem:[%s1 + $0x5c8] sm:$0xff]
        %v614 = vld [vmem:[%s1 + $0x5d0] sm:$0xff]
        %v615 = vld [vmem:[%s1 + $0x5d8] sm:$0xff]
        %v616 = vld [vmem:[%s1 + $0x5e0] sm:$0xff]
        %v617 = vld [vmem:[%s1 + $0x5e8] sm:$0xff]
        %v618 = vld [vmem:[%s1 + $0x5f0] sm:$0xff]
        %v619 = vld [vmem:[%s1 + $0x5f8] sm:$0xff]
        %v620 = vld [vmem:[%s1 + $0x600] sm:$0xff]
        %v621 = vld [vmem:[%s1 + $0x608] sm:$0xff]
        %v622 = vld [vmem:[%s1 + $0x610] sm:$0xff]
        %v623 = vld [vmem:[%s1 + $0x618] sm:$0xff]
        %v624 = vld [vmem:[%s1 + $0x620] sm:$0xff]
        %v625 = vld [vmem:[%s1 + $0x628] sm:$0xff]
        %v626 = vld [vmem:[%s1 + $0x630] sm:$0xff]
        %v627 = vld [vmem:[%s1 + $0x638] sm:$0xff]
        %v628 = vld [vmem:[%s1 + $0x640] sm:$0xff]
        %v629 = vld [vmem:[%s1 + $0x648] sm:$0xff]
        %v630 = vld [vmem:[%s1 + $0x650] sm:$0xff]
        %v631 = vld [vmem:[%s1 + $0x658] sm:$0xff]
        %v632 = vld [vmem:[%s1 + $0x660] sm:$0xff]
        %v633 = vld [vmem:[%s1 + $0x668] sm:$0xff]
        %v634 = vld [vmem:[%s1 + $0x670] sm:$0xff]
        %v635 = vld [vmem:[%s1 + $0x678] sm:$0xff]
        %v636 = vld [vmem:[%s1 + $0x680] sm:$0xff]
        %v637 = vld [vmem:[%s1 + $0x688] sm:$0xff]
        %v638 = vld [vmem:[%s1 + $0x690] sm:$0xff]
        %v639 = vld [vmem:[%s1 + $0x698] sm:$0xff]
        %v640 = vld [vmem:[%s1 + $0x6a0] sm:$0xff]
        %v641 = vld [vmem:[%s1 + $0x6a8] sm:$0xff]
        %v642 = vld [vmem:[%s1 + $0x6b0] sm:$0xff]
        %v643 = vld [vmem:[%s1 + $0x6b8] sm:$0xff]
        %v644 = vld [vmem:[%s1 + $0x6c0] sm:$0xff]
        %v645 = vld [vmem:[%s1 + $0x6c8] sm:$0xff]
        %v646 = vld [vmem:[%s1 + $0x6d0] sm:$0xff]
        %v647 = vld [vmem:[%s1 + $0x6d8] sm:$0xff]
        %v648 = vld [vmem:[%s1 + $0x6e0] sm:$0xff]
        %v649 = vld [vmem:[%s1 + $0x6e8] sm:$0xff]
        %v650 = vld [vmem:[%s1 + $0x6f0] sm:$0xff]
        %v651 = vld [vmem:[%s1 + $0x6f8] sm:$0xff]
        %v652 = vld [vmem:[%s1 + $0x700] sm:$0xff]
        %v653 = vld [vmem:[%s1 + $0x708] sm:$0xff]
        %v654 = vld [vmem:[%s1 + $0x710] sm:$0xff]
        %v655 = vld [vmem:[%s1 + $0x718] sm:$0xff]
        %v656 = vld [vmem:[%s1 + $0x720] sm:$0xff]
        %v657 = vld [vmem:[%s1 + $0x728] sm:$0xff]
        %v658 = vld [vmem:[%s1 + $0x730] sm:$0xff]
        %v659 = vld [vmem:[%s1 + $0x738] sm:$0xff]
        %v660 = vld [vmem:[%s1 + $0x740] sm:$0xff]
        %v661 = vld [vmem:[%s1 + $0x748] sm:$0xff]
        %v662 = vld [vmem:[%s1 + $0x750] sm:$0xff]
        %v663 = vld [vmem:[%s1 + $0x758] sm:$0xff]
        %v664 = vld [vmem:[%s1 + $0x760] sm:$0xff]
        %v665 = vld [vmem:[%s1 + $0x768] sm:$0xff]
        %v666 = vld [vmem:[%s1 + $0x770] sm:$0xff]
        %v667 = vld [vmem:[%s1 + $0x778] sm:$0xff]
        %v668 = vld [vmem:[%s1 + $0x780] sm:$0xff]
        %v669 = vld [vmem:[%s1 + $0x788] sm:$0xff]
        %v670 = vld [vmem:[%s1 + $0x790] sm:$0xff]
        %v671 = vld [vmem:[%s1 + $0x798] sm:$0xff]
        %v672 = vld [vmem:[%s1 + $0x7a0] sm:$0xff]
        %v673 = vld [vmem:[%s1 + $0x7a8] sm:$0xff]
        %v674 = vld [vmem:[%s1 + $0x7b0] sm:$0xff]
        %v675 = vld [vmem:[%s1 + $0x7b8] sm:$0xff]
        %v676 = vld [vmem:[%s1 + $0x7c0] sm:$0xff]
        %v677 = vld [vmem:[%s1 + $0x7c8] sm:$0xff]
        %v678 = vld [vmem:[%s1 + $0x7d0] sm:$0xff]
        %v679 = vld [vmem:[%s1 + $0x7d8] sm:$0xff]
        %v680 = vld [vmem:[%s1 + $0x7e0] sm:$0xff]
        %v681 = vld [vmem:[%s1 + $0x7e8] sm:$0xff]
        %v682 = vld [vmem:[%s1 + $0x7f0] sm:$0xff]
        %v683 = vld [vmem:[%s1 + $0x7f8] sm:$0xff]
        %v684 = vld [vmem:[%s1 + $0x800] sm:$0xff]
        %v685 = vld [vmem:[%s1 + $0x808] sm:$0xff]
        %v686 = vld [vmem:[%s1 + $0x810] sm:$0xff]
        %v687 = vld [vmem:[%s1 + $0x818] sm:$0xff]
        %v688 = vld [vmem:[%s1 + $0x820] sm:$0xff]
        %v689 = vld [vmem:[%s1 + $0x828] sm:$0xff]
        %v690 = vld [vmem:[%s1 + $0x830] sm:$0xff]
        %v691 = vld [vmem:[%s1 + $0x838] sm:$0xff]
        %v692 = vld [vmem:[%s1 + $0x840] sm:$0xff]
        %v693 = vld [vmem:[%s1 + $0x848] sm:$0xff]
        %v694 = vld [vmem:[%s1 + $0x850] sm:$0xff]
        %v695 = vld [vmem:[%s1 + $0x858] sm:$0xff]
        %v696 = vld [vmem:[%s1 + $0x860] sm:$0xff]
        %v697 = vld [vmem:[%s1 + $0x868] sm:$0xff]
        %v698 = vld [vmem:[%s1 + $0x870] sm:$0xff]
        %v699 = vld [vmem:[%s1 + $0x878] sm:$0xff]
        %v700 = vld [vmem:[%s1 + $0x880] sm:$0xff]
        %v701 = vld [vmem:[%s1 + $0x888] sm:$0xff]
        %v702 = vld [vmem:[%s1 + $0x890] sm:$0xff]
        %v703 = vld [vmem:[%s1 + $0x898] sm:$0xff]
        %v704 = vld [vmem:[%s1 + $0x8a0] sm:$0xff]
        %v705 = vld [vmem:[%s1 + $0x8a8] sm:$0xff]
        %v706 = vld [vmem:[%s1 + $0x8b0] sm:$0xff]
        %v707 = vld [vmem:[%s1 + $0x8b8] sm:$0xff]
        %v708 = vld [vmem:[%s1 + $0x8c0] sm:$0xff]
        %v709 = vld [vmem:[%s1 + $0x8c8] sm:$0xff]
        %v710 = vld [vmem:[%s1 + $0x8d0] sm:$0xff]
        %v711 = vld [vmem:[%s1 + $0x8d8] sm:$0xff]
        %v712 = vld [vmem:[%s1 + $0x8e0] sm:$0xff]
        %v713 = vld [vmem:[%s1 + $0x8e8] sm:$0xff]
        %v714 = vld [vmem:[%s1 + $0x8f0] sm:$0xff]
        %v715 = vld [vmem:[%s1 + $0x8f8] sm:$0xff]
        %v716 = vld [vmem:[%s1 + $0x900] sm:$0xff]
        %v717 = vld [vmem:[%s1 + $0x908] sm:$0xff]
        %v718 = vld [vmem:[%s1 + $0x910] sm:$0xff]
        %v719 = vld [vmem:[%s1 + $0x918] sm:$0xff]
        %v720 = vld [vmem:[%s1 + $0x920] sm:$0xff]
        %v721 = vld [vmem:[%s1 + $0x928] sm:$0xff]
        %v722 = vld [vmem:[%s1 + $0x930] sm:$0xff]
        %v723 = vld [vmem:[%s1 + $0x938] sm:$0xff]
        %v724 = vld [vmem:[%s1 + $0x940] sm:$0xff]
        %v725 = vld [vmem:[%s1 + $0x948] sm:$0xff]
        %v726 = vld [vmem:[%s1 + $0x950] sm:$0xff]
        %v727 = vld [vmem:[%s1 + $0x958] sm:$0xff]
        %v728 = vld [vmem:[%s2] sm:$0xf]
        %v730 = vlaneseq
        %v731 = vshrl.u32 %v730, 7
        %v732 = vsub.s32 0, %v731
        %v733 = vrot.slane %v728, %v732
        %v734 = vlaneseq
        %v735 = vshrl.u32 %v734, 7
        %v736 = vsub.s32 1, %v735
        %v737 = vrot.slane %v728, %v736
        %v738 = vlaneseq
        %v739 = vshrl.u32 %v738, 7
        %v740 = vsub.s32 2, %v739
        %v741 = vrot.slane %v728, %v740
        %v742 = vlaneseq
        %v743 = vshrl.u32 %v742, 7
        %v744 = vsub.s32 3, %v743
        %v745 = vrot.slane %v728, %v744
        %v1050 = vunpack.c.l.b16 %v428
        %v1051 = vunpack.c.h.b16 %v428
        %v1052 = vunpack.c.l.b16 %v429
        %v1053 = vunpack.c.h.b16 %v429
        %v1054 = vunpack.c.l.b16 %v430
        %v1055 = vunpack.c.h.b16 %v430
        %v1056 = vunpack.c.l.b16 %v431
        %v1057 = vunpack.c.h.b16 %v431
        %v1058 = vunpack.c.l.b16 %v432
        %v1059 = vunpack.c.h.b16 %v432
        %v1060 = vunpack.c.l.b16 %v433
        %v1061 = vunpack.c.h.b16 %v433
        %v1062 = vunpack.c.l.b16 %v434
        %v1063 = vunpack.c.h.b16 %v434
        %v1064 = vunpack.c.l.b16 %v435
        %v1065 = vunpack.c.h.b16 %v435
        %v1066 = vunpack.c.l.b16 %v436
        %v1067 = vunpack.c.h.b16 %v436
        %v1068 = vunpack.c.l.b16 %v437
        %v1069 = vunpack.c.h.b16 %v437
        %v1070 = vunpack.c.l.b16 %v438
        %v1071 = vunpack.c.h.b16 %v438
        %v1072 = vunpack.c.l.b16 %v439
        %v1073 = vunpack.c.h.b16 %v439
        %v1074 = vunpack.c.l.b16 %v440
        %v1075 = vunpack.c.h.b16 %v440
        %v1076 = vunpack.c.l.b16 %v441
        %v1077 = vunpack.c.h.b16 %v441
        %v1078 = vunpack.c.l.b16 %v442
        %v1079 = vunpack.c.h.b16 %v442
        %v1080 = vunpack.c.l.b16 %v443
        %v1081 = vunpack.c.h.b16 %v443
        %v1082 = vunpack.c.l.b16 %v444
        %v1083 = vunpack.c.h.b16 %v444
        %v1084 = vunpack.c.l.b16 %v445
        %v1085 = vunpack.c.h.b16 %v445
        %v1086 = vunpack.c.l.b16 %v446
        %v1087 = vunpack.c.h.b16 %v446
        %v1088 = vunpack.c.l.b16 %v447
        %v1089 = vunpack.c.h.b16 %v447
        %v1090 = vunpack.c.l.b16 %v448
        %v1091 = vunpack.c.h.b16 %v448
        %v1092 = vunpack.c.l.b16 %v449
        %v1093 = vunpack.c.h.b16 %v449
        %v1094 = vunpack.c.l.b16 %v450
        %v1095 = vunpack.c.h.b16 %v450
        %v1096 = vunpack.c.l.b16 %v451
        %v1097 = vunpack.c.h.b16 %v451
        %v1098 = vunpack.c.l.b16 %v452
        %v1099 = vunpack.c.h.b16 %v452
        %v1100 = vunpack.c.l.b16 %v453
        %v1101 = vunpack.c.h.b16 %v453
        %v1102 = vunpack.c.l.b16 %v454
        %v1103 = vunpack.c.h.b16 %v454
        %v1104 = vunpack.c.l.b16 %v455
        %v1105 = vunpack.c.h.b16 %v455
        %v1106 = vunpack.c.l.b16 %v456
        %v1107 = vunpack.c.h.b16 %v456
        %v1108 = vunpack.c.l.b16 %v457
        %v1109 = vunpack.c.h.b16 %v457
        %v1110 = vunpack.c.l.b16 %v458
        %v1111 = vunpack.c.h.b16 %v458
        %v1112 = vunpack.c.l.b16 %v459
        %v1113 = vunpack.c.h.b16 %v459
        %v1114 = vunpack.c.l.b16 %v460
        %v1115 = vunpack.c.h.b16 %v460
        %v1116 = vunpack.c.l.b16 %v461
        %v1117 = vunpack.c.h.b16 %v461
        %v1118 = vunpack.c.l.b16 %v462
        %v1119 = vunpack.c.h.b16 %v462
        %v1120 = vunpack.c.l.b16 %v463
        %v1121 = vunpack.c.h.b16 %v463
        %v1122 = vunpack.c.l.b16 %v464
        %v1123 = vunpack.c.h.b16 %v464
        %v1124 = vunpack.c.l.b16 %v465
        %v1125 = vunpack.c.h.b16 %v465
        %v1126 = vunpack.c.l.b16 %v466
        %v1127 = vunpack.c.h.b16 %v466
        %v1128 = vunpack.c.l.b16 %v467
        %v1129 = vunpack.c.h.b16 %v467
        %v1130 = vunpack.c.l.b16 %v468
        %v1131 = vunpack.c.h.b16 %v468
        %v1132 = vunpack.c.l.b16 %v469
        %v1133 = vunpack.c.h.b16 %v469
        %v1134 = vunpack.c.l.b16 %v470
        %v1135 = vunpack.c.h.b16 %v470
        %v1136 = vunpack.c.l.b16 %v471
        %v1137 = vunpack.c.h.b16 %v471
        %v1138 = vunpack.c.l.b16 %v472
        %v1139 = vunpack.c.h.b16 %v472
        %v1140 = vunpack.c.l.b16 %v473
        %v1141 = vunpack.c.h.b16 %v473
        %v1142 = vunpack.c.l.b16 %v474
        %v1143 = vunpack.c.h.b16 %v474
        %v1144 = vunpack.c.l.b16 %v475
        %v1145 = vunpack.c.h.b16 %v475
        %v1146 = vunpack.c.l.b16 %v476
        %v1147 = vunpack.c.h.b16 %v476
        %v1148 = vunpack.c.l.b16 %v477
        %v1149 = vunpack.c.h.b16 %v477
        %v1150 = vunpack.c.l.b16 %v478
        %v1151 = vunpack.c.h.b16 %v478
        %v1152 = vunpack.c.l.b16 %v479
        %v1153 = vunpack.c.h.b16 %v479
        %v1154 = vunpack.c.l.b16 %v480
        %v1155 = vunpack.c.h.b16 %v480
        %v1156 = vunpack.c.l.b16 %v481
        %v1157 = vunpack.c.h.b16 %v481
        %v1158 = vunpack.c.l.b16 %v482
        %v1159 = vunpack.c.h.b16 %v482
        %v1160 = vunpack.c.l.b16 %v483
        %v1161 = vunpack.c.h.b16 %v483
        %v1162 = vunpack.c.l.b16 %v484
        %v1163 = vunpack.c.h.b16 %v484
        %v1164 = vunpack.c.l.b16 %v485
        %v1165 = vunpack.c.h.b16 %v485
        %v1166 = vunpack.c.l.b16 %v486
        %v1167 = vunpack.c.h.b16 %v486
        %v1168 = vunpack.c.l.b16 %v487
        %v1169 = vunpack.c.h.b16 %v487
        %v1170 = vunpack.c.l.b16 %v488
        %v1171 = vunpack.c.h.b16 %v488
        %v1172 = vunpack.c.l.b16 %v489
        %v1173 = vunpack.c.h.b16 %v489
        %v1174 = vunpack.c.l.b16 %v490
        %v1175 = vunpack.c.h.b16 %v490
        %v1176 = vunpack.c.l.b16 %v491
        %v1177 = vunpack.c.h.b16 %v491
        %v1178 = vunpack.c.l.b16 %v492
        %v1179 = vunpack.c.h.b16 %v492
        %v1180 = vunpack.c.l.b16 %v493
        %v1181 = vunpack.c.h.b16 %v493
        %v1182 = vunpack.c.l.b16 %v494
        %v1183 = vunpack.c.h.b16 %v494
        %v1184 = vunpack.c.l.b16 %v495
        %v1185 = vunpack.c.h.b16 %v495
        %v1186 = vunpack.c.l.b16 %v496
        %v1187 = vunpack.c.h.b16 %v496
        %v1188 = vunpack.c.l.b16 %v497
        %v1189 = vunpack.c.h.b16 %v497
        %v1190 = vunpack.c.l.b16 %v498
        %v1191 = vunpack.c.h.b16 %v498
        %v1192 = vunpack.c.l.b16 %v499
        %v1193 = vunpack.c.h.b16 %v499
        %v1194 = vunpack.c.l.b16 %v500
        %v1195 = vunpack.c.h.b16 %v500
        %v1196 = vunpack.c.l.b16 %v501
        %v1197 = vunpack.c.h.b16 %v501
        %v1198 = vunpack.c.l.b16 %v502
        %v1199 = vunpack.c.h.b16 %v502
        %v1200 = vunpack.c.l.b16 %v503
        %v1201 = vunpack.c.h.b16 %v503
        %v1202 = vunpack.c.l.b16 %v504
        %v1203 = vunpack.c.h.b16 %v504
        %v1204 = vunpack.c.l.b16 %v505
        %v1205 = vunpack.c.h.b16 %v505
        %v1206 = vunpack.c.l.b16 %v506
        %v1207 = vunpack.c.h.b16 %v506
        %v1208 = vunpack.c.l.b16 %v507
        %v1209 = vunpack.c.h.b16 %v507
        %v1210 = vunpack.c.l.b16 %v508
        %v1211 = vunpack.c.h.b16 %v508
        %v1212 = vunpack.c.l.b16 %v509
        %v1213 = vunpack.c.h.b16 %v509
        %v1214 = vunpack.c.l.b16 %v510
        %v1215 = vunpack.c.h.b16 %v510
        %v1216 = vunpack.c.l.b16 %v511
        %v1217 = vunpack.c.h.b16 %v511
        %v1218 = vunpack.c.l.b16 %v512
        %v1219 = vunpack.c.h.b16 %v512
        %v1220 = vunpack.c.l.b16 %v513
        %v1221 = vunpack.c.h.b16 %v513
        %v1222 = vunpack.c.l.b16 %v514
        %v1223 = vunpack.c.h.b16 %v514
        %v1224 = vunpack.c.l.b16 %v515
        %v1225 = vunpack.c.h.b16 %v515
        %v1226 = vunpack.c.l.b16 %v516
        %v1227 = vunpack.c.h.b16 %v516
        %v1228 = vunpack.c.l.b16 %v517
        %v1229 = vunpack.c.h.b16 %v517
        %v1230 = vunpack.c.l.b16 %v518
        %v1231 = vunpack.c.h.b16 %v518
        %v1232 = vunpack.c.l.b16 %v519
        %v1233 = vunpack.c.h.b16 %v519
        %v1234 = vunpack.c.l.b16 %v520
        %v1235 = vunpack.c.h.b16 %v520
        %v1236 = vunpack.c.l.b16 %v521
        %v1237 = vunpack.c.h.b16 %v521
        %v1238 = vunpack.c.l.b16 %v522
        %v1239 = vunpack.c.h.b16 %v522
        %v1240 = vunpack.c.l.b16 %v523
        %v1241 = vunpack.c.h.b16 %v523
        %v1242 = vunpack.c.l.b16 %v524
        %v1243 = vunpack.c.h.b16 %v524
        %v1244 = vunpack.c.l.b16 %v525
        %v1245 = vunpack.c.h.b16 %v525
        %v1246 = vunpack.c.l.b16 %v526
        %v1247 = vunpack.c.h.b16 %v526
        %v1248 = vunpack.c.l.b16 %v527
        %v1249 = vunpack.c.h.b16 %v527
        %v1250 = vunpack.c.l.b16 %v528
        %v1251 = vunpack.c.h.b16 %v528
        %v1252 = vunpack.c.l.b16 %v529
        %v1253 = vunpack.c.h.b16 %v529
        %v1254 = vunpack.c.l.b16 %v530
        %v1255 = vunpack.c.h.b16 %v530
        %v1256 = vunpack.c.l.b16 %v531
        %v1257 = vunpack.c.h.b16 %v531
        %v1258 = vunpack.c.l.b16 %v532
        %v1259 = vunpack.c.h.b16 %v532
        %v1260 = vunpack.c.l.b16 %v533
        %v1261 = vunpack.c.h.b16 %v533
        %v1262 = vunpack.c.l.b16 %v534
        %v1263 = vunpack.c.h.b16 %v534
        %v1264 = vunpack.c.l.b16 %v535
        %v1265 = vunpack.c.h.b16 %v535
        %v1266 = vunpack.c.l.b16 %v536
        %v1267 = vunpack.c.h.b16 %v536
        %v1268 = vunpack.c.l.b16 %v537
        %v1269 = vunpack.c.h.b16 %v537
        %v1270 = vunpack.c.l.b16 %v538
        %v1271 = vunpack.c.h.b16 %v538
        %v1272 = vunpack.c.l.b16 %v539
        %v1273 = vunpack.c.h.b16 %v539
        %v1274 = vunpack.c.l.b16 %v540
        %v1275 = vunpack.c.h.b16 %v540
        %v1276 = vunpack.c.l.b16 %v541
        %v1277 = vunpack.c.h.b16 %v541
        %v1278 = vunpack.c.l.b16 %v542
        %v1279 = vunpack.c.h.b16 %v542
        %v1280 = vunpack.c.l.b16 %v543
        %v1281 = vunpack.c.h.b16 %v543
        %v1282 = vunpack.c.l.b16 %v544
        %v1283 = vunpack.c.h.b16 %v544
        %v1284 = vunpack.c.l.b16 %v545
        %v1285 = vunpack.c.h.b16 %v545
        %v1286 = vunpack.c.l.b16 %v546
        %v1287 = vunpack.c.h.b16 %v546
        %v1288 = vunpack.c.l.b16 %v547
        %v1289 = vunpack.c.h.b16 %v547
        %v1290 = vunpack.c.l.b16 %v548
        %v1291 = vunpack.c.h.b16 %v548
        %v1292 = vunpack.c.l.b16 %v549
        %v1293 = vunpack.c.h.b16 %v549
        %v1294 = vunpack.c.l.b16 %v550
        %v1295 = vunpack.c.h.b16 %v550
        %v1296 = vunpack.c.l.b16 %v551
        %v1297 = vunpack.c.h.b16 %v551
        %v1298 = vunpack.c.l.b16 %v552
        %v1299 = vunpack.c.h.b16 %v552
        %v1300 = vunpack.c.l.b16 %v553
        %v1301 = vunpack.c.h.b16 %v553
        %v1302 = vunpack.c.l.b16 %v554
        %v1303 = vunpack.c.h.b16 %v554
        %v1304 = vunpack.c.l.b16 %v555
        %v1305 = vunpack.c.h.b16 %v555
        %v1306 = vunpack.c.l.b16 %v556
        %v1307 = vunpack.c.h.b16 %v556
        %v1308 = vunpack.c.l.b16 %v557
        %v1309 = vunpack.c.h.b16 %v557
        %v1310 = vunpack.c.l.b16 %v558
        %v1311 = vunpack.c.h.b16 %v558
        %v1312 = vunpack.c.l.b16 %v559
        %v1313 = vunpack.c.h.b16 %v559
        %v1314 = vunpack.c.l.b16 %v560
        %v1315 = vunpack.c.h.b16 %v560
        %v1316 = vunpack.c.l.b16 %v561
        %v1317 = vunpack.c.h.b16 %v561
        %v1318 = vunpack.c.l.b16 %v562
        %v1319 = vunpack.c.h.b16 %v562
        %v1320 = vunpack.c.l.b16 %v563
        %v1321 = vunpack.c.h.b16 %v563
        %v1322 = vunpack.c.l.b16 %v564
        %v1323 = vunpack.c.h.b16 %v564
        %v1324 = vunpack.c.l.b16 %v565
        %v1325 = vunpack.c.h.b16 %v565
        %v1326 = vunpack.c.l.b16 %v566
        %v1327 = vunpack.c.h.b16 %v566
        %v1328 = vunpack.c.l.b16 %v567
        %v1329 = vunpack.c.h.b16 %v567
        %v1330 = vunpack.c.l.b16 %v568
        %v1331 = vunpack.c.h.b16 %v568
        %v1332 = vunpack.c.l.b16 %v569
        %v1333 = vunpack.c.h.b16 %v569
        %v1334 = vunpack.c.l.b16 %v570
        %v1335 = vunpack.c.h.b16 %v570
        %v1336 = vunpack.c.l.b16 %v571
        %v1337 = vunpack.c.h.b16 %v571
        %v1338 = vunpack.c.l.b16 %v572
        %v1339 = vunpack.c.h.b16 %v572
        %v1340 = vunpack.c.l.b16 %v573
        %v1341 = vunpack.c.h.b16 %v573
        %v1342 = vunpack.c.l.b16 %v574
        %v1343 = vunpack.c.h.b16 %v574
        %v1344 = vunpack.c.l.b16 %v575
        %v1345 = vunpack.c.h.b16 %v575
        %v1346 = vunpack.c.l.b16 %v576
        %v1347 = vunpack.c.h.b16 %v576
        %v1348 = vunpack.c.l.b16 %v577
        %v1349 = vunpack.c.h.b16 %v577
        %v1350 = vunpack.c.l.b16 %v578
        %v1351 = vunpack.c.h.b16 %v578
        %v1352 = vunpack.c.l.b16 %v579
        %v1353 = vunpack.c.h.b16 %v579
        %v1354 = vunpack.c.l.b16 %v580
        %v1355 = vunpack.c.h.b16 %v580
        %v1356 = vunpack.c.l.b16 %v581
        %v1357 = vunpack.c.h.b16 %v581
        %v1358 = vunpack.c.l.b16 %v582
        %v1359 = vunpack.c.h.b16 %v582
        %v1360 = vunpack.c.l.b16 %v583
        %v1361 = vunpack.c.h.b16 %v583
        %v1362 = vunpack.c.l.b16 %v584
        %v1363 = vunpack.c.h.b16 %v584
        %v1364 = vunpack.c.l.b16 %v585
        %v1365 = vunpack.c.h.b16 %v585
        %v1366 = vunpack.c.l.b16 %v586
        %v1367 = vunpack.c.h.b16 %v586
        %v1368 = vunpack.c.l.b16 %v587
        %v1369 = vunpack.c.h.b16 %v587
        %v1370 = vunpack.c.l.b16 %v588
        %v1371 = vunpack.c.h.b16 %v588
        %v1372 = vunpack.c.l.b16 %v589
        %v1373 = vunpack.c.h.b16 %v589
        %v1374 = vunpack.c.l.b16 %v590
        %v1375 = vunpack.c.h.b16 %v590
        %v1376 = vunpack.c.l.b16 %v591
        %v1377 = vunpack.c.h.b16 %v591
        %v1378 = vunpack.c.l.b16 %v592
        %v1379 = vunpack.c.h.b16 %v592
        %v1380 = vunpack.c.l.b16 %v593
        %v1381 = vunpack.c.h.b16 %v593
        %v1382 = vunpack.c.l.b16 %v594
        %v1383 = vunpack.c.h.b16 %v594
        %v1384 = vunpack.c.l.b16 %v595
        %v1385 = vunpack.c.h.b16 %v595
        %v1386 = vunpack.c.l.b16 %v596
        %v1387 = vunpack.c.h.b16 %v596
        %v1388 = vunpack.c.l.b16 %v597
        %v1389 = vunpack.c.h.b16 %v597
        %v1390 = vunpack.c.l.b16 %v598
        %v1391 = vunpack.c.h.b16 %v598
        %v1392 = vunpack.c.l.b16 %v599
        %v1393 = vunpack.c.h.b16 %v599
        %v1394 = vunpack.c.l.b16 %v600
        %v1395 = vunpack.c.h.b16 %v600
        %v1396 = vunpack.c.l.b16 %v601
        %v1397 = vunpack.c.h.b16 %v601
        %v1398 = vunpack.c.l.b16 %v602
        %v1399 = vunpack.c.h.b16 %v602
        %v1400 = vunpack.c.l.b16 %v603
        %v1401 = vunpack.c.h.b16 %v603
        %v1402 = vunpack.c.l.b16 %v604
        %v1403 = vunpack.c.h.b16 %v604
        %v1404 = vunpack.c.l.b16 %v605
        %v1405 = vunpack.c.h.b16 %v605
        %v1406 = vunpack.c.l.b16 %v606
        %v1407 = vunpack.c.h.b16 %v606
        %v1408 = vunpack.c.l.b16 %v607
        %v1409 = vunpack.c.h.b16 %v607
        %v1410 = vunpack.c.l.b16 %v608
        %v1411 = vunpack.c.h.b16 %v608
        %v1412 = vunpack.c.l.b16 %v609
        %v1413 = vunpack.c.h.b16 %v609
        %v1414 = vunpack.c.l.b16 %v610
        %v1415 = vunpack.c.h.b16 %v610
        %v1416 = vunpack.c.l.b16 %v611
        %v1417 = vunpack.c.h.b16 %v611
        %v1418 = vunpack.c.l.b16 %v612
        %v1419 = vunpack.c.h.b16 %v612
        %v1420 = vunpack.c.l.b16 %v613
        %v1421 = vunpack.c.h.b16 %v613
        %v1422 = vunpack.c.l.b16 %v614
        %v1423 = vunpack.c.h.b16 %v614
        %v1424 = vunpack.c.l.b16 %v615
        %v1425 = vunpack.c.h.b16 %v615
        %v1426 = vunpack.c.l.b16 %v616
        %v1427 = vunpack.c.h.b16 %v616
        %v1428 = vunpack.c.l.b16 %v617
        %v1429 = vunpack.c.h.b16 %v617
        %v1430 = vunpack.c.l.b16 %v618
        %v1431 = vunpack.c.h.b16 %v618
        %v1432 = vunpack.c.l.b16 %v619
        %v1433 = vunpack.c.h.b16 %v619
        %v1434 = vunpack.c.l.b16 %v620
        %v1435 = vunpack.c.h.b16 %v620
        %v1436 = vunpack.c.l.b16 %v621
        %v1437 = vunpack.c.h.b16 %v621
        %v1438 = vunpack.c.l.b16 %v622
        %v1439 = vunpack.c.h.b16 %v622
        %v1440 = vunpack.c.l.b16 %v623
        %v1441 = vunpack.c.h.b16 %v623
        %v1442 = vunpack.c.l.b16 %v624
        %v1443 = vunpack.c.h.b16 %v624
        %v1444 = vunpack.c.l.b16 %v625
        %v1445 = vunpack.c.h.b16 %v625
        %v1446 = vunpack.c.l.b16 %v626
        %v1447 = vunpack.c.h.b16 %v626
        %v1448 = vunpack.c.l.b16 %v627
        %v1449 = vunpack.c.h.b16 %v627
        %v1450 = vunpack.c.l.b16 %v628
        %v1451 = vunpack.c.h.b16 %v628
        %v1452 = vunpack.c.l.b16 %v629
        %v1453 = vunpack.c.h.b16 %v629
        %v1454 = vunpack.c.l.b16 %v630
        %v1455 = vunpack.c.h.b16 %v630
        %v1456 = vunpack.c.l.b16 %v631
        %v1457 = vunpack.c.h.b16 %v631
        %v1458 = vunpack.c.l.b16 %v632
        %v1459 = vunpack.c.h.b16 %v632
        %v1460 = vunpack.c.l.b16 %v633
        %v1461 = vunpack.c.h.b16 %v633
        %v1462 = vunpack.c.l.b16 %v634
        %v1463 = vunpack.c.h.b16 %v634
        %v1464 = vunpack.c.l.b16 %v635
        %v1465 = vunpack.c.h.b16 %v635
        %v1466 = vunpack.c.l.b16 %v636
        %v1467 = vunpack.c.h.b16 %v636
        %v1468 = vunpack.c.l.b16 %v637
        %v1469 = vunpack.c.h.b16 %v637
        %v1470 = vunpack.c.l.b16 %v638
        %v1471 = vunpack.c.h.b16 %v638
        %v1472 = vunpack.c.l.b16 %v639
        %v1473 = vunpack.c.h.b16 %v639
        %v1474 = vunpack.c.l.b16 %v640
        %v1475 = vunpack.c.h.b16 %v640
        %v1476 = vunpack.c.l.b16 %v641
        %v1477 = vunpack.c.h.b16 %v641
        %v1478 = vunpack.c.l.b16 %v642
        %v1479 = vunpack.c.h.b16 %v642
        %v1480 = vunpack.c.l.b16 %v643
        %v1481 = vunpack.c.h.b16 %v643
        %v1482 = vunpack.c.l.b16 %v644
        %v1483 = vunpack.c.h.b16 %v644
        %v1484 = vunpack.c.l.b16 %v645
        %v1485 = vunpack.c.h.b16 %v645
        %v1486 = vunpack.c.l.b16 %v646
        %v1487 = vunpack.c.h.b16 %v646
        %v1488 = vunpack.c.l.b16 %v647
        %v1489 = vunpack.c.h.b16 %v647
        %v1490 = vunpack.c.l.b16 %v648
        %v1491 = vunpack.c.h.b16 %v648
        %v1492 = vunpack.c.l.b16 %v649
        %v1493 = vunpack.c.h.b16 %v649
        %v1494 = vunpack.c.l.b16 %v650
        %v1495 = vunpack.c.h.b16 %v650
        %v1496 = vunpack.c.l.b16 %v651
        %v1497 = vunpack.c.h.b16 %v651
        %v1498 = vunpack.c.l.b16 %v652
        %v1499 = vunpack.c.h.b16 %v652
        %v1500 = vunpack.c.l.b16 %v653
        %v1501 = vunpack.c.h.b16 %v653
        %v1502 = vunpack.c.l.b16 %v654
        %v1503 = vunpack.c.h.b16 %v654
        %v1504 = vunpack.c.l.b16 %v655
        %v1505 = vunpack.c.h.b16 %v655
        %v1506 = vunpack.c.l.b16 %v656
        %v1507 = vunpack.c.h.b16 %v656
        %v1508 = vunpack.c.l.b16 %v657
        %v1509 = vunpack.c.h.b16 %v657
        %v1510 = vunpack.c.l.b16 %v658
        %v1511 = vunpack.c.h.b16 %v658
        %v1512 = vunpack.c.l.b16 %v659
        %v1513 = vunpack.c.h.b16 %v659
        %v1514 = vunpack.c.l.b16 %v660
        %v1515 = vunpack.c.h.b16 %v660
        %v1516 = vunpack.c.l.b16 %v661
        %v1517 = vunpack.c.h.b16 %v661
        %v1518 = vunpack.c.l.b16 %v662
        %v1519 = vunpack.c.h.b16 %v662
        %v1520 = vunpack.c.l.b16 %v663
        %v1521 = vunpack.c.h.b16 %v663
        %v1522 = vunpack.c.l.b16 %v664
        %v1523 = vunpack.c.h.b16 %v664
        %v1524 = vunpack.c.l.b16 %v665
        %v1525 = vunpack.c.h.b16 %v665
        %v1526 = vunpack.c.l.b16 %v666
        %v1527 = vunpack.c.h.b16 %v666
        %v1528 = vunpack.c.l.b16 %v667
        %v1529 = vunpack.c.h.b16 %v667
        %v1530 = vunpack.c.l.b16 %v668
        %v1531 = vunpack.c.h.b16 %v668
        %v1532 = vunpack.c.l.b16 %v669
        %v1533 = vunpack.c.h.b16 %v669
        %v1534 = vunpack.c.l.b16 %v670
        %v1535 = vunpack.c.h.b16 %v670
        %v1536 = vunpack.c.l.b16 %v671
        %v1537 = vunpack.c.h.b16 %v671
        %v1538 = vunpack.c.l.b16 %v672
        %v1539 = vunpack.c.h.b16 %v672
        %v1540 = vunpack.c.l.b16 %v673
        %v1541 = vunpack.c.h.b16 %v673
        %v1542 = vunpack.c.l.b16 %v674
        %v1543 = vunpack.c.h.b16 %v674
        %v1544 = vunpack.c.l.b16 %v675
        %v1545 = vunpack.c.h.b16 %v675
        %v1546 = vunpack.c.l.b16 %v676
        %v1547 = vunpack.c.h.b16 %v676
        %v1548 = vunpack.c.l.b16 %v677
        %v1549 = vunpack.c.h.b16 %v677
        %v1550 = vunpack.c.l.b16 %v678
        %v1551 = vunpack.c.h.b16 %v678
        %v1552 = vunpack.c.l.b16 %v679
        %v1553 = vunpack.c.h.b16 %v679
        %v1554 = vunpack.c.l.b16 %v680
        %v1555 = vunpack.c.h.b16 %v680
        %v1556 = vunpack.c.l.b16 %v681
        %v1557 = vunpack.c.h.b16 %v681
        %v1558 = vunpack.c.l.b16 %v682
        %v1559 = vunpack.c.h.b16 %v682
        %v1560 = vunpack.c.l.b16 %v683
        %v1561 = vunpack.c.h.b16 %v683
        %v1562 = vunpack.c.l.b16 %v684
        %v1563 = vunpack.c.h.b16 %v684
        %v1564 = vunpack.c.l.b16 %v685
        %v1565 = vunpack.c.h.b16 %v685
        %v1566 = vunpack.c.l.b16 %v686
        %v1567 = vunpack.c.h.b16 %v686
        %v1568 = vunpack.c.l.b16 %v687
        %v1569 = vunpack.c.h.b16 %v687
        %v1570 = vunpack.c.l.b16 %v688
        %v1571 = vunpack.c.h.b16 %v688
        %v1572 = vunpack.c.l.b16 %v689
        %v1573 = vunpack.c.h.b16 %v689
        %v1574 = vunpack.c.l.b16 %v690
        %v1575 = vunpack.c.h.b16 %v690
        %v1576 = vunpack.c.l.b16 %v691
        %v1577 = vunpack.c.h.b16 %v691
        %v1578 = vunpack.c.l.b16 %v692
        %v1579 = vunpack.c.h.b16 %v692
        %v1580 = vunpack.c.l.b16 %v693
        %v1581 = vunpack.c.h.b16 %v693
        %v1582 = vunpack.c.l.b16 %v694
        %v1583 = vunpack.c.h.b16 %v694
        %v1584 = vunpack.c.l.b16 %v695
        %v1585 = vunpack.c.h.b16 %v695
        %v1586 = vunpack.c.l.b16 %v696
        %v1587 = vunpack.c.h.b16 %v696
        %v1588 = vunpack.c.l.b16 %v697
        %v1589 = vunpack.c.h.b16 %v697
        %v1590 = vunpack.c.l.b16 %v698
        %v1591 = vunpack.c.h.b16 %v698
        %v1592 = vunpack.c.l.b16 %v699
        %v1593 = vunpack.c.h.b16 %v699
        %v1594 = vunpack.c.l.b16 %v700
        %v1595 = vunpack.c.h.b16 %v700
        %v1596 = vunpack.c.l.b16 %v701
        %v1597 = vunpack.c.h.b16 %v701
        %v1598 = vunpack.c.l.b16 %v702
        %v1599 = vunpack.c.h.b16 %v702
        %v1600 = vunpack.c.l.b16 %v703
        %v1601 = vunpack.c.h.b16 %v703
        %v1602 = vunpack.c.l.b16 %v704
        %v1603 = vunpack.c.h.b16 %v704
        %v1604 = vunpack.c.l.b16 %v705
        %v1605 = vunpack.c.h.b16 %v705
        %v1606 = vunpack.c.l.b16 %v706
        %v1607 = vunpack.c.h.b16 %v706
        %v1608 = vunpack.c.l.b16 %v707
        %v1609 = vunpack.c.h.b16 %v707
        %v1610 = vunpack.c.l.b16 %v708
        %v1611 = vunpack.c.h.b16 %v708
        %v1612 = vunpack.c.l.b16 %v709
        %v1613 = vunpack.c.h.b16 %v709
        %v1614 = vunpack.c.l.b16 %v710
        %v1615 = vunpack.c.h.b16 %v710
        %v1616 = vunpack.c.l.b16 %v711
        %v1617 = vunpack.c.h.b16 %v711
        %v1618 = vunpack.c.l.b16 %v712
        %v1619 = vunpack.c.h.b16 %v712
        %v1620 = vunpack.c.l.b16 %v713
        %v1621 = vunpack.c.h.b16 %v713
        %v1622 = vunpack.c.l.b16 %v714
        %v1623 = vunpack.c.h.b16 %v714
        %v1624 = vunpack.c.l.b16 %v715
        %v1625 = vunpack.c.h.b16 %v715
        %v1626 = vunpack.c.l.b16 %v716
        %v1627 = vunpack.c.h.b16 %v716
        %v1628 = vunpack.c.l.b16 %v717
        %v1629 = vunpack.c.h.b16 %v717
        %v1630 = vunpack.c.l.b16 %v718
        %v1631 = vunpack.c.h.b16 %v718
        %v1632 = vunpack.c.l.b16 %v719
        %v1633 = vunpack.c.h.b16 %v719
        %v1634 = vunpack.c.l.b16 %v720
        %v1635 = vunpack.c.h.b16 %v720
        %v1636 = vunpack.c.l.b16 %v721
        %v1637 = vunpack.c.h.b16 %v721
        %v1638 = vunpack.c.l.b16 %v722
        %v1639 = vunpack.c.h.b16 %v722
        %v1640 = vunpack.c.l.b16 %v723
        %v1641 = vunpack.c.h.b16 %v723
        %v1642 = vunpack.c.l.b16 %v724
        %v1643 = vunpack.c.h.b16 %v724
        %v1644 = vunpack.c.l.b16 %v725
        %v1645 = vunpack.c.h.b16 %v725
        %v1646 = vunpack.c.l.b16 %v726
        %v1647 = vunpack.c.h.b16 %v726
        %v1648 = vunpack.c.l.b16 %v727
        %v1649 = vunpack.c.h.b16 %v727
        %v1650 = vpack.c.b16 %v1054, %v1050
        %v1651 = vpack.c.b16 %v1055, %v1051
        %v1652 = vpack.c.b16 %v1056, %v1052
        %v1653 = vpack.c.b16 %v1057, %v1053
        %v1654 = vpack.c.b16 %v1062, %v1058
        %v1655 = vpack.c.b16 %v1063, %v1059
        %v1656 = vpack.c.b16 %v1064, %v1060
        %v1657 = vpack.c.b16 %v1065, %v1061
        %v1658 = vpack.c.b16 %v1070, %v1066
        %v1659 = vpack.c.b16 %v1071, %v1067
        %v1660 = vpack.c.b16 %v1072, %v1068
        %v1661 = vpack.c.b16 %v1073, %v1069
        %v1662 = vpack.c.b16 %v1078, %v1074
        %v1663 = vpack.c.b16 %v1079, %v1075
        %v1664 = vpack.c.b16 %v1080, %v1076
        %v1665 = vpack.c.b16 %v1081, %v1077
        %v1666 = vpack.c.b16 %v1086, %v1082
        %v1667 = vpack.c.b16 %v1087, %v1083
        %v1668 = vpack.c.b16 %v1088, %v1084
        %v1669 = vpack.c.b16 %v1089, %v1085
        %v1670 = vpack.c.b16 %v1094, %v1090
        %v1671 = vpack.c.b16 %v1095, %v1091
        %v1672 = vpack.c.b16 %v1096, %v1092
        %v1673 = vpack.c.b16 %v1097, %v1093
        %v1674 = vpack.c.b16 %v1102, %v1098
        %v1675 = vpack.c.b16 %v1103, %v1099
        %v1676 = vpack.c.b16 %v1104, %v1100
        %v1677 = vpack.c.b16 %v1105, %v1101
        %v1678 = vpack.c.b16 %v1110, %v1106
        %v1679 = vpack.c.b16 %v1111, %v1107
        %v1680 = vpack.c.b16 %v1112, %v1108
        %v1681 = vpack.c.b16 %v1113, %v1109
        %v1682 = vpack.c.b16 %v1118, %v1114
        %v1683 = vpack.c.b16 %v1119, %v1115
        %v1684 = vpack.c.b16 %v1120, %v1116
        %v1685 = vpack.c.b16 %v1121, %v1117
        %v1686 = vpack.c.b16 %v1126, %v1122
        %v1687 = vpack.c.b16 %v1127, %v1123
        %v1688 = vpack.c.b16 %v1128, %v1124
        %v1689 = vpack.c.b16 %v1129, %v1125
        %v1690 = vpack.c.b16 %v1134, %v1130
        %v1691 = vpack.c.b16 %v1135, %v1131
        %v1692 = vpack.c.b16 %v1136, %v1132
        %v1693 = vpack.c.b16 %v1137, %v1133
        %v1694 = vpack.c.b16 %v1142, %v1138
        %v1695 = vpack.c.b16 %v1143, %v1139
        %v1696 = vpack.c.b16 %v1144, %v1140
        %v1697 = vpack.c.b16 %v1145, %v1141
        %v1698 = vpack.c.b16 %v1150, %v1146
        %v1699 = vpack.c.b16 %v1151, %v1147
        %v1700 = vpack.c.b16 %v1152, %v1148
        %v1701 = vpack.c.b16 %v1153, %v1149
        %v1702 = vpack.c.b16 %v1158, %v1154
        %v1703 = vpack.c.b16 %v1159, %v1155
        %v1704 = vpack.c.b16 %v1160, %v1156
        %v1705 = vpack.c.b16 %v1161, %v1157
        %v1706 = vpack.c.b16 %v1166, %v1162
        %v1707 = vpack.c.b16 %v1167, %v1163
        %v1708 = vpack.c.b16 %v1168, %v1164
        %v1709 = vpack.c.b16 %v1169, %v1165
        %v1710 = vpack.c.b16 %v1174, %v1170
        %v1711 = vpack.c.b16 %v1175, %v1171
        %v1712 = vpack.c.b16 %v1176, %v1172
        %v1713 = vpack.c.b16 %v1177, %v1173
        %v1714 = vpack.c.b16 %v1182, %v1178
        %v1715 = vpack.c.b16 %v1183, %v1179
        %v1716 = vpack.c.b16 %v1184, %v1180
        %v1717 = vpack.c.b16 %v1185, %v1181
        %v1718 = vpack.c.b16 %v1190, %v1186
        %v1719 = vpack.c.b16 %v1191, %v1187
        %v1720 = vpack.c.b16 %v1192, %v1188
        %v1721 = vpack.c.b16 %v1193, %v1189
        %v1722 = vpack.c.b16 %v1198, %v1194
        %v1723 = vpack.c.b16 %v1199, %v1195
        %v1724 = vpack.c.b16 %v1200, %v1196
        %v1725 = vpack.c.b16 %v1201, %v1197
        %v1726 = vpack.c.b16 %v1206, %v1202
        %v1727 = vpack.c.b16 %v1207, %v1203
        %v1728 = vpack.c.b16 %v1208, %v1204
        %v1729 = vpack.c.b16 %v1209, %v1205
        %v1730 = vpack.c.b16 %v1214, %v1210
        %v1731 = vpack.c.b16 %v1215, %v1211
        %v1732 = vpack.c.b16 %v1216, %v1212
        %v1733 = vpack.c.b16 %v1217, %v1213
        %v1734 = vpack.c.b16 %v1222, %v1218
        %v1735 = vpack.c.b16 %v1223, %v1219
        %v1736 = vpack.c.b16 %v1224, %v1220
        %v1737 = vpack.c.b16 %v1225, %v1221
        %v1738 = vpack.c.b16 %v1230, %v1226
        %v1739 = vpack.c.b16 %v1231, %v1227
        %v1740 = vpack.c.b16 %v1232, %v1228
        %v1741 = vpack.c.b16 %v1233, %v1229
        %v1742 = vpack.c.b16 %v1238, %v1234
        %v1743 = vpack.c.b16 %v1239, %v1235
        %v1744 = vpack.c.b16 %v1240, %v1236
        %v1745 = vpack.c.b16 %v1241, %v1237
        %v1746 = vpack.c.b16 %v1246, %v1242
        %v1747 = vpack.c.b16 %v1247, %v1243
        %v1748 = vpack.c.b16 %v1248, %v1244
        %v1749 = vpack.c.b16 %v1249, %v1245
        %v1750 = vpack.c.b16 %v1254, %v1250
        %v1751 = vpack.c.b16 %v1255, %v1251
        %v1752 = vpack.c.b16 %v1256, %v1252
        %v1753 = vpack.c.b16 %v1257, %v1253
        %v1754 = vpack.c.b16 %v1262, %v1258
        %v1755 = vpack.c.b16 %v1263, %v1259
        %v1756 = vpack.c.b16 %v1264, %v1260
        %v1757 = vpack.c.b16 %v1265, %v1261
        %v1758 = vpack.c.b16 %v1270, %v1266
        %v1759 = vpack.c.b16 %v1271, %v1267
        %v1760 = vpack.c.b16 %v1272, %v1268
        %v1761 = vpack.c.b16 %v1273, %v1269
        %v1762 = vpack.c.b16 %v1278, %v1274
        %v1763 = vpack.c.b16 %v1279, %v1275
        %v1764 = vpack.c.b16 %v1280, %v1276
        %v1765 = vpack.c.b16 %v1281, %v1277
        %v1766 = vpack.c.b16 %v1286, %v1282
        %v1767 = vpack.c.b16 %v1287, %v1283
        %v1768 = vpack.c.b16 %v1288, %v1284
        %v1769 = vpack.c.b16 %v1289, %v1285
        %v1770 = vpack.c.b16 %v1294, %v1290
        %v1771 = vpack.c.b16 %v1295, %v1291
        %v1772 = vpack.c.b16 %v1296, %v1292
        %v1773 = vpack.c.b16 %v1297, %v1293
        %v1774 = vpack.c.b16 %v1302, %v1298
        %v1775 = vpack.c.b16 %v1303, %v1299
        %v1776 = vpack.c.b16 %v1304, %v1300
        %v1777 = vpack.c.b16 %v1305, %v1301
        %v1778 = vpack.c.b16 %v1310, %v1306
        %v1779 = vpack.c.b16 %v1311, %v1307
        %v1780 = vpack.c.b16 %v1312, %v1308
        %v1781 = vpack.c.b16 %v1313, %v1309
        %v1782 = vpack.c.b16 %v1318, %v1314
        %v1783 = vpack.c.b16 %v1319, %v1315
        %v1784 = vpack.c.b16 %v1320, %v1316
        %v1785 = vpack.c.b16 %v1321, %v1317
        %v1786 = vpack.c.b16 %v1326, %v1322
        %v1787 = vpack.c.b16 %v1327, %v1323
        %v1788 = vpack.c.b16 %v1328, %v1324
        %v1789 = vpack.c.b16 %v1329, %v1325
        %v1790 = vpack.c.b16 %v1334, %v1330
        %v1791 = vpack.c.b16 %v1335, %v1331
        %v1792 = vpack.c.b16 %v1336, %v1332
        %v1793 = vpack.c.b16 %v1337, %v1333
        %v1794 = vpack.c.b16 %v1342, %v1338
        %v1795 = vpack.c.b16 %v1343, %v1339
        %v1796 = vpack.c.b16 %v1344, %v1340
        %v1797 = vpack.c.b16 %v1345, %v1341
        %v1798 = vpack.c.b16 %v1350, %v1346
        %v1799 = vpack.c.b16 %v1351, %v1347
        %v1800 = vpack.c.b16 %v1352, %v1348
        %v1801 = vpack.c.b16 %v1353, %v1349
        %v1802 = vpack.c.b16 %v1358, %v1354
        %v1803 = vpack.c.b16 %v1359, %v1355
        %v1804 = vpack.c.b16 %v1360, %v1356
        %v1805 = vpack.c.b16 %v1361, %v1357
        %v1806 = vpack.c.b16 %v1366, %v1362
        %v1807 = vpack.c.b16 %v1367, %v1363
        %v1808 = vpack.c.b16 %v1368, %v1364
        %v1809 = vpack.c.b16 %v1369, %v1365
        %v1810 = vpack.c.b16 %v1374, %v1370
        %v1811 = vpack.c.b16 %v1375, %v1371
        %v1812 = vpack.c.b16 %v1376, %v1372
        %v1813 = vpack.c.b16 %v1377, %v1373
        %v1814 = vpack.c.b16 %v1382, %v1378
        %v1815 = vpack.c.b16 %v1383, %v1379
        %v1816 = vpack.c.b16 %v1384, %v1380
        %v1817 = vpack.c.b16 %v1385, %v1381
        %v1818 = vpack.c.b16 %v1390, %v1386
        %v1819 = vpack.c.b16 %v1391, %v1387
        %v1820 = vpack.c.b16 %v1392, %v1388
        %v1821 = vpack.c.b16 %v1393, %v1389
        %v1822 = vpack.c.b16 %v1398, %v1394
        %v1823 = vpack.c.b16 %v1399, %v1395
        %v1824 = vpack.c.b16 %v1400, %v1396
        %v1825 = vpack.c.b16 %v1401, %v1397
        %v1826 = vpack.c.b16 %v1406, %v1402
        %v1827 = vpack.c.b16 %v1407, %v1403
        %v1828 = vpack.c.b16 %v1408, %v1404
        %v1829 = vpack.c.b16 %v1409, %v1405
        %v1830 = vpack.c.b16 %v1414, %v1410
        %v1831 = vpack.c.b16 %v1415, %v1411
        %v1832 = vpack.c.b16 %v1416, %v1412
        %v1833 = vpack.c.b16 %v1417, %v1413
        %v1834 = vpack.c.b16 %v1422, %v1418
        %v1835 = vpack.c.b16 %v1423, %v1419
        %v1836 = vpack.c.b16 %v1424, %v1420
        %v1837 = vpack.c.b16 %v1425, %v1421
        %v1838 = vpack.c.b16 %v1430, %v1426
        %v1839 = vpack.c.b16 %v1431, %v1427
        %v1840 = vpack.c.b16 %v1432, %v1428
        %v1841 = vpack.c.b16 %v1433, %v1429
        %v1842 = vpack.c.b16 %v1438, %v1434
        %v1843 = vpack.c.b16 %v1439, %v1435
        %v1844 = vpack.c.b16 %v1440, %v1436
        %v1845 = vpack.c.b16 %v1441, %v1437
        %v1846 = vpack.c.b16 %v1446, %v1442
        %v1847 = vpack.c.b16 %v1447, %v1443
        %v1848 = vpack.c.b16 %v1448, %v1444
        %v1849 = vpack.c.b16 %v1449, %v1445
        %v1850 = vpack.c.b16 %v1454, %v1450
        %v1851 = vpack.c.b16 %v1455, %v1451
        %v1852 = vpack.c.b16 %v1456, %v1452
        %v1853 = vpack.c.b16 %v1457, %v1453
        %v1854 = vpack.c.b16 %v1462, %v1458
        %v1855 = vpack.c.b16 %v1463, %v1459
        %v1856 = vpack.c.b16 %v1464, %v1460
        %v1857 = vpack.c.b16 %v1465, %v1461
        %v1858 = vpack.c.b16 %v1470, %v1466
        %v1859 = vpack.c.b16 %v1471, %v1467
        %v1860 = vpack.c.b16 %v1472, %v1468
        %v1861 = vpack.c.b16 %v1473, %v1469
        %v1862 = vpack.c.b16 %v1478, %v1474
        %v1863 = vpack.c.b16 %v1479, %v1475
        %v1864 = vpack.c.b16 %v1480, %v1476
        %v1865 = vpack.c.b16 %v1481, %v1477
        %v1866 = vpack.c.b16 %v1486, %v1482
        %v1867 = vpack.c.b16 %v1487, %v1483
        %v1868 = vpack.c.b16 %v1488, %v1484
        %v1869 = vpack.c.b16 %v1489, %v1485
        %v1870 = vpack.c.b16 %v1494, %v1490
        %v1871 = vpack.c.b16 %v1495, %v1491
        %v1872 = vpack.c.b16 %v1496, %v1492
        %v1873 = vpack.c.b16 %v1497, %v1493
        %v1874 = vpack.c.b16 %v1502, %v1498
        %v1875 = vpack.c.b16 %v1503, %v1499
        %v1876 = vpack.c.b16 %v1504, %v1500
        %v1877 = vpack.c.b16 %v1505, %v1501
        %v1878 = vpack.c.b16 %v1510, %v1506
        %v1879 = vpack.c.b16 %v1511, %v1507
        %v1880 = vpack.c.b16 %v1512, %v1508
        %v1881 = vpack.c.b16 %v1513, %v1509
        %v1882 = vpack.c.b16 %v1518, %v1514
        %v1883 = vpack.c.b16 %v1519, %v1515
        %v1884 = vpack.c.b16 %v1520, %v1516
        %v1885 = vpack.c.b16 %v1521, %v1517
        %v1886 = vpack.c.b16 %v1526, %v1522
        %v1887 = vpack.c.b16 %v1527, %v1523
        %v1888 = vpack.c.b16 %v1528, %v1524
        %v1889 = vpack.c.b16 %v1529, %v1525
        %v1890 = vpack.c.b16 %v1534, %v1530
        %v1891 = vpack.c.b16 %v1535, %v1531
        %v1892 = vpack.c.b16 %v1536, %v1532
        %v1893 = vpack.c.b16 %v1537, %v1533
        %v1894 = vpack.c.b16 %v1542, %v1538
        %v1895 = vpack.c.b16 %v1543, %v1539
        %v1896 = vpack.c.b16 %v1544, %v1540
        %v1897 = vpack.c.b16 %v1545, %v1541
        %v1898 = vpack.c.b16 %v1550, %v1546
        %v1899 = vpack.c.b16 %v1551, %v1547
        %v1900 = vpack.c.b16 %v1552, %v1548
        %v1901 = vpack.c.b16 %v1553, %v1549
        %v1902 = vpack.c.b16 %v1558, %v1554
        %v1903 = vpack.c.b16 %v1559, %v1555
        %v1904 = vpack.c.b16 %v1560, %v1556
        %v1905 = vpack.c.b16 %v1561, %v1557
        %v1906 = vpack.c.b16 %v1566, %v1562
        %v1907 = vpack.c.b16 %v1567, %v1563
        %v1908 = vpack.c.b16 %v1568, %v1564
        %v1909 = vpack.c.b16 %v1569, %v1565
        %v1910 = vpack.c.b16 %v1574, %v1570
        %v1911 = vpack.c.b16 %v1575, %v1571
        %v1912 = vpack.c.b16 %v1576, %v1572
        %v1913 = vpack.c.b16 %v1577, %v1573
        %v1914 = vpack.c.b16 %v1582, %v1578
        %v1915 = vpack.c.b16 %v1583, %v1579
        %v1916 = vpack.c.b16 %v1584, %v1580
        %v1917 = vpack.c.b16 %v1585, %v1581
        %v1918 = vpack.c.b16 %v1590, %v1586
        %v1919 = vpack.c.b16 %v1591, %v1587
        %v1920 = vpack.c.b16 %v1592, %v1588
        %v1921 = vpack.c.b16 %v1593, %v1589
        %v1922 = vpack.c.b16 %v1598, %v1594
        %v1923 = vpack.c.b16 %v1599, %v1595
        %v1924 = vpack.c.b16 %v1600, %v1596
        %v1925 = vpack.c.b16 %v1601, %v1597
        %v1926 = vpack.c.b16 %v1606, %v1602
        %v1927 = vpack.c.b16 %v1607, %v1603
        %v1928 = vpack.c.b16 %v1608, %v1604
        %v1929 = vpack.c.b16 %v1609, %v1605
        %v1930 = vpack.c.b16 %v1614, %v1610
        %v1931 = vpack.c.b16 %v1615, %v1611
        %v1932 = vpack.c.b16 %v1616, %v1612
        %v1933 = vpack.c.b16 %v1617, %v1613
        %v1934 = vpack.c.b16 %v1622, %v1618
        %v1935 = vpack.c.b16 %v1623, %v1619
        %v1936 = vpack.c.b16 %v1624, %v1620
        %v1937 = vpack.c.b16 %v1625, %v1621
        %v1938 = vpack.c.b16 %v1630, %v1626
        %v1939 = vpack.c.b16 %v1631, %v1627
        %v1940 = vpack.c.b16 %v1632, %v1628
        %v1941 = vpack.c.b16 %v1633, %v1629
        %v1942 = vpack.c.b16 %v1638, %v1634
        %v1943 = vpack.c.b16 %v1639, %v1635
        %v1944 = vpack.c.b16 %v1640, %v1636
        %v1945 = vpack.c.b16 %v1641, %v1637
        %v1946 = vpack.c.b16 %v1646, %v1642
        %v1947 = vpack.c.b16 %v1647, %v1643
        %v1948 = vpack.c.b16 %v1648, %v1644
        %v1949 = vpack.c.b16 %v1649, %v1645
        %vm2250 = vcmask 392192
        %v2252 = vsel %vm2250, %v417, 0
        %v2255 = vsel %vm2250, %v427, 0
        %2257 = vmatprep.subr.bf16.mxu0 %v1679
        %2258 = vmatpush1.bf16.msra.mxu0 %v1678
        %2259 = vmatprep.subr.bf16.mxu0 %v1675
        %2260 = vmatpush1.bf16.msra.mxu0 %v1674
        %2261 = vmatprep.subr.bf16.mxu0 %v1671
        %2262 = vmatpush1.bf16.msra.mxu0 %v1670
        %2263 = vmatprep.subr.bf16.mxu0 %v1667
        %2264 = vmatpush1.bf16.msra.mxu0 %v1666
        %2265 = vmatprep.subr.bf16.mxu0 %v1663
        %2266 = vmatpush1.bf16.msra.mxu0 %v1662
        %2267 = vmatprep.subr.bf16.mxu0 %v1659
        %2268 = vmatpush1.bf16.msra.mxu0 %v1658
        %2269 = vmatprep.subr.bf16.mxu0 %v1655
        %2270 = vmatpush1.bf16.msra.mxu0 %v1654
        %2271 = vmatprep.subr.bf16.mxu0 %v1651
        %2272 = vmatpush1.bf16.msra.mxu0 %v1650
        %2273 = vmatprep.subr.bf16.mxu0 %v1711
        %2274 = vmatpush2.bf16.msra.mxu0 %v1710
        %2275 = vmatprep.subr.bf16.mxu0 %v1707
        %2276 = vmatpush2.bf16.msra.mxu0 %v1706
        %2277 = vmatprep.subr.bf16.mxu0 %v1703
        %2278 = vmatpush2.bf16.msra.mxu0 %v1702
        %2279 = vmatprep.subr.bf16.mxu0 %v1699
        %2280 = vmatpush2.bf16.msra.mxu0 %v1698
        %2281 = vmatprep.subr.bf16.mxu0 %v1695
        %2282 = vmatpush2.bf16.msra.mxu0 %v1694
        %2283 = vmatprep.subr.bf16.mxu0 %v1691
        %2284 = vmatpush2.bf16.msra.mxu0 %v1690
        %2285 = vmatprep.subr.bf16.mxu0 %v1687
        %2286 = vmatpush2.bf16.msra.mxu0 %v1686
        %2287 = vmatprep.subr.bf16.mxu0 %v1683
        %2288 = vmatpush2.bf16.msra.mxu0 %v1682
        %2289 = vmatprep.mubr.bf16.mxu0 %v409
        %2290 = vmatmul.mubr.bf16.gmra.mxu0 %v408
        %v2291 = vpop.f32.mrf.mxu0
        %v2292 = vadd.f32 %v733, %v2291
        %v2293 = vpop.f32.mrf.mxu0
        %v2294 = vadd.f32 %v737, %v2293
        %v2295 = vpop.f32.mrf.mxu0
        %v2296 = vadd.f32 %v733, %v2295
        %v2297 = vpop.f32.mrf.mxu0
        %v2298 = vadd.f32 %v737, %v2297
        %2299 = vmatprep.mubr.bf16.mxu0 %v419
        %2300 = vmatmul.mubr.bf16.gmra.mxu0 %v418
        %v2301 = vpop.f32.mrf.mxu0
        %v2302 = vadd.f32 %v733, %v2301
        %v2303 = vpop.f32.mrf.mxu0
        %v2304 = vadd.f32 %v737, %v2303
        %v2305 = vpop.f32.mrf.mxu0
        %v2306 = vadd.f32 %v733, %v2305
        %v2307 = vpop.f32.mrf.mxu0
        %v2308 = vadd.f32 %v737, %v2307
        %2309 = vdwg.mxu0
        %2310 = vmatprep.subr.bf16.mxu0 %v1743
        %2311 = vmatpush1.bf16.msra.mxu0 %v1742
        %2312 = vmatprep.subr.bf16.mxu0 %v1739
        %2313 = vmatpush1.bf16.msra.mxu0 %v1738
        %2314 = vmatprep.subr.bf16.mxu0 %v1735
        %2315 = vmatpush1.bf16.msra.mxu0 %v1734
        %2316 = vmatprep.subr.bf16.mxu0 %v1731
        %2317 = vmatpush1.bf16.msra.mxu0 %v1730
        %2318 = vmatprep.subr.bf16.mxu0 %v1727
        %2319 = vmatpush1.bf16.msra.mxu0 %v1726
        %2320 = vmatprep.subr.bf16.mxu0 %v1723
        %2321 = vmatpush1.bf16.msra.mxu0 %v1722
        %2322 = vmatprep.subr.bf16.mxu0 %v1719
        %2323 = vmatpush1.bf16.msra.mxu0 %v1718
        %2324 = vmatprep.subr.bf16.mxu0 %v1715
        %2325 = vmatpush1.bf16.msra.mxu0 %v1714
        %2326 = vmatprep.subr.bf16.mxu0 %v1775
        %2327 = vmatpush2.bf16.msra.mxu0 %v1774
        %2328 = vmatprep.subr.bf16.mxu0 %v1771
        %2329 = vmatpush2.bf16.msra.mxu0 %v1770
        %2330 = vmatprep.subr.bf16.mxu0 %v1767
        %2331 = vmatpush2.bf16.msra.mxu0 %v1766
        %2332 = vmatprep.subr.bf16.mxu0 %v1763
        %2333 = vmatpush2.bf16.msra.mxu0 %v1762
        %2334 = vmatprep.subr.bf16.mxu0 %v1759
        %2335 = vmatpush2.bf16.msra.mxu0 %v1758
        %2336 = vmatprep.subr.bf16.mxu0 %v1755
        %2337 = vmatpush2.bf16.msra.mxu0 %v1754
        %2338 = vmatprep.subr.bf16.mxu0 %v1751
        %2339 = vmatpush2.bf16.msra.mxu0 %v1750
        %2340 = vmatprep.subr.bf16.mxu0 %v1747
        %2341 = vmatpush2.bf16.msra.mxu0 %v1746
        %2342 = vmatprep.mubr.bf16.mxu0 %v411
        %2343 = vmatmul.mubr.bf16.gmra.mxu0 %v410
        %v2344 = vpop.f32.mrf.mxu0
        %v2345 = vadd.f32 %v2292, %v2344
        %v2346 = vpop.f32.mrf.mxu0
        %v2347 = vadd.f32 %v2294, %v2346
        %v2348 = vpop.f32.mrf.mxu0
        %v2349 = vadd.f32 %v2296, %v2348
        %v2350 = vpop.f32.mrf.mxu0
        %v2351 = vadd.f32 %v2298, %v2350
        %2352 = vmatprep.mubr.bf16.mxu0 %v421
        %2353 = vmatmul.mubr.bf16.gmra.mxu0 %v420
        %v2354 = vpop.f32.mrf.mxu0
        %v2355 = vadd.f32 %v2302, %v2354
        %v2356 = vpop.f32.mrf.mxu0
        %v2357 = vadd.f32 %v2304, %v2356
        %v2358 = vpop.f32.mrf.mxu0
        %v2359 = vadd.f32 %v2306, %v2358
        %v2360 = vpop.f32.mrf.mxu0
        %v2361 = vadd.f32 %v2308, %v2360
        %2362 = vdwg.mxu0
        %2363 = vmatprep.subr.bf16.mxu0 %v1807
        %2364 = vmatpush1.bf16.msra.mxu0 %v1806
        %2365 = vmatprep.subr.bf16.mxu0 %v1803
        %2366 = vmatpush1.bf16.msra.mxu0 %v1802
        %2367 = vmatprep.subr.bf16.mxu0 %v1799
        %2368 = vmatpush1.bf16.msra.mxu0 %v1798
        %2369 = vmatprep.subr.bf16.mxu0 %v1795
        %2370 = vmatpush1.bf16.msra.mxu0 %v1794
        %2371 = vmatprep.subr.bf16.mxu0 %v1791
        %2372 = vmatpush1.bf16.msra.mxu0 %v1790
        %2373 = vmatprep.subr.bf16.mxu0 %v1787
        %2374 = vmatpush1.bf16.msra.mxu0 %v1786
        %2375 = vmatprep.subr.bf16.mxu0 %v1783
        %2376 = vmatpush1.bf16.msra.mxu0 %v1782
        %2377 = vmatprep.subr.bf16.mxu0 %v1779
        %2378 = vmatpush1.bf16.msra.mxu0 %v1778
        %2379 = vmatprep.subr.bf16.mxu0 %v1839
        %2380 = vmatpush2.bf16.msra.mxu0 %v1838
        %2381 = vmatprep.subr.bf16.mxu0 %v1835
        %2382 = vmatpush2.bf16.msra.mxu0 %v1834
        %2383 = vmatprep.subr.bf16.mxu0 %v1831
        %2384 = vmatpush2.bf16.msra.mxu0 %v1830
        %2385 = vmatprep.subr.bf16.mxu0 %v1827
        %2386 = vmatpush2.bf16.msra.mxu0 %v1826
        %2387 = vmatprep.subr.bf16.mxu0 %v1823
        %2388 = vmatpush2.bf16.msra.mxu0 %v1822
        %2389 = vmatprep.subr.bf16.mxu0 %v1819
        %2390 = vmatpush2.bf16.msra.mxu0 %v1818
        %2391 = vmatprep.subr.bf16.mxu0 %v1815
        %2392 = vmatpush2.bf16.msra.mxu0 %v1814
        %2393 = vmatprep.subr.bf16.mxu0 %v1811
        %2394 = vmatpush2.bf16.msra.mxu0 %v1810
        %2395 = vmatprep.mubr.bf16.mxu0 %v413
        %2396 = vmatmul.mubr.bf16.gmra.mxu0 %v412
        %v2397 = vpop.f32.mrf.mxu0
        %v2398 = vadd.f32 %v2345, %v2397
        %v2399 = vpop.f32.mrf.mxu0
        %v2400 = vadd.f32 %v2347, %v2399
        %v2401 = vpop.f32.mrf.mxu0
        %v2402 = vadd.f32 %v2349, %v2401
        %v2403 = vpop.f32.mrf.mxu0
        %v2404 = vadd.f32 %v2351, %v2403
        %2405 = vmatprep.mubr.bf16.mxu0 %v423
        %2406 = vmatmul.mubr.bf16.gmra.mxu0 %v422
        %v2407 = vpop.f32.mrf.mxu0
        %v2408 = vadd.f32 %v2355, %v2407
        %v2409 = vpop.f32.mrf.mxu0
        %v2410 = vadd.f32 %v2357, %v2409
        %v2411 = vpop.f32.mrf.mxu0
        %v2412 = vadd.f32 %v2359, %v2411
        %v2413 = vpop.f32.mrf.mxu0
        %v2414 = vadd.f32 %v2361, %v2413
        %2415 = vdwg.mxu0
        %2416 = vmatprep.subr.bf16.mxu0 %v1871
        %2417 = vmatpush1.bf16.msra.mxu0 %v1870
        %2418 = vmatprep.subr.bf16.mxu0 %v1867
        %2419 = vmatpush1.bf16.msra.mxu0 %v1866
        %2420 = vmatprep.subr.bf16.mxu0 %v1863
        %2421 = vmatpush1.bf16.msra.mxu0 %v1862
        %2422 = vmatprep.subr.bf16.mxu0 %v1859
        %2423 = vmatpush1.bf16.msra.mxu0 %v1858
        %2424 = vmatprep.subr.bf16.mxu0 %v1855
        %2425 = vmatpush1.bf16.msra.mxu0 %v1854
        %2426 = vmatprep.subr.bf16.mxu0 %v1851
        %2427 = vmatpush1.bf16.msra.mxu0 %v1850
        %2428 = vmatprep.subr.bf16.mxu0 %v1847
        %2429 = vmatpush1.bf16.msra.mxu0 %v1846
        %2430 = vmatprep.subr.bf16.mxu0 %v1843
        %2431 = vmatpush1.bf16.msra.mxu0 %v1842
        %2432 = vmatprep.subr.bf16.mxu0 %v1903
        %2433 = vmatpush2.bf16.msra.mxu0 %v1902
        %2434 = vmatprep.subr.bf16.mxu0 %v1899
        %2435 = vmatpush2.bf16.msra.mxu0 %v1898
        %2436 = vmatprep.subr.bf16.mxu0 %v1895
        %2437 = vmatpush2.bf16.msra.mxu0 %v1894
        %2438 = vmatprep.subr.bf16.mxu0 %v1891
        %2439 = vmatpush2.bf16.msra.mxu0 %v1890
        %2440 = vmatprep.subr.bf16.mxu0 %v1887
        %2441 = vmatpush2.bf16.msra.mxu0 %v1886
        %2442 = vmatprep.subr.bf16.mxu0 %v1883
        %2443 = vmatpush2.bf16.msra.mxu0 %v1882
        %2444 = vmatprep.subr.bf16.mxu0 %v1879
        %2445 = vmatpush2.bf16.msra.mxu0 %v1878
        %2446 = vmatprep.subr.bf16.mxu0 %v1875
        %2447 = vmatpush2.bf16.msra.mxu0 %v1874
        %2448 = vmatprep.mubr.bf16.mxu0 %v415
        %2449 = vmatmul.mubr.bf16.gmra.mxu0 %v414
        %v2450 = vpop.f32.mrf.mxu0
        %v2451 = vadd.f32 %v2398, %v2450
        %v2452 = vpop.f32.mrf.mxu0
        %v2453 = vadd.f32 %v2400, %v2452
        %v2454 = vpop.f32.mrf.mxu0
        %v2455 = vadd.f32 %v2402, %v2454
        %v2456 = vpop.f32.mrf.mxu0
        %v2457 = vadd.f32 %v2404, %v2456
        %2458 = vmatprep.mubr.bf16.mxu0 %v425
        %2459 = vmatmul.mubr.bf16.gmra.mxu0 %v424
        %v2460 = vpop.f32.mrf.mxu0
        %v2461 = vadd.f32 %v2408, %v2460
        %v2462 = vpop.f32.mrf.mxu0
        %v2463 = vadd.f32 %v2410, %v2462
        %v2464 = vpop.f32.mrf.mxu0
        %v2465 = vadd.f32 %v2412, %v2464
        %v2466 = vpop.f32.mrf.mxu0
        %v2467 = vadd.f32 %v2414, %v2466
        %2468 = vdwg.mxu0
        %2469 = vmatprep.subr.bf16.mxu0 %v1935
        %2470 = vmatpush1.bf16.msra.mxu0 %v1934
        %2471 = vmatprep.subr.bf16.mxu0 %v1931
        %2472 = vmatpush1.bf16.msra.mxu0 %v1930
        %2473 = vmatprep.subr.bf16.mxu0 %v1927
        %2474 = vmatpush1.bf16.msra.mxu0 %v1926
        %2475 = vmatprep.subr.bf16.mxu0 %v1923
        %2476 = vmatpush1.bf16.msra.mxu0 %v1922
        %2477 = vmatprep.subr.bf16.mxu0 %v1919
        %2478 = vmatpush1.bf16.msra.mxu0 %v1918
        %2479 = vmatprep.subr.bf16.mxu0 %v1915
        %2480 = vmatpush1.bf16.msra.mxu0 %v1914
        %2481 = vmatprep.subr.bf16.mxu0 %v1911
        %2482 = vmatpush1.bf16.msra.mxu0 %v1910
        %2483 = vmatprep.subr.bf16.mxu0 %v1907
        %2484 = vmatpush1.bf16.msra.mxu0 %v1906
        %2485 = vmatprep.subr.bf16.mxu0 0
        %2486 = vmatpush2.bf16.msra.mxu0 0
        %2487 = vmatprep.subr.bf16.mxu0 0
        %2488 = vmatpush2.bf16.msra.mxu0 0
        %2489 = vmatprep.subr.bf16.mxu0 0
        %2490 = vmatpush2.bf16.msra.mxu0 0
        %2491 = vmatprep.subr.bf16.mxu0 0
        %2492 = vmatpush2.bf16.msra.mxu0 0
        %2493 = vmatprep.subr.bf16.mxu0 0
        %2494 = vmatpush2.bf16.msra.mxu0 0
        %2495 = vmatprep.subr.bf16.mxu0 %v1947
        %2496 = vmatpush2.bf16.msra.mxu0 %v1946
        %2497 = vmatprep.subr.bf16.mxu0 %v1943
        %2498 = vmatpush2.bf16.msra.mxu0 %v1942
        %2499 = vmatprep.subr.bf16.mxu0 %v1939
        %2500 = vmatpush2.bf16.msra.mxu0 %v1938
        %2501 = vmatprep.mubr.bf16.mxu0 %v2252
        %2502 = vmatmul.mubr.bf16.gmra.mxu0 %v416
        %v2503 = vpop.f32.mrf.mxu0
        %v2504 = vadd.f32 %v2451, %v2503
        %v2505 = vpop.f32.mrf.mxu0
        %v2506 = vadd.f32 %v2453, %v2505
        %v2507 = vpop.f32.mrf.mxu0
        %v2508 = vadd.f32 %v2455, %v2507
        %v2509 = vpop.f32.mrf.mxu0
        %v2510 = vadd.f32 %v2457, %v2509
        %2511 = vmatprep.mubr.bf16.mxu0 %v2255
        %2512 = vmatmul.mubr.bf16.gmra.mxu0 %v426
        %v2513 = vpop.f32.mrf.mxu0
        %v2514 = vadd.f32 %v2461, %v2513
        %v2515 = vpop.f32.mrf.mxu0
        %v2516 = vadd.f32 %v2463, %v2515
        %v2517 = vpop.f32.mrf.mxu0
        %v2518 = vadd.f32 %v2465, %v2517
        %v2519 = vpop.f32.mrf.mxu0
        %v2520 = vadd.f32 %v2467, %v2519
        %2521 = vdwg.mxu0
        %2522 = vmatprep.subr.bf16.mxu0 %v1681
        %2523 = vmatpush1.bf16.msra.mxu0 %v1680
        %2524 = vmatprep.subr.bf16.mxu0 %v1677
        %2525 = vmatpush1.bf16.msra.mxu0 %v1676
        %2526 = vmatprep.subr.bf16.mxu0 %v1673
        %2527 = vmatpush1.bf16.msra.mxu0 %v1672
        %2528 = vmatprep.subr.bf16.mxu0 %v1669
        %2529 = vmatpush1.bf16.msra.mxu0 %v1668
        %2530 = vmatprep.subr.bf16.mxu0 %v1665
        %2531 = vmatpush1.bf16.msra.mxu0 %v1664
        %2532 = vmatprep.subr.bf16.mxu0 %v1661
        %2533 = vmatpush1.bf16.msra.mxu0 %v1660
        %2534 = vmatprep.subr.bf16.mxu0 %v1657
        %2535 = vmatpush1.bf16.msra.mxu0 %v1656
        %2536 = vmatprep.subr.bf16.mxu0 %v1653
        %2537 = vmatpush1.bf16.msra.mxu0 %v1652
        %2538 = vmatprep.subr.bf16.mxu0 %v1713
        %2539 = vmatpush2.bf16.msra.mxu0 %v1712
        %2540 = vmatprep.subr.bf16.mxu0 %v1709
        %2541 = vmatpush2.bf16.msra.mxu0 %v1708
        %2542 = vmatprep.subr.bf16.mxu0 %v1705
        %2543 = vmatpush2.bf16.msra.mxu0 %v1704
        %2544 = vmatprep.subr.bf16.mxu0 %v1701
        %2545 = vmatpush2.bf16.msra.mxu0 %v1700
        %2546 = vmatprep.subr.bf16.mxu0 %v1697
        %2547 = vmatpush2.bf16.msra.mxu0 %v1696
        %2548 = vmatprep.subr.bf16.mxu0 %v1693
        %2549 = vmatpush2.bf16.msra.mxu0 %v1692
        %2550 = vmatprep.subr.bf16.mxu0 %v1689
        %2551 = vmatpush2.bf16.msra.mxu0 %v1688
        %2552 = vmatprep.subr.bf16.mxu0 %v1685
        %2553 = vmatpush2.bf16.msra.mxu0 %v1684
        %2554 = vmatprep.mubr.bf16.mxu0 %v409
        %2555 = vmatmul.mubr.bf16.gmra.mxu0 %v408
        %v2556 = vpop.f32.mrf.mxu0
        %v2557 = vadd.f32 %v741, %v2556
        %v2558 = vpop.f32.mrf.mxu0
        %v2559 = vadd.f32 %v745, %v2558
        %v2560 = vpop.f32.mrf.mxu0
        %v2561 = vadd.f32 %v741, %v2560
        %v2562 = vpop.f32.mrf.mxu0
        %v2563 = vadd.f32 %v745, %v2562
        %2564 = vmatprep.mubr.bf16.mxu0 %v419
        %2565 = vmatmul.mubr.bf16.gmra.mxu0 %v418
        %v2566 = vpop.f32.mrf.mxu0
        %v2567 = vadd.f32 %v741, %v2566
        %v2568 = vpop.f32.mrf.mxu0
        %v2569 = vadd.f32 %v745, %v2568
        %v2570 = vpop.f32.mrf.mxu0
        %v2571 = vadd.f32 %v741, %v2570
        %v2572 = vpop.f32.mrf.mxu0
        %v2573 = vadd.f32 %v745, %v2572
        %2574 = vdwg.mxu0
        %2575 = vmatprep.subr.bf16.mxu0 %v1745
        %2576 = vmatpush1.bf16.msra.mxu0 %v1744
        %2577 = vmatprep.subr.bf16.mxu0 %v1741
        %2578 = vmatpush1.bf16.msra.mxu0 %v1740
        %2579 = vmatprep.subr.bf16.mxu0 %v1737
        %2580 = vmatpush1.bf16.msra.mxu0 %v1736
        %2581 = vmatprep.subr.bf16.mxu0 %v1733
        %2582 = vmatpush1.bf16.msra.mxu0 %v1732
        %2583 = vmatprep.subr.bf16.mxu0 %v1729
        %2584 = vmatpush1.bf16.msra.mxu0 %v1728
        %2585 = vmatprep.subr.bf16.mxu0 %v1725
        %2586 = vmatpush1.bf16.msra.mxu0 %v1724
        %2587 = vmatprep.subr.bf16.mxu0 %v1721
        %2588 = vmatpush1.bf16.msra.mxu0 %v1720
        %2589 = vmatprep.subr.bf16.mxu0 %v1717
        %2590 = vmatpush1.bf16.msra.mxu0 %v1716
        %2591 = vmatprep.subr.bf16.mxu0 %v1777
        %2592 = vmatpush2.bf16.msra.mxu0 %v1776
        %2593 = vmatprep.subr.bf16.mxu0 %v1773
        %2594 = vmatpush2.bf16.msra.mxu0 %v1772
        %2595 = vmatprep.subr.bf16.mxu0 %v1769
        %2596 = vmatpush2.bf16.msra.mxu0 %v1768
        %2597 = vmatprep.subr.bf16.mxu0 %v1765
        %2598 = vmatpush2.bf16.msra.mxu0 %v1764
        %2599 = vmatprep.subr.bf16.mxu0 %v1761
        %2600 = vmatpush2.bf16.msra.mxu0 %v1760
        %2601 = vmatprep.subr.bf16.mxu0 %v1757
        %2602 = vmatpush2.bf16.msra.mxu0 %v1756
        %2603 = vmatprep.subr.bf16.mxu0 %v1753
        %2604 = vmatpush2.bf16.msra.mxu0 %v1752
        %2605 = vmatprep.subr.bf16.mxu0 %v1749
        %2606 = vmatpush2.bf16.msra.mxu0 %v1748
        %2607 = vmatprep.mubr.bf16.mxu0 %v411
        %2608 = vmatmul.mubr.bf16.gmra.mxu0 %v410
        %v2609 = vpop.f32.mrf.mxu0
        %v2610 = vadd.f32 %v2557, %v2609
        %v2611 = vpop.f32.mrf.mxu0
        %v2612 = vadd.f32 %v2559, %v2611
        %v2613 = vpop.f32.mrf.mxu0
        %v2614 = vadd.f32 %v2561, %v2613
        %v2615 = vpop.f32.mrf.mxu0
        %v2616 = vadd.f32 %v2563, %v2615
        %2617 = vmatprep.mubr.bf16.mxu0 %v421
        %2618 = vmatmul.mubr.bf16.gmra.mxu0 %v420
        %v2619 = vpop.f32.mrf.mxu0
        %v2620 = vadd.f32 %v2567, %v2619
        %v2621 = vpop.f32.mrf.mxu0
        %v2622 = vadd.f32 %v2569, %v2621
        %v2623 = vpop.f32.mrf.mxu0
        %v2624 = vadd.f32 %v2571, %v2623
        %v2625 = vpop.f32.mrf.mxu0
        %v2626 = vadd.f32 %v2573, %v2625
        %2627 = vdwg.mxu0
        %2628 = vmatprep.subr.bf16.mxu0 %v1809
        %2629 = vmatpush1.bf16.msra.mxu0 %v1808
        %2630 = vmatprep.subr.bf16.mxu0 %v1805
        %2631 = vmatpush1.bf16.msra.mxu0 %v1804
        %2632 = vmatprep.subr.bf16.mxu0 %v1801
        %2633 = vmatpush1.bf16.msra.mxu0 %v1800
        %2634 = vmatprep.subr.bf16.mxu0 %v1797
        %2635 = vmatpush1.bf16.msra.mxu0 %v1796
        %2636 = vmatprep.subr.bf16.mxu0 %v1793
        %2637 = vmatpush1.bf16.msra.mxu0 %v1792
        %2638 = vmatprep.subr.bf16.mxu0 %v1789
        %2639 = vmatpush1.bf16.msra.mxu0 %v1788
        %2640 = vmatprep.subr.bf16.mxu0 %v1785
        %2641 = vmatpush1.bf16.msra.mxu0 %v1784
        %2642 = vmatprep.subr.bf16.mxu0 %v1781
        %2643 = vmatpush1.bf16.msra.mxu0 %v1780
        %2644 = vmatprep.subr.bf16.mxu0 %v1841
        %2645 = vmatpush2.bf16.msra.mxu0 %v1840
        %2646 = vmatprep.subr.bf16.mxu0 %v1837
        %2647 = vmatpush2.bf16.msra.mxu0 %v1836
        %2648 = vmatprep.subr.bf16.mxu0 %v1833
        %2649 = vmatpush2.bf16.msra.mxu0 %v1832
        %2650 = vmatprep.subr.bf16.mxu0 %v1829
        %2651 = vmatpush2.bf16.msra.mxu0 %v1828
        %2652 = vmatprep.subr.bf16.mxu0 %v1825
        %2653 = vmatpush2.bf16.msra.mxu0 %v1824
        %2654 = vmatprep.subr.bf16.mxu0 %v1821
        %2655 = vmatpush2.bf16.msra.mxu0 %v1820
        %2656 = vmatprep.subr.bf16.mxu0 %v1817
        %2657 = vmatpush2.bf16.msra.mxu0 %v1816
        %2658 = vmatprep.subr.bf16.mxu0 %v1813
        %2659 = vmatpush2.bf16.msra.mxu0 %v1812
        %2660 = vmatprep.mubr.bf16.mxu0 %v413
        %2661 = vmatmul.mubr.bf16.gmra.mxu0 %v412
        %v2662 = vpop.f32.mrf.mxu0
        %v2663 = vadd.f32 %v2610, %v2662
        %v2664 = vpop.f32.mrf.mxu0
        %v2665 = vadd.f32 %v2612, %v2664
        %v2666 = vpop.f32.mrf.mxu0
        %v2667 = vadd.f32 %v2614, %v2666
        %v2668 = vpop.f32.mrf.mxu0
        %v2669 = vadd.f32 %v2616, %v2668
        %2670 = vmatprep.mubr.bf16.mxu0 %v423
        %2671 = vmatmul.mubr.bf16.gmra.mxu0 %v422
        %v2672 = vpop.f32.mrf.mxu0
        %v2673 = vadd.f32 %v2620, %v2672
        %v2674 = vpop.f32.mrf.mxu0
        %v2675 = vadd.f32 %v2622, %v2674
        %v2676 = vpop.f32.mrf.mxu0
        %v2677 = vadd.f32 %v2624, %v2676
        %v2678 = vpop.f32.mrf.mxu0
        %v2679 = vadd.f32 %v2626, %v2678
        %2680 = vdwg.mxu0
        %2681 = vmatprep.subr.bf16.mxu0 %v1873
        %2682 = vmatpush1.bf16.msra.mxu0 %v1872
        %2683 = vmatprep.subr.bf16.mxu0 %v1869
        %2684 = vmatpush1.bf16.msra.mxu0 %v1868
        %2685 = vmatprep.subr.bf16.mxu0 %v1865
        %2686 = vmatpush1.bf16.msra.mxu0 %v1864
        %2687 = vmatprep.subr.bf16.mxu0 %v1861
        %2688 = vmatpush1.bf16.msra.mxu0 %v1860
        %2689 = vmatprep.subr.bf16.mxu0 %v1857
        %2690 = vmatpush1.bf16.msra.mxu0 %v1856
        %2691 = vmatprep.subr.bf16.mxu0 %v1853
        %2692 = vmatpush1.bf16.msra.mxu0 %v1852
        %2693 = vmatprep.subr.bf16.mxu0 %v1849
        %2694 = vmatpush1.bf16.msra.mxu0 %v1848
        %2695 = vmatprep.subr.bf16.mxu0 %v1845
        %2696 = vmatpush1.bf16.msra.mxu0 %v1844
        %2697 = vmatprep.subr.bf16.mxu0 %v1905
        %2698 = vmatpush2.bf16.msra.mxu0 %v1904
        %2699 = vmatprep.subr.bf16.mxu0 %v1901
        %2700 = vmatpush2.bf16.msra.mxu0 %v1900
        %2701 = vmatprep.subr.bf16.mxu0 %v1897
        %2702 = vmatpush2.bf16.msra.mxu0 %v1896
        %2703 = vmatprep.subr.bf16.mxu0 %v1893
        %2704 = vmatpush2.bf16.msra.mxu0 %v1892
        %2705 = vmatprep.subr.bf16.mxu0 %v1889
        %2706 = vmatpush2.bf16.msra.mxu0 %v1888
        %2707 = vmatprep.subr.bf16.mxu0 %v1885
        %2708 = vmatpush2.bf16.msra.mxu0 %v1884
        %2709 = vmatprep.subr.bf16.mxu0 %v1881
        %2710 = vmatpush2.bf16.msra.mxu0 %v1880
        %2711 = vmatprep.subr.bf16.mxu0 %v1877
        %2712 = vmatpush2.bf16.msra.mxu0 %v1876
        %2713 = vmatprep.mubr.bf16.mxu0 %v415
        %2714 = vmatmul.mubr.bf16.gmra.mxu0 %v414
        %v2715 = vpop.f32.mrf.mxu0
        %v2716 = vadd.f32 %v2663, %v2715
        %v2717 = vpop.f32.mrf.mxu0
        %v2718 = vadd.f32 %v2665, %v2717
        %v2719 = vpop.f32.mrf.mxu0
        %v2720 = vadd.f32 %v2667, %v2719
        %v2721 = vpop.f32.mrf.mxu0
        %v2722 = vadd.f32 %v2669, %v2721
        %2723 = vmatprep.mubr.bf16.mxu0 %v425
        %2724 = vmatmul.mubr.bf16.gmra.mxu0 %v424
        %v2725 = vpop.f32.mrf.mxu0
        %v2726 = vadd.f32 %v2673, %v2725
        %v2727 = vpop.f32.mrf.mxu0
        %v2728 = vadd.f32 %v2675, %v2727
        %v2729 = vpop.f32.mrf.mxu0
        %v2730 = vadd.f32 %v2677, %v2729
        %v2731 = vpop.f32.mrf.mxu0
        %v2732 = vadd.f32 %v2679, %v2731
        %2733 = vdwg.mxu0
        %2734 = vmatprep.subr.bf16.mxu0 %v1937
        %2735 = vmatpush1.bf16.msra.mxu0 %v1936
        %2736 = vmatprep.subr.bf16.mxu0 %v1933
        %2737 = vmatpush1.bf16.msra.mxu0 %v1932
        %2738 = vmatprep.subr.bf16.mxu0 %v1929
        %2739 = vmatpush1.bf16.msra.mxu0 %v1928
        %2740 = vmatprep.subr.bf16.mxu0 %v1925
        %2741 = vmatpush1.bf16.msra.mxu0 %v1924
        %2742 = vmatprep.subr.bf16.mxu0 %v1921
        %2743 = vmatpush1.bf16.msra.mxu0 %v1920
        %2744 = vmatprep.subr.bf16.mxu0 %v1917
        %2745 = vmatpush1.bf16.msra.mxu0 %v1916
        %2746 = vmatprep.subr.bf16.mxu0 %v1913
        %2747 = vmatpush1.bf16.msra.mxu0 %v1912
        %2748 = vmatprep.subr.bf16.mxu0 %v1909
        %2749 = vmatpush1.bf16.msra.mxu0 %v1908
        %2750 = vmatprep.subr.bf16.mxu0 0
        %2751 = vmatpush2.bf16.msra.mxu0 0
        %2752 = vmatprep.subr.bf16.mxu0 0
        %2753 = vmatpush2.bf16.msra.mxu0 0
        %2754 = vmatprep.subr.bf16.mxu0 0
        %2755 = vmatpush2.bf16.msra.mxu0 0
        %2756 = vmatprep.subr.bf16.mxu0 0
        %2757 = vmatpush2.bf16.msra.mxu0 0
        %2758 = vmatprep.subr.bf16.mxu0 0
        %2759 = vmatpush2.bf16.msra.mxu0 0
        %2760 = vmatprep.subr.bf16.mxu0 %v1949
        %2761 = vmatpush2.bf16.msra.mxu0 %v1948
        %2762 = vmatprep.subr.bf16.mxu0 %v1945
        %2763 = vmatpush2.bf16.msra.mxu0 %v1944
        %2764 = vmatprep.subr.bf16.mxu0 %v1941
        %2765 = vmatpush2.bf16.msra.mxu0 %v1940
        %2766 = vmatprep.mubr.bf16.mxu0 %v2252
        %2767 = vmatmul.mubr.bf16.gmra.mxu0 %v416
        %v2768 = vpop.f32.mrf.mxu0
        %v2769 = vadd.f32 %v2716, %v2768
        %v2770 = vpop.f32.mrf.mxu0
        %v2771 = vadd.f32 %v2718, %v2770
        %v2772 = vpop.f32.mrf.mxu0
        %v2773 = vadd.f32 %v2720, %v2772
        %v2774 = vpop.f32.mrf.mxu0
        %v2775 = vadd.f32 %v2722, %v2774
        %2776 = vmatprep.mubr.bf16.mxu0 %v2255
        %2777 = vmatmul.mubr.bf16.gmra.mxu0 %v426
        %v2778 = vpop.f32.mrf.mxu0
        %v2779 = vadd.f32 %v2726, %v2778
        %v2780 = vpop.f32.mrf.mxu0
        %v2781 = vadd.f32 %v2728, %v2780
        %v2782 = vpop.f32.mrf.mxu0
        %v2783 = vadd.f32 %v2730, %v2782
        %v2784 = vpop.f32.mrf.mxu0
        %v2785 = vadd.f32 %v2732, %v2784
        %2786 = vdwg.mxu0
        %v2787 = vmax.f32 %v2504, 0.0
        %v2788 = vmax.f32 %v2506, 0.0
        %v2789 = vmax.f32 %v2769, 0.0
        %v2790 = vmax.f32 %v2771, 0.0
        %v2791 = vmax.f32 %v2508, 0.0
        %v2792 = vmax.f32 %v2510, 0.0
        %v2793 = vmax.f32 %v2773, 0.0
        %v2794 = vmax.f32 %v2775, 0.0
        %v2795 = vmax.f32 %v2514, 0.0
        %v2796 = vmax.f32 %v2516, 0.0
        %v2797 = vmax.f32 %v2779, 0.0
        %v2798 = vmax.f32 %v2781, 0.0
        %v2799 = vmax.f32 %v2518, 0.0
        %v2800 = vmax.f32 %v2520, 0.0
        %v2801 = vmax.f32 %v2783, 0.0
        %v2802 = vmax.f32 %v2785, 0.0
        %v2803 = vpack.c.bf16 %v2791, %v2787
        %v2804 = vpack.c.bf16 %v2792, %v2788
        %v2805 = vpack.c.bf16 %v2793, %v2789
        %v2806 = vpack.c.bf16 %v2794, %v2790
        %v2807 = vpack.c.bf16 %v2799, %v2795
        %v2808 = vpack.c.bf16 %v2800, %v2796
        %v2809 = vpack.c.bf16 %v2801, %v2797
        %v2810 = vpack.c.bf16 %v2802, %v2798
        %v2811 = vld [vmem:[%s3] sm:$0xf]
        %v2812 = vld [vmem:[%s3 + $0x4] sm:$0xf]
        %v2813 = vld [vmem:[%s3 + $0x8] sm:$0xf]
        %v2814 = vld [vmem:[%s3 + $0xc] sm:$0xf]
        %v2815 = vld [vmem:[%s3 + $0x10] sm:$0xf]
        %v2816 = vld [vmem:[%s3 + $0x14] sm:$0xf]
        %v2817 = vld [vmem:[%s3 + $0x18] sm:$0xf]
        %v2818 = vld [vmem:[%s3 + $0x1c] sm:$0xf]
        %v2819 = vld [vmem:[%s3 + $0x20] sm:$0xf]
        %v2820 = vld [vmem:[%s3 + $0x24] sm:$0xf]
        %v2821 = vld [vmem:[%s3 + $0x28] sm:$0xf]
        %v2822 = vld [vmem:[%s3 + $0x2c] sm:$0xf]
        %v2823 = vld [vmem:[%s3 + $0x30] sm:$0xf]
        %v2824 = vld [vmem:[%s3 + $0x34] sm:$0xf]
        %v2825 = vld [vmem:[%s3 + $0x38] sm:$0xf]
        %v2826 = vld [vmem:[%s3 + $0x3c] sm:$0xf]
        %v2827 = vld [vmem:[%s3 + $0x40] sm:$0xf]
        %v2828 = vld [vmem:[%s3 + $0x44] sm:$0xf]
        %v2829 = vld [vmem:[%s3 + $0x48] sm:$0xf]
        %v2830 = vld [vmem:[%s3 + $0x4c] sm:$0xf]
        %v2831 = vld [vmem:[%s3 + $0x50] sm:$0xf]
        %v2832 = vld [vmem:[%s3 + $0x54] sm:$0xf]
        %v2833 = vld [vmem:[%s3 + $0x58] sm:$0xf]
        %v2834 = vld [vmem:[%s3 + $0x5c] sm:$0xf]
        %v2835 = vld [vmem:[%s3 + $0x60] sm:$0xf]
        %v2836 = vld [vmem:[%s3 + $0x64] sm:$0xf]
        %v2837 = vld [vmem:[%s3 + $0x68] sm:$0xf]
        %v2838 = vld [vmem:[%s3 + $0x6c] sm:$0xf]
        %v2839 = vld [vmem:[%s3 + $0x70] sm:$0xf]
        %v2840 = vld [vmem:[%s3 + $0x74] sm:$0xf]
        %v2841 = vld [vmem:[%s3 + $0x78] sm:$0xf]
        %v2842 = vld [vmem:[%s3 + $0x7c] sm:$0xf]
        %v2843 = vld [vmem:[%s3 + $0x80] sm:$0xf]
        %v2844 = vld [vmem:[%s3 + $0x84] sm:$0xf]
        %v2845 = vld [vmem:[%s3 + $0x88] sm:$0xf]
        %v2846 = vld [vmem:[%s3 + $0x8c] sm:$0xf]
        %v2847 = vld [vmem:[%s3 + $0x90] sm:$0xf]
        %v2848 = vld [vmem:[%s3 + $0x94] sm:$0xf]
        %v2849 = vld [vmem:[%s3 + $0x98] sm:$0xf]
        %v2850 = vld [vmem:[%s3 + $0x9c] sm:$0xf]
        %v2851 = vld [vmem:[%s3 + $0xa0] sm:$0xf]
        %v2852 = vld [vmem:[%s3 + $0xa4] sm:$0xf]
        %v2853 = vld [vmem:[%s3 + $0xa8] sm:$0xf]
        %v2854 = vld [vmem:[%s3 + $0xac] sm:$0xf]
        %v2855 = vld [vmem:[%s3 + $0xb0] sm:$0xf]
        %v2856 = vld [vmem:[%s3 + $0xb4] sm:$0xf]
        %v2857 = vld [vmem:[%s3 + $0xb8] sm:$0xf]
        %v2858 = vld [vmem:[%s3 + $0xbc] sm:$0xf]
        %v2859 = vld [vmem:[%s3 + $0xc0] sm:$0xf]
        %v2860 = vld [vmem:[%s3 + $0xc4] sm:$0xf]
        %v2861 = vld [vmem:[%s3 + $0xc8] sm:$0xf]
        %v2862 = vld [vmem:[%s3 + $0xcc] sm:$0xf]
        %v2863 = vld [vmem:[%s3 + $0xd0] sm:$0xf]
        %v2864 = vld [vmem:[%s3 + $0xd4] sm:$0xf]
        %v2865 = vld [vmem:[%s3 + $0xd8] sm:$0xf]
        %v2866 = vld [vmem:[%s3 + $0xdc] sm:$0xf]
        %v2867 = vld [vmem:[%s3 + $0xe0] sm:$0xf]
        %v2868 = vld [vmem:[%s3 + $0xe4] sm:$0xf]
        %v2869 = vld [vmem:[%s3 + $0xe8] sm:$0xf]
        %v2870 = vld [vmem:[%s3 + $0xec] sm:$0xf]
        %v2871 = vld [vmem:[%s3 + $0xf0] sm:$0xf]
        %v2872 = vld [vmem:[%s3 + $0xf4] sm:$0xf]
        %v2873 = vld [vmem:[%s3 + $0xf8] sm:$0xf]
        %v2874 = vld [vmem:[%s3 + $0xfc] sm:$0xf]
        %v2875 = vld [vmem:[%s4] sm:$0x1]
        %v2877 = vlaneseq
        %v2878 = vshrl.u32 %v2877, 7
        %v2879 = vsub.s32 0, %v2878
        %v2880 = vrot.slane %v2875, %v2879
        %v2946 = vunpack.c.l.b16 %v2811
        %v2947 = vunpack.c.l.b16 %v2812
        %v2948 = vunpack.c.l.b16 %v2813
        %v2949 = vunpack.c.l.b16 %v2814
        %v2950 = vunpack.c.l.b16 %v2815
        %v2951 = vunpack.c.l.b16 %v2816
        %v2952 = vunpack.c.l.b16 %v2817
        %v2953 = vunpack.c.l.b16 %v2818
        %v2954 = vunpack.c.l.b16 %v2819
        %v2955 = vunpack.c.l.b16 %v2820
        %v2956 = vunpack.c.l.b16 %v2821
        %v2957 = vunpack.c.l.b16 %v2822
        %v2958 = vunpack.c.l.b16 %v2823
        %v2959 = vunpack.c.l.b16 %v2824
        %v2960 = vunpack.c.l.b16 %v2825
        %v2961 = vunpack.c.l.b16 %v2826
        %v2962 = vunpack.c.l.b16 %v2827
        %v2963 = vunpack.c.l.b16 %v2828
        %v2964 = vunpack.c.l.b16 %v2829
        %v2965 = vunpack.c.l.b16 %v2830
        %v2966 = vunpack.c.l.b16 %v2831
        %v2967 = vunpack.c.l.b16 %v2832
        %v2968 = vunpack.c.l.b16 %v2833
        %v2969 = vunpack.c.l.b16 %v2834
        %v2970 = vunpack.c.l.b16 %v2835
        %v2971 = vunpack.c.l.b16 %v2836
        %v2972 = vunpack.c.l.b16 %v2837
        %v2973 = vunpack.c.l.b16 %v2838
        %v2974 = vunpack.c.l.b16 %v2839
        %v2975 = vunpack.c.l.b16 %v2840
        %v2976 = vunpack.c.l.b16 %v2841
        %v2977 = vunpack.c.l.b16 %v2842
        %v2978 = vunpack.c.l.b16 %v2843
        %v2979 = vunpack.c.l.b16 %v2844
        %v2980 = vunpack.c.l.b16 %v2845
        %v2981 = vunpack.c.l.b16 %v2846
        %v2982 = vunpack.c.l.b16 %v2847
        %v2983 = vunpack.c.l.b16 %v2848
        %v2984 = vunpack.c.l.b16 %v2849
        %v2985 = vunpack.c.l.b16 %v2850
        %v2986 = vunpack.c.l.b16 %v2851
        %v2987 = vunpack.c.l.b16 %v2852
        %v2988 = vunpack.c.l.b16 %v2853
        %v2989 = vunpack.c.l.b16 %v2854
        %v2990 = vunpack.c.l.b16 %v2855
        %v2991 = vunpack.c.l.b16 %v2856
        %v2992 = vunpack.c.l.b16 %v2857
        %v2993 = vunpack.c.l.b16 %v2858
        %v2994 = vunpack.c.l.b16 %v2859
        %v2995 = vunpack.c.l.b16 %v2860
        %v2996 = vunpack.c.l.b16 %v2861
        %v2997 = vunpack.c.l.b16 %v2862
        %v2998 = vunpack.c.l.b16 %v2863
        %v2999 = vunpack.c.l.b16 %v2864
        %v3000 = vunpack.c.l.b16 %v2865
        %v3001 = vunpack.c.l.b16 %v2866
        %v3002 = vunpack.c.l.b16 %v2867
        %v3003 = vunpack.c.l.b16 %v2868
        %v3004 = vunpack.c.l.b16 %v2869
        %v3005 = vunpack.c.l.b16 %v2870
        %v3006 = vunpack.c.l.b16 %v2871
        %v3007 = vunpack.c.l.b16 %v2872
        %v3008 = vunpack.c.l.b16 %v2873
        %v3009 = vunpack.c.l.b16 %v2874
        %v3010 = vpack.c.b16 %v2947, %v2946
        %v3011 = vpack.c.b16 %v2949, %v2948
        %v3012 = vpack.c.b16 %v2951, %v2950
        %v3013 = vpack.c.b16 %v2953, %v2952
        %v3014 = vpack.c.b16 %v2955, %v2954
        %v3015 = vpack.c.b16 %v2957, %v2956
        %v3016 = vpack.c.b16 %v2959, %v2958
        %v3017 = vpack.c.b16 %v2961, %v2960
        %v3018 = vpack.c.b16 %v2963, %v2962
        %v3019 = vpack.c.b16 %v2965, %v2964
        %v3020 = vpack.c.b16 %v2967, %v2966
        %v3021 = vpack.c.b16 %v2969, %v2968
        %v3022 = vpack.c.b16 %v2971, %v2970
        %v3023 = vpack.c.b16 %v2973, %v2972
        %v3024 = vpack.c.b16 %v2975, %v2974
        %v3025 = vpack.c.b16 %v2977, %v2976
        %v3026 = vpack.c.b16 %v2979, %v2978
        %v3027 = vpack.c.b16 %v2981, %v2980
        %v3028 = vpack.c.b16 %v2983, %v2982
        %v3029 = vpack.c.b16 %v2985, %v2984
        %v3030 = vpack.c.b16 %v2987, %v2986
        %v3031 = vpack.c.b16 %v2989, %v2988
        %v3032 = vpack.c.b16 %v2991, %v2990
        %v3033 = vpack.c.b16 %v2993, %v2992
        %v3034 = vpack.c.b16 %v2995, %v2994
        %v3035 = vpack.c.b16 %v2997, %v2996
        %v3036 = vpack.c.b16 %v2999, %v2998
        %v3037 = vpack.c.b16 %v3001, %v3000
        %v3038 = vpack.c.b16 %v3003, %v3002
        %v3039 = vpack.c.b16 %v3005, %v3004
        %v3040 = vpack.c.b16 %v3007, %v3006
        %v3041 = vpack.c.b16 %v3009, %v3008
        %3074 = vmatprep.subr.bf16.mxu0 0
        %3075 = vmatpush1.bf16.msra.mxu0 %v3017
        %3076 = vmatprep.subr.bf16.mxu0 0
        %3077 = vmatpush1.bf16.msra.mxu0 %v3016
        %3078 = vmatprep.subr.bf16.mxu0 0
        %3079 = vmatpush1.bf16.msra.mxu0 %v3015
        %3080 = vmatprep.subr.bf16.mxu0 0
        %3081 = vmatpush1.bf16.msra.mxu0 %v3014
        %3082 = vmatprep.subr.bf16.mxu0 0
        %3083 = vmatpush1.bf16.msra.mxu0 %v3013
        %3084 = vmatprep.subr.bf16.mxu0 0
        %3085 = vmatpush1.bf16.msra.mxu0 %v3012
        %3086 = vmatprep.subr.bf16.mxu0 0
        %3087 = vmatpush1.bf16.msra.mxu0 %v3011
        %3088 = vmatprep.subr.bf16.mxu0 0
        %3089 = vmatpush1.bf16.msra.mxu0 %v3010
        %3090 = vmatprep.subr.bf16.mxu0 0
        %3091 = vmatpush2.bf16.msra.mxu0 %v3025
        %3092 = vmatprep.subr.bf16.mxu0 0
        %3093 = vmatpush2.bf16.msra.mxu0 %v3024
        %3094 = vmatprep.subr.bf16.mxu0 0
        %3095 = vmatpush2.bf16.msra.mxu0 %v3023
        %3096 = vmatprep.subr.bf16.mxu0 0
        %3097 = vmatpush2.bf16.msra.mxu0 %v3022
        %3098 = vmatprep.subr.bf16.mxu0 0
        %3099 = vmatpush2.bf16.msra.mxu0 %v3021
        %3100 = vmatprep.subr.bf16.mxu0 0
        %3101 = vmatpush2.bf16.msra.mxu0 %v3020
        %3102 = vmatprep.subr.bf16.mxu0 0
        %3103 = vmatpush2.bf16.msra.mxu0 %v3019
        %3104 = vmatprep.subr.bf16.mxu0 0
        %3105 = vmatpush2.bf16.msra.mxu0 %v3018
        %3106 = vmatprep.mubr.bf16.mxu0 %v2804
        %3107 = vmatmul.mubr.bf16.gmra.mxu0 %v2803
        %v3108 = vpop.f32.mrf.mxu0
        %v3109 = vadd.f32 %v2880, %v3108
        %v3110 = vpop.f32.mrf.mxu0
        %v3111 = vpop.f32.mrf.mxu0
        %v3112 = vadd.f32 %v2880, %v3111
        %v3113 = vpop.f32.mrf.mxu0
        %3114 = vmatprep.mubr.bf16.mxu0 %v2808
        %3115 = vmatmul.mubr.bf16.gmra.mxu0 %v2807
        %v3116 = vpop.f32.mrf.mxu0
        %v3117 = vadd.f32 %v2880, %v3116
        %v3118 = vpop.f32.mrf.mxu0
        %v3119 = vpop.f32.mrf.mxu0
        %v3120 = vadd.f32 %v2880, %v3119
        %v3121 = vpop.f32.mrf.mxu0
        %3122 = vdwg.mxu0
        %3123 = vmatprep.subr.bf16.mxu0 0
        %3124 = vmatpush1.bf16.msra.mxu0 %v3033
        %3125 = vmatprep.subr.bf16.mxu0 0
        %3126 = vmatpush1.bf16.msra.mxu0 %v3032
        %3127 = vmatprep.subr.bf16.mxu0 0
        %3128 = vmatpush1.bf16.msra.mxu0 %v3031
        %3129 = vmatprep.subr.bf16.mxu0 0
        %3130 = vmatpush1.bf16.msra.mxu0 %v3030
        %3131 = vmatprep.subr.bf16.mxu0 0
        %3132 = vmatpush1.bf16.msra.mxu0 %v3029
        %3133 = vmatprep.subr.bf16.mxu0 0
        %3134 = vmatpush1.bf16.msra.mxu0 %v3028
        %3135 = vmatprep.subr.bf16.mxu0 0
        %3136 = vmatpush1.bf16.msra.mxu0 %v3027
        %3137 = vmatprep.subr.bf16.mxu0 0
        %3138 = vmatpush1.bf16.msra.mxu0 %v3026
        %3139 = vmatprep.subr.bf16.mxu0 0
        %3140 = vmatpush2.bf16.msra.mxu0 %v3041
        %3141 = vmatprep.subr.bf16.mxu0 0
        %3142 = vmatpush2.bf16.msra.mxu0 %v3040
        %3143 = vmatprep.subr.bf16.mxu0 0
        %3144 = vmatpush2.bf16.msra.mxu0 %v3039
        %3145 = vmatprep.subr.bf16.mxu0 0
        %3146 = vmatpush2.bf16.msra.mxu0 %v3038
        %3147 = vmatprep.subr.bf16.mxu0 0
        %3148 = vmatpush2.bf16.msra.mxu0 %v3037
        %3149 = vmatprep.subr.bf16.mxu0 0
        %3150 = vmatpush2.bf16.msra.mxu0 %v3036
        %3151 = vmatprep.subr.bf16.mxu0 0
        %3152 = vmatpush2.bf16.msra.mxu0 %v3035
        %3153 = vmatprep.subr.bf16.mxu0 0
        %3154 = vmatpush2.bf16.msra.mxu0 %v3034
        %3155 = vmatprep.mubr.bf16.mxu0 %v2806
        %3156 = vmatmul.mubr.bf16.gmra.mxu0 %v2805
        %v3157 = vpop.f32.mrf.mxu0
        %v3158 = vadd.f32 %v3109, %v3157
        %v3159 = vpop.f32.mrf.mxu0
        %v3160 = vpop.f32.mrf.mxu0
        %v3161 = vadd.f32 %v3112, %v3160
        %v3162 = vpop.f32.mrf.mxu0
        %3163 = vmatprep.mubr.bf16.mxu0 %v2810
        %3164 = vmatmul.mubr.bf16.gmra.mxu0 %v2809
        %v3165 = vpop.f32.mrf.mxu0
        %v3166 = vadd.f32 %v3117, %v3165
        %v3167 = vpop.f32.mrf.mxu0
        %v3168 = vpop.f32.mrf.mxu0
        %v3169 = vadd.f32 %v3120, %v3168
        %v3170 = vpop.f32.mrf.mxu0
        %3171 = vdwg.mxu0
        %v3172 = vpack.c.bf16 %v3161, %v3158
        %v3173 = vpack.c.bf16 %v3169, %v3166
        %v3174 = vld [vmem:[%s5] sm:$0xff]
        %v3175 = vld [vmem:[%s5 + $0x8] sm:$0xff]
        %v3176 = vld [vmem:[%s5 + $0x10] sm:$0xff]
        %v3177 = vld [vmem:[%s5 + $0x18] sm:$0xff]
        %v3178 = vld [vmem:[%s5 + $0x20] sm:$0xff]
        %v3179 = vld [vmem:[%s5 + $0x28] sm:$0xff]
        %v3180 = vld [vmem:[%s5 + $0x30] sm:$0xff]
        %v3181 = vld [vmem:[%s5 + $0x38] sm:$0xff]
        %v3182 = vld [vmem:[%s6] sm:$0xf]
        %v3184 = vlaneseq
        %v3185 = vshrl.u32 %v3184, 7
        %v3186 = vsub.s32 0, %v3185
        %v3187 = vrot.slane %v3182, %v3186
        %v3188 = vlaneseq
        %v3189 = vshrl.u32 %v3188, 7
        %v3190 = vsub.s32 1, %v3189
        %v3191 = vrot.slane %v3182, %v3190
        %v3192 = vlaneseq
        %v3193 = vshrl.u32 %v3192, 7
        %v3194 = vsub.s32 2, %v3193
        %v3195 = vrot.slane %v3182, %v3194
        %v3196 = vlaneseq
        %v3197 = vshrl.u32 %v3196, 7
        %v3198 = vsub.s32 3, %v3197
        %v3199 = vrot.slane %v3182, %v3198
        %v3212 = vunpack.c.l.b16 %v3174
        %v3213 = vunpack.c.h.b16 %v3174
        %v3214 = vunpack.c.l.b16 %v3175
        %v3215 = vunpack.c.h.b16 %v3175
        %v3216 = vunpack.c.l.b16 %v3176
        %v3217 = vunpack.c.h.b16 %v3176
        %v3218 = vunpack.c.l.b16 %v3177
        %v3219 = vunpack.c.h.b16 %v3177
        %v3220 = vunpack.c.l.b16 %v3178
        %v3221 = vunpack.c.h.b16 %v3178
        %v3222 = vunpack.c.l.b16 %v3179
        %v3223 = vunpack.c.h.b16 %v3179
        %v3224 = vunpack.c.l.b16 %v3180
        %v3225 = vunpack.c.h.b16 %v3180
        %v3226 = vunpack.c.l.b16 %v3181
        %v3227 = vunpack.c.h.b16 %v3181
        %v3228 = vpack.c.b16 %v3216, %v3212
        %v3229 = vpack.c.b16 %v3217, %v3213
        %v3230 = vpack.c.b16 %v3218, %v3214
        %v3231 = vpack.c.b16 %v3219, %v3215
        %v3232 = vpack.c.b16 %v3224, %v3220
        %v3233 = vpack.c.b16 %v3225, %v3221
        %v3234 = vpack.c.b16 %v3226, %v3222
        %v3235 = vpack.c.b16 %v3227, %v3223
        %vm3244 = vcmask 261120
        %v3246 = vsel %vm3244, %v3172, 0
        %v3249 = vsel %vm3244, %v3173, 0
        %3251 = vmatprep.subr.bf16.mxu0 0
        %3252 = vmatpush1.bf16.msra.mxu0 0
        %3253 = vmatprep.subr.bf16.mxu0 0
        %3254 = vmatpush1.bf16.msra.mxu0 0
        %3255 = vmatprep.subr.bf16.mxu0 0
        %3256 = vmatpush1.bf16.msra.mxu0 0
        %3257 = vmatprep.subr.bf16.mxu0 0
        %3258 = vmatpush1.bf16.msra.mxu0 0
        %3259 = vmatprep.subr.bf16.mxu0 0
        %3260 = vmatpush1.bf16.msra.mxu0 0
        %3261 = vmatprep.subr.bf16.mxu0 0
        %3262 = vmatpush1.bf16.msra.mxu0 0
        %3263 = vmatprep.subr.bf16.mxu0 %v3233
        %3264 = vmatpush1.bf16.msra.mxu0 %v3232
        %3265 = vmatprep.subr.bf16.mxu0 %v3229
        %3266 = vmatpush1.bf16.msra.mxu0 %v3228
        %3267 = vmatprep.subr.bf16.mxu0 0
        %3268 = vmatpush2.bf16.msra.mxu0 0
        %3269 = vmatprep.subr.bf16.mxu0 0
        %3270 = vmatpush2.bf16.msra.mxu0 0
        %3271 = vmatprep.subr.bf16.mxu0 0
        %3272 = vmatpush2.bf16.msra.mxu0 0
        %3273 = vmatprep.subr.bf16.mxu0 0
        %3274 = vmatpush2.bf16.msra.mxu0 0
        %3275 = vmatprep.subr.bf16.mxu0 0
        %3276 = vmatpush2.bf16.msra.mxu0 0
        %3277 = vmatprep.subr.bf16.mxu0 0
        %3278 = vmatpush2.bf16.msra.mxu0 0
        %3279 = vmatprep.subr.bf16.mxu0 0
        %3280 = vmatpush2.bf16.msra.mxu0 0
        %3281 = vmatprep.subr.bf16.mxu0 0
        %3282 = vmatpush2.bf16.msra.mxu0 0
        %3283 = vmatprep.mubr.bf16.mxu0 0
        %3284 = vmatmul.mubr.bf16.gmra.mxu0 %v3246
        %v3285 = vpop.f32.mrf.mxu0
        %v3286 = vadd.f32 %v3187, %v3285
        %v3287 = vpop.f32.mrf.mxu0
        %v3288 = vadd.f32 %v3191, %v3287
        %v3289 = vpop.f32.mrf.mxu0
        %v3290 = vadd.f32 %v3187, %v3289
        %v3291 = vpop.f32.mrf.mxu0
        %v3292 = vadd.f32 %v3191, %v3291
        %3293 = vmatprep.mubr.bf16.mxu0 0
        %3294 = vmatmul.mubr.bf16.gmra.mxu0 %v3249
        %v3295 = vpop.f32.mrf.mxu0
        %v3296 = vadd.f32 %v3187, %v3295
        %v3297 = vpop.f32.mrf.mxu0
        %v3298 = vadd.f32 %v3191, %v3297
        %v3299 = vpop.f32.mrf.mxu0
        %v3300 = vadd.f32 %v3187, %v3299
        %v3301 = vpop.f32.mrf.mxu0
        %v3302 = vadd.f32 %v3191, %v3301
        %3303 = vdwg.mxu0
        %3304 = vmatprep.subr.bf16.mxu0 0
        %3305 = vmatpush1.bf16.msra.mxu0 0
        %3306 = vmatprep.subr.bf16.mxu0 0
        %3307 = vmatpush1.bf16.msra.mxu0 0
        %3308 = vmatprep.subr.bf16.mxu0 0
        %3309 = vmatpush1.bf16.msra.mxu0 0
        %3310 = vmatprep.subr.bf16.mxu0 0
        %3311 = vmatpush1.bf16.msra.mxu0 0
        %3312 = vmatprep.subr.bf16.mxu0 0
        %3313 = vmatpush1.bf16.msra.mxu0 0
        %3314 = vmatprep.subr.bf16.mxu0 0
        %3315 = vmatpush1.bf16.msra.mxu0 0
        %3316 = vmatprep.subr.bf16.mxu0 %v3235
        %3317 = vmatpush1.bf16.msra.mxu0 %v3234
        %3318 = vmatprep.subr.bf16.mxu0 %v3231
        %3319 = vmatpush1.bf16.msra.mxu0 %v3230
        %3320 = vmatprep.subr.bf16.mxu0 0
        %3321 = vmatpush2.bf16.msra.mxu0 0
        %3322 = vmatprep.subr.bf16.mxu0 0
        %3323 = vmatpush2.bf16.msra.mxu0 0
        %3324 = vmatprep.subr.bf16.mxu0 0
        %3325 = vmatpush2.bf16.msra.mxu0 0
        %3326 = vmatprep.subr.bf16.mxu0 0
        %3327 = vmatpush2.bf16.msra.mxu0 0
        %3328 = vmatprep.subr.bf16.mxu0 0
        %3329 = vmatpush2.bf16.msra.mxu0 0
        %3330 = vmatprep.subr.bf16.mxu0 0
        %3331 = vmatpush2.bf16.msra.mxu0 0
        %3332 = vmatprep.subr.bf16.mxu0 0
        %3333 = vmatpush2.bf16.msra.mxu0 0
        %3334 = vmatprep.subr.bf16.mxu0 0
        %3335 = vmatpush2.bf16.msra.mxu0 0
        %3336 = vmatprep.mubr.bf16.mxu0 0
        %3337 = vmatmul.mubr.bf16.gmra.mxu0 %v3246
        %v3338 = vpop.f32.mrf.mxu0
        %v3339 = vadd.f32 %v3195, %v3338
        %v3340 = vpop.f32.mrf.mxu0
        %v3341 = vadd.f32 %v3199, %v3340
        %v3342 = vpop.f32.mrf.mxu0
        %v3343 = vadd.f32 %v3195, %v3342
        %v3344 = vpop.f32.mrf.mxu0
        %v3345 = vadd.f32 %v3199, %v3344
        %3346 = vmatprep.mubr.bf16.mxu0 0
        %3347 = vmatmul.mubr.bf16.gmra.mxu0 %v3249
        %v3348 = vpop.f32.mrf.mxu0
        %v3349 = vadd.f32 %v3195, %v3348
        %v3350 = vpop.f32.mrf.mxu0
        %v3351 = vadd.f32 %v3199, %v3350
        %v3352 = vpop.f32.mrf.mxu0
        %v3353 = vadd.f32 %v3195, %v3352
        %v3354 = vpop.f32.mrf.mxu0
        %v3355 = vadd.f32 %v3199, %v3354
        %3356 = vdwg.mxu0
        %v3357 = vmax.f32 %v3286, 0.0
        %v3358 = vmax.f32 %v3288, 0.0
        %v3359 = vmax.f32 %v3339, 0.0
        %v3360 = vmax.f32 %v3341, 0.0
        %v3361 = vmax.f32 %v3290, 0.0
        %v3362 = vmax.f32 %v3292, 0.0
        %v3363 = vmax.f32 %v3343, 0.0
        %v3364 = vmax.f32 %v3345, 0.0
        %v3365 = vmax.f32 %v3296, 0.0
        %v3366 = vmax.f32 %v3298, 0.0
        %v3367 = vmax.f32 %v3349, 0.0
        %v3368 = vmax.f32 %v3351, 0.0
        %v3369 = vmax.f32 %v3300, 0.0
        %v3370 = vmax.f32 %v3302, 0.0
        %v3371 = vmax.f32 %v3353, 0.0
        %v3372 = vmax.f32 %v3355, 0.0
        %v3373 = vpack.c.bf16 %v3361, %v3357
        %v3374 = vpack.c.bf16 %v3362, %v3358
        %v3375 = vpack.c.bf16 %v3363, %v3359
        %v3376 = vpack.c.bf16 %v3364, %v3360
        %v3377 = vpack.c.bf16 %v3369, %v3365
        %v3378 = vpack.c.bf16 %v3370, %v3366
        %v3379 = vpack.c.bf16 %v3371, %v3367
        %v3380 = vpack.c.bf16 %v3372, %v3368
        %v3381 = vld [vmem:[%s7] sm:$0xff]
        %v3382 = vld [vmem:[%s7 + $0x8] sm:$0xff]
        %v3383 = vld [vmem:[%s7 + $0x10] sm:$0xff]
        %v3384 = vld [vmem:[%s7 + $0x18] sm:$0xff]
        %v3385 = vld [vmem:[%s7 + $0x20] sm:$0xff]
        %v3386 = vld [vmem:[%s7 + $0x28] sm:$0xff]
        %v3387 = vld [vmem:[%s7 + $0x30] sm:$0xff]
        %v3388 = vld [vmem:[%s7 + $0x38] sm:$0xff]
        %v3389 = vld [vmem:[%s7 + $0x40] sm:$0xff]
        %v3390 = vld [vmem:[%s7 + $0x48] sm:$0xff]
        %v3391 = vld [vmem:[%s7 + $0x50] sm:$0xff]
        %v3392 = vld [vmem:[%s7 + $0x58] sm:$0xff]
        %v3393 = vld [vmem:[%s7 + $0x60] sm:$0xff]
        %v3394 = vld [vmem:[%s7 + $0x68] sm:$0xff]
        %v3395 = vld [vmem:[%s7 + $0x70] sm:$0xff]
        %v3396 = vld [vmem:[%s7 + $0x78] sm:$0xff]
        %v3397 = vld [vmem:[%s7 + $0x80] sm:$0xff]
        %v3398 = vld [vmem:[%s7 + $0x88] sm:$0xff]
        %v3399 = vld [vmem:[%s7 + $0x90] sm:$0xff]
        %v3400 = vld [vmem:[%s7 + $0x98] sm:$0xff]
        %v3401 = vld [vmem:[%s7 + $0xa0] sm:$0xff]
        %v3402 = vld [vmem:[%s7 + $0xa8] sm:$0xff]
        %v3403 = vld [vmem:[%s7 + $0xb0] sm:$0xff]
        %v3404 = vld [vmem:[%s7 + $0xb8] sm:$0xff]
        %v3405 = vld [vmem:[%s7 + $0xc0] sm:$0xff]
        %v3406 = vld [vmem:[%s7 + $0xc8] sm:$0xff]
        %v3407 = vld [vmem:[%s7 + $0xd0] sm:$0xff]
        %v3408 = vld [vmem:[%s7 + $0xd8] sm:$0xff]
        %v3409 = vld [vmem:[%s7 + $0xe0] sm:$0xff]
        %v3410 = vld [vmem:[%s7 + $0xe8] sm:$0xff]
        %v3411 = vld [vmem:[%s7 + $0xf0] sm:$0xff]
        %v3412 = vld [vmem:[%s7 + $0xf8] sm:$0xff]
        %v3413 = vld [vmem:[%s7 + $0x100] sm:$0xff]
        %v3414 = vld [vmem:[%s7 + $0x108] sm:$0xff]
        %v3415 = vld [vmem:[%s7 + $0x110] sm:$0xff]
        %v3416 = vld [vmem:[%s7 + $0x118] sm:$0xff]
        %v3417 = vld [vmem:[%s7 + $0x120] sm:$0xff]
        %v3418 = vld [vmem:[%s7 + $0x128] sm:$0xff]
        %v3419 = vld [vmem:[%s7 + $0x130] sm:$0xff]
        %v3420 = vld [vmem:[%s7 + $0x138] sm:$0xff]
        %v3421 = vld [vmem:[%s7 + $0x140] sm:$0xff]
        %v3422 = vld [vmem:[%s7 + $0x148] sm:$0xff]
        %v3423 = vld [vmem:[%s7 + $0x150] sm:$0xff]
        %v3424 = vld [vmem:[%s7 + $0x158] sm:$0xff]
        %v3425 = vld [vmem:[%s7 + $0x160] sm:$0xff]
        %v3426 = vld [vmem:[%s7 + $0x168] sm:$0xff]
        %v3427 = vld [vmem:[%s7 + $0x170] sm:$0xff]
        %v3428 = vld [vmem:[%s7 + $0x178] sm:$0xff]
        %v3429 = vld [vmem:[%s7 + $0x180] sm:$0xff]
        %v3430 = vld [vmem:[%s7 + $0x188] sm:$0xff]
        %v3431 = vld [vmem:[%s7 + $0x190] sm:$0xff]
        %v3432 = vld [vmem:[%s7 + $0x198] sm:$0xff]
        %v3433 = vld [vmem:[%s7 + $0x1a0] sm:$0xff]
        %v3434 = vld [vmem:[%s7 + $0x1a8] sm:$0xff]
        %v3435 = vld [vmem:[%s7 + $0x1b0] sm:$0xff]
        %v3436 = vld [vmem:[%s7 + $0x1b8] sm:$0xff]
        %v3437 = vld [vmem:[%s7 + $0x1c0] sm:$0xff]
        %v3438 = vld [vmem:[%s7 + $0x1c8] sm:$0xff]
        %v3439 = vld [vmem:[%s7 + $0x1d0] sm:$0xff]
        %v3440 = vld [vmem:[%s7 + $0x1d8] sm:$0xff]
        %v3441 = vld [vmem:[%s7 + $0x1e0] sm:$0xff]
        %v3442 = vld [vmem:[%s7 + $0x1e8] sm:$0xff]
        %v3443 = vld [vmem:[%s7 + $0x1f0] sm:$0xff]
        %v3444 = vld [vmem:[%s7 + $0x1f8] sm:$0xff]
        %v3445 = vld [vmem:[%s7 + $0x200] sm:$0xff]
        %v3446 = vld [vmem:[%s7 + $0x208] sm:$0xff]
        %v3447 = vld [vmem:[%s7 + $0x210] sm:$0xff]
        %v3448 = vld [vmem:[%s7 + $0x218] sm:$0xff]
        %v3449 = vld [vmem:[%s7 + $0x220] sm:$0xff]
        %v3450 = vld [vmem:[%s7 + $0x228] sm:$0xff]
        %v3451 = vld [vmem:[%s7 + $0x230] sm:$0xff]
        %v3452 = vld [vmem:[%s7 + $0x238] sm:$0xff]
        %v3453 = vld [vmem:[%s7 + $0x240] sm:$0xff]
        %v3454 = vld [vmem:[%s7 + $0x248] sm:$0xff]
        %v3455 = vld [vmem:[%s7 + $0x250] sm:$0xff]
        %v3456 = vld [vmem:[%s7 + $0x258] sm:$0xff]
        %v3457 = vld [vmem:[%s7 + $0x260] sm:$0xff]
        %v3458 = vld [vmem:[%s7 + $0x268] sm:$0xff]
        %v3459 = vld [vmem:[%s7 + $0x270] sm:$0xff]
        %v3460 = vld [vmem:[%s7 + $0x278] sm:$0xff]
        %v3461 = vld [vmem:[%s7 + $0x280] sm:$0xff]
        %v3462 = vld [vmem:[%s7 + $0x288] sm:$0xff]
        %v3463 = vld [vmem:[%s7 + $0x290] sm:$0xff]
        %v3464 = vld [vmem:[%s7 + $0x298] sm:$0xff]
        %v3465 = vld [vmem:[%s7 + $0x2a0] sm:$0xff]
        %v3466 = vld [vmem:[%s7 + $0x2a8] sm:$0xff]
        %v3467 = vld [vmem:[%s7 + $0x2b0] sm:$0xff]
        %v3468 = vld [vmem:[%s7 + $0x2b8] sm:$0xff]
        %v3469 = vld [vmem:[%s7 + $0x2c0] sm:$0xff]
        %v3470 = vld [vmem:[%s7 + $0x2c8] sm:$0xff]
        %v3471 = vld [vmem:[%s7 + $0x2d0] sm:$0xff]
        %v3472 = vld [vmem:[%s7 + $0x2d8] sm:$0xff]
        %v3473 = vld [vmem:[%s7 + $0x2e0] sm:$0xff]
        %v3474 = vld [vmem:[%s7 + $0x2e8] sm:$0xff]
        %v3475 = vld [vmem:[%s7 + $0x2f0] sm:$0xff]
        %v3476 = vld [vmem:[%s7 + $0x2f8] sm:$0xff]
        %v3477 = vld [vmem:[%s7 + $0x300] sm:$0xff]
        %v3478 = vld [vmem:[%s7 + $0x308] sm:$0xff]
        %v3479 = vld [vmem:[%s7 + $0x310] sm:$0xff]
        %v3480 = vld [vmem:[%s7 + $0x318] sm:$0xff]
        %v3481 = vld [vmem:[%s7 + $0x320] sm:$0xff]
        %v3482 = vld [vmem:[%s7 + $0x328] sm:$0xff]
        %v3483 = vld [vmem:[%s7 + $0x330] sm:$0xff]
        %v3484 = vld [vmem:[%s7 + $0x338] sm:$0xff]
        %v3485 = vld [vmem:[%s7 + $0x340] sm:$0xff]
        %v3486 = vld [vmem:[%s7 + $0x348] sm:$0xff]
        %v3487 = vld [vmem:[%s7 + $0x350] sm:$0xff]
        %v3488 = vld [vmem:[%s7 + $0x358] sm:$0xff]
        %v3489 = vld [vmem:[%s7 + $0x360] sm:$0xff]
        %v3490 = vld [vmem:[%s7 + $0x368] sm:$0xff]
        %v3491 = vld [vmem:[%s7 + $0x370] sm:$0xff]
        %v3492 = vld [vmem:[%s7 + $0x378] sm:$0xff]
        %v3493 = vld [vmem:[%s7 + $0x380] sm:$0xff]
        %v3494 = vld [vmem:[%s7 + $0x388] sm:$0xff]
        %v3495 = vld [vmem:[%s7 + $0x390] sm:$0xff]
        %v3496 = vld [vmem:[%s7 + $0x398] sm:$0xff]
        %v3497 = vld [vmem:[%s7 + $0x3a0] sm:$0xff]
        %v3498 = vld [vmem:[%s7 + $0x3a8] sm:$0xff]
        %v3499 = vld [vmem:[%s7 + $0x3b0] sm:$0xff]
        %v3500 = vld [vmem:[%s7 + $0x3b8] sm:$0xff]
        %v3501 = vld [vmem:[%s7 + $0x3c0] sm:$0xff]
        %v3502 = vld [vmem:[%s7 + $0x3c8] sm:$0xff]
        %v3503 = vld [vmem:[%s7 + $0x3d0] sm:$0xff]
        %v3504 = vld [vmem:[%s7 + $0x3d8] sm:$0xff]
        %v3505 = vld [vmem:[%s7 + $0x3e0] sm:$0xff]
        %v3506 = vld [vmem:[%s7 + $0x3e8] sm:$0xff]
        %v3507 = vld [vmem:[%s7 + $0x3f0] sm:$0xff]
        %v3508 = vld [vmem:[%s7 + $0x3f8] sm:$0xff]
        %v3509 = vld [vmem:[%s7 + $0x400] sm:$0xff]
        %v3510 = vld [vmem:[%s7 + $0x408] sm:$0xff]
        %v3511 = vld [vmem:[%s7 + $0x410] sm:$0xff]
        %v3512 = vld [vmem:[%s7 + $0x418] sm:$0xff]
        %v3513 = vld [vmem:[%s7 + $0x420] sm:$0xff]
        %v3514 = vld [vmem:[%s7 + $0x428] sm:$0xff]
        %v3515 = vld [vmem:[%s7 + $0x430] sm:$0xff]
        %v3516 = vld [vmem:[%s7 + $0x438] sm:$0xff]
        %v3517 = vld [vmem:[%s7 + $0x440] sm:$0xff]
        %v3518 = vld [vmem:[%s7 + $0x448] sm:$0xff]
        %v3519 = vld [vmem:[%s7 + $0x450] sm:$0xff]
        %v3520 = vld [vmem:[%s7 + $0x458] sm:$0xff]
        %v3521 = vld [vmem:[%s7 + $0x460] sm:$0xff]
        %v3522 = vld [vmem:[%s7 + $0x468] sm:$0xff]
        %v3523 = vld [vmem:[%s7 + $0x470] sm:$0xff]
        %v3524 = vld [vmem:[%s7 + $0x478] sm:$0xff]
        %v3525 = vld [vmem:[%s7 + $0x480] sm:$0xff]
        %v3526 = vld [vmem:[%s7 + $0x488] sm:$0xff]
        %v3527 = vld [vmem:[%s7 + $0x490] sm:$0xff]
        %v3528 = vld [vmem:[%s7 + $0x498] sm:$0xff]
        %v3529 = vld [vmem:[%s7 + $0x4a0] sm:$0xff]
        %v3530 = vld [vmem:[%s7 + $0x4a8] sm:$0xff]
        %v3531 = vld [vmem:[%s7 + $0x4b0] sm:$0xff]
        %v3532 = vld [vmem:[%s7 + $0x4b8] sm:$0xff]
        %v3533 = vld [vmem:[%s7 + $0x4c0] sm:$0xff]
        %v3534 = vld [vmem:[%s7 + $0x4c8] sm:$0xff]
        %v3535 = vld [vmem:[%s7 + $0x4d0] sm:$0xff]
        %v3536 = vld [vmem:[%s7 + $0x4d8] sm:$0xff]
        %v3537 = vld [vmem:[%s7 + $0x4e0] sm:$0xff]
        %v3538 = vld [vmem:[%s7 + $0x4e8] sm:$0xff]
        %v3539 = vld [vmem:[%s7 + $0x4f0] sm:$0xff]
        %v3540 = vld [vmem:[%s7 + $0x4f8] sm:$0xff]
        %v3541 = vld [vmem:[%s7 + $0x500] sm:$0xff]
        %v3542 = vld [vmem:[%s7 + $0x508] sm:$0xff]
        %v3543 = vld [vmem:[%s7 + $0x510] sm:$0xff]
        %v3544 = vld [vmem:[%s7 + $0x518] sm:$0xff]
        %v3545 = vld [vmem:[%s7 + $0x520] sm:$0xff]
        %v3546 = vld [vmem:[%s7 + $0x528] sm:$0xff]
        %v3547 = vld [vmem:[%s7 + $0x530] sm:$0xff]
        %v3548 = vld [vmem:[%s7 + $0x538] sm:$0xff]
        %v3549 = vld [vmem:[%s7 + $0x540] sm:$0xff]
        %v3550 = vld [vmem:[%s7 + $0x548] sm:$0xff]
        %v3551 = vld [vmem:[%s7 + $0x550] sm:$0xff]
        %v3552 = vld [vmem:[%s7 + $0x558] sm:$0xff]
        %v3553 = vld [vmem:[%s7 + $0x560] sm:$0xff]
        %v3554 = vld [vmem:[%s7 + $0x568] sm:$0xff]
        %v3555 = vld [vmem:[%s7 + $0x570] sm:$0xff]
        %v3556 = vld [vmem:[%s7 + $0x578] sm:$0xff]
        %v3557 = vld [vmem:[%s7 + $0x580] sm:$0xff]
        %v3558 = vld [vmem:[%s7 + $0x588] sm:$0xff]
        %v3559 = vld [vmem:[%s7 + $0x590] sm:$0xff]
        %v3560 = vld [vmem:[%s7 + $0x598] sm:$0xff]
        %v3561 = vld [vmem:[%s7 + $0x5a0] sm:$0xff]
        %v3562 = vld [vmem:[%s7 + $0x5a8] sm:$0xff]
        %v3563 = vld [vmem:[%s7 + $0x5b0] sm:$0xff]
        %v3564 = vld [vmem:[%s7 + $0x5b8] sm:$0xff]
        %v3565 = vld [vmem:[%s7 + $0x5c0] sm:$0xff]
        %v3566 = vld [vmem:[%s7 + $0x5c8] sm:$0xff]
        %v3567 = vld [vmem:[%s7 + $0x5d0] sm:$0xff]
        %v3568 = vld [vmem:[%s7 + $0x5d8] sm:$0xff]
        %v3569 = vld [vmem:[%s7 + $0x5e0] sm:$0xff]
        %v3570 = vld [vmem:[%s7 + $0x5e8] sm:$0xff]
        %v3571 = vld [vmem:[%s7 + $0x5f0] sm:$0xff]
        %v3572 = vld [vmem:[%s7 + $0x5f8] sm:$0xff]
        %v3573 = vld [vmem:[%s7 + $0x600] sm:$0xff]
        %v3574 = vld [vmem:[%s7 + $0x608] sm:$0xff]
        %v3575 = vld [vmem:[%s7 + $0x610] sm:$0xff]
        %v3576 = vld [vmem:[%s7 + $0x618] sm:$0xff]
        %v3577 = vld [vmem:[%s7 + $0x620] sm:$0xff]
        %v3578 = vld [vmem:[%s7 + $0x628] sm:$0xff]
        %v3579 = vld [vmem:[%s7 + $0x630] sm:$0xff]
        %v3580 = vld [vmem:[%s7 + $0x638] sm:$0xff]
        %v3581 = vld [vmem:[%s7 + $0x640] sm:$0xff]
        %v3582 = vld [vmem:[%s7 + $0x648] sm:$0xff]
        %v3583 = vld [vmem:[%s7 + $0x650] sm:$0xff]
        %v3584 = vld [vmem:[%s7 + $0x658] sm:$0xff]
        %v3585 = vld [vmem:[%s7 + $0x660] sm:$0xff]
        %v3586 = vld [vmem:[%s7 + $0x668] sm:$0xff]
        %v3587 = vld [vmem:[%s7 + $0x670] sm:$0xff]
        %v3588 = vld [vmem:[%s7 + $0x678] sm:$0xff]
        %v3589 = vld [vmem:[%s7 + $0x680] sm:$0xff]
        %v3590 = vld [vmem:[%s7 + $0x688] sm:$0xff]
        %v3591 = vld [vmem:[%s7 + $0x690] sm:$0xff]
        %v3592 = vld [vmem:[%s7 + $0x698] sm:$0xff]
        %v3593 = vld [vmem:[%s7 + $0x6a0] sm:$0xff]
        %v3594 = vld [vmem:[%s7 + $0x6a8] sm:$0xff]
        %v3595 = vld [vmem:[%s7 + $0x6b0] sm:$0xff]
        %v3596 = vld [vmem:[%s7 + $0x6b8] sm:$0xff]
        %v3597 = vld [vmem:[%s7 + $0x6c0] sm:$0xff]
        %v3598 = vld [vmem:[%s7 + $0x6c8] sm:$0xff]
        %v3599 = vld [vmem:[%s7 + $0x6d0] sm:$0xff]
        %v3600 = vld [vmem:[%s7 + $0x6d8] sm:$0xff]
        %v3601 = vld [vmem:[%s7 + $0x6e0] sm:$0xff]
        %v3602 = vld [vmem:[%s7 + $0x6e8] sm:$0xff]
        %v3603 = vld [vmem:[%s7 + $0x6f0] sm:$0xff]
        %v3604 = vld [vmem:[%s7 + $0x6f8] sm:$0xff]
        %v3605 = vld [vmem:[%s7 + $0x700] sm:$0xff]
        %v3606 = vld [vmem:[%s7 + $0x708] sm:$0xff]
        %v3607 = vld [vmem:[%s7 + $0x710] sm:$0xff]
        %v3608 = vld [vmem:[%s7 + $0x718] sm:$0xff]
        %v3609 = vld [vmem:[%s7 + $0x720] sm:$0xff]
        %v3610 = vld [vmem:[%s7 + $0x728] sm:$0xff]
        %v3611 = vld [vmem:[%s7 + $0x730] sm:$0xff]
        %v3612 = vld [vmem:[%s7 + $0x738] sm:$0xff]
        %v3613 = vld [vmem:[%s7 + $0x740] sm:$0xff]
        %v3614 = vld [vmem:[%s7 + $0x748] sm:$0xff]
        %v3615 = vld [vmem:[%s7 + $0x750] sm:$0xff]
        %v3616 = vld [vmem:[%s7 + $0x758] sm:$0xff]
        %v3617 = vld [vmem:[%s7 + $0x760] sm:$0xff]
        %v3618 = vld [vmem:[%s7 + $0x768] sm:$0xff]
        %v3619 = vld [vmem:[%s7 + $0x770] sm:$0xff]
        %v3620 = vld [vmem:[%s7 + $0x778] sm:$0xff]
        %v3621 = vld [vmem:[%s7 + $0x780] sm:$0xff]
        %v3622 = vld [vmem:[%s7 + $0x788] sm:$0xff]
        %v3623 = vld [vmem:[%s7 + $0x790] sm:$0xff]
        %v3624 = vld [vmem:[%s7 + $0x798] sm:$0xff]
        %v3625 = vld [vmem:[%s7 + $0x7a0] sm:$0xff]
        %v3626 = vld [vmem:[%s7 + $0x7a8] sm:$0xff]
        %v3627 = vld [vmem:[%s7 + $0x7b0] sm:$0xff]
        %v3628 = vld [vmem:[%s7 + $0x7b8] sm:$0xff]
        %v3629 = vld [vmem:[%s7 + $0x7c0] sm:$0xff]
        %v3630 = vld [vmem:[%s7 + $0x7c8] sm:$0xff]
        %v3631 = vld [vmem:[%s7 + $0x7d0] sm:$0xff]
        %v3632 = vld [vmem:[%s7 + $0x7d8] sm:$0xff]
        %v3633 = vld [vmem:[%s7 + $0x7e0] sm:$0xff]
        %v3634 = vld [vmem:[%s7 + $0x7e8] sm:$0xff]
        %v3635 = vld [vmem:[%s7 + $0x7f0] sm:$0xff]
        %v3636 = vld [vmem:[%s7 + $0x7f8] sm:$0xff]
        %v3637 = vld [vmem:[%s7 + $0x800] sm:$0xff]
        %v3638 = vld [vmem:[%s7 + $0x808] sm:$0xff]
        %v3639 = vld [vmem:[%s7 + $0x810] sm:$0xff]
        %v3640 = vld [vmem:[%s7 + $0x818] sm:$0xff]
        %v3641 = vld [vmem:[%s7 + $0x820] sm:$0xff]
        %v3642 = vld [vmem:[%s7 + $0x828] sm:$0xff]
        %v3643 = vld [vmem:[%s7 + $0x830] sm:$0xff]
        %v3644 = vld [vmem:[%s7 + $0x838] sm:$0xff]
        %v3645 = vld [vmem:[%s7 + $0x840] sm:$0xff]
        %v3646 = vld [vmem:[%s7 + $0x848] sm:$0xff]
        %v3647 = vld [vmem:[%s7 + $0x850] sm:$0xff]
        %v3648 = vld [vmem:[%s7 + $0x858] sm:$0xff]
        %v3649 = vld [vmem:[%s7 + $0x860] sm:$0xff]
        %v3650 = vld [vmem:[%s7 + $0x868] sm:$0xff]
        %v3651 = vld [vmem:[%s7 + $0x870] sm:$0xff]
        %v3652 = vld [vmem:[%s7 + $0x878] sm:$0xff]
        %v3653 = vld [vmem:[%s7 + $0x880] sm:$0xff]
        %v3654 = vld [vmem:[%s7 + $0x888] sm:$0xff]
        %v3655 = vld [vmem:[%s7 + $0x890] sm:$0xff]
        %v3656 = vld [vmem:[%s7 + $0x898] sm:$0xff]
        %v3657 = vld [vmem:[%s7 + $0x8a0] sm:$0xff]
        %v3658 = vld [vmem:[%s7 + $0x8a8] sm:$0xff]
        %v3659 = vld [vmem:[%s7 + $0x8b0] sm:$0xff]
        %v3660 = vld [vmem:[%s7 + $0x8b8] sm:$0xff]
        %v3661 = vld [vmem:[%s7 + $0x8c0] sm:$0xff]
        %v3662 = vld [vmem:[%s7 + $0x8c8] sm:$0xff]
        %v3663 = vld [vmem:[%s7 + $0x8d0] sm:$0xff]
        %v3664 = vld [vmem:[%s7 + $0x8d8] sm:$0xff]
        %v3665 = vld [vmem:[%s7 + $0x8e0] sm:$0xff]
        %v3666 = vld [vmem:[%s7 + $0x8e8] sm:$0xff]
        %v3667 = vld [vmem:[%s7 + $0x8f0] sm:$0xff]
        %v3668 = vld [vmem:[%s7 + $0x8f8] sm:$0xff]
        %v3669 = vld [vmem:[%s7 + $0x900] sm:$0xff]
        %v3670 = vld [vmem:[%s7 + $0x908] sm:$0xff]
        %v3671 = vld [vmem:[%s7 + $0x910] sm:$0xff]
        %v3672 = vld [vmem:[%s7 + $0x918] sm:$0xff]
        %v3673 = vld [vmem:[%s7 + $0x920] sm:$0xff]
        %v3674 = vld [vmem:[%s7 + $0x928] sm:$0xff]
        %v3675 = vld [vmem:[%s7 + $0x930] sm:$0xff]
        %v3676 = vld [vmem:[%s7 + $0x938] sm:$0xff]
        %v3677 = vld [vmem:[%s7 + $0x940] sm:$0xff]
        %v3678 = vld [vmem:[%s7 + $0x948] sm:$0xff]
        %v3679 = vld [vmem:[%s7 + $0x950] sm:$0xff]
        %v3680 = vld [vmem:[%s7 + $0x958] sm:$0xff]
        %v3681 = vld [vmem:[%s7 + $0x960] sm:$0xff]
        %v3682 = vld [vmem:[%s7 + $0x968] sm:$0xff]
        %v3683 = vld [vmem:[%s7 + $0x970] sm:$0xff]
        %v3684 = vld [vmem:[%s7 + $0x978] sm:$0xff]
        %v3685 = vld [vmem:[%s7 + $0x980] sm:$0xff]
        %v3686 = vld [vmem:[%s7 + $0x988] sm:$0xff]
        %v3687 = vld [vmem:[%s7 + $0x990] sm:$0xff]
        %v3688 = vld [vmem:[%s7 + $0x998] sm:$0xff]
        %v3689 = vld [vmem:[%s7 + $0x9a0] sm:$0xff]
        %v3690 = vld [vmem:[%s7 + $0x9a8] sm:$0xff]
        %v3691 = vld [vmem:[%s7 + $0x9b0] sm:$0xff]
        %v3692 = vld [vmem:[%s7 + $0x9b8] sm:$0xff]
        %v3693 = vld [vmem:[%s7 + $0x9c0] sm:$0xff]
        %v3694 = vld [vmem:[%s7 + $0x9c8] sm:$0xff]
        %v3695 = vld [vmem:[%s7 + $0x9d0] sm:$0xff]
        %v3696 = vld [vmem:[%s7 + $0x9d8] sm:$0xff]
        %v3697 = vld [vmem:[%s7 + $0x9e0] sm:$0xff]
        %v3698 = vld [vmem:[%s7 + $0x9e8] sm:$0xff]
        %v3699 = vld [vmem:[%s7 + $0x9f0] sm:$0xff]
        %v3700 = vld [vmem:[%s7 + $0x9f8] sm:$0xff]
        %v3701 = vld [vmem:[%s8] sm:$0xff]
        %v3702 = vld [vmem:[%s8 + $0x8] sm:$0x3]
        %v3705 = vlaneseq
        %v3706 = vshrl.u32 %v3705, 7
        %v3707 = vsub.s32 0, %v3706
        %v3708 = vrot.slane %v3701, %v3707
        %v3709 = vlaneseq
        %v3710 = vshrl.u32 %v3709, 7
        %v3711 = vsub.s32 1, %v3710
        %v3712 = vrot.slane %v3701, %v3711
        %v3713 = vlaneseq
        %v3714 = vshrl.u32 %v3713, 7
        %v3715 = vsub.s32 2, %v3714
        %v3716 = vrot.slane %v3701, %v3715
        %v3717 = vlaneseq
        %v3718 = vshrl.u32 %v3717, 7
        %v3719 = vsub.s32 3, %v3718
        %v3720 = vrot.slane %v3701, %v3719
        %v3721 = vlaneseq
        %v3722 = vshrl.u32 %v3721, 7
        %v3723 = vsub.s32 4, %v3722
        %v3724 = vrot.slane %v3701, %v3723
        %v3725 = vlaneseq
        %v3726 = vshrl.u32 %v3725, 7
        %v3727 = vsub.s32 5, %v3726
        %v3728 = vrot.slane %v3701, %v3727
        %v3729 = vlaneseq
        %v3730 = vshrl.u32 %v3729, 7
        %v3731 = vsub.s32 6, %v3730
        %v3732 = vrot.slane %v3701, %v3731
        %v3733 = vlaneseq
        %v3734 = vshrl.u32 %v3733, 7
        %v3735 = vsub.s32 7, %v3734
        %v3736 = vrot.slane %v3701, %v3735
        %v3737 = vlaneseq
        %v3738 = vshrl.u32 %v3737, 7
        %v3739 = vsub.s32 0, %v3738
        %v3740 = vrot.slane %v3702, %v3739
        %v3741 = vlaneseq
        %v3742 = vshrl.u32 %v3741, 7
        %v3743 = vsub.s32 1, %v3742
        %v3744 = vrot.slane %v3702, %v3743
        %v4075 = vunpack.c.l.b16 %v3381
        %v4076 = vunpack.c.h.b16 %v3381
        %v4077 = vunpack.c.l.b16 %v3382
        %v4078 = vunpack.c.h.b16 %v3382
        %v4079 = vunpack.c.l.b16 %v3383
        %v4080 = vunpack.c.h.b16 %v3383
        %v4081 = vunpack.c.l.b16 %v3384
        %v4082 = vunpack.c.h.b16 %v3384
        %v4083 = vunpack.c.l.b16 %v3385
        %v4084 = vunpack.c.h.b16 %v3385
        %v4085 = vunpack.c.l.b16 %v3386
        %v4086 = vunpack.c.h.b16 %v3386
        %v4087 = vunpack.c.l.b16 %v3387
        %v4088 = vunpack.c.h.b16 %v3387
        %v4089 = vunpack.c.l.b16 %v3388
        %v4090 = vunpack.c.h.b16 %v3388
        %v4091 = vunpack.c.l.b16 %v3389
        %v4092 = vunpack.c.h.b16 %v3389
        %v4093 = vunpack.c.l.b16 %v3390
        %v4094 = vunpack.c.h.b16 %v3390
        %v4095 = vunpack.c.l.b16 %v3391
        %v4096 = vunpack.c.h.b16 %v3391
        %v4097 = vunpack.c.l.b16 %v3392
        %v4098 = vunpack.c.h.b16 %v3392
        %v4099 = vunpack.c.l.b16 %v3393
        %v4100 = vunpack.c.h.b16 %v3393
        %v4101 = vunpack.c.l.b16 %v3394
        %v4102 = vunpack.c.h.b16 %v3394
        %v4103 = vunpack.c.l.b16 %v3395
        %v4104 = vunpack.c.h.b16 %v3395
        %v4105 = vunpack.c.l.b16 %v3396
        %v4106 = vunpack.c.h.b16 %v3396
        %v4107 = vunpack.c.l.b16 %v3397
        %v4108 = vunpack.c.h.b16 %v3397
        %v4109 = vunpack.c.l.b16 %v3398
        %v4110 = vunpack.c.h.b16 %v3398
        %v4111 = vunpack.c.l.b16 %v3399
        %v4112 = vunpack.c.h.b16 %v3399
        %v4113 = vunpack.c.l.b16 %v3400
        %v4114 = vunpack.c.h.b16 %v3400
        %v4115 = vunpack.c.l.b16 %v3401
        %v4116 = vunpack.c.h.b16 %v3401
        %v4117 = vunpack.c.l.b16 %v3402
        %v4118 = vunpack.c.h.b16 %v3402
        %v4119 = vunpack.c.l.b16 %v3403
        %v4120 = vunpack.c.h.b16 %v3403
        %v4121 = vunpack.c.l.b16 %v3404
        %v4122 = vunpack.c.h.b16 %v3404
        %v4123 = vunpack.c.l.b16 %v3405
        %v4124 = vunpack.c.h.b16 %v3405
        %v4125 = vunpack.c.l.b16 %v3406
        %v4126 = vunpack.c.h.b16 %v3406
        %v4127 = vunpack.c.l.b16 %v3407
        %v4128 = vunpack.c.h.b16 %v3407
        %v4129 = vunpack.c.l.b16 %v3408
        %v4130 = vunpack.c.h.b16 %v3408
        %v4131 = vunpack.c.l.b16 %v3409
        %v4132 = vunpack.c.h.b16 %v3409
        %v4133 = vunpack.c.l.b16 %v3410
        %v4134 = vunpack.c.h.b16 %v3410
        %v4135 = vunpack.c.l.b16 %v3411
        %v4136 = vunpack.c.h.b16 %v3411
        %v4137 = vunpack.c.l.b16 %v3412
        %v4138 = vunpack.c.h.b16 %v3412
        %v4139 = vunpack.c.l.b16 %v3413
        %v4140 = vunpack.c.h.b16 %v3413
        %v4141 = vunpack.c.l.b16 %v3414
        %v4142 = vunpack.c.h.b16 %v3414
        %v4143 = vunpack.c.l.b16 %v3415
        %v4144 = vunpack.c.h.b16 %v3415
        %v4145 = vunpack.c.l.b16 %v3416
        %v4146 = vunpack.c.h.b16 %v3416
        %v4147 = vunpack.c.l.b16 %v3417
        %v4148 = vunpack.c.h.b16 %v3417
        %v4149 = vunpack.c.l.b16 %v3418
        %v4150 = vunpack.c.h.b16 %v3418
        %v4151 = vunpack.c.l.b16 %v3419
        %v4152 = vunpack.c.h.b16 %v3419
        %v4153 = vunpack.c.l.b16 %v3420
        %v4154 = vunpack.c.h.b16 %v3420
        %v4155 = vunpack.c.l.b16 %v3421
        %v4156 = vunpack.c.h.b16 %v3421
        %v4157 = vunpack.c.l.b16 %v3422
        %v4158 = vunpack.c.h.b16 %v3422
        %v4159 = vunpack.c.l.b16 %v3423
        %v4160 = vunpack.c.h.b16 %v3423
        %v4161 = vunpack.c.l.b16 %v3424
        %v4162 = vunpack.c.h.b16 %v3424
        %v4163 = vunpack.c.l.b16 %v3425
        %v4164 = vunpack.c.h.b16 %v3425
        %v4165 = vunpack.c.l.b16 %v3426
        %v4166 = vunpack.c.h.b16 %v3426
        %v4167 = vunpack.c.l.b16 %v3427
        %v4168 = vunpack.c.h.b16 %v3427
        %v4169 = vunpack.c.l.b16 %v3428
        %v4170 = vunpack.c.h.b16 %v3428
        %v4171 = vunpack.c.l.b16 %v3429
        %v4172 = vunpack.c.h.b16 %v3429
        %v4173 = vunpack.c.l.b16 %v3430
        %v4174 = vunpack.c.h.b16 %v3430
        %v4175 = vunpack.c.l.b16 %v3431
        %v4176 = vunpack.c.h.b16 %v3431
        %v4177 = vunpack.c.l.b16 %v3432
        %v4178 = vunpack.c.h.b16 %v3432
        %v4179 = vunpack.c.l.b16 %v3433
        %v4180 = vunpack.c.h.b16 %v3433
        %v4181 = vunpack.c.l.b16 %v3434
        %v4182 = vunpack.c.h.b16 %v3434
        %v4183 = vunpack.c.l.b16 %v3435
        %v4184 = vunpack.c.h.b16 %v3435
        %v4185 = vunpack.c.l.b16 %v3436
        %v4186 = vunpack.c.h.b16 %v3436
        %v4187 = vunpack.c.l.b16 %v3437
        %v4188 = vunpack.c.h.b16 %v3437
        %v4189 = vunpack.c.l.b16 %v3438
        %v4190 = vunpack.c.h.b16 %v3438
        %v4191 = vunpack.c.l.b16 %v3439
        %v4192 = vunpack.c.h.b16 %v3439
        %v4193 = vunpack.c.l.b16 %v3440
        %v4194 = vunpack.c.h.b16 %v3440
        %v4195 = vunpack.c.l.b16 %v3441
        %v4196 = vunpack.c.h.b16 %v3441
        %v4197 = vunpack.c.l.b16 %v3442
        %v4198 = vunpack.c.h.b16 %v3442
        %v4199 = vunpack.c.l.b16 %v3443
        %v4200 = vunpack.c.h.b16 %v3443
        %v4201 = vunpack.c.l.b16 %v3444
        %v4202 = vunpack.c.h.b16 %v3444
        %v4203 = vunpack.c.l.b16 %v3445
        %v4204 = vunpack.c.h.b16 %v3445
        %v4205 = vunpack.c.l.b16 %v3446
        %v4206 = vunpack.c.h.b16 %v3446
        %v4207 = vunpack.c.l.b16 %v3447
        %v4208 = vunpack.c.h.b16 %v3447
        %v4209 = vunpack.c.l.b16 %v3448
        %v4210 = vunpack.c.h.b16 %v3448
        %v4211 = vunpack.c.l.b16 %v3449
        %v4212 = vunpack.c.h.b16 %v3449
        %v4213 = vunpack.c.l.b16 %v3450
        %v4214 = vunpack.c.h.b16 %v3450
        %v4215 = vunpack.c.l.b16 %v3451
        %v4216 = vunpack.c.h.b16 %v3451
        %v4217 = vunpack.c.l.b16 %v3452
        %v4218 = vunpack.c.h.b16 %v3452
        %v4219 = vunpack.c.l.b16 %v3453
        %v4220 = vunpack.c.h.b16 %v3453
        %v4221 = vunpack.c.l.b16 %v3454
        %v4222 = vunpack.c.h.b16 %v3454
        %v4223 = vunpack.c.l.b16 %v3455
        %v4224 = vunpack.c.h.b16 %v3455
        %v4225 = vunpack.c.l.b16 %v3456
        %v4226 = vunpack.c.h.b16 %v3456
        %v4227 = vunpack.c.l.b16 %v3457
        %v4228 = vunpack.c.h.b16 %v3457
        %v4229 = vunpack.c.l.b16 %v3458
        %v4230 = vunpack.c.h.b16 %v3458
        %v4231 = vunpack.c.l.b16 %v3459
        %v4232 = vunpack.c.h.b16 %v3459
        %v4233 = vunpack.c.l.b16 %v3460
        %v4234 = vunpack.c.h.b16 %v3460
        %v4235 = vunpack.c.l.b16 %v3461
        %v4236 = vunpack.c.h.b16 %v3461
        %v4237 = vunpack.c.l.b16 %v3462
        %v4238 = vunpack.c.h.b16 %v3462
        %v4239 = vunpack.c.l.b16 %v3463
        %v4240 = vunpack.c.h.b16 %v3463
        %v4241 = vunpack.c.l.b16 %v3464
        %v4242 = vunpack.c.h.b16 %v3464
        %v4243 = vunpack.c.l.b16 %v3465
        %v4244 = vunpack.c.h.b16 %v3465
        %v4245 = vunpack.c.l.b16 %v3466
        %v4246 = vunpack.c.h.b16 %v3466
        %v4247 = vunpack.c.l.b16 %v3467
        %v4248 = vunpack.c.h.b16 %v3467
        %v4249 = vunpack.c.l.b16 %v3468
        %v4250 = vunpack.c.h.b16 %v3468
        %v4251 = vunpack.c.l.b16 %v3469
        %v4252 = vunpack.c.h.b16 %v3469
        %v4253 = vunpack.c.l.b16 %v3470
        %v4254 = vunpack.c.h.b16 %v3470
        %v4255 = vunpack.c.l.b16 %v3471
        %v4256 = vunpack.c.h.b16 %v3471
        %v4257 = vunpack.c.l.b16 %v3472
        %v4258 = vunpack.c.h.b16 %v3472
        %v4259 = vunpack.c.l.b16 %v3473
        %v4260 = vunpack.c.h.b16 %v3473
        %v4261 = vunpack.c.l.b16 %v3474
        %v4262 = vunpack.c.h.b16 %v3474
        %v4263 = vunpack.c.l.b16 %v3475
        %v4264 = vunpack.c.h.b16 %v3475
        %v4265 = vunpack.c.l.b16 %v3476
        %v4266 = vunpack.c.h.b16 %v3476
        %v4267 = vunpack.c.l.b16 %v3477
        %v4268 = vunpack.c.h.b16 %v3477
        %v4269 = vunpack.c.l.b16 %v3478
        %v4270 = vunpack.c.h.b16 %v3478
        %v4271 = vunpack.c.l.b16 %v3479
        %v4272 = vunpack.c.h.b16 %v3479
        %v4273 = vunpack.c.l.b16 %v3480
        %v4274 = vunpack.c.h.b16 %v3480
        %v4275 = vunpack.c.l.b16 %v3481
        %v4276 = vunpack.c.h.b16 %v3481
        %v4277 = vunpack.c.l.b16 %v3482
        %v4278 = vunpack.c.h.b16 %v3482
        %v4279 = vunpack.c.l.b16 %v3483
        %v4280 = vunpack.c.h.b16 %v3483
        %v4281 = vunpack.c.l.b16 %v3484
        %v4282 = vunpack.c.h.b16 %v3484
        %v4283 = vunpack.c.l.b16 %v3485
        %v4284 = vunpack.c.h.b16 %v3485
        %v4285 = vunpack.c.l.b16 %v3486
        %v4286 = vunpack.c.h.b16 %v3486
        %v4287 = vunpack.c.l.b16 %v3487
        %v4288 = vunpack.c.h.b16 %v3487
        %v4289 = vunpack.c.l.b16 %v3488
        %v4290 = vunpack.c.h.b16 %v3488
        %v4291 = vunpack.c.l.b16 %v3489
        %v4292 = vunpack.c.h.b16 %v3489
        %v4293 = vunpack.c.l.b16 %v3490
        %v4294 = vunpack.c.h.b16 %v3490
        %v4295 = vunpack.c.l.b16 %v3491
        %v4296 = vunpack.c.h.b16 %v3491
        %v4297 = vunpack.c.l.b16 %v3492
        %v4298 = vunpack.c.h.b16 %v3492
        %v4299 = vunpack.c.l.b16 %v3493
        %v4300 = vunpack.c.h.b16 %v3493
        %v4301 = vunpack.c.l.b16 %v3494
        %v4302 = vunpack.c.h.b16 %v3494
        %v4303 = vunpack.c.l.b16 %v3495
        %v4304 = vunpack.c.h.b16 %v3495
        %v4305 = vunpack.c.l.b16 %v3496
        %v4306 = vunpack.c.h.b16 %v3496
        %v4307 = vunpack.c.l.b16 %v3497
        %v4308 = vunpack.c.h.b16 %v3497
        %v4309 = vunpack.c.l.b16 %v3498
        %v4310 = vunpack.c.h.b16 %v3498
        %v4311 = vunpack.c.l.b16 %v3499
        %v4312 = vunpack.c.h.b16 %v3499
        %v4313 = vunpack.c.l.b16 %v3500
        %v4314 = vunpack.c.h.b16 %v3500
        %v4315 = vunpack.c.l.b16 %v3501
        %v4316 = vunpack.c.h.b16 %v3501
        %v4317 = vunpack.c.l.b16 %v3502
        %v4318 = vunpack.c.h.b16 %v3502
        %v4319 = vunpack.c.l.b16 %v3503
        %v4320 = vunpack.c.h.b16 %v3503
        %v4321 = vunpack.c.l.b16 %v3504
        %v4322 = vunpack.c.h.b16 %v3504
        %v4323 = vunpack.c.l.b16 %v3505
        %v4324 = vunpack.c.h.b16 %v3505
        %v4325 = vunpack.c.l.b16 %v3506
        %v4326 = vunpack.c.h.b16 %v3506
        %v4327 = vunpack.c.l.b16 %v3507
        %v4328 = vunpack.c.h.b16 %v3507
        %v4329 = vunpack.c.l.b16 %v3508
        %v4330 = vunpack.c.h.b16 %v3508
        %v4331 = vunpack.c.l.b16 %v3509
        %v4332 = vunpack.c.h.b16 %v3509
        %v4333 = vunpack.c.l.b16 %v3510
        %v4334 = vunpack.c.h.b16 %v3510
        %v4335 = vunpack.c.l.b16 %v3511
        %v4336 = vunpack.c.h.b16 %v3511
        %v4337 = vunpack.c.l.b16 %v3512
        %v4338 = vunpack.c.h.b16 %v3512
        %v4339 = vunpack.c.l.b16 %v3513
        %v4340 = vunpack.c.h.b16 %v3513
        %v4341 = vunpack.c.l.b16 %v3514
        %v4342 = vunpack.c.h.b16 %v3514
        %v4343 = vunpack.c.l.b16 %v3515
        %v4344 = vunpack.c.h.b16 %v3515
        %v4345 = vunpack.c.l.b16 %v3516
        %v4346 = vunpack.c.h.b16 %v3516
        %v4347 = vunpack.c.l.b16 %v3517
        %v4348 = vunpack.c.h.b16 %v3517
        %v4349 = vunpack.c.l.b16 %v3518
        %v4350 = vunpack.c.h.b16 %v3518
        %v4351 = vunpack.c.l.b16 %v3519
        %v4352 = vunpack.c.h.b16 %v3519
        %v4353 = vunpack.c.l.b16 %v3520
        %v4354 = vunpack.c.h.b16 %v3520
        %v4355 = vunpack.c.l.b16 %v3521
        %v4356 = vunpack.c.h.b16 %v3521
        %v4357 = vunpack.c.l.b16 %v3522
        %v4358 = vunpack.c.h.b16 %v3522
        %v4359 = vunpack.c.l.b16 %v3523
        %v4360 = vunpack.c.h.b16 %v3523
        %v4361 = vunpack.c.l.b16 %v3524
        %v4362 = vunpack.c.h.b16 %v3524
        %v4363 = vunpack.c.l.b16 %v3525
        %v4364 = vunpack.c.h.b16 %v3525
        %v4365 = vunpack.c.l.b16 %v3526
        %v4366 = vunpack.c.h.b16 %v3526
        %v4367 = vunpack.c.l.b16 %v3527
        %v4368 = vunpack.c.h.b16 %v3527
        %v4369 = vunpack.c.l.b16 %v3528
        %v4370 = vunpack.c.h.b16 %v3528
        %v4371 = vunpack.c.l.b16 %v3529
        %v4372 = vunpack.c.h.b16 %v3529
        %v4373 = vunpack.c.l.b16 %v3530
        %v4374 = vunpack.c.h.b16 %v3530
        %v4375 = vunpack.c.l.b16 %v3531
        %v4376 = vunpack.c.h.b16 %v3531
        %v4377 = vunpack.c.l.b16 %v3532
        %v4378 = vunpack.c.h.b16 %v3532
        %v4379 = vunpack.c.l.b16 %v3533
        %v4380 = vunpack.c.h.b16 %v3533
        %v4381 = vunpack.c.l.b16 %v3534
        %v4382 = vunpack.c.h.b16 %v3534
        %v4383 = vunpack.c.l.b16 %v3535
        %v4384 = vunpack.c.h.b16 %v3535
        %v4385 = vunpack.c.l.b16 %v3536
        %v4386 = vunpack.c.h.b16 %v3536
        %v4387 = vunpack.c.l.b16 %v3537
        %v4388 = vunpack.c.h.b16 %v3537
        %v4389 = vunpack.c.l.b16 %v3538
        %v4390 = vunpack.c.h.b16 %v3538
        %v4391 = vunpack.c.l.b16 %v3539
        %v4392 = vunpack.c.h.b16 %v3539
        %v4393 = vunpack.c.l.b16 %v3540
        %v4394 = vunpack.c.h.b16 %v3540
        %v4395 = vunpack.c.l.b16 %v3541
        %v4396 = vunpack.c.h.b16 %v3541
        %v4397 = vunpack.c.l.b16 %v3542
        %v4398 = vunpack.c.h.b16 %v3542
        %v4399 = vunpack.c.l.b16 %v3543
        %v4400 = vunpack.c.h.b16 %v3543
        %v4401 = vunpack.c.l.b16 %v3544
        %v4402 = vunpack.c.h.b16 %v3544
        %v4403 = vunpack.c.l.b16 %v3545
        %v4404 = vunpack.c.h.b16 %v3545
        %v4405 = vunpack.c.l.b16 %v3546
        %v4406 = vunpack.c.h.b16 %v3546
        %v4407 = vunpack.c.l.b16 %v3547
        %v4408 = vunpack.c.h.b16 %v3547
        %v4409 = vunpack.c.l.b16 %v3548
        %v4410 = vunpack.c.h.b16 %v3548
        %v4411 = vunpack.c.l.b16 %v3549
        %v4412 = vunpack.c.h.b16 %v3549
        %v4413 = vunpack.c.l.b16 %v3550
        %v4414 = vunpack.c.h.b16 %v3550
        %v4415 = vunpack.c.l.b16 %v3551
        %v4416 = vunpack.c.h.b16 %v3551
        %v4417 = vunpack.c.l.b16 %v3552
        %v4418 = vunpack.c.h.b16 %v3552
        %v4419 = vunpack.c.l.b16 %v3553
        %v4420 = vunpack.c.h.b16 %v3553
        %v4421 = vunpack.c.l.b16 %v3554
        %v4422 = vunpack.c.h.b16 %v3554
        %v4423 = vunpack.c.l.b16 %v3555
        %v4424 = vunpack.c.h.b16 %v3555
        %v4425 = vunpack.c.l.b16 %v3556
        %v4426 = vunpack.c.h.b16 %v3556
        %v4427 = vunpack.c.l.b16 %v3557
        %v4428 = vunpack.c.h.b16 %v3557
        %v4429 = vunpack.c.l.b16 %v3558
        %v4430 = vunpack.c.h.b16 %v3558
        %v4431 = vunpack.c.l.b16 %v3559
        %v4432 = vunpack.c.h.b16 %v3559
        %v4433 = vunpack.c.l.b16 %v3560
        %v4434 = vunpack.c.h.b16 %v3560
        %v4435 = vunpack.c.l.b16 %v3561
        %v4436 = vunpack.c.h.b16 %v3561
        %v4437 = vunpack.c.l.b16 %v3562
        %v4438 = vunpack.c.h.b16 %v3562
        %v4439 = vunpack.c.l.b16 %v3563
        %v4440 = vunpack.c.h.b16 %v3563
        %v4441 = vunpack.c.l.b16 %v3564
        %v4442 = vunpack.c.h.b16 %v3564
        %v4443 = vunpack.c.l.b16 %v3565
        %v4444 = vunpack.c.h.b16 %v3565
        %v4445 = vunpack.c.l.b16 %v3566
        %v4446 = vunpack.c.h.b16 %v3566
        %v4447 = vunpack.c.l.b16 %v3567
        %v4448 = vunpack.c.h.b16 %v3567
        %v4449 = vunpack.c.l.b16 %v3568
        %v4450 = vunpack.c.h.b16 %v3568
        %v4451 = vunpack.c.l.b16 %v3569
        %v4452 = vunpack.c.h.b16 %v3569
        %v4453 = vunpack.c.l.b16 %v3570
        %v4454 = vunpack.c.h.b16 %v3570
        %v4455 = vunpack.c.l.b16 %v3571
        %v4456 = vunpack.c.h.b16 %v3571
        %v4457 = vunpack.c.l.b16 %v3572
        %v4458 = vunpack.c.h.b16 %v3572
        %v4459 = vunpack.c.l.b16 %v3573
        %v4460 = vunpack.c.h.b16 %v3573
        %v4461 = vunpack.c.l.b16 %v3574
        %v4462 = vunpack.c.h.b16 %v3574
        %v4463 = vunpack.c.l.b16 %v3575
        %v4464 = vunpack.c.h.b16 %v3575
        %v4465 = vunpack.c.l.b16 %v3576
        %v4466 = vunpack.c.h.b16 %v3576
        %v4467 = vunpack.c.l.b16 %v3577
        %v4468 = vunpack.c.h.b16 %v3577
        %v4469 = vunpack.c.l.b16 %v3578
        %v4470 = vunpack.c.h.b16 %v3578
        %v4471 = vunpack.c.l.b16 %v3579
        %v4472 = vunpack.c.h.b16 %v3579
        %v4473 = vunpack.c.l.b16 %v3580
        %v4474 = vunpack.c.h.b16 %v3580
        %v4475 = vunpack.c.l.b16 %v3581
        %v4476 = vunpack.c.h.b16 %v3581
        %v4477 = vunpack.c.l.b16 %v3582
        %v4478 = vunpack.c.h.b16 %v3582
        %v4479 = vunpack.c.l.b16 %v3583
        %v4480 = vunpack.c.h.b16 %v3583
        %v4481 = vunpack.c.l.b16 %v3584
        %v4482 = vunpack.c.h.b16 %v3584
        %v4483 = vunpack.c.l.b16 %v3585
        %v4484 = vunpack.c.h.b16 %v3585
        %v4485 = vunpack.c.l.b16 %v3586
        %v4486 = vunpack.c.h.b16 %v3586
        %v4487 = vunpack.c.l.b16 %v3587
        %v4488 = vunpack.c.h.b16 %v3587
        %v4489 = vunpack.c.l.b16 %v3588
        %v4490 = vunpack.c.h.b16 %v3588
        %v4491 = vunpack.c.l.b16 %v3589
        %v4492 = vunpack.c.h.b16 %v3589
        %v4493 = vunpack.c.l.b16 %v3590
        %v4494 = vunpack.c.h.b16 %v3590
        %v4495 = vunpack.c.l.b16 %v3591
        %v4496 = vunpack.c.h.b16 %v3591
        %v4497 = vunpack.c.l.b16 %v3592
        %v4498 = vunpack.c.h.b16 %v3592
        %v4499 = vunpack.c.l.b16 %v3593
        %v4500 = vunpack.c.h.b16 %v3593
        %v4501 = vunpack.c.l.b16 %v3594
        %v4502 = vunpack.c.h.b16 %v3594
        %v4503 = vunpack.c.l.b16 %v3595
        %v4504 = vunpack.c.h.b16 %v3595
        %v4505 = vunpack.c.l.b16 %v3596
        %v4506 = vunpack.c.h.b16 %v3596
        %v4507 = vunpack.c.l.b16 %v3597
        %v4508 = vunpack.c.h.b16 %v3597
        %v4509 = vunpack.c.l.b16 %v3598
        %v4510 = vunpack.c.h.b16 %v3598
        %v4511 = vunpack.c.l.b16 %v3599
        %v4512 = vunpack.c.h.b16 %v3599
        %v4513 = vunpack.c.l.b16 %v3600
        %v4514 = vunpack.c.h.b16 %v3600
        %v4515 = vunpack.c.l.b16 %v3601
        %v4516 = vunpack.c.h.b16 %v3601
        %v4517 = vunpack.c.l.b16 %v3602
        %v4518 = vunpack.c.h.b16 %v3602
        %v4519 = vunpack.c.l.b16 %v3603
        %v4520 = vunpack.c.h.b16 %v3603
        %v4521 = vunpack.c.l.b16 %v3604
        %v4522 = vunpack.c.h.b16 %v3604
        %v4523 = vunpack.c.l.b16 %v3605
        %v4524 = vunpack.c.h.b16 %v3605
        %v4525 = vunpack.c.l.b16 %v3606
        %v4526 = vunpack.c.h.b16 %v3606
        %v4527 = vunpack.c.l.b16 %v3607
        %v4528 = vunpack.c.h.b16 %v3607
        %v4529 = vunpack.c.l.b16 %v3608
        %v4530 = vunpack.c.h.b16 %v3608
        %v4531 = vunpack.c.l.b16 %v3609
        %v4532 = vunpack.c.h.b16 %v3609
        %v4533 = vunpack.c.l.b16 %v3610
        %v4534 = vunpack.c.h.b16 %v3610
        %v4535 = vunpack.c.l.b16 %v3611
        %v4536 = vunpack.c.h.b16 %v3611
        %v4537 = vunpack.c.l.b16 %v3612
        %v4538 = vunpack.c.h.b16 %v3612
        %v4539 = vunpack.c.l.b16 %v3613
        %v4540 = vunpack.c.h.b16 %v3613
        %v4541 = vunpack.c.l.b16 %v3614
        %v4542 = vunpack.c.h.b16 %v3614
        %v4543 = vunpack.c.l.b16 %v3615
        %v4544 = vunpack.c.h.b16 %v3615
        %v4545 = vunpack.c.l.b16 %v3616
        %v4546 = vunpack.c.h.b16 %v3616
        %v4547 = vunpack.c.l.b16 %v3617
        %v4548 = vunpack.c.h.b16 %v3617
        %v4549 = vunpack.c.l.b16 %v3618
        %v4550 = vunpack.c.h.b16 %v3618
        %v4551 = vunpack.c.l.b16 %v3619
        %v4552 = vunpack.c.h.b16 %v3619
        %v4553 = vunpack.c.l.b16 %v3620
        %v4554 = vunpack.c.h.b16 %v3620
        %v4555 = vunpack.c.l.b16 %v3621
        %v4556 = vunpack.c.h.b16 %v3621
        %v4557 = vunpack.c.l.b16 %v3622
        %v4558 = vunpack.c.h.b16 %v3622
        %v4559 = vunpack.c.l.b16 %v3623
        %v4560 = vunpack.c.h.b16 %v3623
        %v4561 = vunpack.c.l.b16 %v3624
        %v4562 = vunpack.c.h.b16 %v3624
        %v4563 = vunpack.c.l.b16 %v3625
        %v4564 = vunpack.c.h.b16 %v3625
        %v4565 = vunpack.c.l.b16 %v3626
        %v4566 = vunpack.c.h.b16 %v3626
        %v4567 = vunpack.c.l.b16 %v3627
        %v4568 = vunpack.c.h.b16 %v3627
        %v4569 = vunpack.c.l.b16 %v3628
        %v4570 = vunpack.c.h.b16 %v3628
        %v4571 = vunpack.c.l.b16 %v3629
        %v4572 = vunpack.c.h.b16 %v3629
        %v4573 = vunpack.c.l.b16 %v3630
        %v4574 = vunpack.c.h.b16 %v3630
        %v4575 = vunpack.c.l.b16 %v3631
        %v4576 = vunpack.c.h.b16 %v3631
        %v4577 = vunpack.c.l.b16 %v3632
        %v4578 = vunpack.c.h.b16 %v3632
        %v4579 = vunpack.c.l.b16 %v3633
        %v4580 = vunpack.c.h.b16 %v3633
        %v4581 = vunpack.c.l.b16 %v3634
        %v4582 = vunpack.c.h.b16 %v3634
        %v4583 = vunpack.c.l.b16 %v3635
        %v4584 = vunpack.c.h.b16 %v3635
        %v4585 = vunpack.c.l.b16 %v3636
        %v4586 = vunpack.c.h.b16 %v3636
        %v4587 = vunpack.c.l.b16 %v3637
        %v4588 = vunpack.c.h.b16 %v3637
        %v4589 = vunpack.c.l.b16 %v3638
        %v4590 = vunpack.c.h.b16 %v3638
        %v4591 = vunpack.c.l.b16 %v3639
        %v4592 = vunpack.c.h.b16 %v3639
        %v4593 = vunpack.c.l.b16 %v3640
        %v4594 = vunpack.c.h.b16 %v3640
        %v4595 = vunpack.c.l.b16 %v3641
        %v4596 = vunpack.c.h.b16 %v3641
        %v4597 = vunpack.c.l.b16 %v3642
        %v4598 = vunpack.c.h.b16 %v3642
        %v4599 = vunpack.c.l.b16 %v3643
        %v4600 = vunpack.c.h.b16 %v3643
        %v4601 = vunpack.c.l.b16 %v3644
        %v4602 = vunpack.c.h.b16 %v3644
        %v4603 = vunpack.c.l.b16 %v3645
        %v4604 = vunpack.c.h.b16 %v3645
        %v4605 = vunpack.c.l.b16 %v3646
        %v4606 = vunpack.c.h.b16 %v3646
        %v4607 = vunpack.c.l.b16 %v3647
        %v4608 = vunpack.c.h.b16 %v3647
        %v4609 = vunpack.c.l.b16 %v3648
        %v4610 = vunpack.c.h.b16 %v3648
        %v4611 = vunpack.c.l.b16 %v3649
        %v4612 = vunpack.c.h.b16 %v3649
        %v4613 = vunpack.c.l.b16 %v3650
        %v4614 = vunpack.c.h.b16 %v3650
        %v4615 = vunpack.c.l.b16 %v3651
        %v4616 = vunpack.c.h.b16 %v3651
        %v4617 = vunpack.c.l.b16 %v3652
        %v4618 = vunpack.c.h.b16 %v3652
        %v4619 = vunpack.c.l.b16 %v3653
        %v4620 = vunpack.c.h.b16 %v3653
        %v4621 = vunpack.c.l.b16 %v3654
        %v4622 = vunpack.c.h.b16 %v3654
        %v4623 = vunpack.c.l.b16 %v3655
        %v4624 = vunpack.c.h.b16 %v3655
        %v4625 = vunpack.c.l.b16 %v3656
        %v4626 = vunpack.c.h.b16 %v3656
        %v4627 = vunpack.c.l.b16 %v3657
        %v4628 = vunpack.c.h.b16 %v3657
        %v4629 = vunpack.c.l.b16 %v3658
        %v4630 = vunpack.c.h.b16 %v3658
        %v4631 = vunpack.c.l.b16 %v3659
        %v4632 = vunpack.c.h.b16 %v3659
        %v4633 = vunpack.c.l.b16 %v3660
        %v4634 = vunpack.c.h.b16 %v3660
        %v4635 = vunpack.c.l.b16 %v3661
        %v4636 = vunpack.c.h.b16 %v3661
        %v4637 = vunpack.c.l.b16 %v3662
        %v4638 = vunpack.c.h.b16 %v3662
        %v4639 = vunpack.c.l.b16 %v3663
        %v4640 = vunpack.c.h.b16 %v3663
        %v4641 = vunpack.c.l.b16 %v3664
        %v4642 = vunpack.c.h.b16 %v3664
        %v4643 = vunpack.c.l.b16 %v3665
        %v4644 = vunpack.c.h.b16 %v3665
        %v4645 = vunpack.c.l.b16 %v3666
        %v4646 = vunpack.c.h.b16 %v3666
        %v4647 = vunpack.c.l.b16 %v3667
        %v4648 = vunpack.c.h.b16 %v3667
        %v4649 = vunpack.c.l.b16 %v3668
        %v4650 = vunpack.c.h.b16 %v3668
        %v4651 = vunpack.c.l.b16 %v3669
        %v4652 = vunpack.c.h.b16 %v3669
        %v4653 = vunpack.c.l.b16 %v3670
        %v4654 = vunpack.c.h.b16 %v3670
        %v4655 = vunpack.c.l.b16 %v3671
        %v4656 = vunpack.c.h.b16 %v3671
        %v4657 = vunpack.c.l.b16 %v3672
        %v4658 = vunpack.c.h.b16 %v3672
        %v4659 = vunpack.c.l.b16 %v3673
        %v4660 = vunpack.c.h.b16 %v3673
        %v4661 = vunpack.c.l.b16 %v3674
        %v4662 = vunpack.c.h.b16 %v3674
        %v4663 = vunpack.c.l.b16 %v3675
        %v4664 = vunpack.c.h.b16 %v3675
        %v4665 = vunpack.c.l.b16 %v3676
        %v4666 = vunpack.c.h.b16 %v3676
        %v4667 = vunpack.c.l.b16 %v3677
        %v4668 = vunpack.c.h.b16 %v3677
        %v4669 = vunpack.c.l.b16 %v3678
        %v4670 = vunpack.c.h.b16 %v3678
        %v4671 = vunpack.c.l.b16 %v3679
        %v4672 = vunpack.c.h.b16 %v3679
        %v4673 = vunpack.c.l.b16 %v3680
        %v4674 = vunpack.c.h.b16 %v3680
        %v4675 = vunpack.c.l.b16 %v3681
        %v4676 = vunpack.c.h.b16 %v3681
        %v4677 = vunpack.c.l.b16 %v3682
        %v4678 = vunpack.c.h.b16 %v3682
        %v4679 = vunpack.c.l.b16 %v3683
        %v4680 = vunpack.c.h.b16 %v3683
        %v4681 = vunpack.c.l.b16 %v3684
        %v4682 = vunpack.c.h.b16 %v3684
        %v4683 = vunpack.c.l.b16 %v3685
        %v4684 = vunpack.c.h.b16 %v3685
        %v4685 = vunpack.c.l.b16 %v3686
        %v4686 = vunpack.c.h.b16 %v3686
        %v4687 = vunpack.c.l.b16 %v3687
        %v4688 = vunpack.c.h.b16 %v3687
        %v4689 = vunpack.c.l.b16 %v3688
        %v4690 = vunpack.c.h.b16 %v3688
        %v4691 = vunpack.c.l.b16 %v3689
        %v4692 = vunpack.c.h.b16 %v3689
        %v4693 = vunpack.c.l.b16 %v3690
        %v4694 = vunpack.c.h.b16 %v3690
        %v4695 = vunpack.c.l.b16 %v3691
        %v4696 = vunpack.c.h.b16 %v3691
        %v4697 = vunpack.c.l.b16 %v3692
        %v4698 = vunpack.c.h.b16 %v3692
        %v4699 = vunpack.c.l.b16 %v3693
        %v4700 = vunpack.c.h.b16 %v3693
        %v4701 = vunpack.c.l.b16 %v3694
        %v4702 = vunpack.c.h.b16 %v3694
        %v4703 = vunpack.c.l.b16 %v3695
        %v4704 = vunpack.c.h.b16 %v3695
        %v4705 = vunpack.c.l.b16 %v3696
        %v4706 = vunpack.c.h.b16 %v3696
        %v4707 = vunpack.c.l.b16 %v3697
        %v4708 = vunpack.c.h.b16 %v3697
        %v4709 = vunpack.c.l.b16 %v3698
        %v4710 = vunpack.c.h.b16 %v3698
        %v4711 = vunpack.c.l.b16 %v3699
        %v4712 = vunpack.c.h.b16 %v3699
        %v4713 = vunpack.c.l.b16 %v3700
        %v4714 = vunpack.c.h.b16 %v3700
        %v4715 = vpack.c.b16 %v4085, %v4075
        %v4716 = vpack.c.b16 %v4086, %v4076
        %v4717 = vpack.c.b16 %v4087, %v4077
        %v4718 = vpack.c.b16 %v4088, %v4078
        %v4719 = vpack.c.b16 %v4089, %v4079
        %v4720 = vpack.c.b16 %v4090, %v4080
        %v4721 = vpack.c.b16 %v4091, %v4081
        %v4722 = vpack.c.b16 %v4092, %v4082
        %v4723 = vpack.c.b16 %v4093, %v4083
        %v4724 = vpack.c.b16 %v4094, %v4084
        %v4725 = vpack.c.b16 %v4105, %v4095
        %v4726 = vpack.c.b16 %v4106, %v4096
        %v4727 = vpack.c.b16 %v4107, %v4097
        %v4728 = vpack.c.b16 %v4108, %v4098
        %v4729 = vpack.c.b16 %v4109, %v4099
        %v4730 = vpack.c.b16 %v4110, %v4100
        %v4731 = vpack.c.b16 %v4111, %v4101
        %v4732 = vpack.c.b16 %v4112, %v4102
        %v4733 = vpack.c.b16 %v4113, %v4103
        %v4734 = vpack.c.b16 %v4114, %v4104
        %v4735 = vpack.c.b16 %v4125, %v4115
        %v4736 = vpack.c.b16 %v4126, %v4116
        %v4737 = vpack.c.b16 %v4127, %v4117
        %v4738 = vpack.c.b16 %v4128, %v4118
        %v4739 = vpack.c.b16 %v4129, %v4119
        %v4740 = vpack.c.b16 %v4130, %v4120
        %v4741 = vpack.c.b16 %v4131, %v4121
        %v4742 = vpack.c.b16 %v4132, %v4122
        %v4743 = vpack.c.b16 %v4133, %v4123
        %v4744 = vpack.c.b16 %v4134, %v4124
        %v4745 = vpack.c.b16 %v4145, %v4135
        %v4746 = vpack.c.b16 %v4146, %v4136
        %v4747 = vpack.c.b16 %v4147, %v4137
        %v4748 = vpack.c.b16 %v4148, %v4138
        %v4749 = vpack.c.b16 %v4149, %v4139
        %v4750 = vpack.c.b16 %v4150, %v4140
        %v4751 = vpack.c.b16 %v4151, %v4141
        %v4752 = vpack.c.b16 %v4152, %v4142
        %v4753 = vpack.c.b16 %v4153, %v4143
        %v4754 = vpack.c.b16 %v4154, %v4144
        %v4755 = vpack.c.b16 %v4165, %v4155
        %v4756 = vpack.c.b16 %v4166, %v4156
        %v4757 = vpack.c.b16 %v4167, %v4157
        %v4758 = vpack.c.b16 %v4168, %v4158
        %v4759 = vpack.c.b16 %v4169, %v4159
        %v4760 = vpack.c.b16 %v4170, %v4160
        %v4761 = vpack.c.b16 %v4171, %v4161
        %v4762 = vpack.c.b16 %v4172, %v4162
        %v4763 = vpack.c.b16 %v4173, %v4163
        %v4764 = vpack.c.b16 %v4174, %v4164
        %v4765 = vpack.c.b16 %v4185, %v4175
        %v4766 = vpack.c.b16 %v4186, %v4176
        %v4767 = vpack.c.b16 %v4187, %v4177
        %v4768 = vpack.c.b16 %v4188, %v4178
        %v4769 = vpack.c.b16 %v4189, %v4179
        %v4770 = vpack.c.b16 %v4190, %v4180
        %v4771 = vpack.c.b16 %v4191, %v4181
        %v4772 = vpack.c.b16 %v4192, %v4182
        %v4773 = vpack.c.b16 %v4193, %v4183
        %v4774 = vpack.c.b16 %v4194, %v4184
        %v4775 = vpack.c.b16 %v4205, %v4195
        %v4776 = vpack.c.b16 %v4206, %v4196
        %v4777 = vpack.c.b16 %v4207, %v4197
        %v4778 = vpack.c.b16 %v4208, %v4198
        %v4779 = vpack.c.b16 %v4209, %v4199
        %v4780 = vpack.c.b16 %v4210, %v4200
        %v4781 = vpack.c.b16 %v4211, %v4201
        %v4782 = vpack.c.b16 %v4212, %v4202
        %v4783 = vpack.c.b16 %v4213, %v4203
        %v4784 = vpack.c.b16 %v4214, %v4204
        %v4785 = vpack.c.b16 %v4225, %v4215
        %v4786 = vpack.c.b16 %v4226, %v4216
        %v4787 = vpack.c.b16 %v4227, %v4217
        %v4788 = vpack.c.b16 %v4228, %v4218
        %v4789 = vpack.c.b16 %v4229, %v4219
        %v4790 = vpack.c.b16 %v4230, %v4220
        %v4791 = vpack.c.b16 %v4231, %v4221
        %v4792 = vpack.c.b16 %v4232, %v4222
        %v4793 = vpack.c.b16 %v4233, %v4223
        %v4794 = vpack.c.b16 %v4234, %v4224
        %v4795 = vpack.c.b16 %v4245, %v4235
        %v4796 = vpack.c.b16 %v4246, %v4236
        %v4797 = vpack.c.b16 %v4247, %v4237
        %v4798 = vpack.c.b16 %v4248, %v4238
        %v4799 = vpack.c.b16 %v4249, %v4239
        %v4800 = vpack.c.b16 %v4250, %v4240
        %v4801 = vpack.c.b16 %v4251, %v4241
        %v4802 = vpack.c.b16 %v4252, %v4242
        %v4803 = vpack.c.b16 %v4253, %v4243
        %v4804 = vpack.c.b16 %v4254, %v4244
        %v4805 = vpack.c.b16 %v4265, %v4255
        %v4806 = vpack.c.b16 %v4266, %v4256
        %v4807 = vpack.c.b16 %v4267, %v4257
        %v4808 = vpack.c.b16 %v4268, %v4258
        %v4809 = vpack.c.b16 %v4269, %v4259
        %v4810 = vpack.c.b16 %v4270, %v4260
        %v4811 = vpack.c.b16 %v4271, %v4261
        %v4812 = vpack.c.b16 %v4272, %v4262
        %v4813 = vpack.c.b16 %v4273, %v4263
        %v4814 = vpack.c.b16 %v4274, %v4264
        %v4815 = vpack.c.b16 %v4285, %v4275
        %v4816 = vpack.c.b16 %v4286, %v4276
        %v4817 = vpack.c.b16 %v4287, %v4277
        %v4818 = vpack.c.b16 %v4288, %v4278
        %v4819 = vpack.c.b16 %v4289, %v4279
        %v4820 = vpack.c.b16 %v4290, %v4280
        %v4821 = vpack.c.b16 %v4291, %v4281
        %v4822 = vpack.c.b16 %v4292, %v4282
        %v4823 = vpack.c.b16 %v4293, %v4283
        %v4824 = vpack.c.b16 %v4294, %v4284
        %v4825 = vpack.c.b16 %v4305, %v4295
        %v4826 = vpack.c.b16 %v4306, %v4296
        %v4827 = vpack.c.b16 %v4307, %v4297
        %v4828 = vpack.c.b16 %v4308, %v4298
        %v4829 = vpack.c.b16 %v4309, %v4299
        %v4830 = vpack.c.b16 %v4310, %v4300
        %v4831 = vpack.c.b16 %v4311, %v4301
        %v4832 = vpack.c.b16 %v4312, %v4302
        %v4833 = vpack.c.b16 %v4313, %v4303
        %v4834 = vpack.c.b16 %v4314, %v4304
        %v4835 = vpack.c.b16 %v4325, %v4315
        %v4836 = vpack.c.b16 %v4326, %v4316
        %v4837 = vpack.c.b16 %v4327, %v4317
        %v4838 = vpack.c.b16 %v4328, %v4318
        %v4839 = vpack.c.b16 %v4329, %v4319
        %v4840 = vpack.c.b16 %v4330, %v4320
        %v4841 = vpack.c.b16 %v4331, %v4321
        %v4842 = vpack.c.b16 %v4332, %v4322
        %v4843 = vpack.c.b16 %v4333, %v4323
        %v4844 = vpack.c.b16 %v4334, %v4324
        %v4845 = vpack.c.b16 %v4345, %v4335
        %v4846 = vpack.c.b16 %v4346, %v4336
        %v4847 = vpack.c.b16 %v4347, %v4337
        %v4848 = vpack.c.b16 %v4348, %v4338
        %v4849 = vpack.c.b16 %v4349, %v4339
        %v4850 = vpack.c.b16 %v4350, %v4340
        %v4851 = vpack.c.b16 %v4351, %v4341
        %v4852 = vpack.c.b16 %v4352, %v4342
        %v4853 = vpack.c.b16 %v4353, %v4343
        %v4854 = vpack.c.b16 %v4354, %v4344
        %v4855 = vpack.c.b16 %v4365, %v4355
        %v4856 = vpack.c.b16 %v4366, %v4356
        %v4857 = vpack.c.b16 %v4367, %v4357
        %v4858 = vpack.c.b16 %v4368, %v4358
        %v4859 = vpack.c.b16 %v4369, %v4359
        %v4860 = vpack.c.b16 %v4370, %v4360
        %v4861 = vpack.c.b16 %v4371, %v4361
        %v4862 = vpack.c.b16 %v4372, %v4362
        %v4863 = vpack.c.b16 %v4373, %v4363
        %v4864 = vpack.c.b16 %v4374, %v4364
        %v4865 = vpack.c.b16 %v4385, %v4375
        %v4866 = vpack.c.b16 %v4386, %v4376
        %v4867 = vpack.c.b16 %v4387, %v4377
        %v4868 = vpack.c.b16 %v4388, %v4378
        %v4869 = vpack.c.b16 %v4389, %v4379
        %v4870 = vpack.c.b16 %v4390, %v4380
        %v4871 = vpack.c.b16 %v4391, %v4381
        %v4872 = vpack.c.b16 %v4392, %v4382
        %v4873 = vpack.c.b16 %v4393, %v4383
        %v4874 = vpack.c.b16 %v4394, %v4384
        %v4875 = vpack.c.b16 %v4405, %v4395
        %v4876 = vpack.c.b16 %v4406, %v4396
        %v4877 = vpack.c.b16 %v4407, %v4397
        %v4878 = vpack.c.b16 %v4408, %v4398
        %v4879 = vpack.c.b16 %v4409, %v4399
        %v4880 = vpack.c.b16 %v4410, %v4400
        %v4881 = vpack.c.b16 %v4411, %v4401
        %v4882 = vpack.c.b16 %v4412, %v4402
        %v4883 = vpack.c.b16 %v4413, %v4403
        %v4884 = vpack.c.b16 %v4414, %v4404
        %v4885 = vpack.c.b16 %v4425, %v4415
        %v4886 = vpack.c.b16 %v4426, %v4416
        %v4887 = vpack.c.b16 %v4427, %v4417
        %v4888 = vpack.c.b16 %v4428, %v4418
        %v4889 = vpack.c.b16 %v4429, %v4419
        %v4890 = vpack.c.b16 %v4430, %v4420
        %v4891 = vpack.c.b16 %v4431, %v4421
        %v4892 = vpack.c.b16 %v4432, %v4422
        %v4893 = vpack.c.b16 %v4433, %v4423
        %v4894 = vpack.c.b16 %v4434, %v4424
        %v4895 = vpack.c.b16 %v4445, %v4435
        %v4896 = vpack.c.b16 %v4446, %v4436
        %v4897 = vpack.c.b16 %v4447, %v4437
        %v4898 = vpack.c.b16 %v4448, %v4438
        %v4899 = vpack.c.b16 %v4449, %v4439
        %v4900 = vpack.c.b16 %v4450, %v4440
        %v4901 = vpack.c.b16 %v4451, %v4441
        %v4902 = vpack.c.b16 %v4452, %v4442
        %v4903 = vpack.c.b16 %v4453, %v4443
        %v4904 = vpack.c.b16 %v4454, %v4444
        %v4905 = vpack.c.b16 %v4465, %v4455
        %v4906 = vpack.c.b16 %v4466, %v4456
        %v4907 = vpack.c.b16 %v4467, %v4457
        %v4908 = vpack.c.b16 %v4468, %v4458
        %v4909 = vpack.c.b16 %v4469, %v4459
        %v4910 = vpack.c.b16 %v4470, %v4460
        %v4911 = vpack.c.b16 %v4471, %v4461
        %v4912 = vpack.c.b16 %v4472, %v4462
        %v4913 = vpack.c.b16 %v4473, %v4463
        %v4914 = vpack.c.b16 %v4474, %v4464
        %v4915 = vpack.c.b16 %v4485, %v4475
        %v4916 = vpack.c.b16 %v4486, %v4476
        %v4917 = vpack.c.b16 %v4487, %v4477
        %v4918 = vpack.c.b16 %v4488, %v4478
        %v4919 = vpack.c.b16 %v4489, %v4479
        %v4920 = vpack.c.b16 %v4490, %v4480
        %v4921 = vpack.c.b16 %v4491, %v4481
        %v4922 = vpack.c.b16 %v4492, %v4482
        %v4923 = vpack.c.b16 %v4493, %v4483
        %v4924 = vpack.c.b16 %v4494, %v4484
        %v4925 = vpack.c.b16 %v4505, %v4495
        %v4926 = vpack.c.b16 %v4506, %v4496
        %v4927 = vpack.c.b16 %v4507, %v4497
        %v4928 = vpack.c.b16 %v4508, %v4498
        %v4929 = vpack.c.b16 %v4509, %v4499
        %v4930 = vpack.c.b16 %v4510, %v4500
        %v4931 = vpack.c.b16 %v4511, %v4501
        %v4932 = vpack.c.b16 %v4512, %v4502
        %v4933 = vpack.c.b16 %v4513, %v4503
        %v4934 = vpack.c.b16 %v4514, %v4504
        %v4935 = vpack.c.b16 %v4525, %v4515
        %v4936 = vpack.c.b16 %v4526, %v4516
        %v4937 = vpack.c.b16 %v4527, %v4517
        %v4938 = vpack.c.b16 %v4528, %v4518
        %v4939 = vpack.c.b16 %v4529, %v4519
        %v4940 = vpack.c.b16 %v4530, %v4520
        %v4941 = vpack.c.b16 %v4531, %v4521
        %v4942 = vpack.c.b16 %v4532, %v4522
        %v4943 = vpack.c.b16 %v4533, %v4523
        %v4944 = vpack.c.b16 %v4534, %v4524
        %v4945 = vpack.c.b16 %v4545, %v4535
        %v4946 = vpack.c.b16 %v4546, %v4536
        %v4947 = vpack.c.b16 %v4547, %v4537
        %v4948 = vpack.c.b16 %v4548, %v4538
        %v4949 = vpack.c.b16 %v4549, %v4539
        %v4950 = vpack.c.b16 %v4550, %v4540
        %v4951 = vpack.c.b16 %v4551, %v4541
        %v4952 = vpack.c.b16 %v4552, %v4542
        %v4953 = vpack.c.b16 %v4553, %v4543
        %v4954 = vpack.c.b16 %v4554, %v4544
        %v4955 = vpack.c.b16 %v4565, %v4555
        %v4956 = vpack.c.b16 %v4566, %v4556
        %v4957 = vpack.c.b16 %v4567, %v4557
        %v4958 = vpack.c.b16 %v4568, %v4558
        %v4959 = vpack.c.b16 %v4569, %v4559
        %v4960 = vpack.c.b16 %v4570, %v4560
        %v4961 = vpack.c.b16 %v4571, %v4561
        %v4962 = vpack.c.b16 %v4572, %v4562
        %v4963 = vpack.c.b16 %v4573, %v4563
        %v4964 = vpack.c.b16 %v4574, %v4564
        %v4965 = vpack.c.b16 %v4585, %v4575
        %v4966 = vpack.c.b16 %v4586, %v4576
        %v4967 = vpack.c.b16 %v4587, %v4577
        %v4968 = vpack.c.b16 %v4588, %v4578
        %v4969 = vpack.c.b16 %v4589, %v4579
        %v4970 = vpack.c.b16 %v4590, %v4580
        %v4971 = vpack.c.b16 %v4591, %v4581
        %v4972 = vpack.c.b16 %v4592, %v4582
        %v4973 = vpack.c.b16 %v4593, %v4583
        %v4974 = vpack.c.b16 %v4594, %v4584
        %v4975 = vpack.c.b16 %v4605, %v4595
        %v4976 = vpack.c.b16 %v4606, %v4596
        %v4977 = vpack.c.b16 %v4607, %v4597
        %v4978 = vpack.c.b16 %v4608, %v4598
        %v4979 = vpack.c.b16 %v4609, %v4599
        %v4980 = vpack.c.b16 %v4610, %v4600
        %v4981 = vpack.c.b16 %v4611, %v4601
        %v4982 = vpack.c.b16 %v4612, %v4602
        %v4983 = vpack.c.b16 %v4613, %v4603
        %v4984 = vpack.c.b16 %v4614, %v4604
        %v4985 = vpack.c.b16 %v4625, %v4615
        %v4986 = vpack.c.b16 %v4626, %v4616
        %v4987 = vpack.c.b16 %v4627, %v4617
        %v4988 = vpack.c.b16 %v4628, %v4618
        %v4989 = vpack.c.b16 %v4629, %v4619
        %v4990 = vpack.c.b16 %v4630, %v4620
        %v4991 = vpack.c.b16 %v4631, %v4621
        %v4992 = vpack.c.b16 %v4632, %v4622
        %v4993 = vpack.c.b16 %v4633, %v4623
        %v4994 = vpack.c.b16 %v4634, %v4624
        %v4995 = vpack.c.b16 %v4645, %v4635
        %v4996 = vpack.c.b16 %v4646, %v4636
        %v4997 = vpack.c.b16 %v4647, %v4637
        %v4998 = vpack.c.b16 %v4648, %v4638
        %v4999 = vpack.c.b16 %v4649, %v4639
        %v5000 = vpack.c.b16 %v4650, %v4640
        %v5001 = vpack.c.b16 %v4651, %v4641
        %v5002 = vpack.c.b16 %v4652, %v4642
        %v5003 = vpack.c.b16 %v4653, %v4643
        %v5004 = vpack.c.b16 %v4654, %v4644
        %v5005 = vpack.c.b16 %v4665, %v4655
        %v5006 = vpack.c.b16 %v4666, %v4656
        %v5007 = vpack.c.b16 %v4667, %v4657
        %v5008 = vpack.c.b16 %v4668, %v4658
        %v5009 = vpack.c.b16 %v4669, %v4659
        %v5010 = vpack.c.b16 %v4670, %v4660
        %v5011 = vpack.c.b16 %v4671, %v4661
        %v5012 = vpack.c.b16 %v4672, %v4662
        %v5013 = vpack.c.b16 %v4673, %v4663
        %v5014 = vpack.c.b16 %v4674, %v4664
        %v5015 = vpack.c.b16 %v4685, %v4675
        %v5016 = vpack.c.b16 %v4686, %v4676
        %v5017 = vpack.c.b16 %v4687, %v4677
        %v5018 = vpack.c.b16 %v4688, %v4678
        %v5019 = vpack.c.b16 %v4689, %v4679
        %v5020 = vpack.c.b16 %v4690, %v4680
        %v5021 = vpack.c.b16 %v4691, %v4681
        %v5022 = vpack.c.b16 %v4692, %v4682
        %v5023 = vpack.c.b16 %v4693, %v4683
        %v5024 = vpack.c.b16 %v4694, %v4684
        %v5025 = vpack.c.b16 %v4705, %v4695
        %v5026 = vpack.c.b16 %v4706, %v4696
        %v5027 = vpack.c.b16 %v4707, %v4697
        %v5028 = vpack.c.b16 %v4708, %v4698
        %v5029 = vpack.c.b16 %v4709, %v4699
        %v5030 = vpack.c.b16 %v4710, %v4700
        %v5031 = vpack.c.b16 %v4711, %v4701
        %v5032 = vpack.c.b16 %v4712, %v4702
        %v5033 = vpack.c.b16 %v4713, %v4703
        %v5034 = vpack.c.b16 %v4714, %v4704
        %5355 = vmatprep.subr.bf16.mxu0 %v4786
        %5356 = vmatpush1.bf16.msra.mxu0 %v4785
        %5357 = vmatprep.subr.bf16.mxu0 %v4776
        %5358 = vmatpush1.bf16.msra.mxu0 %v4775
        %5359 = vmatprep.subr.bf16.mxu0 %v4766
        %5360 = vmatpush1.bf16.msra.mxu0 %v4765
        %5361 = vmatprep.subr.bf16.mxu0 %v4756
        %5362 = vmatpush1.bf16.msra.mxu0 %v4755
        %5363 = vmatprep.subr.bf16.mxu0 %v4746
        %5364 = vmatpush1.bf16.msra.mxu0 %v4745
        %5365 = vmatprep.subr.bf16.mxu0 %v4736
        %5366 = vmatpush1.bf16.msra.mxu0 %v4735
        %5367 = vmatprep.subr.bf16.mxu0 %v4726
        %5368 = vmatpush1.bf16.msra.mxu0 %v4725
        %5369 = vmatprep.subr.bf16.mxu0 %v4716
        %5370 = vmatpush1.bf16.msra.mxu0 %v4715
        %5371 = vmatprep.subr.bf16.mxu0 %v4866
        %5372 = vmatpush2.bf16.msra.mxu0 %v4865
        %5373 = vmatprep.subr.bf16.mxu0 %v4856
        %5374 = vmatpush2.bf16.msra.mxu0 %v4855
        %5375 = vmatprep.subr.bf16.mxu0 %v4846
        %5376 = vmatpush2.bf16.msra.mxu0 %v4845
        %5377 = vmatprep.subr.bf16.mxu0 %v4836
        %5378 = vmatpush2.bf16.msra.mxu0 %v4835
        %5379 = vmatprep.subr.bf16.mxu0 %v4826
        %5380 = vmatpush2.bf16.msra.mxu0 %v4825
        %5381 = vmatprep.subr.bf16.mxu0 %v4816
        %5382 = vmatpush2.bf16.msra.mxu0 %v4815
        %5383 = vmatprep.subr.bf16.mxu0 %v4806
        %5384 = vmatpush2.bf16.msra.mxu0 %v4805
        %5385 = vmatprep.subr.bf16.mxu0 %v4796
        %5386 = vmatpush2.bf16.msra.mxu0 %v4795
        %5387 = vmatprep.mubr.bf16.mxu0 %v3374
        %5388 = vmatmul.mubr.bf16.gmra.mxu0 %v3373
        %v5389 = vpop.f32.mrf.mxu0
        %v5390 = vadd.f32 %v3708, %v5389
        %v5391 = vpop.f32.mrf.mxu0
        %v5392 = vadd.f32 %v3712, %v5391
        %v5393 = vpop.f32.mrf.mxu0
        %v5394 = vadd.f32 %v3708, %v5393
        %v5395 = vpop.f32.mrf.mxu0
        %v5396 = vadd.f32 %v3712, %v5395
        %5397 = vmatprep.mubr.bf16.mxu0 %v3378
        %5398 = vmatmul.mubr.bf16.gmra.mxu0 %v3377
        %v5399 = vpop.f32.mrf.mxu0
        %v5400 = vadd.f32 %v3708, %v5399
        %v5401 = vpop.f32.mrf.mxu0
        %v5402 = vadd.f32 %v3712, %v5401
        %v5403 = vpop.f32.mrf.mxu0
        %v5404 = vadd.f32 %v3708, %v5403
        %v5405 = vpop.f32.mrf.mxu0
        %v5406 = vadd.f32 %v3712, %v5405
        %5407 = vdwg.mxu0
        %5408 = vmatprep.subr.bf16.mxu0 %v4946
        %5409 = vmatpush1.bf16.msra.mxu0 %v4945
        %5410 = vmatprep.subr.bf16.mxu0 %v4936
        %5411 = vmatpush1.bf16.msra.mxu0 %v4935
        %5412 = vmatprep.subr.bf16.mxu0 %v4926
        %5413 = vmatpush1.bf16.msra.mxu0 %v4925
        %5414 = vmatprep.subr.bf16.mxu0 %v4916
        %5415 = vmatpush1.bf16.msra.mxu0 %v4915
        %5416 = vmatprep.subr.bf16.mxu0 %v4906
        %5417 = vmatpush1.bf16.msra.mxu0 %v4905
        %5418 = vmatprep.subr.bf16.mxu0 %v4896
        %5419 = vmatpush1.bf16.msra.mxu0 %v4895
        %5420 = vmatprep.subr.bf16.mxu0 %v4886
        %5421 = vmatpush1.bf16.msra.mxu0 %v4885
        %5422 = vmatprep.subr.bf16.mxu0 %v4876
        %5423 = vmatpush1.bf16.msra.mxu0 %v4875
        %5424 = vmatprep.subr.bf16.mxu0 %v5026
        %5425 = vmatpush2.bf16.msra.mxu0 %v5025
        %5426 = vmatprep.subr.bf16.mxu0 %v5016
        %5427 = vmatpush2.bf16.msra.mxu0 %v5015
        %5428 = vmatprep.subr.bf16.mxu0 %v5006
        %5429 = vmatpush2.bf16.msra.mxu0 %v5005
        %5430 = vmatprep.subr.bf16.mxu0 %v4996
        %5431 = vmatpush2.bf16.msra.mxu0 %v4995
        %5432 = vmatprep.subr.bf16.mxu0 %v4986
        %5433 = vmatpush2.bf16.msra.mxu0 %v4985
        %5434 = vmatprep.subr.bf16.mxu0 %v4976
        %5435 = vmatpush2.bf16.msra.mxu0 %v4975
        %5436 = vmatprep.subr.bf16.mxu0 %v4966
        %5437 = vmatpush2.bf16.msra.mxu0 %v4965
        %5438 = vmatprep.subr.bf16.mxu0 %v4956
        %5439 = vmatpush2.bf16.msra.mxu0 %v4955
        %5440 = vmatprep.mubr.bf16.mxu0 %v3376
        %5441 = vmatmul.mubr.bf16.gmra.mxu0 %v3375
        %v5442 = vpop.f32.mrf.mxu0
        %v5443 = vadd.f32 %v5390, %v5442
        %v5444 = vpop.f32.mrf.mxu0
        %v5445 = vadd.f32 %v5392, %v5444
        %v5446 = vpop.f32.mrf.mxu0
        %v5447 = vadd.f32 %v5394, %v5446
        %v5448 = vpop.f32.mrf.mxu0
        %v5449 = vadd.f32 %v5396, %v5448
        %5450 = vmatprep.mubr.bf16.mxu0 %v3380
        %5451 = vmatmul.mubr.bf16.gmra.mxu0 %v3379
        %v5452 = vpop.f32.mrf.mxu0
        %v5453 = vadd.f32 %v5400, %v5452
        %v5454 = vpop.f32.mrf.mxu0
        %v5455 = vadd.f32 %v5402, %v5454
        %v5456 = vpop.f32.mrf.mxu0
        %v5457 = vadd.f32 %v5404, %v5456
        %v5458 = vpop.f32.mrf.mxu0
        %v5459 = vadd.f32 %v5406, %v5458
        %5460 = vdwg.mxu0
        %5461 = vmatprep.subr.bf16.mxu0 %v4788
        %5462 = vmatpush1.bf16.msra.mxu0 %v4787
        %5463 = vmatprep.subr.bf16.mxu0 %v4778
        %5464 = vmatpush1.bf16.msra.mxu0 %v4777
        %5465 = vmatprep.subr.bf16.mxu0 %v4768
        %5466 = vmatpush1.bf16.msra.mxu0 %v4767
        %5467 = vmatprep.subr.bf16.mxu0 %v4758
        %5468 = vmatpush1.bf16.msra.mxu0 %v4757
        %5469 = vmatprep.subr.bf16.mxu0 %v4748
        %5470 = vmatpush1.bf16.msra.mxu0 %v4747
        %5471 = vmatprep.subr.bf16.mxu0 %v4738
        %5472 = vmatpush1.bf16.msra.mxu0 %v4737
        %5473 = vmatprep.subr.bf16.mxu0 %v4728
        %5474 = vmatpush1.bf16.msra.mxu0 %v4727
        %5475 = vmatprep.subr.bf16.mxu0 %v4718
        %5476 = vmatpush1.bf16.msra.mxu0 %v4717
        %5477 = vmatprep.subr.bf16.mxu0 %v4868
        %5478 = vmatpush2.bf16.msra.mxu0 %v4867
        %5479 = vmatprep.subr.bf16.mxu0 %v4858
        %5480 = vmatpush2.bf16.msra.mxu0 %v4857
        %5481 = vmatprep.subr.bf16.mxu0 %v4848
        %5482 = vmatpush2.bf16.msra.mxu0 %v4847
        %5483 = vmatprep.subr.bf16.mxu0 %v4838
        %5484 = vmatpush2.bf16.msra.mxu0 %v4837
        %5485 = vmatprep.subr.bf16.mxu0 %v4828
        %5486 = vmatpush2.bf16.msra.mxu0 %v4827
        %5487 = vmatprep.subr.bf16.mxu0 %v4818
        %5488 = vmatpush2.bf16.msra.mxu0 %v4817
        %5489 = vmatprep.subr.bf16.mxu0 %v4808
        %5490 = vmatpush2.bf16.msra.mxu0 %v4807
        %5491 = vmatprep.subr.bf16.mxu0 %v4798
        %5492 = vmatpush2.bf16.msra.mxu0 %v4797
        %5493 = vmatprep.mubr.bf16.mxu0 %v3374
        %5494 = vmatmul.mubr.bf16.gmra.mxu0 %v3373
        %v5495 = vpop.f32.mrf.mxu0
        %v5496 = vadd.f32 %v3716, %v5495
        %v5497 = vpop.f32.mrf.mxu0
        %v5498 = vadd.f32 %v3720, %v5497
        %v5499 = vpop.f32.mrf.mxu0
        %v5500 = vadd.f32 %v3716, %v5499
        %v5501 = vpop.f32.mrf.mxu0
        %v5502 = vadd.f32 %v3720, %v5501
        %5503 = vmatprep.mubr.bf16.mxu0 %v3378
        %5504 = vmatmul.mubr.bf16.gmra.mxu0 %v3377
        %v5505 = vpop.f32.mrf.mxu0
        %v5506 = vadd.f32 %v3716, %v5505
        %v5507 = vpop.f32.mrf.mxu0
        %v5508 = vadd.f32 %v3720, %v5507
        %v5509 = vpop.f32.mrf.mxu0
        %v5510 = vadd.f32 %v3716, %v5509
        %v5511 = vpop.f32.mrf.mxu0
        %v5512 = vadd.f32 %v3720, %v5511
        %5513 = vdwg.mxu0
        %5514 = vmatprep.subr.bf16.mxu0 %v4948
        %5515 = vmatpush1.bf16.msra.mxu0 %v4947
        %5516 = vmatprep.subr.bf16.mxu0 %v4938
        %5517 = vmatpush1.bf16.msra.mxu0 %v4937
        %5518 = vmatprep.subr.bf16.mxu0 %v4928
        %5519 = vmatpush1.bf16.msra.mxu0 %v4927
        %5520 = vmatprep.subr.bf16.mxu0 %v4918
        %5521 = vmatpush1.bf16.msra.mxu0 %v4917
        %5522 = vmatprep.subr.bf16.mxu0 %v4908
        %5523 = vmatpush1.bf16.msra.mxu0 %v4907
        %5524 = vmatprep.subr.bf16.mxu0 %v4898
        %5525 = vmatpush1.bf16.msra.mxu0 %v4897
        %5526 = vmatprep.subr.bf16.mxu0 %v4888
        %5527 = vmatpush1.bf16.msra.mxu0 %v4887
        %5528 = vmatprep.subr.bf16.mxu0 %v4878
        %5529 = vmatpush1.bf16.msra.mxu0 %v4877
        %5530 = vmatprep.subr.bf16.mxu0 %v5028
        %5531 = vmatpush2.bf16.msra.mxu0 %v5027
        %5532 = vmatprep.subr.bf16.mxu0 %v5018
        %5533 = vmatpush2.bf16.msra.mxu0 %v5017
        %5534 = vmatprep.subr.bf16.mxu0 %v5008
        %5535 = vmatpush2.bf16.msra.mxu0 %v5007
        %5536 = vmatprep.subr.bf16.mxu0 %v4998
        %5537 = vmatpush2.bf16.msra.mxu0 %v4997
        %5538 = vmatprep.subr.bf16.mxu0 %v4988
        %5539 = vmatpush2.bf16.msra.mxu0 %v4987
        %5540 = vmatprep.subr.bf16.mxu0 %v4978
        %5541 = vmatpush2.bf16.msra.mxu0 %v4977
        %5542 = vmatprep.subr.bf16.mxu0 %v4968
        %5543 = vmatpush2.bf16.msra.mxu0 %v4967
        %5544 = vmatprep.subr.bf16.mxu0 %v4958
        %5545 = vmatpush2.bf16.msra.mxu0 %v4957
        %5546 = vmatprep.mubr.bf16.mxu0 %v3376
        %5547 = vmatmul.mubr.bf16.gmra.mxu0 %v3375
        %v5548 = vpop.f32.mrf.mxu0
        %v5549 = vadd.f32 %v5496, %v5548
        %v5550 = vpop.f32.mrf.mxu0
        %v5551 = vadd.f32 %v5498, %v5550
        %v5552 = vpop.f32.mrf.mxu0
        %v5553 = vadd.f32 %v5500, %v5552
        %v5554 = vpop.f32.mrf.mxu0
        %v5555 = vadd.f32 %v5502, %v5554
        %5556 = vmatprep.mubr.bf16.mxu0 %v3380
        %5557 = vmatmul.mubr.bf16.gmra.mxu0 %v3379
        %v5558 = vpop.f32.mrf.mxu0
        %v5559 = vadd.f32 %v5506, %v5558
        %v5560 = vpop.f32.mrf.mxu0
        %v5561 = vadd.f32 %v5508, %v5560
        %v5562 = vpop.f32.mrf.mxu0
        %v5563 = vadd.f32 %v5510, %v5562
        %v5564 = vpop.f32.mrf.mxu0
        %v5565 = vadd.f32 %v5512, %v5564
        %5566 = vdwg.mxu0
        %5567 = vmatprep.subr.bf16.mxu0 %v4790
        %5568 = vmatpush1.bf16.msra.mxu0 %v4789
        %5569 = vmatprep.subr.bf16.mxu0 %v4780
        %5570 = vmatpush1.bf16.msra.mxu0 %v4779
        %5571 = vmatprep.subr.bf16.mxu0 %v4770
        %5572 = vmatpush1.bf16.msra.mxu0 %v4769
        %5573 = vmatprep.subr.bf16.mxu0 %v4760
        %5574 = vmatpush1.bf16.msra.mxu0 %v4759
        %5575 = vmatprep.subr.bf16.mxu0 %v4750
        %5576 = vmatpush1.bf16.msra.mxu0 %v4749
        %5577 = vmatprep.subr.bf16.mxu0 %v4740
        %5578 = vmatpush1.bf16.msra.mxu0 %v4739
        %5579 = vmatprep.subr.bf16.mxu0 %v4730
        %5580 = vmatpush1.bf16.msra.mxu0 %v4729
        %5581 = vmatprep.subr.bf16.mxu0 %v4720
        %5582 = vmatpush1.bf16.msra.mxu0 %v4719
        %5583 = vmatprep.subr.bf16.mxu0 %v4870
        %5584 = vmatpush2.bf16.msra.mxu0 %v4869
        %5585 = vmatprep.subr.bf16.mxu0 %v4860
        %5586 = vmatpush2.bf16.msra.mxu0 %v4859
        %5587 = vmatprep.subr.bf16.mxu0 %v4850
        %5588 = vmatpush2.bf16.msra.mxu0 %v4849
        %5589 = vmatprep.subr.bf16.mxu0 %v4840
        %5590 = vmatpush2.bf16.msra.mxu0 %v4839
        %5591 = vmatprep.subr.bf16.mxu0 %v4830
        %5592 = vmatpush2.bf16.msra.mxu0 %v4829
        %5593 = vmatprep.subr.bf16.mxu0 %v4820
        %5594 = vmatpush2.bf16.msra.mxu0 %v4819
        %5595 = vmatprep.subr.bf16.mxu0 %v4810
        %5596 = vmatpush2.bf16.msra.mxu0 %v4809
        %5597 = vmatprep.subr.bf16.mxu0 %v4800
        %5598 = vmatpush2.bf16.msra.mxu0 %v4799
        %5599 = vmatprep.mubr.bf16.mxu0 %v3374
        %5600 = vmatmul.mubr.bf16.gmra.mxu0 %v3373
        %v5601 = vpop.f32.mrf.mxu0
        %v5602 = vadd.f32 %v3724, %v5601
        %v5603 = vpop.f32.mrf.mxu0
        %v5604 = vadd.f32 %v3728, %v5603
        %v5605 = vpop.f32.mrf.mxu0
        %v5606 = vadd.f32 %v3724, %v5605
        %v5607 = vpop.f32.mrf.mxu0
        %v5608 = vadd.f32 %v3728, %v5607
        %5609 = vmatprep.mubr.bf16.mxu0 %v3378
        %5610 = vmatmul.mubr.bf16.gmra.mxu0 %v3377
        %v5611 = vpop.f32.mrf.mxu0
        %v5612 = vadd.f32 %v3724, %v5611
        %v5613 = vpop.f32.mrf.mxu0
        %v5614 = vadd.f32 %v3728, %v5613
        %v5615 = vpop.f32.mrf.mxu0
        %v5616 = vadd.f32 %v3724, %v5615
        %v5617 = vpop.f32.mrf.mxu0
        %v5618 = vadd.f32 %v3728, %v5617
        %5619 = vdwg.mxu0
        %5620 = vmatprep.subr.bf16.mxu0 %v4950
        %5621 = vmatpush1.bf16.msra.mxu0 %v4949
        %5622 = vmatprep.subr.bf16.mxu0 %v4940
        %5623 = vmatpush1.bf16.msra.mxu0 %v4939
        %5624 = vmatprep.subr.bf16.mxu0 %v4930
        %5625 = vmatpush1.bf16.msra.mxu0 %v4929
        %5626 = vmatprep.subr.bf16.mxu0 %v4920
        %5627 = vmatpush1.bf16.msra.mxu0 %v4919
        %5628 = vmatprep.subr.bf16.mxu0 %v4910
        %5629 = vmatpush1.bf16.msra.mxu0 %v4909
        %5630 = vmatprep.subr.bf16.mxu0 %v4900
        %5631 = vmatpush1.bf16.msra.mxu0 %v4899
        %5632 = vmatprep.subr.bf16.mxu0 %v4890
        %5633 = vmatpush1.bf16.msra.mxu0 %v4889
        %5634 = vmatprep.subr.bf16.mxu0 %v4880
        %5635 = vmatpush1.bf16.msra.mxu0 %v4879
        %5636 = vmatprep.subr.bf16.mxu0 %v5030
        %5637 = vmatpush2.bf16.msra.mxu0 %v5029
        %5638 = vmatprep.subr.bf16.mxu0 %v5020
        %5639 = vmatpush2.bf16.msra.mxu0 %v5019
        %5640 = vmatprep.subr.bf16.mxu0 %v5010
        %5641 = vmatpush2.bf16.msra.mxu0 %v5009
        %5642 = vmatprep.subr.bf16.mxu0 %v5000
        %5643 = vmatpush2.bf16.msra.mxu0 %v4999
        %5644 = vmatprep.subr.bf16.mxu0 %v4990
        %5645 = vmatpush2.bf16.msra.mxu0 %v4989
        %5646 = vmatprep.subr.bf16.mxu0 %v4980
        %5647 = vmatpush2.bf16.msra.mxu0 %v4979
        %5648 = vmatprep.subr.bf16.mxu0 %v4970
        %5649 = vmatpush2.bf16.msra.mxu0 %v4969
        %5650 = vmatprep.subr.bf16.mxu0 %v4960
        %5651 = vmatpush2.bf16.msra.mxu0 %v4959
        %5652 = vmatprep.mubr.bf16.mxu0 %v3376
        %5653 = vmatmul.mubr.bf16.gmra.mxu0 %v3375
        %v5654 = vpop.f32.mrf.mxu0
        %v5655 = vadd.f32 %v5602, %v5654
        %v5656 = vpop.f32.mrf.mxu0
        %v5657 = vadd.f32 %v5604, %v5656
        %v5658 = vpop.f32.mrf.mxu0
        %v5659 = vadd.f32 %v5606, %v5658
        %v5660 = vpop.f32.mrf.mxu0
        %v5661 = vadd.f32 %v5608, %v5660
        %5662 = vmatprep.mubr.bf16.mxu0 %v3380
        %5663 = vmatmul.mubr.bf16.gmra.mxu0 %v3379
        %v5664 = vpop.f32.mrf.mxu0
        %v5665 = vadd.f32 %v5612, %v5664
        %v5666 = vpop.f32.mrf.mxu0
        %v5667 = vadd.f32 %v5614, %v5666
        %v5668 = vpop.f32.mrf.mxu0
        %v5669 = vadd.f32 %v5616, %v5668
        %v5670 = vpop.f32.mrf.mxu0
        %v5671 = vadd.f32 %v5618, %v5670
        %5672 = vdwg.mxu0
        %5673 = vmatprep.subr.bf16.mxu0 %v4792
        %5674 = vmatpush1.bf16.msra.mxu0 %v4791
        %5675 = vmatprep.subr.bf16.mxu0 %v4782
        %5676 = vmatpush1.bf16.msra.mxu0 %v4781
        %5677 = vmatprep.subr.bf16.mxu0 %v4772
        %5678 = vmatpush1.bf16.msra.mxu0 %v4771
        %5679 = vmatprep.subr.bf16.mxu0 %v4762
        %5680 = vmatpush1.bf16.msra.mxu0 %v4761
        %5681 = vmatprep.subr.bf16.mxu0 %v4752
        %5682 = vmatpush1.bf16.msra.mxu0 %v4751
        %5683 = vmatprep.subr.bf16.mxu0 %v4742
        %5684 = vmatpush1.bf16.msra.mxu0 %v4741
        %5685 = vmatprep.subr.bf16.mxu0 %v4732
        %5686 = vmatpush1.bf16.msra.mxu0 %v4731
        %5687 = vmatprep.subr.bf16.mxu0 %v4722
        %5688 = vmatpush1.bf16.msra.mxu0 %v4721
        %5689 = vmatprep.subr.bf16.mxu0 %v4872
        %5690 = vmatpush2.bf16.msra.mxu0 %v4871
        %5691 = vmatprep.subr.bf16.mxu0 %v4862
        %5692 = vmatpush2.bf16.msra.mxu0 %v4861
        %5693 = vmatprep.subr.bf16.mxu0 %v4852
        %5694 = vmatpush2.bf16.msra.mxu0 %v4851
        %5695 = vmatprep.subr.bf16.mxu0 %v4842
        %5696 = vmatpush2.bf16.msra.mxu0 %v4841
        %5697 = vmatprep.subr.bf16.mxu0 %v4832
        %5698 = vmatpush2.bf16.msra.mxu0 %v4831
        %5699 = vmatprep.subr.bf16.mxu0 %v4822
        %5700 = vmatpush2.bf16.msra.mxu0 %v4821
        %5701 = vmatprep.subr.bf16.mxu0 %v4812
        %5702 = vmatpush2.bf16.msra.mxu0 %v4811
        %5703 = vmatprep.subr.bf16.mxu0 %v4802
        %5704 = vmatpush2.bf16.msra.mxu0 %v4801
        %5705 = vmatprep.mubr.bf16.mxu0 %v3374
        %5706 = vmatmul.mubr.bf16.gmra.mxu0 %v3373
        %v5707 = vpop.f32.mrf.mxu0
        %v5708 = vadd.f32 %v3732, %v5707
        %v5709 = vpop.f32.mrf.mxu0
        %v5710 = vadd.f32 %v3736, %v5709
        %v5711 = vpop.f32.mrf.mxu0
        %v5712 = vadd.f32 %v3732, %v5711
        %v5713 = vpop.f32.mrf.mxu0
        %v5714 = vadd.f32 %v3736, %v5713
        %5715 = vmatprep.mubr.bf16.mxu0 %v3378
        %5716 = vmatmul.mubr.bf16.gmra.mxu0 %v3377
        %v5717 = vpop.f32.mrf.mxu0
        %v5718 = vadd.f32 %v3732, %v5717
        %v5719 = vpop.f32.mrf.mxu0
        %v5720 = vadd.f32 %v3736, %v5719
        %v5721 = vpop.f32.mrf.mxu0
        %v5722 = vadd.f32 %v3732, %v5721
        %v5723 = vpop.f32.mrf.mxu0
        %v5724 = vadd.f32 %v3736, %v5723
        %5725 = vdwg.mxu0
        %5726 = vmatprep.subr.bf16.mxu0 %v4952
        %5727 = vmatpush1.bf16.msra.mxu0 %v4951
        %5728 = vmatprep.subr.bf16.mxu0 %v4942
        %5729 = vmatpush1.bf16.msra.mxu0 %v4941
        %5730 = vmatprep.subr.bf16.mxu0 %v4932
        %5731 = vmatpush1.bf16.msra.mxu0 %v4931
        %5732 = vmatprep.subr.bf16.mxu0 %v4922
        %5733 = vmatpush1.bf16.msra.mxu0 %v4921
        %5734 = vmatprep.subr.bf16.mxu0 %v4912
        %5735 = vmatpush1.bf16.msra.mxu0 %v4911
        %5736 = vmatprep.subr.bf16.mxu0 %v4902
        %5737 = vmatpush1.bf16.msra.mxu0 %v4901
        %5738 = vmatprep.subr.bf16.mxu0 %v4892
        %5739 = vmatpush1.bf16.msra.mxu0 %v4891
        %5740 = vmatprep.subr.bf16.mxu0 %v4882
        %5741 = vmatpush1.bf16.msra.mxu0 %v4881
        %5742 = vmatprep.subr.bf16.mxu0 %v5032
        %5743 = vmatpush2.bf16.msra.mxu0 %v5031
        %5744 = vmatprep.subr.bf16.mxu0 %v5022
        %5745 = vmatpush2.bf16.msra.mxu0 %v5021
        %5746 = vmatprep.subr.bf16.mxu0 %v5012
        %5747 = vmatpush2.bf16.msra.mxu0 %v5011
        %5748 = vmatprep.subr.bf16.mxu0 %v5002
        %5749 = vmatpush2.bf16.msra.mxu0 %v5001
        %5750 = vmatprep.subr.bf16.mxu0 %v4992
        %5751 = vmatpush2.bf16.msra.mxu0 %v4991
        %5752 = vmatprep.subr.bf16.mxu0 %v4982
        %5753 = vmatpush2.bf16.msra.mxu0 %v4981
        %5754 = vmatprep.subr.bf16.mxu0 %v4972
        %5755 = vmatpush2.bf16.msra.mxu0 %v4971
        %5756 = vmatprep.subr.bf16.mxu0 %v4962
        %5757 = vmatpush2.bf16.msra.mxu0 %v4961
        %5758 = vmatprep.mubr.bf16.mxu0 %v3376
        %5759 = vmatmul.mubr.bf16.gmra.mxu0 %v3375
        %v5760 = vpop.f32.mrf.mxu0
        %v5761 = vadd.f32 %v5708, %v5760
        %v5762 = vpop.f32.mrf.mxu0
        %v5763 = vadd.f32 %v5710, %v5762
        %v5764 = vpop.f32.mrf.mxu0
        %v5765 = vadd.f32 %v5712, %v5764
        %v5766 = vpop.f32.mrf.mxu0
        %v5767 = vadd.f32 %v5714, %v5766
        %5768 = vmatprep.mubr.bf16.mxu0 %v3380
        %5769 = vmatmul.mubr.bf16.gmra.mxu0 %v3379
        %v5770 = vpop.f32.mrf.mxu0
        %v5771 = vadd.f32 %v5718, %v5770
        %v5772 = vpop.f32.mrf.mxu0
        %v5773 = vadd.f32 %v5720, %v5772
        %v5774 = vpop.f32.mrf.mxu0
        %v5775 = vadd.f32 %v5722, %v5774
        %v5776 = vpop.f32.mrf.mxu0
        %v5777 = vadd.f32 %v5724, %v5776
        %5778 = vdwg.mxu0
        %5779 = vmatprep.subr.bf16.mxu0 %v4794
        %5780 = vmatpush1.bf16.msra.mxu0 %v4793
        %5781 = vmatprep.subr.bf16.mxu0 %v4784
        %5782 = vmatpush1.bf16.msra.mxu0 %v4783
        %5783 = vmatprep.subr.bf16.mxu0 %v4774
        %5784 = vmatpush1.bf16.msra.mxu0 %v4773
        %5785 = vmatprep.subr.bf16.mxu0 %v4764
        %5786 = vmatpush1.bf16.msra.mxu0 %v4763
        %5787 = vmatprep.subr.bf16.mxu0 %v4754
        %5788 = vmatpush1.bf16.msra.mxu0 %v4753
        %5789 = vmatprep.subr.bf16.mxu0 %v4744
        %5790 = vmatpush1.bf16.msra.mxu0 %v4743
        %5791 = vmatprep.subr.bf16.mxu0 %v4734
        %5792 = vmatpush1.bf16.msra.mxu0 %v4733
        %5793 = vmatprep.subr.bf16.mxu0 %v4724
        %5794 = vmatpush1.bf16.msra.mxu0 %v4723
        %5795 = vmatprep.subr.bf16.mxu0 %v4874
        %5796 = vmatpush2.bf16.msra.mxu0 %v4873
        %5797 = vmatprep.subr.bf16.mxu0 %v4864
        %5798 = vmatpush2.bf16.msra.mxu0 %v4863
        %5799 = vmatprep.subr.bf16.mxu0 %v4854
        %5800 = vmatpush2.bf16.msra.mxu0 %v4853
        %5801 = vmatprep.subr.bf16.mxu0 %v4844
        %5802 = vmatpush2.bf16.msra.mxu0 %v4843
        %5803 = vmatprep.subr.bf16.mxu0 %v4834
        %5804 = vmatpush2.bf16.msra.mxu0 %v4833
        %5805 = vmatprep.subr.bf16.mxu0 %v4824
        %5806 = vmatpush2.bf16.msra.mxu0 %v4823
        %5807 = vmatprep.subr.bf16.mxu0 %v4814
        %5808 = vmatpush2.bf16.msra.mxu0 %v4813
        %5809 = vmatprep.subr.bf16.mxu0 %v4804
        %5810 = vmatpush2.bf16.msra.mxu0 %v4803
        %5811 = vmatprep.mubr.bf16.mxu0 %v3374
        %5812 = vmatmul.mubr.bf16.gmra.mxu0 %v3373
        %v5813 = vpop.f32.mrf.mxu0
        %v5814 = vadd.f32 %v3740, %v5813
        %v5815 = vpop.f32.mrf.mxu0
        %v5816 = vadd.f32 %v3744, %v5815
        %v5817 = vpop.f32.mrf.mxu0
        %v5818 = vadd.f32 %v3740, %v5817
        %v5819 = vpop.f32.mrf.mxu0
        %v5820 = vadd.f32 %v3744, %v5819
        %5821 = vmatprep.mubr.bf16.mxu0 %v3378
        %5822 = vmatmul.mubr.bf16.gmra.mxu0 %v3377
        %v5823 = vpop.f32.mrf.mxu0
        %v5824 = vadd.f32 %v3740, %v5823
        %v5825 = vpop.f32.mrf.mxu0
        %v5826 = vadd.f32 %v3744, %v5825
        %v5827 = vpop.f32.mrf.mxu0
        %v5828 = vadd.f32 %v3740, %v5827
        %v5829 = vpop.f32.mrf.mxu0
        %v5830 = vadd.f32 %v3744, %v5829
        %5831 = vdwg.mxu0
        %5832 = vmatprep.subr.bf16.mxu0 %v4954
        %5833 = vmatpush1.bf16.msra.mxu0 %v4953
        %5834 = vmatprep.subr.bf16.mxu0 %v4944
        %5835 = vmatpush1.bf16.msra.mxu0 %v4943
        %5836 = vmatprep.subr.bf16.mxu0 %v4934
        %5837 = vmatpush1.bf16.msra.mxu0 %v4933
        %5838 = vmatprep.subr.bf16.mxu0 %v4924
        %5839 = vmatpush1.bf16.msra.mxu0 %v4923
        %5840 = vmatprep.subr.bf16.mxu0 %v4914
        %5841 = vmatpush1.bf16.msra.mxu0 %v4913
        %5842 = vmatprep.subr.bf16.mxu0 %v4904
        %5843 = vmatpush1.bf16.msra.mxu0 %v4903
        %5844 = vmatprep.subr.bf16.mxu0 %v4894
        %5845 = vmatpush1.bf16.msra.mxu0 %v4893
        %5846 = vmatprep.subr.bf16.mxu0 %v4884
        %5847 = vmatpush1.bf16.msra.mxu0 %v4883
        %5848 = vmatprep.subr.bf16.mxu0 %v5034
        %5849 = vmatpush2.bf16.msra.mxu0 %v5033
        %5850 = vmatprep.subr.bf16.mxu0 %v5024
        %5851 = vmatpush2.bf16.msra.mxu0 %v5023
        %5852 = vmatprep.subr.bf16.mxu0 %v5014
        %5853 = vmatpush2.bf16.msra.mxu0 %v5013
        %5854 = vmatprep.subr.bf16.mxu0 %v5004
        %5855 = vmatpush2.bf16.msra.mxu0 %v5003
        %5856 = vmatprep.subr.bf16.mxu0 %v4994
        %5857 = vmatpush2.bf16.msra.mxu0 %v4993
        %5858 = vmatprep.subr.bf16.mxu0 %v4984
        %5859 = vmatpush2.bf16.msra.mxu0 %v4983
        %5860 = vmatprep.subr.bf16.mxu0 %v4974
        %5861 = vmatpush2.bf16.msra.mxu0 %v4973
        %5862 = vmatprep.subr.bf16.mxu0 %v4964
        %5863 = vmatpush2.bf16.msra.mxu0 %v4963
        %5864 = vmatprep.mubr.bf16.mxu0 %v3376
        %5865 = vmatmul.mubr.bf16.gmra.mxu0 %v3375
        %v5866 = vpop.f32.mrf.mxu0
        %v5867 = vadd.f32 %v5814, %v5866
        %v5868 = vpop.f32.mrf.mxu0
        %v5869 = vadd.f32 %v5816, %v5868
        %v5870 = vpop.f32.mrf.mxu0
        %v5871 = vadd.f32 %v5818, %v5870
        %v5872 = vpop.f32.mrf.mxu0
        %v5873 = vadd.f32 %v5820, %v5872
        %5874 = vmatprep.mubr.bf16.mxu0 %v3380
        %5875 = vmatmul.mubr.bf16.gmra.mxu0 %v3379
        %v5876 = vpop.f32.mrf.mxu0
        %v5877 = vadd.f32 %v5824, %v5876
        %v5878 = vpop.f32.mrf.mxu0
        %v5879 = vadd.f32 %v5826, %v5878
        %v5880 = vpop.f32.mrf.mxu0
        %v5881 = vadd.f32 %v5828, %v5880
        %v5882 = vpop.f32.mrf.mxu0
        %v5883 = vadd.f32 %v5830, %v5882
        %5884 = vdwg.mxu0
        %v5885 = vmul.f32 %v5443, 0.5
        %v5886 = vmul.f32 %v5445, 0.5
        %v5887 = vmul.f32 %v5549, 0.5
        %v5888 = vmul.f32 %v5551, 0.5
        %v5889 = vmul.f32 %v5655, 0.5
        %v5890 = vmul.f32 %v5657, 0.5
        %v5891 = vmul.f32 %v5761, 0.5
        %v5892 = vmul.f32 %v5763, 0.5
        %v5893 = vmul.f32 %v5867, 0.5
        %v5894 = vmul.f32 %v5869, 0.5
        %v5895 = vmul.f32 %v5447, 0.5
        %v5896 = vmul.f32 %v5449, 0.5
        %v5897 = vmul.f32 %v5553, 0.5
        %v5898 = vmul.f32 %v5555, 0.5
        %v5899 = vmul.f32 %v5659, 0.5
        %v5900 = vmul.f32 %v5661, 0.5
        %v5901 = vmul.f32 %v5765, 0.5
        %v5902 = vmul.f32 %v5767, 0.5
        %v5903 = vmul.f32 %v5871, 0.5
        %v5904 = vmul.f32 %v5873, 0.5
        %v5905 = vmul.f32 %v5453, 0.5
        %v5906 = vmul.f32 %v5455, 0.5
        %v5907 = vmul.f32 %v5559, 0.5
        %v5908 = vmul.f32 %v5561, 0.5
        %v5909 = vmul.f32 %v5665, 0.5
        %v5910 = vmul.f32 %v5667, 0.5
        %v5911 = vmul.f32 %v5771, 0.5
        %v5912 = vmul.f32 %v5773, 0.5
        %v5913 = vmul.f32 %v5877, 0.5
        %v5914 = vmul.f32 %v5879, 0.5
        %v5915 = vmul.f32 %v5457, 0.5
        %v5916 = vmul.f32 %v5459, 0.5
        %v5917 = vmul.f32 %v5563, 0.5
        %v5918 = vmul.f32 %v5565, 0.5
        %v5919 = vmul.f32 %v5669, 0.5
        %v5920 = vmul.f32 %v5671, 0.5
        %v5921 = vmul.f32 %v5775, 0.5
        %v5922 = vmul.f32 %v5777, 0.5
        %v5923 = vmul.f32 %v5881, 0.5
        %v5924 = vmul.f32 %v5883, 0.5
        %v5925 = vtanh.pop %v5885
        %v5926 = vtanh.pop %v5886
        %v5927 = vtanh.pop %v5887
        %v5928 = vtanh.pop %v5888
        %v5929 = vtanh.pop %v5889
        %v5930 = vtanh.pop %v5890
        %v5931 = vtanh.pop %v5891
        %v5932 = vtanh.pop %v5892
        %v5933 = vtanh.pop %v5893
        %v5934 = vtanh.pop %v5894
        %v5935 = vtanh.pop %v5895
        %v5936 = vtanh.pop %v5896
        %v5937 = vtanh.pop %v5897
        %v5938 = vtanh.pop %v5898
        %v5939 = vtanh.pop %v5899
        %v5940 = vtanh.pop %v5900
        %v5941 = vtanh.pop %v5901
        %v5942 = vtanh.pop %v5902
        %v5943 = vtanh.pop %v5903
        %v5944 = vtanh.pop %v5904
        %v5945 = vtanh.pop %v5905
        %v5946 = vtanh.pop %v5906
        %v5947 = vtanh.pop %v5907
        %v5948 = vtanh.pop %v5908
        %v5949 = vtanh.pop %v5909
        %v5950 = vtanh.pop %v5910
        %v5951 = vtanh.pop %v5911
        %v5952 = vtanh.pop %v5912
        %v5953 = vtanh.pop %v5913
        %v5954 = vtanh.pop %v5914
        %v5955 = vtanh.pop %v5915
        %v5956 = vtanh.pop %v5916
        %v5957 = vtanh.pop %v5917
        %v5958 = vtanh.pop %v5918
        %v5959 = vtanh.pop %v5919
        %v5960 = vtanh.pop %v5920
        %v5961 = vtanh.pop %v5921
        %v5962 = vtanh.pop %v5922
        %v5963 = vtanh.pop %v5923
        %v5964 = vtanh.pop %v5924
        %v5965 = vadd.f32 %v5925, 1.0
        %v5966 = vadd.f32 %v5926, 1.0
        %v5967 = vadd.f32 %v5927, 1.0
        %v5968 = vadd.f32 %v5928, 1.0
        %v5969 = vadd.f32 %v5929, 1.0
        %v5970 = vadd.f32 %v5930, 1.0
        %v5971 = vadd.f32 %v5931, 1.0
        %v5972 = vadd.f32 %v5932, 1.0
        %v5973 = vadd.f32 %v5933, 1.0
        %v5974 = vadd.f32 %v5934, 1.0
        %v5975 = vadd.f32 %v5935, 1.0
        %v5976 = vadd.f32 %v5936, 1.0
        %v5977 = vadd.f32 %v5937, 1.0
        %v5978 = vadd.f32 %v5938, 1.0
        %v5979 = vadd.f32 %v5939, 1.0
        %v5980 = vadd.f32 %v5940, 1.0
        %v5981 = vadd.f32 %v5941, 1.0
        %v5982 = vadd.f32 %v5942, 1.0
        %v5983 = vadd.f32 %v5943, 1.0
        %v5984 = vadd.f32 %v5944, 1.0
        %v5985 = vadd.f32 %v5945, 1.0
        %v5986 = vadd.f32 %v5946, 1.0
        %v5987 = vadd.f32 %v5947, 1.0
        %v5988 = vadd.f32 %v5948, 1.0
        %v5989 = vadd.f32 %v5949, 1.0
        %v5990 = vadd.f32 %v5950, 1.0
        %v5991 = vadd.f32 %v5951, 1.0
        %v5992 = vadd.f32 %v5952, 1.0
        %v5993 = vadd.f32 %v5953, 1.0
        %v5994 = vadd.f32 %v5954, 1.0
        %v5995 = vadd.f32 %v5955, 1.0
        %v5996 = vadd.f32 %v5956, 1.0
        %v5997 = vadd.f32 %v5957, 1.0
        %v5998 = vadd.f32 %v5958, 1.0
        %v5999 = vadd.f32 %v5959, 1.0
        %v6000 = vadd.f32 %v5960, 1.0
        %v6001 = vadd.f32 %v5961, 1.0
        %v6002 = vadd.f32 %v5962, 1.0
        %v6003 = vadd.f32 %v5963, 1.0
        %v6004 = vadd.f32 %v5964, 1.0
        %v6005 = vmul.f32 %v5965, 0.5
        %v6006 = vmul.f32 %v5966, 0.5
        %v6007 = vmul.f32 %v5967, 0.5
        %v6008 = vmul.f32 %v5968, 0.5
        %v6009 = vmul.f32 %v5969, 0.5
        %v6010 = vmul.f32 %v5970, 0.5
        %v6011 = vmul.f32 %v5971, 0.5
        %v6012 = vmul.f32 %v5972, 0.5
        %v6013 = vmul.f32 %v5973, 0.5
        %v6014 = vmul.f32 %v5974, 0.5
        %v6015 = vmul.f32 %v5975, 0.5
        %v6016 = vmul.f32 %v5976, 0.5
        %v6017 = vmul.f32 %v5977, 0.5
        %v6018 = vmul.f32 %v5978, 0.5
        %v6019 = vmul.f32 %v5979, 0.5
        %v6020 = vmul.f32 %v5980, 0.5
        %v6021 = vmul.f32 %v5981, 0.5
        %v6022 = vmul.f32 %v5982, 0.5
        %v6023 = vmul.f32 %v5983, 0.5
        %v6024 = vmul.f32 %v5984, 0.5
        %v6025 = vmul.f32 %v5985, 0.5
        %v6026 = vmul.f32 %v5986, 0.5
        %v6027 = vmul.f32 %v5987, 0.5
        %v6028 = vmul.f32 %v5988, 0.5
        %v6029 = vmul.f32 %v5989, 0.5
        %v6030 = vmul.f32 %v5990, 0.5
        %v6031 = vmul.f32 %v5991, 0.5
        %v6032 = vmul.f32 %v5992, 0.5
        %v6033 = vmul.f32 %v5993, 0.5
        %v6034 = vmul.f32 %v5994, 0.5
        %v6035 = vmul.f32 %v5995, 0.5
        %v6036 = vmul.f32 %v5996, 0.5
        %v6037 = vmul.f32 %v5997, 0.5
        %v6038 = vmul.f32 %v5998, 0.5
        %v6039 = vmul.f32 %v5999, 0.5
        %v6040 = vmul.f32 %v6000, 0.5
        %v6041 = vmul.f32 %v6001, 0.5
        %v6042 = vmul.f32 %v6002, 0.5
        %v6043 = vmul.f32 %v6003, 0.5
        %v6044 = vmul.f32 %v6004, 0.5
        %6045 = vst [vmem:[%s343] sm:$0xff] %v6005
        %6046 = vst [vmem:[%s343 + $0x8] sm:$0xff] %v6006
        %6047 = vst [vmem:[%s343 + $0x10] sm:$0xff] %v6007
        %6048 = vst [vmem:[%s343 + $0x18] sm:$0xff] %v6008
        %6049 = vst [vmem:[%s343 + $0x20] sm:$0xff] %v6009
        %6050 = vst [vmem:[%s343 + $0x28] sm:$0xff] %v6010
        %6051 = vst [vmem:[%s343 + $0x30] sm:$0xff] %v6011
        %6052 = vst [vmem:[%s343 + $0x38] sm:$0xff] %v6012
        %6053 = vst [vmem:[%s343 + $0x40] sm:$0xff] %v6013
        %6054 = vst.msk [vmem:[%s343 + $0x48] sm:$0xff] %vm2250, %v6014
        %6055 = vst [vmem:[%s343 + $0x50] sm:$0xff] %v6015
        %6056 = vst [vmem:[%s343 + $0x58] sm:$0xff] %v6016
        %6057 = vst [vmem:[%s343 + $0x60] sm:$0xff] %v6017
        %6058 = vst [vmem:[%s343 + $0x68] sm:$0xff] %v6018
        %6059 = vst [vmem:[%s343 + $0x70] sm:$0xff] %v6019
        %6060 = vst [vmem:[%s343 + $0x78] sm:$0xff] %v6020
        %6061 = vst [vmem:[%s343 + $0x80] sm:$0xff] %v6021
        %6062 = vst [vmem:[%s343 + $0x88] sm:$0xff] %v6022
        %6063 = vst [vmem:[%s343 + $0x90] sm:$0xff] %v6023
        %6064 = vst.msk [vmem:[%s343 + $0x98] sm:$0xff] %vm2250, %v6024
        %6065 = vst [vmem:[%s343 + $0xa0] sm:$0xff] %v6025
        %6066 = vst [vmem:[%s343 + $0xa8] sm:$0xff] %v6026
        %6067 = vst [vmem:[%s343 + $0xb0] sm:$0xff] %v6027
        %6068 = vst [vmem:[%s343 + $0xb8] sm:$0xff] %v6028
        %6069 = vst [vmem:[%s343 + $0xc0] sm:$0xff] %v6029
        %6070 = vst [vmem:[%s343 + $0xc8] sm:$0xff] %v6030
        %6071 = vst [vmem:[%s343 + $0xd0] sm:$0xff] %v6031
        %6072 = vst [vmem:[%s343 + $0xd8] sm:$0xff] %v6032
        %6073 = vst [vmem:[%s343 + $0xe0] sm:$0xff] %v6033
        %6074 = vst.msk [vmem:[%s343 + $0xe8] sm:$0xff] %vm2250, %v6034
        %6075 = vst [vmem:[%s343 + $0xf0] sm:$0xff] %v6035
        %6076 = vst [vmem:[%s343 + $0xf8] sm:$0xff] %v6036
        %6077 = vst [vmem:[%s343 + $0x100] sm:$0xff] %v6037
        %6078 = vst [vmem:[%s343 + $0x108] sm:$0xff] %v6038
        %6079 = vst [vmem:[%s343 + $0x110] sm:$0xff] %v6039
        %6080 = vst [vmem:[%s343 + $0x118] sm:$0xff] %v6040
        %6081 = vst [vmem:[%s343 + $0x120] sm:$0xff] %v6041
        %6082 = vst [vmem:[%s343 + $0x128] sm:$0xff] %v6042
        %6083 = vst [vmem:[%s343 + $0x130] sm:$0xff] %v6043
        %6084 = vst.msk [vmem:[%s343 + $0x138] sm:$0xff] %vm2250, %v6044
        %s6085 = sand.u32 %s225, 1
        %s6086 = scalar_lea.sflag [#allocation3], %s6085
        %s6087 = sand.u32 %s225, 1
        %s6088 = smul.addr %s6087, 320
        %s6089 = scalar_lea.vmem [#allocation2], %s6088
        // Predicated region
        $region57: #{tpu_custom_call.1} parent=55 // pred_check
          %p6090 = pneg %p235
        $region58: #{tpu_custom_call.1} parent=55 // pred_check_branch
          %6092 = sbr.rel (%p6090) target = $region60
        $region59: #{tpu_custom_call.1} parent=55 // pred_region
          %s6093 = smul.u32 4, %s23
          %s6094 = ssub.s32 13, %s6093
          %p6095 = scmp.lt.s32.totalorder %s6094, 4
          %s6096 = scalar_select %p6095, %s6094, 4
          %s6097 = smul.u32 128, %s6096
          %s6098 = smul.u32 %s6097, 10
          %s6100 = ssub.s32 5120, %s6098
          %6101 = vsyncadd %s6086, %s6100
          %p6102 = scmp.ne.s32.totalorder 0, %s6098
          %s6103 = smul.addr %s6093, 10
          %s6104 = smul.addr %s6103, 128
          %s6105 = scalar_lea.hbm %s9, %s6104
          %s6106 = smul.u32 80, %s6096
          %s6107 = sshll.u32 %s6089, 4
          %s6108 = int_to_ptr.vmem [resolvable:$true] %s6107
          %s6109 = sshll.u32 %s6106, 4
          %6113 = dma.vmem_to_hbm [thread:$0]  (%p6102), %s6108, %s6109, %s6105, %s6086, 1280, 1280, 80
        $region60: #{tpu_custom_call.1} parent=55 // pred_fallthru
          _
      $region56: #{tpu_custom_call.1} parent=5 // pred_fallthru
        _
      %p6114 = scmp.le.s32.totalorder 2, %s18
      // Predicated region
      $region61: #{tpu_custom_call.1} parent=5 // pred_check
        %p6115 = pneg %p6114
      $region62: #{tpu_custom_call.1} parent=5 // pred_check_branch
        %6117 = sbr.rel (%p6115) target = $region64
      $region63: #{tpu_custom_call.1} parent=5 // pred_region
        %s6118 = ssub.s32 %s18, 2
        // Predicated region
        $region65: #{tpu_custom_call.1} parent=63 // pred_check
          %p6119 = pneg %p241
        $region66: #{tpu_custom_call.1} parent=63 // pred_check_branch
          %6121 = sbr.rel (%p6119) target = $region68
        $region67: #{tpu_custom_call.1} parent=63 // pred_region
          %s6122 = sand.u32 %s226, 1
          %s6123 = scalar_lea.sflag [#allocation3], %s6122
          %s6124 = sand.u32 %s226, 1
          %s6125 = smul.addr %s6124, 320
          %s6126 = scalar_lea.vmem [#allocation2], %s6125
          %6127 = dma.done %s6123, 5120
        $region68: #{tpu_custom_call.1} parent=63 // pred_fallthru
          _
      $region64: #{tpu_custom_call.1} parent=5 // pred_fallthru
        _
    $region6: #{tpu_custom_call.1} parent=1 // loop_footer
      %s22 = sadd.s32 1, %s18
    $region7: #{tpu_custom_call.1} parent=1 // loop_footer_branch
      %17 = sbr.rel target = $region3
    $region8: #{tpu_custom_call.1} parent=1 // loop_exit
      _
    %6128 = vsyncpa [#allocation3], 1
    %s6129 = scalar_lea.sflag [#allocation3], 1
    %6130 = vsyncpa %s6129, 1

// kernel: tpu_custom_call.1
$region0: #{tpu_custom_call.1}
  #allocation0 [shape = 'u32[]', space=smem, size = 0x4, offset = 0x4, fixed_abs, tag = 'smem constant byte address 0x4 - core index']
  #allocation1 [shape = 'u32[144,128]{1,0:T(1,128)}', space=vmem, size = 0x12000, scoped, tag = 'internal scratch']
  %s0 = inlined_call_operand.vmem [shape: f32[100,1200], index: 0, kind: input, shape index: {}]
  %s1 = inlined_call_operand.vmem [shape: bf16[1200,512], index: 1, kind: input, shape index: {}]
  %s2 = inlined_call_operand.vmem [shape: f32[1,512], index: 2, kind: input, shape index: {}]
  %s3 = inlined_call_operand.vmem [shape: bf16[512,32], index: 3, kind: input, shape index: {}]
  %s4 = inlined_call_operand.vmem [shape: f32[1,32], index: 4, kind: input, shape index: {}]
  %s5 = inlined_call_operand.vmem [shape: bf16[32,512], index: 5, kind: input, shape index: {}]
  %s6 = inlined_call_operand.vmem [shape: f32[1,512], index: 6, kind: input, shape index: {}]
  %s7 = inlined_call_operand.vmem [shape: bf16[512,1200], index: 7, kind: input, shape index: {}]
  %s8 = inlined_call_operand.vmem [shape: f32[1,1200], index: 8, kind: input, shape index: {}]
  %s9 = inlined_call_operand.hbm [shape: f32[100,1200], index: 9, kind: output, shape index: {}]
  %s10 = sld [smem:[#allocation0]]
  $region69: #{tpu_custom_call.1} parent=0
    _
  %s12 = ssub.s32 1, %s10
  %s13 = scalar_select 0, %s12, %s10
  $region1: #{tpu_custom_call.1} parent=0
    #allocation2 [shape = 'u8[327680]{0}', space=vmem, size = 0x50000, scoped, tag = 'output window, operand 0']
    #allocation3 [shape = 's32[2]{0}', space=sflag, size = 0x8, scoped, tag = 'scoped memory for tpu_custom_call.1']
    %14 = vsyncpa [#allocation3], 0
    %s15 = scalar_lea.sflag [#allocation3], 1
    %16 = vsyncpa %s15, 0
    loop: start=0, step=1, limit=6
    $region2: #{tpu_custom_call.1} parent=1 // loop_pre_header
      _
    $region3: #{tpu_custom_call.1} parent=1 // loop_header
      %s18 = sphi 0, %s22
      %p19 = scmp.ge.s32.totalorder %s18, 6
      %s28 = sphi 0, %s30
      %s31 = sphi 0, %s28
      %s32 = sphi 0, %s31
      %s48 = sphi 0, %s32
      %s52 = sphi 0, %s52
      %s54 = sphi 0, %s52
      %s55 = sphi 0, %s54
      %s69 = sphi 0, %s55
      %s73 = sphi 0, %s73
      %s75 = sphi 0, %s73
      %s76 = sphi 0, %s75
      %s90 = sphi 0, %s76
      %s94 = sphi 0, %s94
      %s96 = sphi 0, %s94
      %s97 = sphi 0, %s96
      %s111 = sphi 0, %s97
      %s115 = sphi 0, %s115
      %s117 = sphi 0, %s115
      %s118 = sphi 0, %s117
      %s132 = sphi 0, %s118
      %s136 = sphi 0, %s136
      %s138 = sphi 0, %s136
      %s139 = sphi 0, %s138
      %s153 = sphi 0, %s139
      %s157 = sphi 0, %s157
      %s159 = sphi 0, %s157
      %s160 = sphi 0, %s159
      %s174 = sphi 0, %s160
      %s178 = sphi 0, %s178
      %s180 = sphi 0, %s178
      %s181 = sphi 0, %s180
      %s195 = sphi 0, %s181
      %s199 = sphi 0, %s199
      %s201 = sphi 0, %s199
      %s202 = sphi 0, %s201
      %s216 = sphi 0, %s202
      %s222 = sphi 0, %s224
      %s225 = sphi 0, %s222
      %s226 = sphi 0, %s225
      %s242 = sphi 0, %s226
    $region4: #{tpu_custom_call.1} parent=1 // loop_header_branch
      %21 = sbr.rel (%p19) target = $region8
    $region5: #{tpu_custom_call.1} parent=1 // loop_body
      %s23 = ssub.s32 %s18, 1
      %s24 = ssub.s32 %s18, 2
      %s25 = sadd.s32 %s18, 1
      %s26 = ssub.s32 %s18, %s25
      %p27 = scmp.eq.s32.totalorder %s26, 0
      %s29 = sadd.s32 %s28, 1
      %s30 = scalar_select %p27, %s28, %s29
      %p33 = pneg %p27
      %p34 = scmp.eq.s32.totalorder %s18, 3
      %p35 = por %p33, %p34
      %p36 = scmp.ne.s32.totalorder %s28, %s31
      %p37 = scmp.eq.s32.totalorder %s18, 0
      %p38 = por %p36, %p37
      %p39 = scmp.ne.s32.totalorder %s28, %s31
      %p40 = scmp.eq.s32.totalorder %s23, 3
      %p41 = por %p39, %p40
      %p42 = scmp.ne.s32.totalorder %s31, %s32
      %p43 = scmp.eq.s32.totalorder %s23, 0
      %p44 = por %p42, %p43
      %p45 = scmp.ne.s32.totalorder %s31, %s32
      %p46 = scmp.eq.s32.totalorder %s24, 3
      %p47 = por %p45, %p46
      %p49 = scmp.ne.s32.totalorder %s32, %s48
      %p50 = scmp.eq.s32.totalorder %s24, 0
      %p51 = por %p49, %p50
      %s53 = sadd.s32 %s52, 1
      %p56 = scmp.eq.s32.totalorder %s18, 3
      %p57 = scmp.ne.s32.totalorder %s52, %s54
      %p58 = scmp.eq.s32.totalorder %s18, 0
      %p59 = por %p57, %p58
      %p60 = scmp.ne.s32.totalorder %s52, %s54
      %p61 = scmp.eq.s32.totalorder %s23, 3
      %p62 = por %p60, %p61
      %p63 = scmp.ne.s32.totalorder %s54, %s55
      %p64 = scmp.eq.s32.totalorder %s23, 0
      %p65 = por %p63, %p64
      %p66 = scmp.ne.s32.totalorder %s54, %s55
      %p67 = scmp.eq.s32.totalorder %s24, 3
      %p68 = por %p66, %p67
      %p70 = scmp.ne.s32.totalorder %s55, %s69
      %p71 = scmp.eq.s32.totalorder %s24, 0
      %p72 = por %p70, %p71
      %s74 = sadd.s32 %s73, 1
      %p77 = scmp.eq.s32.totalorder %s18, 3
      %p78 = scmp.ne.s32.totalorder %s73, %s75
      %p79 = scmp.eq.s32.totalorder %s18, 0
      %p80 = por %p78, %p79
      %p81 = scmp.ne.s32.totalorder %s73, %s75
      %p82 = scmp.eq.s32.totalorder %s23, 3
      %p83 = por %p81, %p82
      %p84 = scmp.ne.s32.totalorder %s75, %s76
      %p85 = scmp.eq.s32.totalorder %s23, 0
      %p86 = por %p84, %p85
      %p87 = scmp.ne.s32.totalorder %s75, %s76
      %p88 = scmp.eq.s32.totalorder %s24, 3
      %p89 = por %p87, %p88
      %p91 = scmp.ne.s32.totalorder %s76, %s90
      %p92 = scmp.eq.s32.totalorder %s24, 0
      %p93 = por %p91, %p92
      %s95 = sadd.s32 %s94, 1
      %p98 = scmp.eq.s32.totalorder %s18, 3
      %p99 = scmp.ne.s32.totalorder %s94, %s96
      %p100 = scmp.eq.s32.totalorder %s18, 0
      %p101 = por %p99, %p100
      %p102 = scmp.ne.s32.totalorder %s94, %s96
      %p103 = scmp.eq.s32.totalorder %s23, 3
      %p104 = por %p102, %p103
      %p105 = scmp.ne.s32.totalorder %s96, %s97
      %p106 = scmp.eq.s32.totalorder %s23, 0
      %p107 = por %p105, %p106
      %p108 = scmp.ne.s32.totalorder %s96, %s97
      %p109 = scmp.eq.s32.totalorder %s24, 3
      %p110 = por %p108, %p109
      %p112 = scmp.ne.s32.totalorder %s97, %s111
      %p113 = scmp.eq.s32.totalorder %s24, 0
      %p114 = por %p112, %p113
      %s116 = sadd.s32 %s115, 1
      %p119 = scmp.eq.s32.totalorder %s18, 3
      %p120 = scmp.ne.s32.totalorder %s115, %s117
      %p121 = scmp.eq.s32.totalorder %s18, 0
      %p122 = por %p120, %p121
      %p123 = scmp.ne.s32.totalorder %s115, %s117
      %p124 = scmp.eq.s32.totalorder %s23, 3
      %p125 = por %p123, %p124
      %p126 = scmp.ne.s32.totalorder %s117, %s118
      %p127 = scmp.eq.s32.totalorder %s23, 0
      %p128 = por %p126, %p127
      %p129 = scmp.ne.s32.totalorder %s117, %s118
      %p130 = scmp.eq.s32.totalorder %s24, 3
      %p131 = por %p129, %p130
      %p133 = scmp.ne.s32.totalorder %s118, %s132
      %p134 = scmp.eq.s32.totalorder %s24, 0
      %p135 = por %p133, %p134
      %s137 = sadd.s32 %s136, 1
      %p140 = scmp.eq.s32.totalorder %s18, 3
      %p141 = scmp.ne.s32.totalorder %s136, %s138
      %p142 = scmp.eq.s32.totalorder %s18, 0
      %p143 = por %p141, %p142
      %p144 = scmp.ne.s32.totalorder %s136, %s138
      %p145 = scmp.eq.s32.totalorder %s23, 3
      %p146 = por %p144, %p145
      %p147 = scmp.ne.s32.totalorder %s138, %s139
      %p148 = scmp.eq.s32.totalorder %s23, 0
      %p149 = por %p147, %p148
      %p150 = scmp.ne.s32.totalorder %s138, %s139
      %p151 = scmp.eq.s32.totalorder %s24, 3
      %p152 = por %p150, %p151
      %p154 = scmp.ne.s32.totalorder %s139, %s153
      %p155 = scmp.eq.s32.totalorder %s24, 0
      %p156 = por %p154, %p155
      %s158 = sadd.s32 %s157, 1
      %p161 = scmp.eq.s32.totalorder %s18, 3
      %p162 = scmp.ne.s32.totalorder %s157, %s159
      %p163 = scmp.eq.s32.totalorder %s18, 0
      %p164 = por %p162, %p163
      %p165 = scmp.ne.s32.totalorder %s157, %s159
      %p166 = scmp.eq.s32.totalorder %s23, 3
      %p167 = por %p165, %p166
      %p168 = scmp.ne.s32.totalorder %s159, %s160
      %p169 = scmp.eq.s32.totalorder %s23, 0
      %p170 = por %p168, %p169
      %p171 = scmp.ne.s32.totalorder %s159, %s160
      %p172 = scmp.eq.s32.totalorder %s24, 3
      %p173 = por %p171, %p172
      %p175 = scmp.ne.s32.totalorder %s160, %s174
      %p176 = scmp.eq.s32.totalorder %s24, 0
      %p177 = por %p175, %p176
      %s179 = sadd.s32 %s178, 1
      %p182 = scmp.eq.s32.totalorder %s18, 3
      %p183 = scmp.ne.s32.totalorder %s178, %s180
      %p184 = scmp.eq.s32.totalorder %s18, 0
      %p185 = por %p183, %p184
      %p186 = scmp.ne.s32.totalorder %s178, %s180
      %p187 = scmp.eq.s32.totalorder %s23, 3
      %p188 = por %p186, %p187
      %p189 = scmp.ne.s32.totalorder %s180, %s181
      %p190 = scmp.eq.s32.totalorder %s23, 0
      %p191 = por %p189, %p190
      %p192 = scmp.ne.s32.totalorder %s180, %s181
      %p193 = scmp.eq.s32.totalorder %s24, 3
      %p194 = por %p192, %p193
      %p196 = scmp.ne.s32.totalorder %s181, %s195
      %p197 = scmp.eq.s32.totalorder %s24, 0
      %p198 = por %p196, %p197
      %s200 = sadd.s32 %s199, 1
      %p203 = scmp.eq.s32.totalorder %s18, 3
      %p204 = scmp.ne.s32.totalorder %s199, %s201
      %p205 = scmp.eq.s32.totalorder %s18, 0
      %p206 = por %p204, %p205
      %p207 = scmp.ne.s32.totalorder %s199, %s201
      %p208 = scmp.eq.s32.totalorder %s23, 3
      %p209 = por %p207, %p208
      %p210 = scmp.ne.s32.totalorder %s201, %s202
      %p211 = scmp.eq.s32.totalorder %s23, 0
      %p212 = por %p210, %p211
      %p213 = scmp.ne.s32.totalorder %s201, %s202
      %p214 = scmp.eq.s32.totalorder %s24, 3
      %p215 = por %p213, %p214
      %p217 = scmp.ne.s32.totalorder %s202, %s216
      %p218 = scmp.eq.s32.totalorder %s24, 0
      %p219 = por %p217, %p218
      %s220 = ssub.s32 %s18, %s25
      %p221 = scmp.eq.s32.totalorder %s220, 0
      %s223 = sadd.s32 %s222, 1
      %s224 = scalar_select %p221, %s222, %s223
      %p227 = pneg %p221
      %p228 = scmp.eq.s32.totalorder %s18, 3
      %p229 = por %p227, %p228
      %p230 = scmp.ne.s32.totalorder %s222, %s225
      %p231 = scmp.eq.s32.totalorder %s18, 0
      %p232 = por %p230, %p231
      %p233 = scmp.ne.s32.totalorder %s222, %s225
      %p234 = scmp.eq.s32.totalorder %s23, 3
      %p235 = por %p233, %p234
      %p236 = scmp.ne.s32.totalorder %s225, %s226
      %p237 = scmp.eq.s32.totalorder %s23, 0
      %p238 = por %p236, %p237
      %p239 = scmp.ne.s32.totalorder %s225, %s226
      %p240 = scmp.eq.s32.totalorder %s24, 3
      %p241 = por %p239, %p240
      %p243 = scmp.ne.s32.totalorder %s226, %s242
      %p244 = scmp.eq.s32.totalorder %s24, 0
      %p245 = por %p243, %p244
      %p246 = scmp.le.s32.totalorder 1, %s18
      %p247 = scmp.lt.s32.totalorder %s18, 5
      %p248 = pnand %p246, %p247
      %p249 = pneg %p248
      // Predicated region
      $region9: #{tpu_custom_call.1} parent=5 // pred_check
        _
      $region10: #{tpu_custom_call.1} parent=5 // pred_check_branch
        %251 = sbr.rel (%p248) target = $region12
      $region11: #{tpu_custom_call.1} parent=5 // pred_region
        %s252 = ssub.s32 %s18, 1
        // Predicated region
        $region13: #{tpu_custom_call.1} parent=11 // pred_check
          %p253 = pneg %p65
        $region14: #{tpu_custom_call.1} parent=11 // pred_check_branch
          %255 = sbr.rel (%p253) target = $region16
        $region15: #{tpu_custom_call.1} parent=11 // pred_region
          _
        $region16: #{tpu_custom_call.1} parent=11 // pred_fallthru
          _
        // Predicated region
        $region17: #{tpu_custom_call.1} parent=11 // pred_check
          %p256 = pneg %p86
        $region18: #{tpu_custom_call.1} parent=11 // pred_check_branch
          %258 = sbr.rel (%p256) target = $region20
        $region19: #{tpu_custom_call.1} parent=11 // pred_region
          _
        $region20: #{tpu_custom_call.1} parent=11 // pred_fallthru
          _
        // Predicated region
        $region21: #{tpu_custom_call.1} parent=11 // pred_check
          %p259 = pneg %p107
        $region22: #{tpu_custom_call.1} parent=11 // pred_check_branch
          %261 = sbr.rel (%p259) target = $region24
        $region23: #{tpu_custom_call.1} parent=11 // pred_region
          _
        $region24: #{tpu_custom_call.1} parent=11 // pred_fallthru
          _
        // Predicated region
        $region25: #{tpu_custom_call.1} parent=11 // pred_check
          %p262 = pneg %p128
        $region26: #{tpu_custom_call.1} parent=11 // pred_check_branch
          %264 = sbr.rel (%p262) target = $region28
        $region27: #{tpu_custom_call.1} parent=11 // pred_region
          _
        $region28: #{tpu_custom_call.1} parent=11 // pred_fallthru
          _
        // Predicated region
        $region29: #{tpu_custom_call.1} parent=11 // pred_check
          %p265 = pneg %p149
        $region30: #{tpu_custom_call.1} parent=11 // pred_check_branch
          %267 = sbr.rel (%p265) target = $region32
        $region31: #{tpu_custom_call.1} parent=11 // pred_region
          _
        $region32: #{tpu_custom_call.1} parent=11 // pred_fallthru
          _
        // Predicated region
        $region33: #{tpu_custom_call.1} parent=11 // pred_check
          %p268 = pneg %p170
        $region34: #{tpu_custom_call.1} parent=11 // pred_check_branch
          %270 = sbr.rel (%p268) target = $region36
        $region35: #{tpu_custom_call.1} parent=11 // pred_region
          _
        $region36: #{tpu_custom_call.1} parent=11 // pred_fallthru
          _
        // Predicated region
        $region37: #{tpu_custom_call.1} parent=11 // pred_check
          %p271 = pneg %p191
        $region38: #{tpu_custom_call.1} parent=11 // pred_check_branch
          %273 = sbr.rel (%p271) target = $region40
        $region39: #{tpu_custom_call.1} parent=11 // pred_region
          _
        $region40: #{tpu_custom_call.1} parent=11 // pred_fallthru
          _
        // Predicated region
        $region41: #{tpu_custom_call.1} parent=11 // pred_check
          %p274 = pneg %p212
        $region42: #{tpu_custom_call.1} parent=11 // pred_check_branch
          %276 = sbr.rel (%p274) target = $region44
        $region43: #{tpu_custom_call.1} parent=11 // pred_region
          _
        $region44: #{tpu_custom_call.1} parent=11 // pred_fallthru
          _
      $region12: #{tpu_custom_call.1} parent=5 // pred_fallthru
        _
      %p277 = scmp.lt.s32.totalorder %s18, 4
      // Predicated region
      $region45: #{tpu_custom_call.1} parent=5 // pred_check
        %p278 = pneg %p277
      $region46: #{tpu_custom_call.1} parent=5 // pred_check_branch
        %280 = sbr.rel (%p278) target = $region48
      $region47: #{tpu_custom_call.1} parent=5 // pred_region
        // Predicated region
        $region49: #{tpu_custom_call.1} parent=47 // pred_check
          %p281 = pneg %p38
        $region50: #{tpu_custom_call.1} parent=47 // pred_check_branch
          %283 = sbr.rel (%p281) target = $region52
        $region51: #{tpu_custom_call.1} parent=47 // pred_region
          %s284 = smul.u32 4, %s18
          %s285 = ssub.s32 13, %s284
          %p286 = scmp.lt.s32.totalorder %s285, 4
          %s287 = scalar_select %p286, %s285, 4
          %s288 = smul.u32 128, %s287
          %s289 = smul.u32 %s288, 10
          %p290 = scmp.lt.s32.totalorder %s284, 12
          %s291 = scalar_select %p290, %s284, 12
          %s292 = smul.addr %s291, 10
          %s293 = smul.addr %s292, 8
          %s294 = scalar_lea.vmem %s0, %s293
          %s295 = smul.u32 4, %s18
          %s296 = ssub.s32 13, %s295
          %p297 = scmp.lt.s32.totalorder %s296, 4
          %s298 = scalar_select %p297, %s296, 4
          %s299 = smul.u32 128, %s298
          %s300 = smul.u32 %s299, 10
        $region52: #{tpu_custom_call.1} parent=47 // pred_fallthru
          _
      $region48: #{tpu_custom_call.1} parent=5 // pred_fallthru
        _
      %p301 = scmp.le.s32.totalorder 1, %s18
      %p302 = scmp.lt.s32.totalorder %s18, 5
      %p303 = pnand %p301, %p302
      %p304 = pneg %p303
      // Predicated region
      $region53: #{tpu_custom_call.1} parent=5 // pred_check
        _
      $region54: #{tpu_custom_call.1} parent=5 // pred_check_branch
        %306 = sbr.rel (%p303) target = $region56
      $region55: #{tpu_custom_call.1} parent=5 // pred_region
        %s307 = ssub.s32 %s18, 1
        %s308 = smul.u32 4, %s23
        %s309 = ssub.s32 13, %s308
        %p310 = scmp.lt.s32.totalorder %s309, 4
        %s311 = scalar_select %p310, %s309, 4
        %s312 = smul.u32 128, %s311
        %s313 = smul.u32 %s312, 10
        %p314 = scmp.lt.s32.totalorder %s308, 12
        %s315 = scalar_select %p314, %s308, 12
        %s316 = smul.addr %s315, 10
        %s317 = smul.addr %s316, 8
        %s318 = scalar_lea.vmem %s0, %s317
        %p319 = pneg %p44
        %p320 = pneg %p41
        %p321 = pneg %p65
        %p322 = pneg %p62
        %p323 = pneg %p86
        %p324 = pneg %p83
        %p325 = pneg %p107
        %p326 = pneg %p104
        %p327 = pneg %p128
        %p328 = pneg %p125
        %p329 = pneg %p149
        %p330 = pneg %p146
        %p331 = pneg %p170
        %p332 = pneg %p167
        %p333 = pneg %p191
        %p334 = pneg %p188
        %p335 = pneg %p212
        %p336 = pneg %p209
        %p337 = pneg %p238
        %p338 = pneg %p235
        %s339 = sand.u32 %s225, 1
        %s340 = scalar_lea.sflag [#allocation3], %s339
        %s341 = sand.u32 %s225, 1
        %s342 = smul.addr %s341, 320
        %s343 = scalar_lea.vmem [#allocation2], %s342
        %s344 = smul.u32 4, %s23
        %s345 = ssub.s32 13, %s344
        %p346 = scmp.lt.s32.totalorder %s345, 4
        %s347 = scalar_select %p346, %s345, 4
        %s348 = smul.u32 128, %s347
        %s349 = smul.u32 %s348, 10
        %p350 = scmp.lt.s32.totalorder %s344, 12
        %s351 = scalar_select %p350, %s344, 12
        %s352 = smul.addr %s351, 10
        %s353 = smul.addr %s352, 8
        %s354 = scalar_lea.vmem %s0, %s353
        %s355 = smul.u32 4, %s23
        %s356 = ssub.s32 13, %s355
        %p357 = scmp.lt.s32.totalorder %s356, 4
        %s358 = scalar_select %p357, %s356, 4
        %s359 = smul.u32 128, %s358
        %s360 = smul.u32 %s359, 10
        %s361 = smul.u32 4, %s23
        %s362 = ssub.s32 13, %s361
        %p363 = scmp.lt.s32.totalorder %s362, 4
        %s364 = scalar_select %p363, %s362, 4
        %s365 = smul.u32 128, %s364
        %s366 = smul.u32 %s365, 10
        %v368 = vld [vmem:[%s354] sm:$0xff]
        %v369 = vld [vmem:[%s354 + $0x8] sm:$0xff]
        %v370 = vld [vmem:[%s354 + $0x10] sm:$0xff]
        %v371 = vld [vmem:[%s354 + $0x18] sm:$0xff]
        %v372 = vld [vmem:[%s354 + $0x20] sm:$0xff]
        %v373 = vld [vmem:[%s354 + $0x28] sm:$0xff]
        %v374 = vld [vmem:[%s354 + $0x30] sm:$0xff]
        %v375 = vld [vmem:[%s354 + $0x38] sm:$0xff]
        %v376 = vld [vmem:[%s354 + $0x40] sm:$0xff]
        %v377 = vld [vmem:[%s354 + $0x48] sm:$0xff]
        %v378 = vld [vmem:[%s354 + $0x50] sm:$0xff]
        %v379 = vld [vmem:[%s354 + $0x58] sm:$0xff]
        %v380 = vld [vmem:[%s354 + $0x60] sm:$0xff]
        %v381 = vld [vmem:[%s354 + $0x68] sm:$0xff]
        %v382 = vld [vmem:[%s354 + $0x70] sm:$0xff]
        %v383 = vld [vmem:[%s354 + $0x78] sm:$0xff]
        %v384 = vld [vmem:[%s354 + $0x80] sm:$0xff]
        %v385 = vld [vmem:[%s354 + $0x88] sm:$0xff]
        %v386 = vld [vmem:[%s354 + $0x90] sm:$0xff]
        %v387 = vld [vmem:[%s354 + $0x98] sm:$0xff]
        %v388 = vld [vmem:[%s354 + $0xa0] sm:$0xff]
        %v389 = vld [vmem:[%s354 + $0xa8] sm:$0xff]
        %v390 = vld [vmem:[%s354 + $0xb0] sm:$0xff]
        %v391 = vld [vmem:[%s354 + $0xb8] sm:$0xff]
        %v392 = vld [vmem:[%s354 + $0xc0] sm:$0xff]
        %v393 = vld [vmem:[%s354 + $0xc8] sm:$0xff]
        %v394 = vld [vmem:[%s354 + $0xd0] sm:$0xff]
        %v395 = vld [vmem:[%s354 + $0xd8] sm:$0xff]
        %v396 = vld [vmem:[%s354 + $0xe0] sm:$0xff]
        %v397 = vld [vmem:[%s354 + $0xe8] sm:$0xff]
        %v398 = vld [vmem:[%s354 + $0xf0] sm:$0xff]
        %v399 = vld [vmem:[%s354 + $0xf8] sm:$0xff]
        %v400 = vld [vmem:[%s354 + $0x100] sm:$0xff]
        %v401 = vld [vmem:[%s354 + $0x108] sm:$0xff]
        %v402 = vld [vmem:[%s354 + $0x110] sm:$0xff]
        %v403 = vld [vmem:[%s354 + $0x118] sm:$0xff]
        %v404 = vld [vmem:[%s354 + $0x120] sm:$0xff]
        %v405 = vld [vmem:[%s354 + $0x128] sm:$0xff]
        %v406 = vld [vmem:[%s354 + $0x130] sm:$0xff]
        %v407 = vld [vmem:[%s354 + $0x138] sm:$0xff]
        %v408 = vpack.c.bf16 %v378, %v368
        %v409 = vpack.c.bf16 %v379, %v369
        %v410 = vpack.c.bf16 %v380, %v370
        %v411 = vpack.c.bf16 %v381, %v371
        %v412 = vpack.c.bf16 %v382, %v372
        %v413 = vpack.c.bf16 %v383, %v373
        %v414 = vpack.c.bf16 %v384, %v374
        %v415 = vpack.c.bf16 %v385, %v375
        %v416 = vpack.c.bf16 %v386, %v376
        %v417 = vpack.c.bf16 %v387, %v377
        %v418 = vpack.c.bf16 %v398, %v388
        %v419 = vpack.c.bf16 %v399, %v389
        %v420 = vpack.c.bf16 %v400, %v390
        %v421 = vpack.c.bf16 %v401, %v391
        %v422 = vpack.c.bf16 %v402, %v392
        %v423 = vpack.c.bf16 %v403, %v393
        %v424 = vpack.c.bf16 %v404, %v394
        %v425 = vpack.c.bf16 %v405, %v395
        %v426 = vpack.c.bf16 %v406, %v396
        %v427 = vpack.c.bf16 %v407, %v397
        %v428 = vld [vmem:[%s1] sm:$0xff]
        %v429 = vld [vmem:[%s1 + $0x8] sm:$0xff]
        %v430 = vld [vmem:[%s1 + $0x10] sm:$0xff]
        %v431 = vld [vmem:[%s1 + $0x18] sm:$0xff]
        %v432 = vld [vmem:[%s1 + $0x20] sm:$0xff]
        %v433 = vld [vmem:[%s1 + $0x28] sm:$0xff]
        %v434 = vld [vmem:[%s1 + $0x30] sm:$0xff]
        %v435 = vld [vmem:[%s1 + $0x38] sm:$0xff]
        %v436 = vld [vmem:[%s1 + $0x40] sm:$0xff]
        %v437 = vld [vmem:[%s1 + $0x48] sm:$0xff]
        %v438 = vld [vmem:[%s1 + $0x50] sm:$0xff]
        %v439 = vld [vmem:[%s1 + $0x58] sm:$0xff]
        %v440 = vld [vmem:[%s1 + $0x60] sm:$0xff]
        %v441 = vld [vmem:[%s1 + $0x68] sm:$0xff]
        %v442 = vld [vmem:[%s1 + $0x70] sm:$0xff]
        %v443 = vld [vmem:[%s1 + $0x78] sm:$0xff]
        %v444 = vld [vmem:[%s1 + $0x80] sm:$0xff]
        %v445 = vld [vmem:[%s1 + $0x88] sm:$0xff]
        %v446 = vld [vmem:[%s1 + $0x90] sm:$0xff]
        %v447 = vld [vmem:[%s1 + $0x98] sm:$0xff]
        %v448 = vld [vmem:[%s1 + $0xa0] sm:$0xff]
        %v449 = vld [vmem:[%s1 + $0xa8] sm:$0xff]
        %v450 = vld [vmem:[%s1 + $0xb0] sm:$0xff]
        %v451 = vld [vmem:[%s1 + $0xb8] sm:$0xff]
        %v452 = vld [vmem:[%s1 + $0xc0] sm:$0xff]
        %v453 = vld [vmem:[%s1 + $0xc8] sm:$0xff]
        %v454 = vld [vmem:[%s1 + $0xd0] sm:$0xff]
        %v455 = vld [vmem:[%s1 + $0xd8] sm:$0xff]
        %v456 = vld [vmem:[%s1 + $0xe0] sm:$0xff]
        %v457 = vld [vmem:[%s1 + $0xe8] sm:$0xff]
        %v458 = vld [vmem:[%s1 + $0xf0] sm:$0xff]
        %v459 = vld [vmem:[%s1 + $0xf8] sm:$0xff]
        %v460 = vld [vmem:[%s1 + $0x100] sm:$0xff]
        %v461 = vld [vmem:[%s1 + $0x108] sm:$0xff]
        %v462 = vld [vmem:[%s1 + $0x110] sm:$0xff]
        %v463 = vld [vmem:[%s1 + $0x118] sm:$0xff]
        %v464 = vld [vmem:[%s1 + $0x120] sm:$0xff]
        %v465 = vld [vmem:[%s1 + $0x128] sm:$0xff]
        %v466 = vld [vmem:[%s1 + $0x130] sm:$0xff]
        %v467 = vld [vmem:[%s1 + $0x138] sm:$0xff]
        %v468 = vld [vmem:[%s1 + $0x140] sm:$0xff]
        %v469 = vld [vmem:[%s1 + $0x148] sm:$0xff]
        %v470 = vld [vmem:[%s1 + $0x150] sm:$0xff]
        %v471 = vld [vmem:[%s1 + $0x158] sm:$0xff]
        %v472 = vld [vmem:[%s1 + $0x160] sm:$0xff]
        %v473 = vld [vmem:[%s1 + $0x168] sm:$0xff]
        %v474 = vld [vmem:[%s1 + $0x170] sm:$0xff]
        %v475 = vld [vmem:[%s1 + $0x178] sm:$0xff]
        %v476 = vld [vmem:[%s1 + $0x180] sm:$0xff]
        %v477 = vld [vmem:[%s1 + $0x188] sm:$0xff]
        %v478 = vld [vmem:[%s1 + $0x190] sm:$0xff]
        %v479 = vld [vmem:[%s1 + $0x198] sm:$0xff]
        %v480 = vld [vmem:[%s1 + $0x1a0] sm:$0xff]
        %v481 = vld [vmem:[%s1 + $0x1a8] sm:$0xff]
        %v482 = vld [vmem:[%s1 + $0x1b0] sm:$0xff]
        %v483 = vld [vmem:[%s1 + $0x1b8] sm:$0xff]
        %v484 = vld [vmem:[%s1 + $0x1c0] sm:$0xff]
        %v485 = vld [vmem:[%s1 + $0x1c8] sm:$0xff]
        %v486 = vld [vmem:[%s1 + $0x1d0] sm:$0xff]
        %v487 = vld [vmem:[%s1 + $0x1d8] sm:$0xff]
        %v488 = vld [vmem:[%s1 + $0x1e0] sm:$0xff]
        %v489 = vld [vmem:[%s1 + $0x1e8] sm:$0xff]
        %v490 = vld [vmem:[%s1 + $0x1f0] sm:$0xff]
        %v491 = vld [vmem:[%s1 + $0x1f8] sm:$0xff]
        %v492 = vld [vmem:[%s1 + $0x200] sm:$0xff]
        %v493 = vld [vmem:[%s1 + $0x208] sm:$0xff]
        %v494 = vld [vmem:[%s1 + $0x210] sm:$0xff]
        %v495 = vld [vmem:[%s1 + $0x218] sm:$0xff]
        %v496 = vld [vmem:[%s1 + $0x220] sm:$0xff]
        %v497 = vld [vmem:[%s1 + $0x228] sm:$0xff]
        %v498 = vld [vmem:[%s1 + $0x230] sm:$0xff]
        %v499 = vld [vmem:[%s1 + $0x238] sm:$0xff]
        %v500 = vld [vmem:[%s1 + $0x240] sm:$0xff]
        %v501 = vld [vmem:[%s1 + $0x248] sm:$0xff]
        %v502 = vld [vmem:[%s1 + $0x250] sm:$0xff]
        %v503 = vld [vmem:[%s1 + $0x258] sm:$0xff]
        %v504 = vld [vmem:[%s1 + $0x260] sm:$0xff]
        %v505 = vld [vmem:[%s1 + $0x268] sm:$0xff]
        %v506 = vld [vmem:[%s1 + $0x270] sm:$0xff]
        %v507 = vld [vmem:[%s1 + $0x278] sm:$0xff]
        %v508 = vld [vmem:[%s1 + $0x280] sm:$0xff]
        %v509 = vld [vmem:[%s1 + $0x288] sm:$0xff]
        %v510 = vld [vmem:[%s1 + $0x290] sm:$0xff]
        %v511 = vld [vmem:[%s1 + $0x298] sm:$0xff]
        %v512 = vld [vmem:[%s1 + $0x2a0] sm:$0xff]
        %v513 = vld [vmem:[%s1 + $0x2a8] sm:$0xff]
        %v514 = vld [vmem:[%s1 + $0x2b0] sm:$0xff]
        %v515 = vld [vmem:[%s1 + $0x2b8] sm:$0xff]
        %v516 = vld [vmem:[%s1 + $0x2c0] sm:$0xff]
        %v517 = vld [vmem:[%s1 + $0x2c8] sm:$0xff]
        %v518 = vld [vmem:[%s1 + $0x2d0] sm:$0xff]
        %v519 = vld [vmem:[%s1 + $0x2d8] sm:$0xff]
        %v520 = vld [vmem:[%s1 + $0x2e0] sm:$0xff]
        %v521 = vld [vmem:[%s1 + $0x2e8] sm:$0xff]
        %v522 = vld [vmem:[%s1 + $0x2f0] sm:$0xff]
        %v523 = vld [vmem:[%s1 + $0x2f8] sm:$0xff]
        %v524 = vld [vmem:[%s1 + $0x300] sm:$0xff]
        %v525 = vld [vmem:[%s1 + $0x308] sm:$0xff]
        %v526 = vld [vmem:[%s1 + $0x310] sm:$0xff]
        %v527 = vld [vmem:[%s1 + $0x318] sm:$0xff]
        %v528 = vld [vmem:[%s1 + $0x320] sm:$0xff]
        %v529 = vld [vmem:[%s1 + $0x328] sm:$0xff]
        %v530 = vld [vmem:[%s1 + $0x330] sm:$0xff]
        %v531 = vld [vmem:[%s1 + $0x338] sm:$0xff]
        %v532 = vld [vmem:[%s1 + $0x340] sm:$0xff]
        %v533 = vld [vmem:[%s1 + $0x348] sm:$0xff]
        %v534 = vld [vmem:[%s1 + $0x350] sm:$0xff]
        %v535 = vld [vmem:[%s1 + $0x358] sm:$0xff]
        %v536 = vld [vmem:[%s1 + $0x360] sm:$0xff]
        %v537 = vld [vmem:[%s1 + $0x368] sm:$0xff]
        %v538 = vld [vmem:[%s1 + $0x370] sm:$0xff]
        %v539 = vld [vmem:[%s1 + $0x378] sm:$0xff]
        %v540 = vld [vmem:[%s1 + $0x380] sm:$0xff]
        %v541 = vld [vmem:[%s1 + $0x388] sm:$0xff]
        %v542 = vld [vmem:[%s1 + $0x390] sm:$0xff]
        %v543 = vld [vmem:[%s1 + $0x398] sm:$0xff]
        %v544 = vld [vmem:[%s1 + $0x3a0] sm:$0xff]
        %v545 = vld [vmem:[%s1 + $0x3a8] sm:$0xff]
        %v546 = vld [vmem:[%s1 + $0x3b0] sm:$0xff]
        %v547 = vld [vmem:[%s1 + $0x3b8] sm:$0xff]
        %v548 = vld [vmem:[%s1 + $0x3c0] sm:$0xff]
        %v549 = vld [vmem:[%s1 + $0x3c8] sm:$0xff]
        %v550 = vld [vmem:[%s1 + $0x3d0] sm:$0xff]
        %v551 = vld [vmem:[%s1 + $0x3d8] sm:$0xff]
        %v552 = vld [vmem:[%s1 + $0x3e0] sm:$0xff]
        %v553 = vld [vmem:[%s1 + $0x3e8] sm:$0xff]
        %v554 = vld [vmem:[%s1 + $0x3f0] sm:$0xff]
        %v555 = vld [vmem:[%s1 + $0x3f8] sm:$0xff]
        %v556 = vld [vmem:[%s1 + $0x400] sm:$0xff]
        %v557 = vld [vmem:[%s1 + $0x408] sm:$0xff]
        %v558 = vld [vmem:[%s1 + $0x410] sm:$0xff]
        %v559 = vld [vmem:[%s1 + $0x418] sm:$0xff]
        %v560 = vld [vmem:[%s1 + $0x420] sm:$0xff]
        %v561 = vld [vmem:[%s1 + $0x428] sm:$0xff]
        %v562 = vld [vmem:[%s1 + $0x430] sm:$0xff]
        %v563 = vld [vmem:[%s1 + $0x438] sm:$0xff]
        %v564 = vld [vmem:[%s1 + $0x440] sm:$0xff]
        %v565 = vld [vmem:[%s1 + $0x448] sm:$0xff]
        %v566 = vld [vmem:[%s1 + $0x450] sm:$0xff]
        %v567 = vld [vmem:[%s1 + $0x458] sm:$0xff]
        %v568 = vld [vmem:[%s1 + $0x460] sm:$0xff]
        %v569 = vld [vmem:[%s1 + $0x468] sm:$0xff]
        %v570 = vld [vmem:[%s1 + $0x470] sm:$0xff]
        %v571 = vld [vmem:[%s1 + $0x478] sm:$0xff]
        %v572 = vld [vmem:[%s1 + $0x480] sm:$0xff]
        %v573 = vld [vmem:[%s1 + $0x488] sm:$0xff]
        %v574 = vld [vmem:[%s1 + $0x490] sm:$0xff]
        %v575 = vld [vmem:[%s1 + $0x498] sm:$0xff]
        %v576 = vld [vmem:[%s1 + $0x4a0] sm:$0xff]
        %v577 = vld [vmem:[%s1 + $0x4a8] sm:$0xff]
        %v578 = vld [vmem:[%s1 + $0x4b0] sm:$0xff]
        %v579 = vld [vmem:[%s1 + $0x4b8] sm:$0xff]
        %v580 = vld [vmem:[%s1 + $0x4c0] sm:$0xff]
        %v581 = vld [vmem:[%s1 + $0x4c8] sm:$0xff]
        %v582 = vld [vmem:[%s1 + $0x4d0] sm:$0xff]
        %v583 = vld [vmem:[%s1 + $0x4d8] sm:$0xff]
        %v584 = vld [vmem:[%s1 + $0x4e0] sm:$0xff]
        %v585 = vld [vmem:[%s1 + $0x4e8] sm:$0xff]
        %v586 = vld [vmem:[%s1 + $0x4f0] sm:$0xff]
        %v587 = vld [vmem:[%s1 + $0x4f8] sm:$0xff]
        %v588 = vld [vmem:[%s1 + $0x500] sm:$0xff]
        %v589 = vld [vmem:[%s1 + $0x508] sm:$0xff]
        %v590 = vld [vmem:[%s1 + $0x510] sm:$0xff]
        %v591 = vld [vmem:[%s1 + $0x518] sm:$0xff]
        %v592 = vld [vmem:[%s1 + $0x520] sm:$0xff]
        %v593 = vld [vmem:[%s1 + $0x528] sm:$0xff]
        %v594 = vld [vmem:[%s1 + $0x530] sm:$0xff]
        %v595 = vld [vmem:[%s1 + $0x538] sm:$0xff]
        %v596 = vld [vmem:[%s1 + $0x540] sm:$0xff]
        %v597 = vld [vmem:[%s1 + $0x548] sm:$0xff]
        %v598 = vld [vmem:[%s1 + $0x550] sm:$0xff]
        %v599 = vld [vmem:[%s1 + $0x558] sm:$0xff]
        %v600 = vld [vmem:[%s1 + $0x560] sm:$0xff]
        %v601 = vld [vmem:[%s1 + $0x568] sm:$0xff]
        %v602 = vld [vmem:[%s1 + $0x570] sm:$0xff]
        %v603 = vld [vmem:[%s1 + $0x578] sm:$0xff]
        %v604 = vld [vmem:[%s1 + $0x580] sm:$0xff]
        %v605 = vld [vmem:[%s1 + $0x588] sm:$0xff]
        %v606 = vld [vmem:[%s1 + $0x590] sm:$0xff]
        %v607 = vld [vmem:[%s1 + $0x598] sm:$0xff]
        %v608 = vld [vmem:[%s1 + $0x5a0] sm:$0xff]
        %v609 = vld [vmem:[%s1 + $0x5a8] sm:$0xff]
        %v610 = vld [vmem:[%s1 + $0x5b0] sm:$0xff]
        %v611 = vld [vmem:[%s1 + $0x5b8] sm:$0xff]
        %v612 = vld [vmem:[%s1 + $0x5c0] sm:$0xff]
        %v613 = vld [vmem:[%s1 + $0x5c8] sm:$0xff]
        %v614 = vld [vmem:[%s1 + $0x5d0] sm:$0xff]
        %v615 = vld [vmem:[%s1 + $0x5d8] sm:$0xff]
        %v616 = vld [vmem:[%s1 + $0x5e0] sm:$0xff]
        %v617 = vld [vmem:[%s1 + $0x5e8] sm:$0xff]
        %v618 = vld [vmem:[%s1 + $0x5f0] sm:$0xff]
        %v619 = vld [vmem:[%s1 + $0x5f8] sm:$0xff]
        %v620 = vld [vmem:[%s1 + $0x600] sm:$0xff]
        %v621 = vld [vmem:[%s1 + $0x608] sm:$0xff]
        %v622 = vld [vmem:[%s1 + $0x610] sm:$0xff]
        %v623 = vld [vmem:[%s1 + $0x618] sm:$0xff]
        %v624 = vld [vmem:[%s1 + $0x620] sm:$0xff]
        %v625 = vld [vmem:[%s1 + $0x628] sm:$0xff]
        %v626 = vld [vmem:[%s1 + $0x630] sm:$0xff]
        %v627 = vld [vmem:[%s1 + $0x638] sm:$0xff]
        %v628 = vld [vmem:[%s1 + $0x640] sm:$0xff]
        %v629 = vld [vmem:[%s1 + $0x648] sm:$0xff]
        %v630 = vld [vmem:[%s1 + $0x650] sm:$0xff]
        %v631 = vld [vmem:[%s1 + $0x658] sm:$0xff]
        %v632 = vld [vmem:[%s1 + $0x660] sm:$0xff]
        %v633 = vld [vmem:[%s1 + $0x668] sm:$0xff]
        %v634 = vld [vmem:[%s1 + $0x670] sm:$0xff]
        %v635 = vld [vmem:[%s1 + $0x678] sm:$0xff]
        %v636 = vld [vmem:[%s1 + $0x680] sm:$0xff]
        %v637 = vld [vmem:[%s1 + $0x688] sm:$0xff]
        %v638 = vld [vmem:[%s1 + $0x690] sm:$0xff]
        %v639 = vld [vmem:[%s1 + $0x698] sm:$0xff]
        %v640 = vld [vmem:[%s1 + $0x6a0] sm:$0xff]
        %v641 = vld [vmem:[%s1 + $0x6a8] sm:$0xff]
        %v642 = vld [vmem:[%s1 + $0x6b0] sm:$0xff]
        %v643 = vld [vmem:[%s1 + $0x6b8] sm:$0xff]
        %v644 = vld [vmem:[%s1 + $0x6c0] sm:$0xff]
        %v645 = vld [vmem:[%s1 + $0x6c8] sm:$0xff]
        %v646 = vld [vmem:[%s1 + $0x6d0] sm:$0xff]
        %v647 = vld [vmem:[%s1 + $0x6d8] sm:$0xff]
        %v648 = vld [vmem:[%s1 + $0x6e0] sm:$0xff]
        %v649 = vld [vmem:[%s1 + $0x6e8] sm:$0xff]
        %v650 = vld [vmem:[%s1 + $0x6f0] sm:$0xff]
        %v651 = vld [vmem:[%s1 + $0x6f8] sm:$0xff]
        %v652 = vld [vmem:[%s1 + $0x700] sm:$0xff]
        %v653 = vld [vmem:[%s1 + $0x708] sm:$0xff]
        %v654 = vld [vmem:[%s1 + $0x710] sm:$0xff]
        %v655 = vld [vmem:[%s1 + $0x718] sm:$0xff]
        %v656 = vld [vmem:[%s1 + $0x720] sm:$0xff]
        %v657 = vld [vmem:[%s1 + $0x728] sm:$0xff]
        %v658 = vld [vmem:[%s1 + $0x730] sm:$0xff]
        %v659 = vld [vmem:[%s1 + $0x738] sm:$0xff]
        %v660 = vld [vmem:[%s1 + $0x740] sm:$0xff]
        %v661 = vld [vmem:[%s1 + $0x748] sm:$0xff]
        %v662 = vld [vmem:[%s1 + $0x750] sm:$0xff]
        %v663 = vld [vmem:[%s1 + $0x758] sm:$0xff]
        %v664 = vld [vmem:[%s1 + $0x760] sm:$0xff]
        %v665 = vld [vmem:[%s1 + $0x768] sm:$0xff]
        %v666 = vld [vmem:[%s1 + $0x770] sm:$0xff]
        %v667 = vld [vmem:[%s1 + $0x778] sm:$0xff]
        %v668 = vld [vmem:[%s1 + $0x780] sm:$0xff]
        %v669 = vld [vmem:[%s1 + $0x788] sm:$0xff]
        %v670 = vld [vmem:[%s1 + $0x790] sm:$0xff]
        %v671 = vld [vmem:[%s1 + $0x798] sm:$0xff]
        %v672 = vld [vmem:[%s1 + $0x7a0] sm:$0xff]
        %v673 = vld [vmem:[%s1 + $0x7a8] sm:$0xff]
        %v674 = vld [vmem:[%s1 + $0x7b0] sm:$0xff]
        %v675 = vld [vmem:[%s1 + $0x7b8] sm:$0xff]
        %v676 = vld [vmem:[%s1 + $0x7c0] sm:$0xff]
        %v677 = vld [vmem:[%s1 + $0x7c8] sm:$0xff]
        %v678 = vld [vmem:[%s1 + $0x7d0] sm:$0xff]
        %v679 = vld [vmem:[%s1 + $0x7d8] sm:$0xff]
        %v680 = vld [vmem:[%s1 + $0x7e0] sm:$0xff]
        %v681 = vld [vmem:[%s1 + $0x7e8] sm:$0xff]
        %v682 = vld [vmem:[%s1 + $0x7f0] sm:$0xff]
        %v683 = vld [vmem:[%s1 + $0x7f8] sm:$0xff]
        %v684 = vld [vmem:[%s1 + $0x800] sm:$0xff]
        %v685 = vld [vmem:[%s1 + $0x808] sm:$0xff]
        %v686 = vld [vmem:[%s1 + $0x810] sm:$0xff]
        %v687 = vld [vmem:[%s1 + $0x818] sm:$0xff]
        %v688 = vld [vmem:[%s1 + $0x820] sm:$0xff]
        %v689 = vld [vmem:[%s1 + $0x828] sm:$0xff]
        %v690 = vld [vmem:[%s1 + $0x830] sm:$0xff]
        %v691 = vld [vmem:[%s1 + $0x838] sm:$0xff]
        %v692 = vld [vmem:[%s1 + $0x840] sm:$0xff]
        %v693 = vld [vmem:[%s1 + $0x848] sm:$0xff]
        %v694 = vld [vmem:[%s1 + $0x850] sm:$0xff]
        %v695 = vld [vmem:[%s1 + $0x858] sm:$0xff]
        %v696 = vld [vmem:[%s1 + $0x860] sm:$0xff]
        %v697 = vld [vmem:[%s1 + $0x868] sm:$0xff]
        %v698 = vld [vmem:[%s1 + $0x870] sm:$0xff]
        %v699 = vld [vmem:[%s1 + $0x878] sm:$0xff]
        %v700 = vld [vmem:[%s1 + $0x880] sm:$0xff]
        %v701 = vld [vmem:[%s1 + $0x888] sm:$0xff]
        %v702 = vld [vmem:[%s1 + $0x890] sm:$0xff]
        %v703 = vld [vmem:[%s1 + $0x898] sm:$0xff]
        %v704 = vld [vmem:[%s1 + $0x8a0] sm:$0xff]
        %v705 = vld [vmem:[%s1 + $0x8a8] sm:$0xff]
        %v706 = vld [vmem:[%s1 + $0x8b0] sm:$0xff]
        %v707 = vld [vmem:[%s1 + $0x8b8] sm:$0xff]
        %v708 = vld [vmem:[%s1 + $0x8c0] sm:$0xff]
        %v709 = vld [vmem:[%s1 + $0x8c8] sm:$0xff]
        %v710 = vld [vmem:[%s1 + $0x8d0] sm:$0xff]
        %v711 = vld [vmem:[%s1 + $0x8d8] sm:$0xff]
        %v712 = vld [vmem:[%s1 + $0x8e0] sm:$0xff]
        %v713 = vld [vmem:[%s1 + $0x8e8] sm:$0xff]
        %v714 = vld [vmem:[%s1 + $0x8f0] sm:$0xff]
        %v715 = vld [vmem:[%s1 + $0x8f8] sm:$0xff]
        %v716 = vld [vmem:[%s1 + $0x900] sm:$0xff]
        %v717 = vld [vmem:[%s1 + $0x908] sm:$0xff]
        %v718 = vld [vmem:[%s1 + $0x910] sm:$0xff]
        %v719 = vld [vmem:[%s1 + $0x918] sm:$0xff]
        %v720 = vld [vmem:[%s1 + $0x920] sm:$0xff]
        %v721 = vld [vmem:[%s1 + $0x928] sm:$0xff]
        %v722 = vld [vmem:[%s1 + $0x930] sm:$0xff]
        %v723 = vld [vmem:[%s1 + $0x938] sm:$0xff]
        %v724 = vld [vmem:[%s1 + $0x940] sm:$0xff]
        %v725 = vld [vmem:[%s1 + $0x948] sm:$0xff]
        %v726 = vld [vmem:[%s1 + $0x950] sm:$0xff]
        %v727 = vld [vmem:[%s1 + $0x958] sm:$0xff]
        %v728 = vld [vmem:[%s2] sm:$0xf]
        %v730 = vlaneseq
        %v731 = vshrl.u32 %v730, 7
        %v732 = vsub.s32 0, %v731
        %v733 = vrot.slane %v728, %v732
        %v734 = vlaneseq
        %v735 = vshrl.u32 %v734, 7
        %v736 = vsub.s32 1, %v735
        %v737 = vrot.slane %v728, %v736
        %v738 = vlaneseq
        %v739 = vshrl.u32 %v738, 7
        %v740 = vsub.s32 2, %v739
        %v741 = vrot.slane %v728, %v740
        %v742 = vlaneseq
        %v743 = vshrl.u32 %v742, 7
        %v744 = vsub.s32 3, %v743
        %v745 = vrot.slane %v728, %v744
        %v1050 = vunpack.c.l.b16 %v428
        %v1051 = vunpack.c.h.b16 %v428
        %v1052 = vunpack.c.l.b16 %v429
        %v1053 = vunpack.c.h.b16 %v429
        %v1054 = vunpack.c.l.b16 %v430
        %v1055 = vunpack.c.h.b16 %v430
        %v1056 = vunpack.c.l.b16 %v431
        %v1057 = vunpack.c.h.b16 %v431
        %v1058 = vunpack.c.l.b16 %v432
        %v1059 = vunpack.c.h.b16 %v432
        %v1060 = vunpack.c.l.b16 %v433
        %v1061 = vunpack.c.h.b16 %v433
        %v1062 = vunpack.c.l.b16 %v434
        %v1063 = vunpack.c.h.b16 %v434
        %v1064 = vunpack.c.l.b16 %v435
        %v1065 = vunpack.c.h.b16 %v435
        %v1066 = vunpack.c.l.b16 %v436
        %v1067 = vunpack.c.h.b16 %v436
        %v1068 = vunpack.c.l.b16 %v437
        %v1069 = vunpack.c.h.b16 %v437
        %v1070 = vunpack.c.l.b16 %v438
        %v1071 = vunpack.c.h.b16 %v438
        %v1072 = vunpack.c.l.b16 %v439
        %v1073 = vunpack.c.h.b16 %v439
        %v1074 = vunpack.c.l.b16 %v440
        %v1075 = vunpack.c.h.b16 %v440
        %v1076 = vunpack.c.l.b16 %v441
        %v1077 = vunpack.c.h.b16 %v441
        %v1078 = vunpack.c.l.b16 %v442
        %v1079 = vunpack.c.h.b16 %v442
        %v1080 = vunpack.c.l.b16 %v443
        %v1081 = vunpack.c.h.b16 %v443
        %v1082 = vunpack.c.l.b16 %v444
        %v1083 = vunpack.c.h.b16 %v444
        %v1084 = vunpack.c.l.b16 %v445
        %v1085 = vunpack.c.h.b16 %v445
        %v1086 = vunpack.c.l.b16 %v446
        %v1087 = vunpack.c.h.b16 %v446
        %v1088 = vunpack.c.l.b16 %v447
        %v1089 = vunpack.c.h.b16 %v447
        %v1090 = vunpack.c.l.b16 %v448
        %v1091 = vunpack.c.h.b16 %v448
        %v1092 = vunpack.c.l.b16 %v449
        %v1093 = vunpack.c.h.b16 %v449
        %v1094 = vunpack.c.l.b16 %v450
        %v1095 = vunpack.c.h.b16 %v450
        %v1096 = vunpack.c.l.b16 %v451
        %v1097 = vunpack.c.h.b16 %v451
        %v1098 = vunpack.c.l.b16 %v452
        %v1099 = vunpack.c.h.b16 %v452
        %v1100 = vunpack.c.l.b16 %v453
        %v1101 = vunpack.c.h.b16 %v453
        %v1102 = vunpack.c.l.b16 %v454
        %v1103 = vunpack.c.h.b16 %v454
        %v1104 = vunpack.c.l.b16 %v455
        %v1105 = vunpack.c.h.b16 %v455
        %v1106 = vunpack.c.l.b16 %v456
        %v1107 = vunpack.c.h.b16 %v456
        %v1108 = vunpack.c.l.b16 %v457
        %v1109 = vunpack.c.h.b16 %v457
        %v1110 = vunpack.c.l.b16 %v458
        %v1111 = vunpack.c.h.b16 %v458
        %v1112 = vunpack.c.l.b16 %v459
        %v1113 = vunpack.c.h.b16 %v459
        %v1114 = vunpack.c.l.b16 %v460
        %v1115 = vunpack.c.h.b16 %v460
        %v1116 = vunpack.c.l.b16 %v461
        %v1117 = vunpack.c.h.b16 %v461
        %v1118 = vunpack.c.l.b16 %v462
        %v1119 = vunpack.c.h.b16 %v462
        %v1120 = vunpack.c.l.b16 %v463
        %v1121 = vunpack.c.h.b16 %v463
        %v1122 = vunpack.c.l.b16 %v464
        %v1123 = vunpack.c.h.b16 %v464
        %v1124 = vunpack.c.l.b16 %v465
        %v1125 = vunpack.c.h.b16 %v465
        %v1126 = vunpack.c.l.b16 %v466
        %v1127 = vunpack.c.h.b16 %v466
        %v1128 = vunpack.c.l.b16 %v467
        %v1129 = vunpack.c.h.b16 %v467
        %v1130 = vunpack.c.l.b16 %v468
        %v1131 = vunpack.c.h.b16 %v468
        %v1132 = vunpack.c.l.b16 %v469
        %v1133 = vunpack.c.h.b16 %v469
        %v1134 = vunpack.c.l.b16 %v470
        %v1135 = vunpack.c.h.b16 %v470
        %v1136 = vunpack.c.l.b16 %v471
        %v1137 = vunpack.c.h.b16 %v471
        %v1138 = vunpack.c.l.b16 %v472
        %v1139 = vunpack.c.h.b16 %v472
        %v1140 = vunpack.c.l.b16 %v473
        %v1141 = vunpack.c.h.b16 %v473
        %v1142 = vunpack.c.l.b16 %v474
        %v1143 = vunpack.c.h.b16 %v474
        %v1144 = vunpack.c.l.b16 %v475
        %v1145 = vunpack.c.h.b16 %v475
        %v1146 = vunpack.c.l.b16 %v476
        %v1147 = vunpack.c.h.b16 %v476
        %v1148 = vunpack.c.l.b16 %v477
        %v1149 = vunpack.c.h.b16 %v477
        %v1150 = vunpack.c.l.b16 %v478
        %v1151 = vunpack.c.h.b16 %v478
        %v1152 = vunpack.c.l.b16 %v479
        %v1153 = vunpack.c.h.b16 %v479
        %v1154 = vunpack.c.l.b16 %v480
        %v1155 = vunpack.c.h.b16 %v480
        %v1156 = vunpack.c.l.b16 %v481
        %v1157 = vunpack.c.h.b16 %v481
        %v1158 = vunpack.c.l.b16 %v482
        %v1159 = vunpack.c.h.b16 %v482
        %v1160 = vunpack.c.l.b16 %v483
        %v1161 = vunpack.c.h.b16 %v483
        %v1162 = vunpack.c.l.b16 %v484
        %v1163 = vunpack.c.h.b16 %v484
        %v1164 = vunpack.c.l.b16 %v485
        %v1165 = vunpack.c.h.b16 %v485
        %v1166 = vunpack.c.l.b16 %v486
        %v1167 = vunpack.c.h.b16 %v486
        %v1168 = vunpack.c.l.b16 %v487
        %v1169 = vunpack.c.h.b16 %v487
        %v1170 = vunpack.c.l.b16 %v488
        %v1171 = vunpack.c.h.b16 %v488
        %v1172 = vunpack.c.l.b16 %v489
        %v1173 = vunpack.c.h.b16 %v489
        %v1174 = vunpack.c.l.b16 %v490
        %v1175 = vunpack.c.h.b16 %v490
        %v1176 = vunpack.c.l.b16 %v491
        %v1177 = vunpack.c.h.b16 %v491
        %v1178 = vunpack.c.l.b16 %v492
        %v1179 = vunpack.c.h.b16 %v492
        %v1180 = vunpack.c.l.b16 %v493
        %v1181 = vunpack.c.h.b16 %v493
        %v1182 = vunpack.c.l.b16 %v494
        %v1183 = vunpack.c.h.b16 %v494
        %v1184 = vunpack.c.l.b16 %v495
        %v1185 = vunpack.c.h.b16 %v495
        %v1186 = vunpack.c.l.b16 %v496
        %v1187 = vunpack.c.h.b16 %v496
        %v1188 = vunpack.c.l.b16 %v497
        %v1189 = vunpack.c.h.b16 %v497
        %v1190 = vunpack.c.l.b16 %v498
        %v1191 = vunpack.c.h.b16 %v498
        %v1192 = vunpack.c.l.b16 %v499
        %v1193 = vunpack.c.h.b16 %v499
        %v1194 = vunpack.c.l.b16 %v500
        %v1195 = vunpack.c.h.b16 %v500
        %v1196 = vunpack.c.l.b16 %v501
        %v1197 = vunpack.c.h.b16 %v501
        %v1198 = vunpack.c.l.b16 %v502
        %v1199 = vunpack.c.h.b16 %v502
        %v1200 = vunpack.c.l.b16 %v503
        %v1201 = vunpack.c.h.b16 %v503
        %v1202 = vunpack.c.l.b16 %v504
        %v1203 = vunpack.c.h.b16 %v504
        %v1204 = vunpack.c.l.b16 %v505
        %v1205 = vunpack.c.h.b16 %v505
        %v1206 = vunpack.c.l.b16 %v506
        %v1207 = vunpack.c.h.b16 %v506
        %v1208 = vunpack.c.l.b16 %v507
        %v1209 = vunpack.c.h.b16 %v507
        %v1210 = vunpack.c.l.b16 %v508
        %v1211 = vunpack.c.h.b16 %v508
        %v1212 = vunpack.c.l.b16 %v509
        %v1213 = vunpack.c.h.b16 %v509
        %v1214 = vunpack.c.l.b16 %v510
        %v1215 = vunpack.c.h.b16 %v510
        %v1216 = vunpack.c.l.b16 %v511
        %v1217 = vunpack.c.h.b16 %v511
        %v1218 = vunpack.c.l.b16 %v512
        %v1219 = vunpack.c.h.b16 %v512
        %v1220 = vunpack.c.l.b16 %v513
        %v1221 = vunpack.c.h.b16 %v513
        %v1222 = vunpack.c.l.b16 %v514
        %v1223 = vunpack.c.h.b16 %v514
        %v1224 = vunpack.c.l.b16 %v515
        %v1225 = vunpack.c.h.b16 %v515
        %v1226 = vunpack.c.l.b16 %v516
        %v1227 = vunpack.c.h.b16 %v516
        %v1228 = vunpack.c.l.b16 %v517
        %v1229 = vunpack.c.h.b16 %v517
        %v1230 = vunpack.c.l.b16 %v518
        %v1231 = vunpack.c.h.b16 %v518
        %v1232 = vunpack.c.l.b16 %v519
        %v1233 = vunpack.c.h.b16 %v519
        %v1234 = vunpack.c.l.b16 %v520
        %v1235 = vunpack.c.h.b16 %v520
        %v1236 = vunpack.c.l.b16 %v521
        %v1237 = vunpack.c.h.b16 %v521
        %v1238 = vunpack.c.l.b16 %v522
        %v1239 = vunpack.c.h.b16 %v522
        %v1240 = vunpack.c.l.b16 %v523
        %v1241 = vunpack.c.h.b16 %v523
        %v1242 = vunpack.c.l.b16 %v524
        %v1243 = vunpack.c.h.b16 %v524
        %v1244 = vunpack.c.l.b16 %v525
        %v1245 = vunpack.c.h.b16 %v525
        %v1246 = vunpack.c.l.b16 %v526
        %v1247 = vunpack.c.h.b16 %v526
        %v1248 = vunpack.c.l.b16 %v527
        %v1249 = vunpack.c.h.b16 %v527
        %v1250 = vunpack.c.l.b16 %v528
        %v1251 = vunpack.c.h.b16 %v528
        %v1252 = vunpack.c.l.b16 %v529
        %v1253 = vunpack.c.h.b16 %v529
        %v1254 = vunpack.c.l.b16 %v530
        %v1255 = vunpack.c.h.b16 %v530
        %v1256 = vunpack.c.l.b16 %v531
        %v1257 = vunpack.c.h.b16 %v531
        %v1258 = vunpack.c.l.b16 %v532
        %v1259 = vunpack.c.h.b16 %v532
        %v1260 = vunpack.c.l.b16 %v533
        %v1261 = vunpack.c.h.b16 %v533
        %v1262 = vunpack.c.l.b16 %v534
        %v1263 = vunpack.c.h.b16 %v534
        %v1264 = vunpack.c.l.b16 %v535
        %v1265 = vunpack.c.h.b16 %v535
        %v1266 = vunpack.c.l.b16 %v536
        %v1267 = vunpack.c.h.b16 %v536
        %v1268 = vunpack.c.l.b16 %v537
        %v1269 = vunpack.c.h.b16 %v537
        %v1270 = vunpack.c.l.b16 %v538
        %v1271 = vunpack.c.h.b16 %v538
        %v1272 = vunpack.c.l.b16 %v539
        %v1273 = vunpack.c.h.b16 %v539
        %v1274 = vunpack.c.l.b16 %v540
        %v1275 = vunpack.c.h.b16 %v540
        %v1276 = vunpack.c.l.b16 %v541
        %v1277 = vunpack.c.h.b16 %v541
        %v1278 = vunpack.c.l.b16 %v542
        %v1279 = vunpack.c.h.b16 %v542
        %v1280 = vunpack.c.l.b16 %v543
        %v1281 = vunpack.c.h.b16 %v543
        %v1282 = vunpack.c.l.b16 %v544
        %v1283 = vunpack.c.h.b16 %v544
        %v1284 = vunpack.c.l.b16 %v545
        %v1285 = vunpack.c.h.b16 %v545
        %v1286 = vunpack.c.l.b16 %v546
        %v1287 = vunpack.c.h.b16 %v546
        %v1288 = vunpack.c.l.b16 %v547
        %v1289 = vunpack.c.h.b16 %v547
        %v1290 = vunpack.c.l.b16 %v548
        %v1291 = vunpack.c.h.b16 %v548
        %v1292 = vunpack.c.l.b16 %v549
        %v1293 = vunpack.c.h.b16 %v549
        %v1294 = vunpack.c.l.b16 %v550
        %v1295 = vunpack.c.h.b16 %v550
        %v1296 = vunpack.c.l.b16 %v551
        %v1297 = vunpack.c.h.b16 %v551
        %v1298 = vunpack.c.l.b16 %v552
        %v1299 = vunpack.c.h.b16 %v552
        %v1300 = vunpack.c.l.b16 %v553
        %v1301 = vunpack.c.h.b16 %v553
        %v1302 = vunpack.c.l.b16 %v554
        %v1303 = vunpack.c.h.b16 %v554
        %v1304 = vunpack.c.l.b16 %v555
        %v1305 = vunpack.c.h.b16 %v555
        %v1306 = vunpack.c.l.b16 %v556
        %v1307 = vunpack.c.h.b16 %v556
        %v1308 = vunpack.c.l.b16 %v557
        %v1309 = vunpack.c.h.b16 %v557
        %v1310 = vunpack.c.l.b16 %v558
        %v1311 = vunpack.c.h.b16 %v558
        %v1312 = vunpack.c.l.b16 %v559
        %v1313 = vunpack.c.h.b16 %v559
        %v1314 = vunpack.c.l.b16 %v560
        %v1315 = vunpack.c.h.b16 %v560
        %v1316 = vunpack.c.l.b16 %v561
        %v1317 = vunpack.c.h.b16 %v561
        %v1318 = vunpack.c.l.b16 %v562
        %v1319 = vunpack.c.h.b16 %v562
        %v1320 = vunpack.c.l.b16 %v563
        %v1321 = vunpack.c.h.b16 %v563
        %v1322 = vunpack.c.l.b16 %v564
        %v1323 = vunpack.c.h.b16 %v564
        %v1324 = vunpack.c.l.b16 %v565
        %v1325 = vunpack.c.h.b16 %v565
        %v1326 = vunpack.c.l.b16 %v566
        %v1327 = vunpack.c.h.b16 %v566
        %v1328 = vunpack.c.l.b16 %v567
        %v1329 = vunpack.c.h.b16 %v567
        %v1330 = vunpack.c.l.b16 %v568
        %v1331 = vunpack.c.h.b16 %v568
        %v1332 = vunpack.c.l.b16 %v569
        %v1333 = vunpack.c.h.b16 %v569
        %v1334 = vunpack.c.l.b16 %v570
        %v1335 = vunpack.c.h.b16 %v570
        %v1336 = vunpack.c.l.b16 %v571
        %v1337 = vunpack.c.h.b16 %v571
        %v1338 = vunpack.c.l.b16 %v572
        %v1339 = vunpack.c.h.b16 %v572
        %v1340 = vunpack.c.l.b16 %v573
        %v1341 = vunpack.c.h.b16 %v573
        %v1342 = vunpack.c.l.b16 %v574
        %v1343 = vunpack.c.h.b16 %v574
        %v1344 = vunpack.c.l.b16 %v575
        %v1345 = vunpack.c.h.b16 %v575
        %v1346 = vunpack.c.l.b16 %v576
        %v1347 = vunpack.c.h.b16 %v576
        %v1348 = vunpack.c.l.b16 %v577
        %v1349 = vunpack.c.h.b16 %v577
        %v1350 = vunpack.c.l.b16 %v578
        %v1351 = vunpack.c.h.b16 %v578
        %v1352 = vunpack.c.l.b16 %v579
        %v1353 = vunpack.c.h.b16 %v579
        %v1354 = vunpack.c.l.b16 %v580
        %v1355 = vunpack.c.h.b16 %v580
        %v1356 = vunpack.c.l.b16 %v581
        %v1357 = vunpack.c.h.b16 %v581
        %v1358 = vunpack.c.l.b16 %v582
        %v1359 = vunpack.c.h.b16 %v582
        %v1360 = vunpack.c.l.b16 %v583
        %v1361 = vunpack.c.h.b16 %v583
        %v1362 = vunpack.c.l.b16 %v584
        %v1363 = vunpack.c.h.b16 %v584
        %v1364 = vunpack.c.l.b16 %v585
        %v1365 = vunpack.c.h.b16 %v585
        %v1366 = vunpack.c.l.b16 %v586
        %v1367 = vunpack.c.h.b16 %v586
        %v1368 = vunpack.c.l.b16 %v587
        %v1369 = vunpack.c.h.b16 %v587
        %v1370 = vunpack.c.l.b16 %v588
        %v1371 = vunpack.c.h.b16 %v588
        %v1372 = vunpack.c.l.b16 %v589
        %v1373 = vunpack.c.h.b16 %v589
        %v1374 = vunpack.c.l.b16 %v590
        %v1375 = vunpack.c.h.b16 %v590
        %v1376 = vunpack.c.l.b16 %v591
        %v1377 = vunpack.c.h.b16 %v591
        %v1378 = vunpack.c.l.b16 %v592
        %v1379 = vunpack.c.h.b16 %v592
        %v1380 = vunpack.c.l.b16 %v593
        %v1381 = vunpack.c.h.b16 %v593
        %v1382 = vunpack.c.l.b16 %v594
        %v1383 = vunpack.c.h.b16 %v594
        %v1384 = vunpack.c.l.b16 %v595
        %v1385 = vunpack.c.h.b16 %v595
        %v1386 = vunpack.c.l.b16 %v596
        %v1387 = vunpack.c.h.b16 %v596
        %v1388 = vunpack.c.l.b16 %v597
        %v1389 = vunpack.c.h.b16 %v597
        %v1390 = vunpack.c.l.b16 %v598
        %v1391 = vunpack.c.h.b16 %v598
        %v1392 = vunpack.c.l.b16 %v599
        %v1393 = vunpack.c.h.b16 %v599
        %v1394 = vunpack.c.l.b16 %v600
        %v1395 = vunpack.c.h.b16 %v600
        %v1396 = vunpack.c.l.b16 %v601
        %v1397 = vunpack.c.h.b16 %v601
        %v1398 = vunpack.c.l.b16 %v602
        %v1399 = vunpack.c.h.b16 %v602
        %v1400 = vunpack.c.l.b16 %v603
        %v1401 = vunpack.c.h.b16 %v603
        %v1402 = vunpack.c.l.b16 %v604
        %v1403 = vunpack.c.h.b16 %v604
        %v1404 = vunpack.c.l.b16 %v605
        %v1405 = vunpack.c.h.b16 %v605
        %v1406 = vunpack.c.l.b16 %v606
        %v1407 = vunpack.c.h.b16 %v606
        %v1408 = vunpack.c.l.b16 %v607
        %v1409 = vunpack.c.h.b16 %v607
        %v1410 = vunpack.c.l.b16 %v608
        %v1411 = vunpack.c.h.b16 %v608
        %v1412 = vunpack.c.l.b16 %v609
        %v1413 = vunpack.c.h.b16 %v609
        %v1414 = vunpack.c.l.b16 %v610
        %v1415 = vunpack.c.h.b16 %v610
        %v1416 = vunpack.c.l.b16 %v611
        %v1417 = vunpack.c.h.b16 %v611
        %v1418 = vunpack.c.l.b16 %v612
        %v1419 = vunpack.c.h.b16 %v612
        %v1420 = vunpack.c.l.b16 %v613
        %v1421 = vunpack.c.h.b16 %v613
        %v1422 = vunpack.c.l.b16 %v614
        %v1423 = vunpack.c.h.b16 %v614
        %v1424 = vunpack.c.l.b16 %v615
        %v1425 = vunpack.c.h.b16 %v615
        %v1426 = vunpack.c.l.b16 %v616
        %v1427 = vunpack.c.h.b16 %v616
        %v1428 = vunpack.c.l.b16 %v617
        %v1429 = vunpack.c.h.b16 %v617
        %v1430 = vunpack.c.l.b16 %v618
        %v1431 = vunpack.c.h.b16 %v618
        %v1432 = vunpack.c.l.b16 %v619
        %v1433 = vunpack.c.h.b16 %v619
        %v1434 = vunpack.c.l.b16 %v620
        %v1435 = vunpack.c.h.b16 %v620
        %v1436 = vunpack.c.l.b16 %v621
        %v1437 = vunpack.c.h.b16 %v621
        %v1438 = vunpack.c.l.b16 %v622
        %v1439 = vunpack.c.h.b16 %v622
        %v1440 = vunpack.c.l.b16 %v623
        %v1441 = vunpack.c.h.b16 %v623
        %v1442 = vunpack.c.l.b16 %v624
        %v1443 = vunpack.c.h.b16 %v624
        %v1444 = vunpack.c.l.b16 %v625
        %v1445 = vunpack.c.h.b16 %v625
        %v1446 = vunpack.c.l.b16 %v626
        %v1447 = vunpack.c.h.b16 %v626
        %v1448 = vunpack.c.l.b16 %v627
        %v1449 = vunpack.c.h.b16 %v627
        %v1450 = vunpack.c.l.b16 %v628
        %v1451 = vunpack.c.h.b16 %v628
        %v1452 = vunpack.c.l.b16 %v629
        %v1453 = vunpack.c.h.b16 %v629
        %v1454 = vunpack.c.l.b16 %v630
        %v1455 = vunpack.c.h.b16 %v630
        %v1456 = vunpack.c.l.b16 %v631
        %v1457 = vunpack.c.h.b16 %v631
        %v1458 = vunpack.c.l.b16 %v632
        %v1459 = vunpack.c.h.b16 %v632
        %v1460 = vunpack.c.l.b16 %v633
        %v1461 = vunpack.c.h.b16 %v633
        %v1462 = vunpack.c.l.b16 %v634
        %v1463 = vunpack.c.h.b16 %v634
        %v1464 = vunpack.c.l.b16 %v635
        %v1465 = vunpack.c.h.b16 %v635
        %v1466 = vunpack.c.l.b16 %v636
        %v1467 = vunpack.c.h.b16 %v636
        %v1468 = vunpack.c.l.b16 %v637
        %v1469 = vunpack.c.h.b16 %v637
        %v1470 = vunpack.c.l.b16 %v638
        %v1471 = vunpack.c.h.b16 %v638
        %v1472 = vunpack.c.l.b16 %v639
        %v1473 = vunpack.c.h.b16 %v639
        %v1474 = vunpack.c.l.b16 %v640
        %v1475 = vunpack.c.h.b16 %v640
        %v1476 = vunpack.c.l.b16 %v641
        %v1477 = vunpack.c.h.b16 %v641
        %v1478 = vunpack.c.l.b16 %v642
        %v1479 = vunpack.c.h.b16 %v642
        %v1480 = vunpack.c.l.b16 %v643
        %v1481 = vunpack.c.h.b16 %v643
        %v1482 = vunpack.c.l.b16 %v644
        %v1483 = vunpack.c.h.b16 %v644
        %v1484 = vunpack.c.l.b16 %v645
        %v1485 = vunpack.c.h.b16 %v645
        %v1486 = vunpack.c.l.b16 %v646
        %v1487 = vunpack.c.h.b16 %v646
        %v1488 = vunpack.c.l.b16 %v647
        %v1489 = vunpack.c.h.b16 %v647
        %v1490 = vunpack.c.l.b16 %v648
        %v1491 = vunpack.c.h.b16 %v648
        %v1492 = vunpack.c.l.b16 %v649
        %v1493 = vunpack.c.h.b16 %v649
        %v1494 = vunpack.c.l.b16 %v650
        %v1495 = vunpack.c.h.b16 %v650
        %v1496 = vunpack.c.l.b16 %v651
        %v1497 = vunpack.c.h.b16 %v651
        %v1498 = vunpack.c.l.b16 %v652
        %v1499 = vunpack.c.h.b16 %v652
        %v1500 = vunpack.c.l.b16 %v653
        %v1501 = vunpack.c.h.b16 %v653
        %v1502 = vunpack.c.l.b16 %v654
        %v1503 = vunpack.c.h.b16 %v654
        %v1504 = vunpack.c.l.b16 %v655
        %v1505 = vunpack.c.h.b16 %v655
        %v1506 = vunpack.c.l.b16 %v656
        %v1507 = vunpack.c.h.b16 %v656
        %v1508 = vunpack.c.l.b16 %v657
        %v1509 = vunpack.c.h.b16 %v657
        %v1510 = vunpack.c.l.b16 %v658
        %v1511 = vunpack.c.h.b16 %v658
        %v1512 = vunpack.c.l.b16 %v659
        %v1513 = vunpack.c.h.b16 %v659
        %v1514 = vunpack.c.l.b16 %v660
        %v1515 = vunpack.c.h.b16 %v660
        %v1516 = vunpack.c.l.b16 %v661
        %v1517 = vunpack.c.h.b16 %v661
        %v1518 = vunpack.c.l.b16 %v662
        %v1519 = vunpack.c.h.b16 %v662
        %v1520 = vunpack.c.l.b16 %v663
        %v1521 = vunpack.c.h.b16 %v663
        %v1522 = vunpack.c.l.b16 %v664
        %v1523 = vunpack.c.h.b16 %v664
        %v1524 = vunpack.c.l.b16 %v665
        %v1525 = vunpack.c.h.b16 %v665
        %v1526 = vunpack.c.l.b16 %v666
        %v1527 = vunpack.c.h.b16 %v666
        %v1528 = vunpack.c.l.b16 %v667
        %v1529 = vunpack.c.h.b16 %v667
        %v1530 = vunpack.c.l.b16 %v668
        %v1531 = vunpack.c.h.b16 %v668
        %v1532 = vunpack.c.l.b16 %v669
        %v1533 = vunpack.c.h.b16 %v669
        %v1534 = vunpack.c.l.b16 %v670
        %v1535 = vunpack.c.h.b16 %v670
        %v1536 = vunpack.c.l.b16 %v671
        %v1537 = vunpack.c.h.b16 %v671
        %v1538 = vunpack.c.l.b16 %v672
        %v1539 = vunpack.c.h.b16 %v672
        %v1540 = vunpack.c.l.b16 %v673
        %v1541 = vunpack.c.h.b16 %v673
        %v1542 = vunpack.c.l.b16 %v674
        %v1543 = vunpack.c.h.b16 %v674
        %v1544 = vunpack.c.l.b16 %v675
        %v1545 = vunpack.c.h.b16 %v675
        %v1546 = vunpack.c.l.b16 %v676
        %v1547 = vunpack.c.h.b16 %v676
        %v1548 = vunpack.c.l.b16 %v677
        %v1549 = vunpack.c.h.b16 %v677
        %v1550 = vunpack.c.l.b16 %v678
        %v1551 = vunpack.c.h.b16 %v678
        %v1552 = vunpack.c.l.b16 %v679
        %v1553 = vunpack.c.h.b16 %v679
        %v1554 = vunpack.c.l.b16 %v680
        %v1555 = vunpack.c.h.b16 %v680
        %v1556 = vunpack.c.l.b16 %v681
        %v1557 = vunpack.c.h.b16 %v681
        %v1558 = vunpack.c.l.b16 %v682
        %v1559 = vunpack.c.h.b16 %v682
        %v1560 = vunpack.c.l.b16 %v683
        %v1561 = vunpack.c.h.b16 %v683
        %v1562 = vunpack.c.l.b16 %v684
        %v1563 = vunpack.c.h.b16 %v684
        %v1564 = vunpack.c.l.b16 %v685
        %v1565 = vunpack.c.h.b16 %v685
        %v1566 = vunpack.c.l.b16 %v686
        %v1567 = vunpack.c.h.b16 %v686
        %v1568 = vunpack.c.l.b16 %v687
        %v1569 = vunpack.c.h.b16 %v687
        %v1570 = vunpack.c.l.b16 %v688
        %v1571 = vunpack.c.h.b16 %v688
        %v1572 = vunpack.c.l.b16 %v689
        %v1573 = vunpack.c.h.b16 %v689
        %v1574 = vunpack.c.l.b16 %v690
        %v1575 = vunpack.c.h.b16 %v690
        %v1576 = vunpack.c.l.b16 %v691
        %v1577 = vunpack.c.h.b16 %v691
        %v1578 = vunpack.c.l.b16 %v692
        %v1579 = vunpack.c.h.b16 %v692
        %v1580 = vunpack.c.l.b16 %v693
        %v1581 = vunpack.c.h.b16 %v693
        %v1582 = vunpack.c.l.b16 %v694
        %v1583 = vunpack.c.h.b16 %v694
        %v1584 = vunpack.c.l.b16 %v695
        %v1585 = vunpack.c.h.b16 %v695
        %v1586 = vunpack.c.l.b16 %v696
        %v1587 = vunpack.c.h.b16 %v696
        %v1588 = vunpack.c.l.b16 %v697
        %v1589 = vunpack.c.h.b16 %v697
        %v1590 = vunpack.c.l.b16 %v698
        %v1591 = vunpack.c.h.b16 %v698
        %v1592 = vunpack.c.l.b16 %v699
        %v1593 = vunpack.c.h.b16 %v699
        %v1594 = vunpack.c.l.b16 %v700
        %v1595 = vunpack.c.h.b16 %v700
        %v1596 = vunpack.c.l.b16 %v701
        %v1597 = vunpack.c.h.b16 %v701
        %v1598 = vunpack.c.l.b16 %v702
        %v1599 = vunpack.c.h.b16 %v702
        %v1600 = vunpack.c.l.b16 %v703
        %v1601 = vunpack.c.h.b16 %v703
        %v1602 = vunpack.c.l.b16 %v704
        %v1603 = vunpack.c.h.b16 %v704
        %v1604 = vunpack.c.l.b16 %v705
        %v1605 = vunpack.c.h.b16 %v705
        %v1606 = vunpack.c.l.b16 %v706
        %v1607 = vunpack.c.h.b16 %v706
        %v1608 = vunpack.c.l.b16 %v707
        %v1609 = vunpack.c.h.b16 %v707
        %v1610 = vunpack.c.l.b16 %v708
        %v1611 = vunpack.c.h.b16 %v708
        %v1612 = vunpack.c.l.b16 %v709
        %v1613 = vunpack.c.h.b16 %v709
        %v1614 = vunpack.c.l.b16 %v710
        %v1615 = vunpack.c.h.b16 %v710
        %v1616 = vunpack.c.l.b16 %v711
        %v1617 = vunpack.c.h.b16 %v711
        %v1618 = vunpack.c.l.b16 %v712
        %v1619 = vunpack.c.h.b16 %v712
        %v1620 = vunpack.c.l.b16 %v713
        %v1621 = vunpack.c.h.b16 %v713
        %v1622 = vunpack.c.l.b16 %v714
        %v1623 = vunpack.c.h.b16 %v714
        %v1624 = vunpack.c.l.b16 %v715
        %v1625 = vunpack.c.h.b16 %v715
        %v1626 = vunpack.c.l.b16 %v716
        %v1627 = vunpack.c.h.b16 %v716
        %v1628 = vunpack.c.l.b16 %v717
        %v1629 = vunpack.c.h.b16 %v717
        %v1630 = vunpack.c.l.b16 %v718
        %v1631 = vunpack.c.h.b16 %v718
        %v1632 = vunpack.c.l.b16 %v719
        %v1633 = vunpack.c.h.b16 %v719
        %v1634 = vunpack.c.l.b16 %v720
        %v1635 = vunpack.c.h.b16 %v720
        %v1636 = vunpack.c.l.b16 %v721
        %v1637 = vunpack.c.h.b16 %v721
        %v1638 = vunpack.c.l.b16 %v722
        %v1639 = vunpack.c.h.b16 %v722
        %v1640 = vunpack.c.l.b16 %v723
        %v1641 = vunpack.c.h.b16 %v723
        %v1642 = vunpack.c.l.b16 %v724
        %v1643 = vunpack.c.h.b16 %v724
        %v1644 = vunpack.c.l.b16 %v725
        %v1645 = vunpack.c.h.b16 %v725
        %v1646 = vunpack.c.l.b16 %v726
        %v1647 = vunpack.c.h.b16 %v726
        %v1648 = vunpack.c.l.b16 %v727
        %v1649 = vunpack.c.h.b16 %v727
        %v1650 = vpack.c.b16 %v1054, %v1050
        %v1651 = vpack.c.b16 %v1055, %v1051
        %v1652 = vpack.c.b16 %v1056, %v1052
        %v1653 = vpack.c.b16 %v1057, %v1053
        %v1654 = vpack.c.b16 %v1062, %v1058
        %v1655 = vpack.c.b16 %v1063, %v1059
        %v1656 = vpack.c.b16 %v1064, %v1060
        %v1657 = vpack.c.b16 %v1065, %v1061
        %v1658 = vpack.c.b16 %v1070, %v1066
        %v1659 = vpack.c.b16 %v1071, %v1067
        %v1660 = vpack.c.b16 %v1072, %v1068
        %v1661 = vpack.c.b16 %v1073, %v1069
        %v1662 = vpack.c.b16 %v1078, %v1074
        %v1663 = vpack.c.b16 %v1079, %v1075
        %v1664 = vpack.c.b16 %v1080, %v1076
        %v1665 = vpack.c.b16 %v1081, %v1077
        %v1666 = vpack.c.b16 %v1086, %v1082
        %v1667 = vpack.c.b16 %v1087, %v1083
        %v1668 = vpack.c.b16 %v1088, %v1084
        %v1669 = vpack.c.b16 %v1089, %v1085
        %v1670 = vpack.c.b16 %v1094, %v1090
        %v1671 = vpack.c.b16 %v1095, %v1091
        %v1672 = vpack.c.b16 %v1096, %v1092
        %v1673 = vpack.c.b16 %v1097, %v1093
        %v1674 = vpack.c.b16 %v1102, %v1098
        %v1675 = vpack.c.b16 %v1103, %v1099
        %v1676 = vpack.c.b16 %v1104, %v1100
        %v1677 = vpack.c.b16 %v1105, %v1101
        %v1678 = vpack.c.b16 %v1110, %v1106
        %v1679 = vpack.c.b16 %v1111, %v1107
        %v1680 = vpack.c.b16 %v1112, %v1108
        %v1681 = vpack.c.b16 %v1113, %v1109
        %v1682 = vpack.c.b16 %v1118, %v1114
        %v1683 = vpack.c.b16 %v1119, %v1115
        %v1684 = vpack.c.b16 %v1120, %v1116
        %v1685 = vpack.c.b16 %v1121, %v1117
        %v1686 = vpack.c.b16 %v1126, %v1122
        %v1687 = vpack.c.b16 %v1127, %v1123
        %v1688 = vpack.c.b16 %v1128, %v1124
        %v1689 = vpack.c.b16 %v1129, %v1125
        %v1690 = vpack.c.b16 %v1134, %v1130
        %v1691 = vpack.c.b16 %v1135, %v1131
        %v1692 = vpack.c.b16 %v1136, %v1132
        %v1693 = vpack.c.b16 %v1137, %v1133
        %v1694 = vpack.c.b16 %v1142, %v1138
        %v1695 = vpack.c.b16 %v1143, %v1139
        %v1696 = vpack.c.b16 %v1144, %v1140
        %v1697 = vpack.c.b16 %v1145, %v1141
        %v1698 = vpack.c.b16 %v1150, %v1146
        %v1699 = vpack.c.b16 %v1151, %v1147
        %v1700 = vpack.c.b16 %v1152, %v1148
        %v1701 = vpack.c.b16 %v1153, %v1149
        %v1702 = vpack.c.b16 %v1158, %v1154
        %v1703 = vpack.c.b16 %v1159, %v1155
        %v1704 = vpack.c.b16 %v1160, %v1156
        %v1705 = vpack.c.b16 %v1161, %v1157
        %v1706 = vpack.c.b16 %v1166, %v1162
        %v1707 = vpack.c.b16 %v1167, %v1163
        %v1708 = vpack.c.b16 %v1168, %v1164
        %v1709 = vpack.c.b16 %v1169, %v1165
        %v1710 = vpack.c.b16 %v1174, %v1170
        %v1711 = vpack.c.b16 %v1175, %v1171
        %v1712 = vpack.c.b16 %v1176, %v1172
        %v1713 = vpack.c.b16 %v1177, %v1173
        %v1714 = vpack.c.b16 %v1182, %v1178
        %v1715 = vpack.c.b16 %v1183, %v1179
        %v1716 = vpack.c.b16 %v1184, %v1180
        %v1717 = vpack.c.b16 %v1185, %v1181
        %v1718 = vpack.c.b16 %v1190, %v1186
        %v1719 = vpack.c.b16 %v1191, %v1187
        %v1720 = vpack.c.b16 %v1192, %v1188
        %v1721 = vpack.c.b16 %v1193, %v1189
        %v1722 = vpack.c.b16 %v1198, %v1194
        %v1723 = vpack.c.b16 %v1199, %v1195
        %v1724 = vpack.c.b16 %v1200, %v1196
        %v1725 = vpack.c.b16 %v1201, %v1197
        %v1726 = vpack.c.b16 %v1206, %v1202
        %v1727 = vpack.c.b16 %v1207, %v1203
        %v1728 = vpack.c.b16 %v1208, %v1204
        %v1729 = vpack.c.b16 %v1209, %v1205
        %v1730 = vpack.c.b16 %v1214, %v1210
        %v1731 = vpack.c.b16 %v1215, %v1211
        %v1732 = vpack.c.b16 %v1216, %v1212
        %v1733 = vpack.c.b16 %v1217, %v1213
        %v1734 = vpack.c.b16 %v1222, %v1218
        %v1735 = vpack.c.b16 %v1223, %v1219
        %v1736 = vpack.c.b16 %v1224, %v1220
        %v1737 = vpack.c.b16 %v1225, %v1221
        %v1738 = vpack.c.b16 %v1230, %v1226
        %v1739 = vpack.c.b16 %v1231, %v1227
        %v1740 = vpack.c.b16 %v1232, %v1228
        %v1741 = vpack.c.b16 %v1233, %v1229
        %v1742 = vpack.c.b16 %v1238, %v1234
        %v1743 = vpack.c.b16 %v1239, %v1235
        %v1744 = vpack.c.b16 %v1240, %v1236
        %v1745 = vpack.c.b16 %v1241, %v1237
        %v1746 = vpack.c.b16 %v1246, %v1242
        %v1747 = vpack.c.b16 %v1247, %v1243
        %v1748 = vpack.c.b16 %v1248, %v1244
        %v1749 = vpack.c.b16 %v1249, %v1245
        %v1750 = vpack.c.b16 %v1254, %v1250
        %v1751 = vpack.c.b16 %v1255, %v1251
        %v1752 = vpack.c.b16 %v1256, %v1252
        %v1753 = vpack.c.b16 %v1257, %v1253
        %v1754 = vpack.c.b16 %v1262, %v1258
        %v1755 = vpack.c.b16 %v1263, %v1259
        %v1756 = vpack.c.b16 %v1264, %v1260
        %v1757 = vpack.c.b16 %v1265, %v1261
        %v1758 = vpack.c.b16 %v1270, %v1266
        %v1759 = vpack.c.b16 %v1271, %v1267
        %v1760 = vpack.c.b16 %v1272, %v1268
        %v1761 = vpack.c.b16 %v1273, %v1269
        %v1762 = vpack.c.b16 %v1278, %v1274
        %v1763 = vpack.c.b16 %v1279, %v1275
        %v1764 = vpack.c.b16 %v1280, %v1276
        %v1765 = vpack.c.b16 %v1281, %v1277
        %v1766 = vpack.c.b16 %v1286, %v1282
        %v1767 = vpack.c.b16 %v1287, %v1283
        %v1768 = vpack.c.b16 %v1288, %v1284
        %v1769 = vpack.c.b16 %v1289, %v1285
        %v1770 = vpack.c.b16 %v1294, %v1290
        %v1771 = vpack.c.b16 %v1295, %v1291
        %v1772 = vpack.c.b16 %v1296, %v1292
        %v1773 = vpack.c.b16 %v1297, %v1293
        %v1774 = vpack.c.b16 %v1302, %v1298
        %v1775 = vpack.c.b16 %v1303, %v1299
        %v1776 = vpack.c.b16 %v1304, %v1300
        %v1777 = vpack.c.b16 %v1305, %v1301
        %v1778 = vpack.c.b16 %v1310, %v1306
        %v1779 = vpack.c.b16 %v1311, %v1307
        %v1780 = vpack.c.b16 %v1312, %v1308
        %v1781 = vpack.c.b16 %v1313, %v1309
        %v1782 = vpack.c.b16 %v1318, %v1314
        %v1783 = vpack.c.b16 %v1319, %v1315
        %v1784 = vpack.c.b16 %v1320, %v1316
        %v1785 = vpack.c.b16 %v1321, %v1317
        %v1786 = vpack.c.b16 %v1326, %v1322
        %v1787 = vpack.c.b16 %v1327, %v1323
        %v1788 = vpack.c.b16 %v1328, %v1324
        %v1789 = vpack.c.b16 %v1329, %v1325
        %v1790 = vpack.c.b16 %v1334, %v1330
        %v1791 = vpack.c.b16 %v1335, %v1331
        %v1792 = vpack.c.b16 %v1336, %v1332
        %v1793 = vpack.c.b16 %v1337, %v1333
        %v1794 = vpack.c.b16 %v1342, %v1338
        %v1795 = vpack.c.b16 %v1343, %v1339
        %v1796 = vpack.c.b16 %v1344, %v1340
        %v1797 = vpack.c.b16 %v1345, %v1341
        %v1798 = vpack.c.b16 %v1350, %v1346
        %v1799 = vpack.c.b16 %v1351, %v1347
        %v1800 = vpack.c.b16 %v1352, %v1348
        %v1801 = vpack.c.b16 %v1353, %v1349
        %v1802 = vpack.c.b16 %v1358, %v1354
        %v1803 = vpack.c.b16 %v1359, %v1355
        %v1804 = vpack.c.b16 %v1360, %v1356
        %v1805 = vpack.c.b16 %v1361, %v1357
        %v1806 = vpack.c.b16 %v1366, %v1362
        %v1807 = vpack.c.b16 %v1367, %v1363
        %v1808 = vpack.c.b16 %v1368, %v1364
        %v1809 = vpack.c.b16 %v1369, %v1365
        %v1810 = vpack.c.b16 %v1374, %v1370
        %v1811 = vpack.c.b16 %v1375, %v1371
        %v1812 = vpack.c.b16 %v1376, %v1372
        %v1813 = vpack.c.b16 %v1377, %v1373
        %v1814 = vpack.c.b16 %v1382, %v1378
        %v1815 = vpack.c.b16 %v1383, %v1379
        %v1816 = vpack.c.b16 %v1384, %v1380
        %v1817 = vpack.c.b16 %v1385, %v1381
        %v1818 = vpack.c.b16 %v1390, %v1386
        %v1819 = vpack.c.b16 %v1391, %v1387
        %v1820 = vpack.c.b16 %v1392, %v1388
        %v1821 = vpack.c.b16 %v1393, %v1389
        %v1822 = vpack.c.b16 %v1398, %v1394
        %v1823 = vpack.c.b16 %v1399, %v1395
        %v1824 = vpack.c.b16 %v1400, %v1396
        %v1825 = vpack.c.b16 %v1401, %v1397
        %v1826 = vpack.c.b16 %v1406, %v1402
        %v1827 = vpack.c.b16 %v1407, %v1403
        %v1828 = vpack.c.b16 %v1408, %v1404
        %v1829 = vpack.c.b16 %v1409, %v1405
        %v1830 = vpack.c.b16 %v1414, %v1410
        %v1831 = vpack.c.b16 %v1415, %v1411
        %v1832 = vpack.c.b16 %v1416, %v1412
        %v1833 = vpack.c.b16 %v1417, %v1413
        %v1834 = vpack.c.b16 %v1422, %v1418
        %v1835 = vpack.c.b16 %v1423, %v1419
        %v1836 = vpack.c.b16 %v1424, %v1420
        %v1837 = vpack.c.b16 %v1425, %v1421
        %v1838 = vpack.c.b16 %v1430, %v1426
        %v1839 = vpack.c.b16 %v1431, %v1427
        %v1840 = vpack.c.b16 %v1432, %v1428
        %v1841 = vpack.c.b16 %v1433, %v1429
        %v1842 = vpack.c.b16 %v1438, %v1434
        %v1843 = vpack.c.b16 %v1439, %v1435
        %v1844 = vpack.c.b16 %v1440, %v1436
        %v1845 = vpack.c.b16 %v1441, %v1437
        %v1846 = vpack.c.b16 %v1446, %v1442
        %v1847 = vpack.c.b16 %v1447, %v1443
        %v1848 = vpack.c.b16 %v1448, %v1444
        %v1849 = vpack.c.b16 %v1449, %v1445
        %v1850 = vpack.c.b16 %v1454, %v1450
        %v1851 = vpack.c.b16 %v1455, %v1451
        %v1852 = vpack.c.b16 %v1456, %v1452
        %v1853 = vpack.c.b16 %v1457, %v1453
        %v1854 = vpack.c.b16 %v1462, %v1458
        %v1855 = vpack.c.b16 %v1463, %v1459
        %v1856 = vpack.c.b16 %v1464, %v1460
        %v1857 = vpack.c.b16 %v1465, %v1461
        %v1858 = vpack.c.b16 %v1470, %v1466
        %v1859 = vpack.c.b16 %v1471, %v1467
        %v1860 = vpack.c.b16 %v1472, %v1468
        %v1861 = vpack.c.b16 %v1473, %v1469
        %v1862 = vpack.c.b16 %v1478, %v1474
        %v1863 = vpack.c.b16 %v1479, %v1475
        %v1864 = vpack.c.b16 %v1480, %v1476
        %v1865 = vpack.c.b16 %v1481, %v1477
        %v1866 = vpack.c.b16 %v1486, %v1482
        %v1867 = vpack.c.b16 %v1487, %v1483
        %v1868 = vpack.c.b16 %v1488, %v1484
        %v1869 = vpack.c.b16 %v1489, %v1485
        %v1870 = vpack.c.b16 %v1494, %v1490
        %v1871 = vpack.c.b16 %v1495, %v1491
        %v1872 = vpack.c.b16 %v1496, %v1492
        %v1873 = vpack.c.b16 %v1497, %v1493
        %v1874 = vpack.c.b16 %v1502, %v1498
        %v1875 = vpack.c.b16 %v1503, %v1499
        %v1876 = vpack.c.b16 %v1504, %v1500
        %v1877 = vpack.c.b16 %v1505, %v1501
        %v1878 = vpack.c.b16 %v1510, %v1506
        %v1879 = vpack.c.b16 %v1511, %v1507
        %v1880 = vpack.c.b16 %v1512, %v1508
        %v1881 = vpack.c.b16 %v1513, %v1509
        %v1882 = vpack.c.b16 %v1518, %v1514
        %v1883 = vpack.c.b16 %v1519, %v1515
        %v1884 = vpack.c.b16 %v1520, %v1516
        %v1885 = vpack.c.b16 %v1521, %v1517
        %v1886 = vpack.c.b16 %v1526, %v1522
        %v1887 = vpack.c.b16 %v1527, %v1523
        %v1888 = vpack.c.b16 %v1528, %v1524
        %v1889 = vpack.c.b16 %v1529, %v1525
        %v1890 = vpack.c.b16 %v1534, %v1530
        %v1891 = vpack.c.b16 %v1535, %v1531
        %v1892 = vpack.c.b16 %v1536, %v1532
        %v1893 = vpack.c.b16 %v1537, %v1533
        %v1894 = vpack.c.b16 %v1542, %v1538
        %v1895 = vpack.c.b16 %v1543, %v1539
        %v1896 = vpack.c.b16 %v1544, %v1540
        %v1897 = vpack.c.b16 %v1545, %v1541
        %v1898 = vpack.c.b16 %v1550, %v1546
        %v1899 = vpack.c.b16 %v1551, %v1547
        %v1900 = vpack.c.b16 %v1552, %v1548
        %v1901 = vpack.c.b16 %v1553, %v1549
        %v1902 = vpack.c.b16 %v1558, %v1554
        %v1903 = vpack.c.b16 %v1559, %v1555
        %v1904 = vpack.c.b16 %v1560, %v1556
        %v1905 = vpack.c.b16 %v1561, %v1557
        %v1906 = vpack.c.b16 %v1566, %v1562
        %v1907 = vpack.c.b16 %v1567, %v1563
        %v1908 = vpack.c.b16 %v1568, %v1564
        %v1909 = vpack.c.b16 %v1569, %v1565
        %v1910 = vpack.c.b16 %v1574, %v1570
        %v1911 = vpack.c.b16 %v1575, %v1571
        %v1912 = vpack.c.b16 %v1576, %v1572
        %v1913 = vpack.c.b16 %v1577, %v1573
        %v1914 = vpack.c.b16 %v1582, %v1578
        %v1915 = vpack.c.b16 %v1583, %v1579
        %v1916 = vpack.c.b16 %v1584, %v1580
        %v1917 = vpack.c.b16 %v1585, %v1581
        %v1918 = vpack.c.b16 %v1590, %v1586
        %v1919 = vpack.c.b16 %v1591, %v1587
        %v1920 = vpack.c.b16 %v1592, %v1588
        %v1921 = vpack.c.b16 %v1593, %v1589
        %v1922 = vpack.c.b16 %v1598, %v1594
        %v1923 = vpack.c.b16 %v1599, %v1595
        %v1924 = vpack.c.b16 %v1600, %v1596
        %v1925 = vpack.c.b16 %v1601, %v1597
        %v1926 = vpack.c.b16 %v1606, %v1602
        %v1927 = vpack.c.b16 %v1607, %v1603
        %v1928 = vpack.c.b16 %v1608, %v1604
        %v1929 = vpack.c.b16 %v1609, %v1605
        %v1930 = vpack.c.b16 %v1614, %v1610
        %v1931 = vpack.c.b16 %v1615, %v1611
        %v1932 = vpack.c.b16 %v1616, %v1612
        %v1933 = vpack.c.b16 %v1617, %v1613
        %v1934 = vpack.c.b16 %v1622, %v1618
        %v1935 = vpack.c.b16 %v1623, %v1619
        %v1936 = vpack.c.b16 %v1624, %v1620
        %v1937 = vpack.c.b16 %v1625, %v1621
        %v1938 = vpack.c.b16 %v1630, %v1626
        %v1939 = vpack.c.b16 %v1631, %v1627
        %v1940 = vpack.c.b16 %v1632, %v1628
        %v1941 = vpack.c.b16 %v1633, %v1629
        %v1942 = vpack.c.b16 %v1638, %v1634
        %v1943 = vpack.c.b16 %v1639, %v1635
        %v1944 = vpack.c.b16 %v1640, %v1636
        %v1945 = vpack.c.b16 %v1641, %v1637
        %v1946 = vpack.c.b16 %v1646, %v1642
        %v1947 = vpack.c.b16 %v1647, %v1643
        %v1948 = vpack.c.b16 %v1648, %v1644
        %v1949 = vpack.c.b16 %v1649, %v1645
        %vm2250 = vcmask 392192
        %v2252 = vsel %vm2250, %v417, 0
        %v2255 = vsel %vm2250, %v427, 0
        %2257 = vmatprep.subr.bf16.mxu0 %v1679
        %2258 = vmatpush1.bf16.msra.mxu0 %v1678
        %2259 = vmatprep.subr.bf16.mxu0 %v1675
        %2260 = vmatpush1.bf16.msra.mxu0 %v1674
        %2261 = vmatprep.subr.bf16.mxu0 %v1671
        %2262 = vmatpush1.bf16.msra.mxu0 %v1670
        %2263 = vmatprep.subr.bf16.mxu0 %v1667
        %2264 = vmatpush1.bf16.msra.mxu0 %v1666
        %2265 = vmatprep.subr.bf16.mxu0 %v1663
        %2266 = vmatpush1.bf16.msra.mxu0 %v1662
        %2267 = vmatprep.subr.bf16.mxu0 %v1659
        %2268 = vmatpush1.bf16.msra.mxu0 %v1658
        %2269 = vmatprep.subr.bf16.mxu0 %v1655
        %2270 = vmatpush1.bf16.msra.mxu0 %v1654
        %2271 = vmatprep.subr.bf16.mxu0 %v1651
        %2272 = vmatpush1.bf16.msra.mxu0 %v1650
        %2273 = vmatprep.subr.bf16.mxu0 %v1711
        %2274 = vmatpush2.bf16.msra.mxu0 %v1710
        %2275 = vmatprep.subr.bf16.mxu0 %v1707
        %2276 = vmatpush2.bf16.msra.mxu0 %v1706
        %2277 = vmatprep.subr.bf16.mxu0 %v1703
        %2278 = vmatpush2.bf16.msra.mxu0 %v1702
        %2279 = vmatprep.subr.bf16.mxu0 %v1699
        %2280 = vmatpush2.bf16.msra.mxu0 %v1698
        %2281 = vmatprep.subr.bf16.mxu0 %v1695
        %2282 = vmatpush2.bf16.msra.mxu0 %v1694
        %2283 = vmatprep.subr.bf16.mxu0 %v1691
        %2284 = vmatpush2.bf16.msra.mxu0 %v1690
        %2285 = vmatprep.subr.bf16.mxu0 %v1687
        %2286 = vmatpush2.bf16.msra.mxu0 %v1686
        %2287 = vmatprep.subr.bf16.mxu0 %v1683
        %2288 = vmatpush2.bf16.msra.mxu0 %v1682
        %2289 = vmatprep.mubr.bf16.mxu0 %v409
        %2290 = vmatmul.mubr.bf16.gmra.mxu0 %v408
        %v2291 = vpop.f32.mrf.mxu0
        %v2292 = vadd.f32 %v733, %v2291
        %v2293 = vpop.f32.mrf.mxu0
        %v2294 = vadd.f32 %v737, %v2293
        %v2295 = vpop.f32.mrf.mxu0
        %v2296 = vadd.f32 %v733, %v2295
        %v2297 = vpop.f32.mrf.mxu0
        %v2298 = vadd.f32 %v737, %v2297
        %2299 = vmatprep.mubr.bf16.mxu0 %v419
        %2300 = vmatmul.mubr.bf16.gmra.mxu0 %v418
        %v2301 = vpop.f32.mrf.mxu0
        %v2302 = vadd.f32 %v733, %v2301
        %v2303 = vpop.f32.mrf.mxu0
        %v2304 = vadd.f32 %v737, %v2303
        %v2305 = vpop.f32.mrf.mxu0
        %v2306 = vadd.f32 %v733, %v2305
        %v2307 = vpop.f32.mrf.mxu0
        %v2308 = vadd.f32 %v737, %v2307
        %2309 = vdwg.mxu0
        %2310 = vmatprep.subr.bf16.mxu0 %v1743
        %2311 = vmatpush1.bf16.msra.mxu0 %v1742
        %2312 = vmatprep.subr.bf16.mxu0 %v1739
        %2313 = vmatpush1.bf16.msra.mxu0 %v1738
        %2314 = vmatprep.subr.bf16.mxu0 %v1735
        %2315 = vmatpush1.bf16.msra.mxu0 %v1734
        %2316 = vmatprep.subr.bf16.mxu0 %v1731
        %2317 = vmatpush1.bf16.msra.mxu0 %v1730
        %2318 = vmatprep.subr.bf16.mxu0 %v1727
        %2319 = vmatpush1.bf16.msra.mxu0 %v1726
        %2320 = vmatprep.subr.bf16.mxu0 %v1723
        %2321 = vmatpush1.bf16.msra.mxu0 %v1722
        %2322 = vmatprep.subr.bf16.mxu0 %v1719
        %2323 = vmatpush1.bf16.msra.mxu0 %v1718
        %2324 = vmatprep.subr.bf16.mxu0 %v1715
        %2325 = vmatpush1.bf16.msra.mxu0 %v1714
        %2326 = vmatprep.subr.bf16.mxu0 %v1775
        %2327 = vmatpush2.bf16.msra.mxu0 %v1774
        %2328 = vmatprep.subr.bf16.mxu0 %v1771
        %2329 = vmatpush2.bf16.msra.mxu0 %v1770
        %2330 = vmatprep.subr.bf16.mxu0 %v1767
        %2331 = vmatpush2.bf16.msra.mxu0 %v1766
        %2332 = vmatprep.subr.bf16.mxu0 %v1763
        %2333 = vmatpush2.bf16.msra.mxu0 %v1762
        %2334 = vmatprep.subr.bf16.mxu0 %v1759
        %2335 = vmatpush2.bf16.msra.mxu0 %v1758
        %2336 = vmatprep.subr.bf16.mxu0 %v1755
        %2337 = vmatpush2.bf16.msra.mxu0 %v1754
        %2338 = vmatprep.subr.bf16.mxu0 %v1751
        %2339 = vmatpush2.bf16.msra.mxu0 %v1750
        %2340 = vmatprep.subr.bf16.mxu0 %v1747
        %2341 = vmatpush2.bf16.msra.mxu0 %v1746
        %2342 = vmatprep.mubr.bf16.mxu0 %v411
        %2343 = vmatmul.mubr.bf16.gmra.mxu0 %v410
        %v2344 = vpop.f32.mrf.mxu0
        %v2345 = vadd.f32 %v2292, %v2344
        %v2346 = vpop.f32.mrf.mxu0
        %v2347 = vadd.f32 %v2294, %v2346
        %v2348 = vpop.f32.mrf.mxu0
        %v2349 = vadd.f32 %v2296, %v2348
        %v2350 = vpop.f32.mrf.mxu0
        %v2351 = vadd.f32 %v2298, %v2350
        %2352 = vmatprep.mubr.bf16.mxu0 %v421
        %2353 = vmatmul.mubr.bf16.gmra.mxu0 %v420
        %v2354 = vpop.f32.mrf.mxu0
        %v2355 = vadd.f32 %v2302, %v2354
        %v2356 = vpop.f32.mrf.mxu0
        %v2357 = vadd.f32 %v2304, %v2356
        %v2358 = vpop.f32.mrf.mxu0
        %v2359 = vadd.f32 %v2306, %v2358
        %v2360 = vpop.f32.mrf.mxu0
        %v2361 = vadd.f32 %v2308, %v2360
        %2362 = vdwg.mxu0
        %2363 = vmatprep.subr.bf16.mxu0 %v1807
        %2364 = vmatpush1.bf16.msra.mxu0 %v1806
        %2365 = vmatprep.subr.bf16.mxu0 %v1803
        %2366 = vmatpush1.bf16.msra.mxu0 %v1802
        %2367 = vmatprep.subr.bf16.mxu0 %v1799
        %2368 = vmatpush1.bf16.msra.mxu0 %v1798
        %2369 = vmatprep.subr.bf16.mxu0 %v1795
        %2370 = vmatpush1.bf16.msra.mxu0 %v1794
        %2371 = vmatprep.subr.bf16.mxu0 %v1791
        %2372 = vmatpush1.bf16.msra.mxu0 %v1790
        %2373 = vmatprep.subr.bf16.mxu0 %v1787
        %2374 = vmatpush1.bf16.msra.mxu0 %v1786
        %2375 = vmatprep.subr.bf16.mxu0 %v1783
        %2376 = vmatpush1.bf16.msra.mxu0 %v1782
        %2377 = vmatprep.subr.bf16.mxu0 %v1779
        %2378 = vmatpush1.bf16.msra.mxu0 %v1778
        %2379 = vmatprep.subr.bf16.mxu0 %v1839
        %2380 = vmatpush2.bf16.msra.mxu0 %v1838
        %2381 = vmatprep.subr.bf16.mxu0 %v1835
        %2382 = vmatpush2.bf16.msra.mxu0 %v1834
        %2383 = vmatprep.subr.bf16.mxu0 %v1831
        %2384 = vmatpush2.bf16.msra.mxu0 %v1830
        %2385 = vmatprep.subr.bf16.mxu0 %v1827
        %2386 = vmatpush2.bf16.msra.mxu0 %v1826
        %2387 = vmatprep.subr.bf16.mxu0 %v1823
        %2388 = vmatpush2.bf16.msra.mxu0 %v1822
        %2389 = vmatprep.subr.bf16.mxu0 %v1819
        %2390 = vmatpush2.bf16.msra.mxu0 %v1818
        %2391 = vmatprep.subr.bf16.mxu0 %v1815
        %2392 = vmatpush2.bf16.msra.mxu0 %v1814
        %2393 = vmatprep.subr.bf16.mxu0 %v1811
        %2394 = vmatpush2.bf16.msra.mxu0 %v1810
        %2395 = vmatprep.mubr.bf16.mxu0 %v413
        %2396 = vmatmul.mubr.bf16.gmra.mxu0 %v412
        %v2397 = vpop.f32.mrf.mxu0
        %v2398 = vadd.f32 %v2345, %v2397
        %v2399 = vpop.f32.mrf.mxu0
        %v2400 = vadd.f32 %v2347, %v2399
        %v2401 = vpop.f32.mrf.mxu0
        %v2402 = vadd.f32 %v2349, %v2401
        %v2403 = vpop.f32.mrf.mxu0
        %v2404 = vadd.f32 %v2351, %v2403
        %2405 = vmatprep.mubr.bf16.mxu0 %v423
        %2406 = vmatmul.mubr.bf16.gmra.mxu0 %v422
        %v2407 = vpop.f32.mrf.mxu0
        %v2408 = vadd.f32 %v2355, %v2407
        %v2409 = vpop.f32.mrf.mxu0
        %v2410 = vadd.f32 %v2357, %v2409
        %v2411 = vpop.f32.mrf.mxu0
        %v2412 = vadd.f32 %v2359, %v2411
        %v2413 = vpop.f32.mrf.mxu0
        %v2414 = vadd.f32 %v2361, %v2413
        %2415 = vdwg.mxu0
        %2416 = vmatprep.subr.bf16.mxu0 %v1871
        %2417 = vmatpush1.bf16.msra.mxu0 %v1870
        %2418 = vmatprep.subr.bf16.mxu0 %v1867
        %2419 = vmatpush1.bf16.msra.mxu0 %v1866
        %2420 = vmatprep.subr.bf16.mxu0 %v1863
        %2421 = vmatpush1.bf16.msra.mxu0 %v1862
        %2422 = vmatprep.subr.bf16.mxu0 %v1859
        %2423 = vmatpush1.bf16.msra.mxu0 %v1858
        %2424 = vmatprep.subr.bf16.mxu0 %v1855
        %2425 = vmatpush1.bf16.msra.mxu0 %v1854
        %2426 = vmatprep.subr.bf16.mxu0 %v1851
        %2427 = vmatpush1.bf16.msra.mxu0 %v1850
        %2428 = vmatprep.subr.bf16.mxu0 %v1847
        %2429 = vmatpush1.bf16.msra.mxu0 %v1846
        %2430 = vmatprep.subr.bf16.mxu0 %v1843
        %2431 = vmatpush1.bf16.msra.mxu0 %v1842
        %2432 = vmatprep.subr.bf16.mxu0 %v1903
        %2433 = vmatpush2.bf16.msra.mxu0 %v1902
        %2434 = vmatprep.subr.bf16.mxu0 %v1899
        %2435 = vmatpush2.bf16.msra.mxu0 %v1898
        %2436 = vmatprep.subr.bf16.mxu0 %v1895
        %2437 = vmatpush2.bf16.msra.mxu0 %v1894
        %2438 = vmatprep.subr.bf16.mxu0 %v1891
        %2439 = vmatpush2.bf16.msra.mxu0 %v1890
        %2440 = vmatprep.subr.bf16.mxu0 %v1887
        %2441 = vmatpush2.bf16.msra.mxu0 %v1886
        %2442 = vmatprep.subr.bf16.mxu0 %v1883
        %2443 = vmatpush2.bf16.msra.mxu0 %v1882
        %2444 = vmatprep.subr.bf16.mxu0 %v1879
        %2445 = vmatpush2.bf16.msra.mxu0 %v1878
        %2446 = vmatprep.subr.bf16.mxu0 %v1875
        %2447 = vmatpush2.bf16.msra.mxu0 %v1874
        %2448 = vmatprep.mubr.bf16.mxu0 %v415
        %2449 = vmatmul.mubr.bf16.gmra.mxu0 %v414
        %v2450 = vpop.f32.mrf.mxu0
        %v2451 = vadd.f32 %v2398, %v2450
        %v2452 = vpop.f32.mrf.mxu0
        %v2453 = vadd.f32 %v2400, %v2452
        %v2454 = vpop.f32.mrf.mxu0
        %v2455 = vadd.f32 %v2402, %v2454
        %v2456 = vpop.f32.mrf.mxu0
        %v2457 = vadd.f32 %v2404, %v2456
        %2458 = vmatprep.mubr.bf16.mxu0 %v425
        %2459 = vmatmul.mubr.bf16.gmra.mxu0 %v424
        %v2460 = vpop.f32.mrf.mxu0
        %v2461 = vadd.f32 %v2408, %v2460
        %v2462 = vpop.f32.mrf.mxu0
        %v2463 = vadd.f32 %v2410, %v2462
        %v2464 = vpop.f32.mrf.mxu0
        %v2465 = vadd.f32 %v2412, %v2464
        %v2466 = vpop.f32.mrf.mxu0
        %v2467 = vadd.f32 %v2414, %v2466
        %2468 = vdwg.mxu0
        %2469 = vmatprep.subr.bf16.mxu0 %v1935
        %2470 = vmatpush1.bf16.msra.mxu0 %v1934
        %2471 = vmatprep.subr.bf16.mxu0 %v1931
        %2472 = vmatpush1.bf16.msra.mxu0 %v1930
        %2473 = vmatprep.subr.bf16.mxu0 %v1927
        %2474 = vmatpush1.bf16.msra.mxu0 %v1926
        %2475 = vmatprep.subr.bf16.mxu0 %v1923
        %2476 = vmatpush1.bf16.msra.mxu0 %v1922
        %2477 = vmatprep.subr.bf16.mxu0 %v1919
        %2478 = vmatpush1.bf16.msra.mxu0 %v1918
        %2479 = vmatprep.subr.bf16.mxu0 %v1915
        %2480 = vmatpush1.bf16.msra.mxu0 %v1914
        %2481 = vmatprep.subr.bf16.mxu0 %v1911
        %2482 = vmatpush1.bf16.msra.mxu0 %v1910
        %2483 = vmatprep.subr.bf16.mxu0 %v1907
        %2484 = vmatpush1.bf16.msra.mxu0 %v1906
        %2485 = vmatprep.subr.bf16.mxu0 0
        %2486 = vmatpush2.bf16.msra.mxu0 0
        %2487 = vmatprep.subr.bf16.mxu0 0
        %2488 = vmatpush2.bf16.msra.mxu0 0
        %2489 = vmatprep.subr.bf16.mxu0 0
        %2490 = vmatpush2.bf16.msra.mxu0 0
        %2491 = vmatprep.subr.bf16.mxu0 0
        %2492 = vmatpush2.bf16.msra.mxu0 0
        %2493 = vmatprep.subr.bf16.mxu0 0
        %2494 = vmatpush2.bf16.msra.mxu0 0
        %2495 = vmatprep.subr.bf16.mxu0 %v1947
        %2496 = vmatpush2.bf16.msra.mxu0 %v1946
        %2497 = vmatprep.subr.bf16.mxu0 %v1943
        %2498 = vmatpush2.bf16.msra.mxu0 %v1942
        %2499 = vmatprep.subr.bf16.mxu0 %v1939
        %2500 = vmatpush2.bf16.msra.mxu0 %v1938
        %2501 = vmatprep.mubr.bf16.mxu0 %v2252
        %2502 = vmatmul.mubr.bf16.gmra.mxu0 %v416
        %v2503 = vpop.f32.mrf.mxu0
        %v2504 = vadd.f32 %v2451, %v2503
        %v2505 = vpop.f32.mrf.mxu0
        %v2506 = vadd.f32 %v2453, %v2505
        %v2507 = vpop.f32.mrf.mxu0
        %v2508 = vadd.f32 %v2455, %v2507
        %v2509 = vpop.f32.mrf.mxu0
        %v2510 = vadd.f32 %v2457, %v2509
        %2511 = vmatprep.mubr.bf16.mxu0 %v2255
        %2512 = vmatmul.mubr.bf16.gmra.mxu0 %v426
        %v2513 = vpop.f32.mrf.mxu0
        %v2514 = vadd.f32 %v2461, %v2513
        %v2515 = vpop.f32.mrf.mxu0
        %v2516 = vadd.f32 %v2463, %v2515
        %v2517 = vpop.f32.mrf.mxu0
        %v2518 = vadd.f32 %v2465, %v2517
        %v2519 = vpop.f32.mrf.mxu0
        %v2520 = vadd.f32 %v2467, %v2519
        %2521 = vdwg.mxu0
        %2522 = vmatprep.subr.bf16.mxu0 %v1681
        %2523 = vmatpush1.bf16.msra.mxu0 %v1680
        %2524 = vmatprep.subr.bf16.mxu0 %v1677
        %2525 = vmatpush1.bf16.msra.mxu0 %v1676
        %2526 = vmatprep.subr.bf16.mxu0 %v1673
        %2527 = vmatpush1.bf16.msra.mxu0 %v1672
        %2528 = vmatprep.subr.bf16.mxu0 %v1669
        %2529 = vmatpush1.bf16.msra.mxu0 %v1668
        %2530 = vmatprep.subr.bf16.mxu0 %v1665
        %2531 = vmatpush1.bf16.msra.mxu0 %v1664
        %2532 = vmatprep.subr.bf16.mxu0 %v1661
        %2533 = vmatpush1.bf16.msra.mxu0 %v1660
        %2534 = vmatprep.subr.bf16.mxu0 %v1657
        %2535 = vmatpush1.bf16.msra.mxu0 %v1656
        %2536 = vmatprep.subr.bf16.mxu0 %v1653
        %2537 = vmatpush1.bf16.msra.mxu0 %v1652
        %2538 = vmatprep.subr.bf16.mxu0 %v1713
        %2539 = vmatpush2.bf16.msra.mxu0 %v1712
        %2540 = vmatprep.subr.bf16.mxu0 %v1709
        %2541 = vmatpush2.bf16.msra.mxu0 %v1708
        %2542 = vmatprep.subr.bf16.mxu0 %v1705
        %2543 = vmatpush2.bf16.msra.mxu0 %v1704
        %2544 = vmatprep.subr.bf16.mxu0 %v1701
        %2545 = vmatpush2.bf16.msra.mxu0 %v1700
        %2546 = vmatprep.subr.bf16.mxu0 %v1697
        %2547 = vmatpush2.bf16.msra.mxu0 %v1696
        %2548 = vmatprep.subr.bf16.mxu0 %v1693
        %2549 = vmatpush2.bf16.msra.mxu0 %v1692
        %2550 = vmatprep.subr.bf16.mxu0 %v1689
        %2551 = vmatpush2.bf16.msra.mxu0 %v1688
        %2552 = vmatprep.subr.bf16.mxu0 %v1685
        %2553 = vmatpush2.bf16.msra.mxu0 %v1684
        %2554 = vmatprep.mubr.bf16.mxu0 %v409
        %2555 = vmatmul.mubr.bf16.gmra.mxu0 %v408
        %v2556 = vpop.f32.mrf.mxu0
        %v2557 = vadd.f32 %v741, %v2556
        %v2558 = vpop.f32.mrf.mxu0
        %v2559 = vadd.f32 %v745, %v2558
        %v2560 = vpop.f32.mrf.mxu0
        %v2561 = vadd.f32 %v741, %v2560
        %v2562 = vpop.f32.mrf.mxu0
        %v2563 = vadd.f32 %v745, %v2562
        %2564 = vmatprep.mubr.bf16.mxu0 %v419
        %2565 = vmatmul.mubr.bf16.gmra.mxu0 %v418
        %v2566 = vpop.f32.mrf.mxu0
        %v2567 = vadd.f32 %v741, %v2566
        %v2568 = vpop.f32.mrf.mxu0
        %v2569 = vadd.f32 %v745, %v2568
        %v2570 = vpop.f32.mrf.mxu0
        %v2571 = vadd.f32 %v741, %v2570
        %v2572 = vpop.f32.mrf.mxu0
        %v2573 = vadd.f32 %v745, %v2572
        %2574 = vdwg.mxu0
        %2575 = vmatprep.subr.bf16.mxu0 %v1745
        %2576 = vmatpush1.bf16.msra.mxu0 %v1744
        %2577 = vmatprep.subr.bf16.mxu0 %v1741
        %2578 = vmatpush1.bf16.msra.mxu0 %v1740
        %2579 = vmatprep.subr.bf16.mxu0 %v1737
        %2580 = vmatpush1.bf16.msra.mxu0 %v1736
        %2581 = vmatprep.subr.bf16.mxu0 %v1733
        %2582 = vmatpush1.bf16.msra.mxu0 %v1732
        %2583 = vmatprep.subr.bf16.mxu0 %v1729
        %2584 = vmatpush1.bf16.msra.mxu0 %v1728
        %2585 = vmatprep.subr.bf16.mxu0 %v1725
        %2586 = vmatpush1.bf16.msra.mxu0 %v1724
        %2587 = vmatprep.subr.bf16.mxu0 %v1721
        %2588 = vmatpush1.bf16.msra.mxu0 %v1720
        %2589 = vmatprep.subr.bf16.mxu0 %v1717
        %2590 = vmatpush1.bf16.msra.mxu0 %v1716
        %2591 = vmatprep.subr.bf16.mxu0 %v1777
        %2592 = vmatpush2.bf16.msra.mxu0 %v1776
        %2593 = vmatprep.subr.bf16.mxu0 %v1773
        %2594 = vmatpush2.bf16.msra.mxu0 %v1772
        %2595 = vmatprep.subr.bf16.mxu0 %v1769
        %2596 = vmatpush2.bf16.msra.mxu0 %v1768
        %2597 = vmatprep.subr.bf16.mxu0 %v1765
        %2598 = vmatpush2.bf16.msra.mxu0 %v1764
        %2599 = vmatprep.subr.bf16.mxu0 %v1761
        %2600 = vmatpush2.bf16.msra.mxu0 %v1760
        %2601 = vmatprep.subr.bf16.mxu0 %v1757
        %2602 = vmatpush2.bf16.msra.mxu0 %v1756
        %2603 = vmatprep.subr.bf16.mxu0 %v1753
        %2604 = vmatpush2.bf16.msra.mxu0 %v1752
        %2605 = vmatprep.subr.bf16.mxu0 %v1749
        %2606 = vmatpush2.bf16.msra.mxu0 %v1748
        %2607 = vmatprep.mubr.bf16.mxu0 %v411
        %2608 = vmatmul.mubr.bf16.gmra.mxu0 %v410
        %v2609 = vpop.f32.mrf.mxu0
        %v2610 = vadd.f32 %v2557, %v2609
        %v2611 = vpop.f32.mrf.mxu0
        %v2612 = vadd.f32 %v2559, %v2611
        %v2613 = vpop.f32.mrf.mxu0
        %v2614 = vadd.f32 %v2561, %v2613
        %v2615 = vpop.f32.mrf.mxu0
        %v2616 = vadd.f32 %v2563, %v2615
        %2617 = vmatprep.mubr.bf16.mxu0 %v421
        %2618 = vmatmul.mubr.bf16.gmra.mxu0 %v420
        %v2619 = vpop.f32.mrf.mxu0
        %v2620 = vadd.f32 %v2567, %v2619
        %v2621 = vpop.f32.mrf.mxu0
        %v2622 = vadd.f32 %v2569, %v2621
        %v2623 = vpop.f32.mrf.mxu0
        %v2624 = vadd.f32 %v2571, %v2623
        %v2625 = vpop.f32.mrf.mxu0
        %v2626 = vadd.f32 %v2573, %v2625
        %2627 = vdwg.mxu0
        %2628 = vmatprep.subr.bf16.mxu0 %v1809
        %2629 = vmatpush1.bf16.msra.mxu0 %v1808
        %2630 = vmatprep.subr.bf16.mxu0 %v1805
        %2631 = vmatpush1.bf16.msra.mxu0 %v1804
        %2632 = vmatprep.subr.bf16.mxu0 %v1801
        %2633 = vmatpush1.bf16.msra.mxu0 %v1800
        %2634 = vmatprep.subr.bf16.mxu0 %v1797
        %2635 = vmatpush1.bf16.msra.mxu0 %v1796
        %2636 = vmatprep.subr.bf16.mxu0 %v1793
        %2637 = vmatpush1.bf16.msra.mxu0 %v1792
        %2638 = vmatprep.subr.bf16.mxu0 %v1789
        %2639 = vmatpush1.bf16.msra.mxu0 %v1788
        %2640 = vmatprep.subr.bf16.mxu0 %v1785
        %2641 = vmatpush1.bf16.msra.mxu0 %v1784
        %2642 = vmatprep.subr.bf16.mxu0 %v1781
        %2643 = vmatpush1.bf16.msra.mxu0 %v1780
        %2644 = vmatprep.subr.bf16.mxu0 %v1841
        %2645 = vmatpush2.bf16.msra.mxu0 %v1840
        %2646 = vmatprep.subr.bf16.mxu0 %v1837
        %2647 = vmatpush2.bf16.msra.mxu0 %v1836
        %2648 = vmatprep.subr.bf16.mxu0 %v1833
        %2649 = vmatpush2.bf16.msra.mxu0 %v1832
        %2650 = vmatprep.subr.bf16.mxu0 %v1829
        %2651 = vmatpush2.bf16.msra.mxu0 %v1828
        %2652 = vmatprep.subr.bf16.mxu0 %v1825
        %2653 = vmatpush2.bf16.msra.mxu0 %v1824
        %2654 = vmatprep.subr.bf16.mxu0 %v1821
        %2655 = vmatpush2.bf16.msra.mxu0 %v1820
        %2656 = vmatprep.subr.bf16.mxu0 %v1817
        %2657 = vmatpush2.bf16.msra.mxu0 %v1816
        %2658 = vmatprep.subr.bf16.mxu0 %v1813
        %2659 = vmatpush2.bf16.msra.mxu0 %v1812
        %2660 = vmatprep.mubr.bf16.mxu0 %v413
        %2661 = vmatmul.mubr.bf16.gmra.mxu0 %v412
        %v2662 = vpop.f32.mrf.mxu0
        %v2663 = vadd.f32 %v2610, %v2662
        %v2664 = vpop.f32.mrf.mxu0
        %v2665 = vadd.f32 %v2612, %v2664
        %v2666 = vpop.f32.mrf.mxu0
        %v2667 = vadd.f32 %v2614, %v2666
        %v2668 = vpop.f32.mrf.mxu0
        %v2669 = vadd.f32 %v2616, %v2668
        %2670 = vmatprep.mubr.bf16.mxu0 %v423
        %2671 = vmatmul.mubr.bf16.gmra.mxu0 %v422
        %v2672 = vpop.f32.mrf.mxu0
        %v2673 = vadd.f32 %v2620, %v2672
        %v2674 = vpop.f32.mrf.mxu0
        %v2675 = vadd.f32 %v2622, %v2674
        %v2676 = vpop.f32.mrf.mxu0
        %v2677 = vadd.f32 %v2624, %v2676
        %v2678 = vpop.f32.mrf.mxu0
        %v2679 = vadd.f32 %v2626, %v2678
        %2680 = vdwg.mxu0
        %2681 = vmatprep.subr.bf16.mxu0 %v1873
        %2682 = vmatpush1.bf16.msra.mxu0 %v1872
        %2683 = vmatprep.subr.bf16.mxu0 %v1869
        %2684 = vmatpush1.bf16.msra.mxu0 %v1868
        %2685 = vmatprep.subr.bf16.mxu0 %v1865
        %2686 = vmatpush1.bf16.msra.mxu0 %v1864
        %2687 = vmatprep.subr.bf16.mxu0 %v1861
        %2688 = vmatpush1.bf16.msra.mxu0 %v1860
        %2689 = vmatprep.subr.bf16.mxu0 %v1857
        %2690 = vmatpush1.bf16.msra.mxu0 %v1856
        %2691 = vmatprep.subr.bf16.mxu0 %v1853
        %2692 = vmatpush1.bf16.msra.mxu0 %v1852
        %2693 = vmatprep.subr.bf16.mxu0 %v1849
        %2694 = vmatpush1.bf16.msra.mxu0 %v1848
        %2695 = vmatprep.subr.bf16.mxu0 %v1845
        %2696 = vmatpush1.bf16.msra.mxu0 %v1844
        %2697 = vmatprep.subr.bf16.mxu0 %v1905
        %2698 = vmatpush2.bf16.msra.mxu0 %v1904
        %2699 = vmatprep.subr.bf16.mxu0 %v1901
        %2700 = vmatpush2.bf16.msra.mxu0 %v1900
        %2701 = vmatprep.subr.bf16.mxu0 %v1897
        %2702 = vmatpush2.bf16.msra.mxu0 %v1896
        %2703 = vmatprep.subr.bf16.mxu0 %v1893
        %2704 = vmatpush2.bf16.msra.mxu0 %v1892
        %2705 = vmatprep.subr.bf16.mxu0 %v1889
        %2706 = vmatpush2.bf16.msra.mxu0 %v1888
        %2707 = vmatprep.subr.bf16.mxu0 %v1885
        %2708 = vmatpush2.bf16.msra.mxu0 %v1884
        %2709 = vmatprep.subr.bf16.mxu0 %v1881
        %2710 = vmatpush2.bf16.msra.mxu0 %v1880
        %2711 = vmatprep.subr.bf16.mxu0 %v1877
        %2712 = vmatpush2.bf16.msra.mxu0 %v1876
        %2713 = vmatprep.mubr.bf16.mxu0 %v415
        %2714 = vmatmul.mubr.bf16.gmra.mxu0 %v414
        %v2715 = vpop.f32.mrf.mxu0
        %v2716 = vadd.f32 %v2663, %v2715
        %v2717 = vpop.f32.mrf.mxu0
        %v2718 = vadd.f32 %v2665, %v2717
        %v2719 = vpop.f32.mrf.mxu0
        %v2720 = vadd.f32 %v2667, %v2719
        %v2721 = vpop.f32.mrf.mxu0
        %v2722 = vadd.f32 %v2669, %v2721
        %2723 = vmatprep.mubr.bf16.mxu0 %v425
        %2724 = vmatmul.mubr.bf16.gmra.mxu0 %v424
        %v2725 = vpop.f32.mrf.mxu0
        %v2726 = vadd.f32 %v2673, %v2725
        %v2727 = vpop.f32.mrf.mxu0
        %v2728 = vadd.f32 %v2675, %v2727
        %v2729 = vpop.f32.mrf.mxu0
        %v2730 = vadd.f32 %v2677, %v2729
        %v2731 = vpop.f32.mrf.mxu0
        %v2732 = vadd.f32 %v2679, %v2731
        %2733 = vdwg.mxu0
        %2734 = vmatprep.subr.bf16.mxu0 %v1937
        %2735 = vmatpush1.bf16.msra.mxu0 %v1936
        %2736 = vmatprep.subr.bf16.mxu0 %v1933
        %2737 = vmatpush1.bf16.msra.mxu0 %v1932
        %2738 = vmatprep.subr.bf16.mxu0 %v1929
        %2739 = vmatpush1.bf16.msra.mxu0 %v1928
        %2740 = vmatprep.subr.bf16.mxu0 %v1925
        %2741 = vmatpush1.bf16.msra.mxu0 %v1924
        %2742 = vmatprep.subr.bf16.mxu0 %v1921
        %2743 = vmatpush1.bf16.msra.mxu0 %v1920
        %2744 = vmatprep.subr.bf16.mxu0 %v1917
        %2745 = vmatpush1.bf16.msra.mxu0 %v1916
        %2746 = vmatprep.subr.bf16.mxu0 %v1913
        %2747 = vmatpush1.bf16.msra.mxu0 %v1912
        %2748 = vmatprep.subr.bf16.mxu0 %v1909
        %2749 = vmatpush1.bf16.msra.mxu0 %v1908
        %2750 = vmatprep.subr.bf16.mxu0 0
        %2751 = vmatpush2.bf16.msra.mxu0 0
        %2752 = vmatprep.subr.bf16.mxu0 0
        %2753 = vmatpush2.bf16.msra.mxu0 0
        %2754 = vmatprep.subr.bf16.mxu0 0
        %2755 = vmatpush2.bf16.msra.mxu0 0
        %2756 = vmatprep.subr.bf16.mxu0 0
        %2757 = vmatpush2.bf16.msra.mxu0 0
        %2758 = vmatprep.subr.bf16.mxu0 0
        %2759 = vmatpush2.bf16.msra.mxu0 0
        %2760 = vmatprep.subr.bf16.mxu0 %v1949
        %2761 = vmatpush2.bf16.msra.mxu0 %v1948
        %2762 = vmatprep.subr.bf16.mxu0 %v1945
        %2763 = vmatpush2.bf16.msra.mxu0 %v1944
        %2764 = vmatprep.subr.bf16.mxu0 %v1941
        %2765 = vmatpush2.bf16.msra.mxu0 %v1940
        %2766 = vmatprep.mubr.bf16.mxu0 %v2252
        %2767 = vmatmul.mubr.bf16.gmra.mxu0 %v416
        %v2768 = vpop.f32.mrf.mxu0
        %v2769 = vadd.f32 %v2716, %v2768
        %v2770 = vpop.f32.mrf.mxu0
        %v2771 = vadd.f32 %v2718, %v2770
        %v2772 = vpop.f32.mrf.mxu0
        %v2773 = vadd.f32 %v2720, %v2772
        %v2774 = vpop.f32.mrf.mxu0
        %v2775 = vadd.f32 %v2722, %v2774
        %2776 = vmatprep.mubr.bf16.mxu0 %v2255
        %2777 = vmatmul.mubr.bf16.gmra.mxu0 %v426
        %v2778 = vpop.f32.mrf.mxu0
        %v2779 = vadd.f32 %v2726, %v2778
        %v2780 = vpop.f32.mrf.mxu0
        %v2781 = vadd.f32 %v2728, %v2780
        %v2782 = vpop.f32.mrf.mxu0
        %v2783 = vadd.f32 %v2730, %v2782
        %v2784 = vpop.f32.mrf.mxu0
        %v2785 = vadd.f32 %v2732, %v2784
        %2786 = vdwg.mxu0
        %v2787 = vmax.f32 %v2504, 0.0
        %v2788 = vmax.f32 %v2506, 0.0
        %v2789 = vmax.f32 %v2769, 0.0
        %v2790 = vmax.f32 %v2771, 0.0
        %v2791 = vmax.f32 %v2508, 0.0
        %v2792 = vmax.f32 %v2510, 0.0
        %v2793 = vmax.f32 %v2773, 0.0
        %v2794 = vmax.f32 %v2775, 0.0
        %v2795 = vmax.f32 %v2514, 0.0
        %v2796 = vmax.f32 %v2516, 0.0
        %v2797 = vmax.f32 %v2779, 0.0
        %v2798 = vmax.f32 %v2781, 0.0
        %v2799 = vmax.f32 %v2518, 0.0
        %v2800 = vmax.f32 %v2520, 0.0
        %v2801 = vmax.f32 %v2783, 0.0
        %v2802 = vmax.f32 %v2785, 0.0
        %v2803 = vpack.c.bf16 %v2791, %v2787
        %v2804 = vpack.c.bf16 %v2792, %v2788
        %v2805 = vpack.c.bf16 %v2793, %v2789
        %v2806 = vpack.c.bf16 %v2794, %v2790
        %v2807 = vpack.c.bf16 %v2799, %v2795
        %v2808 = vpack.c.bf16 %v2800, %v2796
        %v2809 = vpack.c.bf16 %v2801, %v2797
        %v2810 = vpack.c.bf16 %v2802, %v2798
        %v2811 = vld [vmem:[%s3] sm:$0xf]
        %v2812 = vld [vmem:[%s3 + $0x4] sm:$0xf]
        %v2813 = vld [vmem:[%s3 + $0x8] sm:$0xf]
        %v2814 = vld [vmem:[%s3 + $0xc] sm:$0xf]
        %v2815 = vld [vmem:[%s3 + $0x10] sm:$0xf]
        %v2816 = vld [vmem:[%s3 + $0x14] sm:$0xf]
        %v2817 = vld [vmem:[%s3 + $0x18] sm:$0xf]
        %v2818 = vld [vmem:[%s3 + $0x1c] sm:$0xf]
        %v2819 = vld [vmem:[%s3 + $0x20] sm:$0xf]
        %v2820 = vld [vmem:[%s3 + $0x24] sm:$0xf]
        %v2821 = vld [vmem:[%s3 + $0x28] sm:$0xf]
        %v2822 = vld [vmem:[%s3 + $0x2c] sm:$0xf]
        %v2823 = vld [vmem:[%s3 + $0x30] sm:$0xf]
        %v2824 = vld [vmem:[%s3 + $0x34] sm:$0xf]
        %v2825 = vld [vmem:[%s3 + $0x38] sm:$0xf]
        %v2826 = vld [vmem:[%s3 + $0x3c] sm:$0xf]
        %v2827 = vld [vmem:[%s3 + $0x40] sm:$0xf]
        %v2828 = vld [vmem:[%s3 + $0x44] sm:$0xf]
        %v2829 = vld [vmem:[%s3 + $0x48] sm:$0xf]
        %v2830 = vld [vmem:[%s3 + $0x4c] sm:$0xf]
        %v2831 = vld [vmem:[%s3 + $0x50] sm:$0xf]
        %v2832 = vld [vmem:[%s3 + $0x54] sm:$0xf]
        %v2833 = vld [vmem:[%s3 + $0x58] sm:$0xf]
        %v2834 = vld [vmem:[%s3 + $0x5c] sm:$0xf]
        %v2835 = vld [vmem:[%s3 + $0x60] sm:$0xf]
        %v2836 = vld [vmem:[%s3 + $0x64] sm:$0xf]
        %v2837 = vld [vmem:[%s3 + $0x68] sm:$0xf]
        %v2838 = vld [vmem:[%s3 + $0x6c] sm:$0xf]
        %v2839 = vld [vmem:[%s3 + $0x70] sm:$0xf]
        %v2840 = vld [vmem:[%s3 + $0x74] sm:$0xf]
        %v2841 = vld [vmem:[%s3 + $0x78] sm:$0xf]
        %v2842 = vld [vmem:[%s3 + $0x7c] sm:$0xf]
        %v2843 = vld [vmem:[%s3 + $0x80] sm:$0xf]
        %v2844 = vld [vmem:[%s3 + $0x84] sm:$0xf]
        %v2845 = vld [vmem:[%s3 + $0x88] sm:$0xf]
        %v2846 = vld [vmem:[%s3 + $0x8c] sm:$0xf]
        %v2847 = vld [vmem:[%s3 + $0x90] sm:$0xf]
        %v2848 = vld [vmem:[%s3 + $0x94] sm:$0xf]
        %v2849 = vld [vmem:[%s3 + $0x98] sm:$0xf]
        %v2850 = vld [vmem:[%s3 + $0x9c] sm:$0xf]
        %v2851 = vld [vmem:[%s3 + $0xa0] sm:$0xf]
        %v2852 = vld [vmem:[%s3 + $0xa4] sm:$0xf]
        %v2853 = vld [vmem:[%s3 + $0xa8] sm:$0xf]
        %v2854 = vld [vmem:[%s3 + $0xac] sm:$0xf]
        %v2855 = vld [vmem:[%s3 + $0xb0] sm:$0xf]
        %v2856 = vld [vmem:[%s3 + $0xb4] sm:$0xf]
        %v2857 = vld [vmem:[%s3 + $0xb8] sm:$0xf]
        %v2858 = vld [vmem:[%s3 + $0xbc] sm:$0xf]
        %v2859 = vld [vmem:[%s3 + $0xc0] sm:$0xf]
        %v2860 = vld [vmem:[%s3 + $0xc4] sm:$0xf]
        %v2861 = vld [vmem:[%s3 + $0xc8] sm:$0xf]
        %v2862 = vld [vmem:[%s3 + $0xcc] sm:$0xf]
        %v2863 = vld [vmem:[%s3 + $0xd0] sm:$0xf]
        %v2864 = vld [vmem:[%s3 + $0xd4] sm:$0xf]
        %v2865 = vld [vmem:[%s3 + $0xd8] sm:$0xf]
        %v2866 = vld [vmem:[%s3 + $0xdc] sm:$0xf]
        %v2867 = vld [vmem:[%s3 + $0xe0] sm:$0xf]
        %v2868 = vld [vmem:[%s3 + $0xe4] sm:$0xf]
        %v2869 = vld [vmem:[%s3 + $0xe8] sm:$0xf]
        %v2870 = vld [vmem:[%s3 + $0xec] sm:$0xf]
        %v2871 = vld [vmem:[%s3 + $0xf0] sm:$0xf]
        %v2872 = vld [vmem:[%s3 + $0xf4] sm:$0xf]
        %v2873 = vld [vmem:[%s3 + $0xf8] sm:$0xf]
        %v2874 = vld [vmem:[%s3 + $0xfc] sm:$0xf]
        %v2875 = vld [vmem:[%s4] sm:$0x1]
        %v2877 = vlaneseq
        %v2878 = vshrl.u32 %v2877, 7
        %v2879 = vsub.s32 0, %v2878
        %v2880 = vrot.slane %v2875, %v2879
        %v2946 = vunpack.c.l.b16 %v2811
        %v2947 = vunpack.c.l.b16 %v2812
        %v2948 = vunpack.c.l.b16 %v2813
        %v2949 = vunpack.c.l.b16 %v2814
        %v2950 = vunpack.c.l.b16 %v2815
        %v2951 = vunpack.c.l.b16 %v2816
        %v2952 = vunpack.c.l.b16 %v2817
        %v2953 = vunpack.c.l.b16 %v2818
        %v2954 = vunpack.c.l.b16 %v2819
        %v2955 = vunpack.c.l.b16 %v2820
        %v2956 = vunpack.c.l.b16 %v2821
        %v2957 = vunpack.c.l.b16 %v2822
        %v2958 = vunpack.c.l.b16 %v2823
        %v2959 = vunpack.c.l.b16 %v2824
        %v2960 = vunpack.c.l.b16 %v2825
        %v2961 = vunpack.c.l.b16 %v2826
        %v2962 = vunpack.c.l.b16 %v2827
        %v2963 = vunpack.c.l.b16 %v2828
        %v2964 = vunpack.c.l.b16 %v2829
        %v2965 = vunpack.c.l.b16 %v2830
        %v2966 = vunpack.c.l.b16 %v2831
        %v2967 = vunpack.c.l.b16 %v2832
        %v2968 = vunpack.c.l.b16 %v2833
        %v2969 = vunpack.c.l.b16 %v2834
        %v2970 = vunpack.c.l.b16 %v2835
        %v2971 = vunpack.c.l.b16 %v2836
        %v2972 = vunpack.c.l.b16 %v2837
        %v2973 = vunpack.c.l.b16 %v2838
        %v2974 = vunpack.c.l.b16 %v2839
        %v2975 = vunpack.c.l.b16 %v2840
        %v2976 = vunpack.c.l.b16 %v2841
        %v2977 = vunpack.c.l.b16 %v2842
        %v2978 = vunpack.c.l.b16 %v2843
        %v2979 = vunpack.c.l.b16 %v2844
        %v2980 = vunpack.c.l.b16 %v2845
        %v2981 = vunpack.c.l.b16 %v2846
        %v2982 = vunpack.c.l.b16 %v2847
        %v2983 = vunpack.c.l.b16 %v2848
        %v2984 = vunpack.c.l.b16 %v2849
        %v2985 = vunpack.c.l.b16 %v2850
        %v2986 = vunpack.c.l.b16 %v2851
        %v2987 = vunpack.c.l.b16 %v2852
        %v2988 = vunpack.c.l.b16 %v2853
        %v2989 = vunpack.c.l.b16 %v2854
        %v2990 = vunpack.c.l.b16 %v2855
        %v2991 = vunpack.c.l.b16 %v2856
        %v2992 = vunpack.c.l.b16 %v2857
        %v2993 = vunpack.c.l.b16 %v2858
        %v2994 = vunpack.c.l.b16 %v2859
        %v2995 = vunpack.c.l.b16 %v2860
        %v2996 = vunpack.c.l.b16 %v2861
        %v2997 = vunpack.c.l.b16 %v2862
        %v2998 = vunpack.c.l.b16 %v2863
        %v2999 = vunpack.c.l.b16 %v2864
        %v3000 = vunpack.c.l.b16 %v2865
        %v3001 = vunpack.c.l.b16 %v2866
        %v3002 = vunpack.c.l.b16 %v2867
        %v3003 = vunpack.c.l.b16 %v2868
        %v3004 = vunpack.c.l.b16 %v2869
        %v3005 = vunpack.c.l.b16 %v2870
        %v3006 = vunpack.c.l.b16 %v2871
        %v3007 = vunpack.c.l.b16 %v2872
        %v3008 = vunpack.c.l.b16 %v2873
        %v3009 = vunpack.c.l.b16 %v2874
        %v3010 = vpack.c.b16 %v2947, %v2946
        %v3011 = vpack.c.b16 %v2949, %v2948
        %v3012 = vpack.c.b16 %v2951, %v2950
        %v3013 = vpack.c.b16 %v2953, %v2952
        %v3014 = vpack.c.b16 %v2955, %v2954
        %v3015 = vpack.c.b16 %v2957, %v2956
        %v3016 = vpack.c.b16 %v2959, %v2958
        %v3017 = vpack.c.b16 %v2961, %v2960
        %v3018 = vpack.c.b16 %v2963, %v2962
        %v3019 = vpack.c.b16 %v2965, %v2964
        %v3020 = vpack.c.b16 %v2967, %v2966
        %v3021 = vpack.c.b16 %v2969, %v2968
        %v3022 = vpack.c.b16 %v2971, %v2970
        %v3023 = vpack.c.b16 %v2973, %v2972
        %v3024 = vpack.c.b16 %v2975, %v2974
        %v3025 = vpack.c.b16 %v2977, %v2976
        %v3026 = vpack.c.b16 %v2979, %v2978
        %v3027 = vpack.c.b16 %v2981, %v2980
        %v3028 = vpack.c.b16 %v2983, %v2982
        %v3029 = vpack.c.b16 %v2985, %v2984
        %v3030 = vpack.c.b16 %v2987, %v2986
        %v3031 = vpack.c.b16 %v2989, %v2988
        %v3032 = vpack.c.b16 %v2991, %v2990
        %v3033 = vpack.c.b16 %v2993, %v2992
        %v3034 = vpack.c.b16 %v2995, %v2994
        %v3035 = vpack.c.b16 %v2997, %v2996
        %v3036 = vpack.c.b16 %v2999, %v2998
        %v3037 = vpack.c.b16 %v3001, %v3000
        %v3038 = vpack.c.b16 %v3003, %v3002
        %v3039 = vpack.c.b16 %v3005, %v3004
        %v3040 = vpack.c.b16 %v3007, %v3006
        %v3041 = vpack.c.b16 %v3009, %v3008
        %3074 = vmatprep.subr.bf16.mxu0 0
        %3075 = vmatpush1.bf16.msra.mxu0 %v3017
        %3076 = vmatprep.subr.bf16.mxu0 0
        %3077 = vmatpush1.bf16.msra.mxu0 %v3016
        %3078 = vmatprep.subr.bf16.mxu0 0
        %3079 = vmatpush1.bf16.msra.mxu0 %v3015
        %3080 = vmatprep.subr.bf16.mxu0 0
        %3081 = vmatpush1.bf16.msra.mxu0 %v3014
        %3082 = vmatprep.subr.bf16.mxu0 0
        %3083 = vmatpush1.bf16.msra.mxu0 %v3013
        %3084 = vmatprep.subr.bf16.mxu0 0
        %3085 = vmatpush1.bf16.msra.mxu0 %v3012
        %3086 = vmatprep.subr.bf16.mxu0 0
        %3087 = vmatpush1.bf16.msra.mxu0 %v3011
        %3088 = vmatprep.subr.bf16.mxu0 0
        %3089 = vmatpush1.bf16.msra.mxu0 %v3010
        %3090 = vmatprep.subr.bf16.mxu0 0
        %3091 = vmatpush2.bf16.msra.mxu0 %v3025
        %3092 = vmatprep.subr.bf16.mxu0 0
        %3093 = vmatpush2.bf16.msra.mxu0 %v3024
        %3094 = vmatprep.subr.bf16.mxu0 0
        %3095 = vmatpush2.bf16.msra.mxu0 %v3023
        %3096 = vmatprep.subr.bf16.mxu0 0
        %3097 = vmatpush2.bf16.msra.mxu0 %v3022
        %3098 = vmatprep.subr.bf16.mxu0 0
        %3099 = vmatpush2.bf16.msra.mxu0 %v3021
        %3100 = vmatprep.subr.bf16.mxu0 0
        %3101 = vmatpush2.bf16.msra.mxu0 %v3020
        %3102 = vmatprep.subr.bf16.mxu0 0
        %3103 = vmatpush2.bf16.msra.mxu0 %v3019
        %3104 = vmatprep.subr.bf16.mxu0 0
        %3105 = vmatpush2.bf16.msra.mxu0 %v3018
        %3106 = vmatprep.mubr.bf16.mxu0 %v2804
        %3107 = vmatmul.mubr.bf16.gmra.mxu0 %v2803
        %v3108 = vpop.f32.mrf.mxu0
        %v3109 = vadd.f32 %v2880, %v3108
        %v3110 = vpop.f32.mrf.mxu0
        %v3111 = vpop.f32.mrf.mxu0
        %v3112 = vadd.f32 %v2880, %v3111
        %v3113 = vpop.f32.mrf.mxu0
        %3114 = vmatprep.mubr.bf16.mxu0 %v2808
        %3115 = vmatmul.mubr.bf16.gmra.mxu0 %v2807
        %v3116 = vpop.f32.mrf.mxu0
        %v3117 = vadd.f32 %v2880, %v3116
        %v3118 = vpop.f32.mrf.mxu0
        %v3119 = vpop.f32.mrf.mxu0
        %v3120 = vadd.f32 %v2880, %v3119
        %v3121 = vpop.f32.mrf.mxu0
        %3122 = vdwg.mxu0
        %3123 = vmatprep.subr.bf16.mxu0 0
        %3124 = vmatpush1.bf16.msra.mxu0 %v3033
        %3125 = vmatprep.subr.bf16.mxu0 0
        %3126 = vmatpush1.bf16.msra.mxu0 %v3032
        %3127 = vmatprep.subr.bf16.mxu0 0
        %3128 = vmatpush1.bf16.msra.mxu0 %v3031
        %3129 = vmatprep.subr.bf16.mxu0 0
        %3130 = vmatpush1.bf16.msra.mxu0 %v3030
        %3131 = vmatprep.subr.bf16.mxu0 0
        %3132 = vmatpush1.bf16.msra.mxu0 %v3029
        %3133 = vmatprep.subr.bf16.mxu0 0
        %3134 = vmatpush1.bf16.msra.mxu0 %v3028
        %3135 = vmatprep.subr.bf16.mxu0 0
        %3136 = vmatpush1.bf16.msra.mxu0 %v3027
        %3137 = vmatprep.subr.bf16.mxu0 0
        %3138 = vmatpush1.bf16.msra.mxu0 %v3026
        %3139 = vmatprep.subr.bf16.mxu0 0
        %3140 = vmatpush2.bf16.msra.mxu0 %v3041
        %3141 = vmatprep.subr.bf16.mxu0 0
        %3142 = vmatpush2.bf16.msra.mxu0 %v3040
        %3143 = vmatprep.subr.bf16.mxu0 0
        %3144 = vmatpush2.bf16.msra.mxu0 %v3039
        %3145 = vmatprep.subr.bf16.mxu0 0
        %3146 = vmatpush2.bf16.msra.mxu0 %v3038
        %3147 = vmatprep.subr.bf16.mxu0 0
        %3148 = vmatpush2.bf16.msra.mxu0 %v3037
        %3149 = vmatprep.subr.bf16.mxu0 0
        %3150 = vmatpush2.bf16.msra.mxu0 %v3036
        %3151 = vmatprep.subr.bf16.mxu0 0
        %3152 = vmatpush2.bf16.msra.mxu0 %v3035
        %3153 = vmatprep.subr.bf16.mxu0 0
        %3154 = vmatpush2.bf16.msra.mxu0 %v3034
        %3155 = vmatprep.mubr.bf16.mxu0 %v2806
        %3156 = vmatmul.mubr.bf16.gmra.mxu0 %v2805
        %v3157 = vpop.f32.mrf.mxu0
        %v3158 = vadd.f32 %v3109, %v3157
        %v3159 = vpop.f32.mrf.mxu0
        %v3160 = vpop.f32.mrf.mxu0
        %v3161 = vadd.f32 %v3112, %v3160
        %v3162 = vpop.f32.mrf.mxu0
        %3163 = vmatprep.mubr.bf16.mxu0 %v2810
        %3164 = vmatmul.mubr.bf16.gmra.mxu0 %v2809
        %v3165 = vpop.f32.mrf.mxu0
        %v3166 = vadd.f32 %v3117, %v3165
        %v3167 = vpop.f32.mrf.mxu0
        %v3168 = vpop.f32.mrf.mxu0
        %v3169 = vadd.f32 %v3120, %v3168
        %v3170 = vpop.f32.mrf.mxu0
        %3171 = vdwg.mxu0
        %v3172 = vpack.c.bf16 %v3161, %v3158
        %v3173 = vpack.c.bf16 %v3169, %v3166
        %v3174 = vld [vmem:[%s5] sm:$0xff]
        %v3175 = vld [vmem:[%s5 + $0x8] sm:$0xff]
        %v3176 = vld [vmem:[%s5 + $0x10] sm:$0xff]
        %v3177 = vld [vmem:[%s5 + $0x18] sm:$0xff]
        %v3178 = vld [vmem:[%s5 + $0x20] sm:$0xff]
        %v3179 = vld [vmem:[%s5 + $0x28] sm:$0xff]
        %v3180 = vld [vmem:[%s5 + $0x30] sm:$0xff]
        %v3181 = vld [vmem:[%s5 + $0x38] sm:$0xff]
        %v3182 = vld [vmem:[%s6] sm:$0xf]
        %v3184 = vlaneseq
        %v3185 = vshrl.u32 %v3184, 7
        %v3186 = vsub.s32 0, %v3185
        %v3187 = vrot.slane %v3182, %v3186
        %v3188 = vlaneseq
        %v3189 = vshrl.u32 %v3188, 7
        %v3190 = vsub.s32 1, %v3189
        %v3191 = vrot.slane %v3182, %v3190
        %v3192 = vlaneseq
        %v3193 = vshrl.u32 %v3192, 7
        %v3194 = vsub.s32 2, %v3193
        %v3195 = vrot.slane %v3182, %v3194
        %v3196 = vlaneseq
        %v3197 = vshrl.u32 %v3196, 7
        %v3198 = vsub.s32 3, %v3197
        %v3199 = vrot.slane %v3182, %v3198
        %v3212 = vunpack.c.l.b16 %v3174
        %v3213 = vunpack.c.h.b16 %v3174
        %v3214 = vunpack.c.l.b16 %v3175
        %v3215 = vunpack.c.h.b16 %v3175
        %v3216 = vunpack.c.l.b16 %v3176
        %v3217 = vunpack.c.h.b16 %v3176
        %v3218 = vunpack.c.l.b16 %v3177
        %v3219 = vunpack.c.h.b16 %v3177
        %v3220 = vunpack.c.l.b16 %v3178
        %v3221 = vunpack.c.h.b16 %v3178
        %v3222 = vunpack.c.l.b16 %v3179
        %v3223 = vunpack.c.h.b16 %v3179
        %v3224 = vunpack.c.l.b16 %v3180
        %v3225 = vunpack.c.h.b16 %v3180
        %v3226 = vunpack.c.l.b16 %v3181
        %v3227 = vunpack.c.h.b16 %v3181
        %v3228 = vpack.c.b16 %v3216, %v3212
        %v3229 = vpack.c.b16 %v3217, %v3213
        %v3230 = vpack.c.b16 %v3218, %v3214
        %v3231 = vpack.c.b16 %v3219, %v3215
        %v3232 = vpack.c.b16 %v3224, %v3220
        %v3233 = vpack.c.b16 %v3225, %v3221
        %v3234 = vpack.c.b16 %v3226, %v3222
        %v3235 = vpack.c.b16 %v3227, %v3223
        %vm3244 = vcmask 261120
        %v3246 = vsel %vm3244, %v3172, 0
        %v3249 = vsel %vm3244, %v3173, 0
        %3251 = vmatprep.subr.bf16.mxu0 0
        %3252 = vmatpush1.bf16.msra.mxu0 0
        %3253 = vmatprep.subr.bf16.mxu0 0
        %3254 = vmatpush1.bf16.msra.mxu0 0
        %3255 = vmatprep.subr.bf16.mxu0 0
        %3256 = vmatpush1.bf16.msra.mxu0 0
        %3257 = vmatprep.subr.bf16.mxu0 0
        %3258 = vmatpush1.bf16.msra.mxu0 0
        %3259 = vmatprep.subr.bf16.mxu0 0
        %3260 = vmatpush1.bf16.msra.mxu0 0
        %3261 = vmatprep.subr.bf16.mxu0 0
        %3262 = vmatpush1.bf16.msra.mxu0 0
        %3263 = vmatprep.subr.bf16.mxu0 %v3233
        %3264 = vmatpush1.bf16.msra.mxu0 %v3232
        %3265 = vmatprep.subr.bf16.mxu0 %v3229
        %3266 = vmatpush1.bf16.msra.mxu0 %v3228
        %3267 = vmatprep.subr.bf16.mxu0 0
        %3268 = vmatpush2.bf16.msra.mxu0 0
        %3269 = vmatprep.subr.bf16.mxu0 0
        %3270 = vmatpush2.bf16.msra.mxu0 0
        %3271 = vmatprep.subr.bf16.mxu0 0
        %3272 = vmatpush2.bf16.msra.mxu0 0
        %3273 = vmatprep.subr.bf16.mxu0 0
        %3274 = vmatpush2.bf16.msra.mxu0 0
        %3275 = vmatprep.subr.bf16.mxu0 0
        %3276 = vmatpush2.bf16.msra.mxu0 0
        %3277 = vmatprep.subr.bf16.mxu0 0
        %3278 = vmatpush2.bf16.msra.mxu0 0
        %3279 = vmatprep.subr.bf16.mxu0 0
        %3280 = vmatpush2.bf16.msra.mxu0 0
        %3281 = vmatprep.subr.bf16.mxu0 0
        %3282 = vmatpush2.bf16.msra.mxu0 0
        %3283 = vmatprep.mubr.bf16.mxu0 0
        %3284 = vmatmul.mubr.bf16.gmra.mxu0 %v3246
        %v3285 = vpop.f32.mrf.mxu0
        %v3286 = vadd.f32 %v3187, %v3285
        %v3287 = vpop.f32.mrf.mxu0
        %v3288 = vadd.f32 %v3191, %v3287
        %v3289 = vpop.f32.mrf.mxu0
        %v3290 = vadd.f32 %v3187, %v3289
        %v3291 = vpop.f32.mrf.mxu0
        %v3292 = vadd.f32 %v3191, %v3291
        %3293 = vmatprep.mubr.bf16.mxu0 0
        %3294 = vmatmul.mubr.bf16.gmra.mxu0 %v3249
        %v3295 = vpop.f32.mrf.mxu0
        %v3296 = vadd.f32 %v3187, %v3295
        %v3297 = vpop.f32.mrf.mxu0
        %v3298 = vadd.f32 %v3191, %v3297
        %v3299 = vpop.f32.mrf.mxu0
        %v3300 = vadd.f32 %v3187, %v3299
        %v3301 = vpop.f32.mrf.mxu0
        %v3302 = vadd.f32 %v3191, %v3301
        %3303 = vdwg.mxu0
        %3304 = vmatprep.subr.bf16.mxu0 0
        %3305 = vmatpush1.bf16.msra.mxu0 0
        %3306 = vmatprep.subr.bf16.mxu0 0
        %3307 = vmatpush1.bf16.msra.mxu0 0
        %3308 = vmatprep.subr.bf16.mxu0 0
        %3309 = vmatpush1.bf16.msra.mxu0 0
        %3310 = vmatprep.subr.bf16.mxu0 0
        %3311 = vmatpush1.bf16.msra.mxu0 0
        %3312 = vmatprep.subr.bf16.mxu0 0
        %3313 = vmatpush1.bf16.msra.mxu0 0
        %3314 = vmatprep.subr.bf16.mxu0 0
        %3315 = vmatpush1.bf16.msra.mxu0 0
        %3316 = vmatprep.subr.bf16.mxu0 %v3235
        %3317 = vmatpush1.bf16.msra.mxu0 %v3234
        %3318 = vmatprep.subr.bf16.mxu0 %v3231
        %3319 = vmatpush1.bf16.msra.mxu0 %v3230
        %3320 = vmatprep.subr.bf16.mxu0 0
        %3321 = vmatpush2.bf16.msra.mxu0 0
        %3322 = vmatprep.subr.bf16.mxu0 0
        %3323 = vmatpush2.bf16.msra.mxu0 0
        %3324 = vmatprep.subr.bf16.mxu0 0
        %3325 = vmatpush2.bf16.msra.mxu0 0
        %3326 = vmatprep.subr.bf16.mxu0 0
        %3327 = vmatpush2.bf16.msra.mxu0 0
        %3328 = vmatprep.subr.bf16.mxu0 0
        %3329 = vmatpush2.bf16.msra.mxu0 0
        %3330 = vmatprep.subr.bf16.mxu0 0
        %3331 = vmatpush2.bf16.msra.mxu0 0
        %3332 = vmatprep.subr.bf16.mxu0 0
        %3333 = vmatpush2.bf16.msra.mxu0 0
        %3334 = vmatprep.subr.bf16.mxu0 0
        %3335 = vmatpush2.bf16.msra.mxu0 0
        %3336 = vmatprep.mubr.bf16.mxu0 0
        %3337 = vmatmul.mubr.bf16.gmra.mxu0 %v3246
        %v3338 = vpop.f32.mrf.mxu0
        %v3339 = vadd.f32 %v3195, %v3338
        %v3340 = vpop.f32.mrf.mxu0
        %v3341 = vadd.f32 %v3199, %v3340
        %v3342 = vpop.f32.mrf.mxu0
        %v3343 = vadd.f32 %v3195, %v3342
        %v3344 = vpop.f32.mrf.mxu0
        %v3345 = vadd.f32 %v3199, %v3344
        %3346 = vmatprep.mubr.bf16.mxu0 0
        %3347 = vmatmul.mubr.bf16.gmra.mxu0 %v3249
        %v3348 = vpop.f32.mrf.mxu0
        %v3349 = vadd.f32 %v3195, %v3348
        %v3350 = vpop.f32.mrf.mxu0
        %v3351 = vadd.f32 %v3199, %v3350
        %v3352 = vpop.f32.mrf.mxu0
        %v3353 = vadd.f32 %v3195, %v3352
        %v3354 = vpop.f32.mrf.mxu0
        %v3355 = vadd.f32 %v3199, %v3354
        %3356 = vdwg.mxu0
        %v3357 = vmax.f32 %v3286, 0.0
        %v3358 = vmax.f32 %v3288, 0.0
        %v3359 = vmax.f32 %v3339, 0.0
        %v3360 = vmax.f32 %v3341, 0.0
        %v3361 = vmax.f32 %v3290, 0.0
        %v3362 = vmax.f32 %v3292, 0.0
        %v3363 = vmax.f32 %v3343, 0.0
        %v3364 = vmax.f32 %v3345, 0.0
        %v3365 = vmax.f32 %v3296, 0.0
        %v3366 = vmax.f32 %v3298, 0.0
        %v3367 = vmax.f32 %v3349, 0.0
        %v3368 = vmax.f32 %v3351, 0.0
        %v3369 = vmax.f32 %v3300, 0.0
        %v3370 = vmax.f32 %v3302, 0.0
        %v3371 = vmax.f32 %v3353, 0.0
        %v3372 = vmax.f32 %v3355, 0.0
        %v3373 = vpack.c.bf16 %v3361, %v3357
        %v3374 = vpack.c.bf16 %v3362, %v3358
        %v3375 = vpack.c.bf16 %v3363, %v3359
        %v3376 = vpack.c.bf16 %v3364, %v3360
        %v3377 = vpack.c.bf16 %v3369, %v3365
        %v3378 = vpack.c.bf16 %v3370, %v3366
        %v3379 = vpack.c.bf16 %v3371, %v3367
        %v3380 = vpack.c.bf16 %v3372, %v3368
        %v3381 = vld [vmem:[%s7] sm:$0xff]
        %v3382 = vld [vmem:[%s7 + $0x8] sm:$0xff]
        %v3383 = vld [vmem:[%s7 + $0x10] sm:$0xff]
        %v3384 = vld [vmem:[%s7 + $0x18] sm:$0xff]
        %v3385 = vld [vmem:[%s7 + $0x20] sm:$0xff]
        %v3386 = vld [vmem:[%s7 + $0x28] sm:$0xff]
        %v3387 = vld [vmem:[%s7 + $0x30] sm:$0xff]
        %v3388 = vld [vmem:[%s7 + $0x38] sm:$0xff]
        %v3389 = vld [vmem:[%s7 + $0x40] sm:$0xff]
        %v3390 = vld [vmem:[%s7 + $0x48] sm:$0xff]
        %v3391 = vld [vmem:[%s7 + $0x50] sm:$0xff]
        %v3392 = vld [vmem:[%s7 + $0x58] sm:$0xff]
        %v3393 = vld [vmem:[%s7 + $0x60] sm:$0xff]
        %v3394 = vld [vmem:[%s7 + $0x68] sm:$0xff]
        %v3395 = vld [vmem:[%s7 + $0x70] sm:$0xff]
        %v3396 = vld [vmem:[%s7 + $0x78] sm:$0xff]
        %v3397 = vld [vmem:[%s7 + $0x80] sm:$0xff]
        %v3398 = vld [vmem:[%s7 + $0x88] sm:$0xff]
        %v3399 = vld [vmem:[%s7 + $0x90] sm:$0xff]
        %v3400 = vld [vmem:[%s7 + $0x98] sm:$0xff]
        %v3401 = vld [vmem:[%s7 + $0xa0] sm:$0xff]
        %v3402 = vld [vmem:[%s7 + $0xa8] sm:$0xff]
        %v3403 = vld [vmem:[%s7 + $0xb0] sm:$0xff]
        %v3404 = vld [vmem:[%s7 + $0xb8] sm:$0xff]
        %v3405 = vld [vmem:[%s7 + $0xc0] sm:$0xff]
        %v3406 = vld [vmem:[%s7 + $0xc8] sm:$0xff]
        %v3407 = vld [vmem:[%s7 + $0xd0] sm:$0xff]
        %v3408 = vld [vmem:[%s7 + $0xd8] sm:$0xff]
        %v3409 = vld [vmem:[%s7 + $0xe0] sm:$0xff]
        %v3410 = vld [vmem:[%s7 + $0xe8] sm:$0xff]
        %v3411 = vld [vmem:[%s7 + $0xf0] sm:$0xff]
        %v3412 = vld [vmem:[%s7 + $0xf8] sm:$0xff]
        %v3413 = vld [vmem:[%s7 + $0x100] sm:$0xff]
        %v3414 = vld [vmem:[%s7 + $0x108] sm:$0xff]
        %v3415 = vld [vmem:[%s7 + $0x110] sm:$0xff]
        %v3416 = vld [vmem:[%s7 + $0x118] sm:$0xff]
        %v3417 = vld [vmem:[%s7 + $0x120] sm:$0xff]
        %v3418 = vld [vmem:[%s7 + $0x128] sm:$0xff]
        %v3419 = vld [vmem:[%s7 + $0x130] sm:$0xff]
        %v3420 = vld [vmem:[%s7 + $0x138] sm:$0xff]
        %v3421 = vld [vmem:[%s7 + $0x140] sm:$0xff]
        %v3422 = vld [vmem:[%s7 + $0x148] sm:$0xff]
        %v3423 = vld [vmem:[%s7 + $0x150] sm:$0xff]
        %v3424 = vld [vmem:[%s7 + $0x158] sm:$0xff]
        %v3425 = vld [vmem:[%s7 + $0x160] sm:$0xff]
        %v3426 = vld [vmem:[%s7 + $0x168] sm:$0xff]
        %v3427 = vld [vmem:[%s7 + $0x170] sm:$0xff]
        %v3428 = vld [vmem:[%s7 + $0x178] sm:$0xff]
        %v3429 = vld [vmem:[%s7 + $0x180] sm:$0xff]
        %v3430 = vld [vmem:[%s7 + $0x188] sm:$0xff]
        %v3431 = vld [vmem:[%s7 + $0x190] sm:$0xff]
        %v3432 = vld [vmem:[%s7 + $0x198] sm:$0xff]
        %v3433 = vld [vmem:[%s7 + $0x1a0] sm:$0xff]
        %v3434 = vld [vmem:[%s7 + $0x1a8] sm:$0xff]
        %v3435 = vld [vmem:[%s7 + $0x1b0] sm:$0xff]
        %v3436 = vld [vmem:[%s7 + $0x1b8] sm:$0xff]
        %v3437 = vld [vmem:[%s7 + $0x1c0] sm:$0xff]
        %v3438 = vld [vmem:[%s7 + $0x1c8] sm:$0xff]
        %v3439 = vld [vmem:[%s7 + $0x1d0] sm:$0xff]
        %v3440 = vld [vmem:[%s7 + $0x1d8] sm:$0xff]
        %v3441 = vld [vmem:[%s7 + $0x1e0] sm:$0xff]
        %v3442 = vld [vmem:[%s7 + $0x1e8] sm:$0xff]
        %v3443 = vld [vmem:[%s7 + $0x1f0] sm:$0xff]
        %v3444 = vld [vmem:[%s7 + $0x1f8] sm:$0xff]
        %v3445 = vld [vmem:[%s7 + $0x200] sm:$0xff]
        %v3446 = vld [vmem:[%s7 + $0x208] sm:$0xff]
        %v3447 = vld [vmem:[%s7 + $0x210] sm:$0xff]
        %v3448 = vld [vmem:[%s7 + $0x218] sm:$0xff]
        %v3449 = vld [vmem:[%s7 + $0x220] sm:$0xff]
        %v3450 = vld [vmem:[%s7 + $0x228] sm:$0xff]
        %v3451 = vld [vmem:[%s7 + $0x230] sm:$0xff]
        %v3452 = vld [vmem:[%s7 + $0x238] sm:$0xff]
        %v3453 = vld [vmem:[%s7 + $0x240] sm:$0xff]
        %v3454 = vld [vmem:[%s7 + $0x248] sm:$0xff]
        %v3455 = vld [vmem:[%s7 + $0x250] sm:$0xff]
        %v3456 = vld [vmem:[%s7 + $0x258] sm:$0xff]
        %v3457 = vld [vmem:[%s7 + $0x260] sm:$0xff]
        %v3458 = vld [vmem:[%s7 + $0x268] sm:$0xff]
        %v3459 = vld [vmem:[%s7 + $0x270] sm:$0xff]
        %v3460 = vld [vmem:[%s7 + $0x278] sm:$0xff]
        %v3461 = vld [vmem:[%s7 + $0x280] sm:$0xff]
        %v3462 = vld [vmem:[%s7 + $0x288] sm:$0xff]
        %v3463 = vld [vmem:[%s7 + $0x290] sm:$0xff]
        %v3464 = vld [vmem:[%s7 + $0x298] sm:$0xff]
        %v3465 = vld [vmem:[%s7 + $0x2a0] sm:$0xff]
        %v3466 = vld [vmem:[%s7 + $0x2a8] sm:$0xff]
        %v3467 = vld [vmem:[%s7 + $0x2b0] sm:$0xff]
        %v3468 = vld [vmem:[%s7 + $0x2b8] sm:$0xff]
        %v3469 = vld [vmem:[%s7 + $0x2c0] sm:$0xff]
        %v3470 = vld [vmem:[%s7 + $0x2c8] sm:$0xff]
        %v3471 = vld [vmem:[%s7 + $0x2d0] sm:$0xff]
        %v3472 = vld [vmem:[%s7 + $0x2d8] sm:$0xff]
        %v3473 = vld [vmem:[%s7 + $0x2e0] sm:$0xff]
        %v3474 = vld [vmem:[%s7 + $0x2e8] sm:$0xff]
        %v3475 = vld [vmem:[%s7 + $0x2f0] sm:$0xff]
        %v3476 = vld [vmem:[%s7 + $0x2f8] sm:$0xff]
        %v3477 = vld [vmem:[%s7 + $0x300] sm:$0xff]
        %v3478 = vld [vmem:[%s7 + $0x308] sm:$0xff]
        %v3479 = vld [vmem:[%s7 + $0x310] sm:$0xff]
        %v3480 = vld [vmem:[%s7 + $0x318] sm:$0xff]
        %v3481 = vld [vmem:[%s7 + $0x320] sm:$0xff]
        %v3482 = vld [vmem:[%s7 + $0x328] sm:$0xff]
        %v3483 = vld [vmem:[%s7 + $0x330] sm:$0xff]
        %v3484 = vld [vmem:[%s7 + $0x338] sm:$0xff]
        %v3485 = vld [vmem:[%s7 + $0x340] sm:$0xff]
        %v3486 = vld [vmem:[%s7 + $0x348] sm:$0xff]
        %v3487 = vld [vmem:[%s7 + $0x350] sm:$0xff]
        %v3488 = vld [vmem:[%s7 + $0x358] sm:$0xff]
        %v3489 = vld [vmem:[%s7 + $0x360] sm:$0xff]
        %v3490 = vld [vmem:[%s7 + $0x368] sm:$0xff]
        %v3491 = vld [vmem:[%s7 + $0x370] sm:$0xff]
        %v3492 = vld [vmem:[%s7 + $0x378] sm:$0xff]
        %v3493 = vld [vmem:[%s7 + $0x380] sm:$0xff]
        %v3494 = vld [vmem:[%s7 + $0x388] sm:$0xff]
        %v3495 = vld [vmem:[%s7 + $0x390] sm:$0xff]
        %v3496 = vld [vmem:[%s7 + $0x398] sm:$0xff]
        %v3497 = vld [vmem:[%s7 + $0x3a0] sm:$0xff]
        %v3498 = vld [vmem:[%s7 + $0x3a8] sm:$0xff]
        %v3499 = vld [vmem:[%s7 + $0x3b0] sm:$0xff]
        %v3500 = vld [vmem:[%s7 + $0x3b8] sm:$0xff]
        %v3501 = vld [vmem:[%s7 + $0x3c0] sm:$0xff]
        %v3502 = vld [vmem:[%s7 + $0x3c8] sm:$0xff]
        %v3503 = vld [vmem:[%s7 + $0x3d0] sm:$0xff]
        %v3504 = vld [vmem:[%s7 + $0x3d8] sm:$0xff]
        %v3505 = vld [vmem:[%s7 + $0x3e0] sm:$0xff]
        %v3506 = vld [vmem:[%s7 + $0x3e8] sm:$0xff]
        %v3507 = vld [vmem:[%s7 + $0x3f0] sm:$0xff]
        %v3508 = vld [vmem:[%s7 + $0x3f8] sm:$0xff]
        %v3509 = vld [vmem:[%s7 + $0x400] sm:$0xff]
        %v3510 = vld [vmem:[%s7 + $0x408] sm:$0xff]
        %v3511 = vld [vmem:[%s7 + $0x410] sm:$0xff]
        %v3512 = vld [vmem:[%s7 + $0x418] sm:$0xff]
        %v3513 = vld [vmem:[%s7 + $0x420] sm:$0xff]
        %v3514 = vld [vmem:[%s7 + $0x428] sm:$0xff]
        %v3515 = vld [vmem:[%s7 + $0x430] sm:$0xff]
        %v3516 = vld [vmem:[%s7 + $0x438] sm:$0xff]
        %v3517 = vld [vmem:[%s7 + $0x440] sm:$0xff]
        %v3518 = vld [vmem:[%s7 + $0x448] sm:$0xff]
        %v3519 = vld [vmem:[%s7 + $0x450] sm:$0xff]
        %v3520 = vld [vmem:[%s7 + $0x458] sm:$0xff]
        %v3521 = vld [vmem:[%s7 + $0x460] sm:$0xff]
        %v3522 = vld [vmem:[%s7 + $0x468] sm:$0xff]
        %v3523 = vld [vmem:[%s7 + $0x470] sm:$0xff]
        %v3524 = vld [vmem:[%s7 + $0x478] sm:$0xff]
        %v3525 = vld [vmem:[%s7 + $0x480] sm:$0xff]
        %v3526 = vld [vmem:[%s7 + $0x488] sm:$0xff]
        %v3527 = vld [vmem:[%s7 + $0x490] sm:$0xff]
        %v3528 = vld [vmem:[%s7 + $0x498] sm:$0xff]
        %v3529 = vld [vmem:[%s7 + $0x4a0] sm:$0xff]
        %v3530 = vld [vmem:[%s7 + $0x4a8] sm:$0xff]
        %v3531 = vld [vmem:[%s7 + $0x4b0] sm:$0xff]
        %v3532 = vld [vmem:[%s7 + $0x4b8] sm:$0xff]
        %v3533 = vld [vmem:[%s7 + $0x4c0] sm:$0xff]
        %v3534 = vld [vmem:[%s7 + $0x4c8] sm:$0xff]
        %v3535 = vld [vmem:[%s7 + $0x4d0] sm:$0xff]
        %v3536 = vld [vmem:[%s7 + $0x4d8] sm:$0xff]
        %v3537 = vld [vmem:[%s7 + $0x4e0] sm:$0xff]
        %v3538 = vld [vmem:[%s7 + $0x4e8] sm:$0xff]
        %v3539 = vld [vmem:[%s7 + $0x4f0] sm:$0xff]
        %v3540 = vld [vmem:[%s7 + $0x4f8] sm:$0xff]
        %v3541 = vld [vmem:[%s7 + $0x500] sm:$0xff]
        %v3542 = vld [vmem:[%s7 + $0x508] sm:$0xff]
        %v3543 = vld [vmem:[%s7 + $0x510] sm:$0xff]
        %v3544 = vld [vmem:[%s7 + $0x518] sm:$0xff]
        %v3545 = vld [vmem:[%s7 + $0x520] sm:$0xff]
        %v3546 = vld [vmem:[%s7 + $0x528] sm:$0xff]
        %v3547 = vld [vmem:[%s7 + $0x530] sm:$0xff]
        %v3548 = vld [vmem:[%s7 + $0x538] sm:$0xff]
        %v3549 = vld [vmem:[%s7 + $0x540] sm:$0xff]
        %v3550 = vld [vmem:[%s7 + $0x548] sm:$0xff]
        %v3551 = vld [vmem:[%s7 + $0x550] sm:$0xff]
        %v3552 = vld [vmem:[%s7 + $0x558] sm:$0xff]
        %v3553 = vld [vmem:[%s7 + $0x560] sm:$0xff]
        %v3554 = vld [vmem:[%s7 + $0x568] sm:$0xff]
        %v3555 = vld [vmem:[%s7 + $0x570] sm:$0xff]
        %v3556 = vld [vmem:[%s7 + $0x578] sm:$0xff]
        %v3557 = vld [vmem:[%s7 + $0x580] sm:$0xff]
        %v3558 = vld [vmem:[%s7 + $0x588] sm:$0xff]
        %v3559 = vld [vmem:[%s7 + $0x590] sm:$0xff]
        %v3560 = vld [vmem:[%s7 + $0x598] sm:$0xff]
        %v3561 = vld [vmem:[%s7 + $0x5a0] sm:$0xff]
        %v3562 = vld [vmem:[%s7 + $0x5a8] sm:$0xff]
        %v3563 = vld [vmem:[%s7 + $0x5b0] sm:$0xff]
        %v3564 = vld [vmem:[%s7 + $0x5b8] sm:$0xff]
        %v3565 = vld [vmem:[%s7 + $0x5c0] sm:$0xff]
        %v3566 = vld [vmem:[%s7 + $0x5c8] sm:$0xff]
        %v3567 = vld [vmem:[%s7 + $0x5d0] sm:$0xff]
        %v3568 = vld [vmem:[%s7 + $0x5d8] sm:$0xff]
        %v3569 = vld [vmem:[%s7 + $0x5e0] sm:$0xff]
        %v3570 = vld [vmem:[%s7 + $0x5e8] sm:$0xff]
        %v3571 = vld [vmem:[%s7 + $0x5f0] sm:$0xff]
        %v3572 = vld [vmem:[%s7 + $0x5f8] sm:$0xff]
        %v3573 = vld [vmem:[%s7 + $0x600] sm:$0xff]
        %v3574 = vld [vmem:[%s7 + $0x608] sm:$0xff]
        %v3575 = vld [vmem:[%s7 + $0x610] sm:$0xff]
        %v3576 = vld [vmem:[%s7 + $0x618] sm:$0xff]
        %v3577 = vld [vmem:[%s7 + $0x620] sm:$0xff]
        %v3578 = vld [vmem:[%s7 + $0x628] sm:$0xff]
        %v3579 = vld [vmem:[%s7 + $0x630] sm:$0xff]
        %v3580 = vld [vmem:[%s7 + $0x638] sm:$0xff]
        %v3581 = vld [vmem:[%s7 + $0x640] sm:$0xff]
        %v3582 = vld [vmem:[%s7 + $0x648] sm:$0xff]
        %v3583 = vld [vmem:[%s7 + $0x650] sm:$0xff]
        %v3584 = vld [vmem:[%s7 + $0x658] sm:$0xff]
        %v3585 = vld [vmem:[%s7 + $0x660] sm:$0xff]
        %v3586 = vld [vmem:[%s7 + $0x668] sm:$0xff]
        %v3587 = vld [vmem:[%s7 + $0x670] sm:$0xff]
        %v3588 = vld [vmem:[%s7 + $0x678] sm:$0xff]
        %v3589 = vld [vmem:[%s7 + $0x680] sm:$0xff]
        %v3590 = vld [vmem:[%s7 + $0x688] sm:$0xff]
        %v3591 = vld [vmem:[%s7 + $0x690] sm:$0xff]
        %v3592 = vld [vmem:[%s7 + $0x698] sm:$0xff]
        %v3593 = vld [vmem:[%s7 + $0x6a0] sm:$0xff]
        %v3594 = vld [vmem:[%s7 + $0x6a8] sm:$0xff]
        %v3595 = vld [vmem:[%s7 + $0x6b0] sm:$0xff]
        %v3596 = vld [vmem:[%s7 + $0x6b8] sm:$0xff]
        %v3597 = vld [vmem:[%s7 + $0x6c0] sm:$0xff]
        %v3598 = vld [vmem:[%s7 + $0x6c8] sm:$0xff]
        %v3599 = vld [vmem:[%s7 + $0x6d0] sm:$0xff]
        %v3600 = vld [vmem:[%s7 + $0x6d8] sm:$0xff]
        %v3601 = vld [vmem:[%s7 + $0x6e0] sm:$0xff]
        %v3602 = vld [vmem:[%s7 + $0x6e8] sm:$0xff]
        %v3603 = vld [vmem:[%s7 + $0x6f0] sm:$0xff]
        %v3604 = vld [vmem:[%s7 + $0x6f8] sm:$0xff]
        %v3605 = vld [vmem:[%s7 + $0x700] sm:$0xff]
        %v3606 = vld [vmem:[%s7 + $0x708] sm:$0xff]
        %v3607 = vld [vmem:[%s7 + $0x710] sm:$0xff]
        %v3608 = vld [vmem:[%s7 + $0x718] sm:$0xff]
        %v3609 = vld [vmem:[%s7 + $0x720] sm:$0xff]
        %v3610 = vld [vmem:[%s7 + $0x728] sm:$0xff]
        %v3611 = vld [vmem:[%s7 + $0x730] sm:$0xff]
        %v3612 = vld [vmem:[%s7 + $0x738] sm:$0xff]
        %v3613 = vld [vmem:[%s7 + $0x740] sm:$0xff]
        %v3614 = vld [vmem:[%s7 + $0x748] sm:$0xff]
        %v3615 = vld [vmem:[%s7 + $0x750] sm:$0xff]
        %v3616 = vld [vmem:[%s7 + $0x758] sm:$0xff]
        %v3617 = vld [vmem:[%s7 + $0x760] sm:$0xff]
        %v3618 = vld [vmem:[%s7 + $0x768] sm:$0xff]
        %v3619 = vld [vmem:[%s7 + $0x770] sm:$0xff]
        %v3620 = vld [vmem:[%s7 + $0x778] sm:$0xff]
        %v3621 = vld [vmem:[%s7 + $0x780] sm:$0xff]
        %v3622 = vld [vmem:[%s7 + $0x788] sm:$0xff]
        %v3623 = vld [vmem:[%s7 + $0x790] sm:$0xff]
        %v3624 = vld [vmem:[%s7 + $0x798] sm:$0xff]
        %v3625 = vld [vmem:[%s7 + $0x7a0] sm:$0xff]
        %v3626 = vld [vmem:[%s7 + $0x7a8] sm:$0xff]
        %v3627 = vld [vmem:[%s7 + $0x7b0] sm:$0xff]
        %v3628 = vld [vmem:[%s7 + $0x7b8] sm:$0xff]
        %v3629 = vld [vmem:[%s7 + $0x7c0] sm:$0xff]
        %v3630 = vld [vmem:[%s7 + $0x7c8] sm:$0xff]
        %v3631 = vld [vmem:[%s7 + $0x7d0] sm:$0xff]
        %v3632 = vld [vmem:[%s7 + $0x7d8] sm:$0xff]
        %v3633 = vld [vmem:[%s7 + $0x7e0] sm:$0xff]
        %v3634 = vld [vmem:[%s7 + $0x7e8] sm:$0xff]
        %v3635 = vld [vmem:[%s7 + $0x7f0] sm:$0xff]
        %v3636 = vld [vmem:[%s7 + $0x7f8] sm:$0xff]
        %v3637 = vld [vmem:[%s7 + $0x800] sm:$0xff]
        %v3638 = vld [vmem:[%s7 + $0x808] sm:$0xff]
        %v3639 = vld [vmem:[%s7 + $0x810] sm:$0xff]
        %v3640 = vld [vmem:[%s7 + $0x818] sm:$0xff]
        %v3641 = vld [vmem:[%s7 + $0x820] sm:$0xff]
        %v3642 = vld [vmem:[%s7 + $0x828] sm:$0xff]
        %v3643 = vld [vmem:[%s7 + $0x830] sm:$0xff]
        %v3644 = vld [vmem:[%s7 + $0x838] sm:$0xff]
        %v3645 = vld [vmem:[%s7 + $0x840] sm:$0xff]
        %v3646 = vld [vmem:[%s7 + $0x848] sm:$0xff]
        %v3647 = vld [vmem:[%s7 + $0x850] sm:$0xff]
        %v3648 = vld [vmem:[%s7 + $0x858] sm:$0xff]
        %v3649 = vld [vmem:[%s7 + $0x860] sm:$0xff]
        %v3650 = vld [vmem:[%s7 + $0x868] sm:$0xff]
        %v3651 = vld [vmem:[%s7 + $0x870] sm:$0xff]
        %v3652 = vld [vmem:[%s7 + $0x878] sm:$0xff]
        %v3653 = vld [vmem:[%s7 + $0x880] sm:$0xff]
        %v3654 = vld [vmem:[%s7 + $0x888] sm:$0xff]
        %v3655 = vld [vmem:[%s7 + $0x890] sm:$0xff]
        %v3656 = vld [vmem:[%s7 + $0x898] sm:$0xff]
        %v3657 = vld [vmem:[%s7 + $0x8a0] sm:$0xff]
        %v3658 = vld [vmem:[%s7 + $0x8a8] sm:$0xff]
        %v3659 = vld [vmem:[%s7 + $0x8b0] sm:$0xff]
        %v3660 = vld [vmem:[%s7 + $0x8b8] sm:$0xff]
        %v3661 = vld [vmem:[%s7 + $0x8c0] sm:$0xff]
        %v3662 = vld [vmem:[%s7 + $0x8c8] sm:$0xff]
        %v3663 = vld [vmem:[%s7 + $0x8d0] sm:$0xff]
        %v3664 = vld [vmem:[%s7 + $0x8d8] sm:$0xff]
        %v3665 = vld [vmem:[%s7 + $0x8e0] sm:$0xff]
        %v3666 = vld [vmem:[%s7 + $0x8e8] sm:$0xff]
        %v3667 = vld [vmem:[%s7 + $0x8f0] sm:$0xff]
        %v3668 = vld [vmem:[%s7 + $0x8f8] sm:$0xff]
        %v3669 = vld [vmem:[%s7 + $0x900] sm:$0xff]
        %v3670 = vld [vmem:[%s7 + $0x908] sm:$0xff]
        %v3671 = vld [vmem:[%s7 + $0x910] sm:$0xff]
        %v3672 = vld [vmem:[%s7 + $0x918] sm:$0xff]
        %v3673 = vld [vmem:[%s7 + $0x920] sm:$0xff]
        %v3674 = vld [vmem:[%s7 + $0x928] sm:$0xff]
        %v3675 = vld [vmem:[%s7 + $0x930] sm:$0xff]
        %v3676 = vld [vmem:[%s7 + $0x938] sm:$0xff]
        %v3677 = vld [vmem:[%s7 + $0x940] sm:$0xff]
        %v3678 = vld [vmem:[%s7 + $0x948] sm:$0xff]
        %v3679 = vld [vmem:[%s7 + $0x950] sm:$0xff]
        %v3680 = vld [vmem:[%s7 + $0x958] sm:$0xff]
        %v3681 = vld [vmem:[%s7 + $0x960] sm:$0xff]
        %v3682 = vld [vmem:[%s7 + $0x968] sm:$0xff]
        %v3683 = vld [vmem:[%s7 + $0x970] sm:$0xff]
        %v3684 = vld [vmem:[%s7 + $0x978] sm:$0xff]
        %v3685 = vld [vmem:[%s7 + $0x980] sm:$0xff]
        %v3686 = vld [vmem:[%s7 + $0x988] sm:$0xff]
        %v3687 = vld [vmem:[%s7 + $0x990] sm:$0xff]
        %v3688 = vld [vmem:[%s7 + $0x998] sm:$0xff]
        %v3689 = vld [vmem:[%s7 + $0x9a0] sm:$0xff]
        %v3690 = vld [vmem:[%s7 + $0x9a8] sm:$0xff]
        %v3691 = vld [vmem:[%s7 + $0x9b0] sm:$0xff]
        %v3692 = vld [vmem:[%s7 + $0x9b8] sm:$0xff]
        %v3693 = vld [vmem:[%s7 + $0x9c0] sm:$0xff]
        %v3694 = vld [vmem:[%s7 + $0x9c8] sm:$0xff]
        %v3695 = vld [vmem:[%s7 + $0x9d0] sm:$0xff]
        %v3696 = vld [vmem:[%s7 + $0x9d8] sm:$0xff]
        %v3697 = vld [vmem:[%s7 + $0x9e0] sm:$0xff]
        %v3698 = vld [vmem:[%s7 + $0x9e8] sm:$0xff]
        %v3699 = vld [vmem:[%s7 + $0x9f0] sm:$0xff]
        %v3700 = vld [vmem:[%s7 + $0x9f8] sm:$0xff]
        %v3701 = vld [vmem:[%s8] sm:$0xff]
        %v3702 = vld [vmem:[%s8 + $0x8] sm:$0x3]
        %v3705 = vlaneseq
        %v3706 = vshrl.u32 %v3705, 7
        %v3707 = vsub.s32 0, %v3706
        %v3708 = vrot.slane %v3701, %v3707
        %v3709 = vlaneseq
        %v3710 = vshrl.u32 %v3709, 7
        %v3711 = vsub.s32 1, %v3710
        %v3712 = vrot.slane %v3701, %v3711
        %v3713 = vlaneseq
        %v3714 = vshrl.u32 %v3713, 7
        %v3715 = vsub.s32 2, %v3714
        %v3716 = vrot.slane %v3701, %v3715
        %v3717 = vlaneseq
        %v3718 = vshrl.u32 %v3717, 7
        %v3719 = vsub.s32 3, %v3718
        %v3720 = vrot.slane %v3701, %v3719
        %v3721 = vlaneseq
        %v3722 = vshrl.u32 %v3721, 7
        %v3723 = vsub.s32 4, %v3722
        %v3724 = vrot.slane %v3701, %v3723
        %v3725 = vlaneseq
        %v3726 = vshrl.u32 %v3725, 7
        %v3727 = vsub.s32 5, %v3726
        %v3728 = vrot.slane %v3701, %v3727
        %v3729 = vlaneseq
        %v3730 = vshrl.u32 %v3729, 7
        %v3731 = vsub.s32 6, %v3730
        %v3732 = vrot.slane %v3701, %v3731
        %v3733 = vlaneseq
        %v3734 = vshrl.u32 %v3733, 7
        %v3735 = vsub.s32 7, %v3734
        %v3736 = vrot.slane %v3701, %v3735
        %v3737 = vlaneseq
        %v3738 = vshrl.u32 %v3737, 7
        %v3739 = vsub.s32 0, %v3738
        %v3740 = vrot.slane %v3702, %v3739
        %v3741 = vlaneseq
        %v3742 = vshrl.u32 %v3741, 7
        %v3743 = vsub.s32 1, %v3742
        %v3744 = vrot.slane %v3702, %v3743
        %v4075 = vunpack.c.l.b16 %v3381
        %v4076 = vunpack.c.h.b16 %v3381
        %v4077 = vunpack.c.l.b16 %v3382
        %v4078 = vunpack.c.h.b16 %v3382
        %v4079 = vunpack.c.l.b16 %v3383
        %v4080 = vunpack.c.h.b16 %v3383
        %v4081 = vunpack.c.l.b16 %v3384
        %v4082 = vunpack.c.h.b16 %v3384
        %v4083 = vunpack.c.l.b16 %v3385
        %v4084 = vunpack.c.h.b16 %v3385
        %v4085 = vunpack.c.l.b16 %v3386
        %v4086 = vunpack.c.h.b16 %v3386
        %v4087 = vunpack.c.l.b16 %v3387
        %v4088 = vunpack.c.h.b16 %v3387
        %v4089 = vunpack.c.l.b16 %v3388
        %v4090 = vunpack.c.h.b16 %v3388
        %v4091 = vunpack.c.l.b16 %v3389
        %v4092 = vunpack.c.h.b16 %v3389
        %v4093 = vunpack.c.l.b16 %v3390
        %v4094 = vunpack.c.h.b16 %v3390
        %v4095 = vunpack.c.l.b16 %v3391
        %v4096 = vunpack.c.h.b16 %v3391
        %v4097 = vunpack.c.l.b16 %v3392
        %v4098 = vunpack.c.h.b16 %v3392
        %v4099 = vunpack.c.l.b16 %v3393
        %v4100 = vunpack.c.h.b16 %v3393
        %v4101 = vunpack.c.l.b16 %v3394
        %v4102 = vunpack.c.h.b16 %v3394
        %v4103 = vunpack.c.l.b16 %v3395
        %v4104 = vunpack.c.h.b16 %v3395
        %v4105 = vunpack.c.l.b16 %v3396
        %v4106 = vunpack.c.h.b16 %v3396
        %v4107 = vunpack.c.l.b16 %v3397
        %v4108 = vunpack.c.h.b16 %v3397
        %v4109 = vunpack.c.l.b16 %v3398
        %v4110 = vunpack.c.h.b16 %v3398
        %v4111 = vunpack.c.l.b16 %v3399
        %v4112 = vunpack.c.h.b16 %v3399
        %v4113 = vunpack.c.l.b16 %v3400
        %v4114 = vunpack.c.h.b16 %v3400
        %v4115 = vunpack.c.l.b16 %v3401
        %v4116 = vunpack.c.h.b16 %v3401
        %v4117 = vunpack.c.l.b16 %v3402
        %v4118 = vunpack.c.h.b16 %v3402
        %v4119 = vunpack.c.l.b16 %v3403
        %v4120 = vunpack.c.h.b16 %v3403
        %v4121 = vunpack.c.l.b16 %v3404
        %v4122 = vunpack.c.h.b16 %v3404
        %v4123 = vunpack.c.l.b16 %v3405
        %v4124 = vunpack.c.h.b16 %v3405
        %v4125 = vunpack.c.l.b16 %v3406
        %v4126 = vunpack.c.h.b16 %v3406
        %v4127 = vunpack.c.l.b16 %v3407
        %v4128 = vunpack.c.h.b16 %v3407
        %v4129 = vunpack.c.l.b16 %v3408
        %v4130 = vunpack.c.h.b16 %v3408
        %v4131 = vunpack.c.l.b16 %v3409
        %v4132 = vunpack.c.h.b16 %v3409
        %v4133 = vunpack.c.l.b16 %v3410
        %v4134 = vunpack.c.h.b16 %v3410
        %v4135 = vunpack.c.l.b16 %v3411
        %v4136 = vunpack.c.h.b16 %v3411
        %v4137 = vunpack.c.l.b16 %v3412
        %v4138 = vunpack.c.h.b16 %v3412
        %v4139 = vunpack.c.l.b16 %v3413
        %v4140 = vunpack.c.h.b16 %v3413
        %v4141 = vunpack.c.l.b16 %v3414
        %v4142 = vunpack.c.h.b16 %v3414
        %v4143 = vunpack.c.l.b16 %v3415
        %v4144 = vunpack.c.h.b16 %v3415
        %v4145 = vunpack.c.l.b16 %v3416
        %v4146 = vunpack.c.h.b16 %v3416
        %v4147 = vunpack.c.l.b16 %v3417
        %v4148 = vunpack.c.h.b16 %v3417
        %v4149 = vunpack.c.l.b16 %v3418
        %v4150 = vunpack.c.h.b16 %v3418
        %v4151 = vunpack.c.l.b16 %v3419
        %v4152 = vunpack.c.h.b16 %v3419
        %v4153 = vunpack.c.l.b16 %v3420
        %v4154 = vunpack.c.h.b16 %v3420
        %v4155 = vunpack.c.l.b16 %v3421
        %v4156 = vunpack.c.h.b16 %v3421
        %v4157 = vunpack.c.l.b16 %v3422
        %v4158 = vunpack.c.h.b16 %v3422
        %v4159 = vunpack.c.l.b16 %v3423
        %v4160 = vunpack.c.h.b16 %v3423
        %v4161 = vunpack.c.l.b16 %v3424
        %v4162 = vunpack.c.h.b16 %v3424
        %v4163 = vunpack.c.l.b16 %v3425
        %v4164 = vunpack.c.h.b16 %v3425
        %v4165 = vunpack.c.l.b16 %v3426
        %v4166 = vunpack.c.h.b16 %v3426
        %v4167 = vunpack.c.l.b16 %v3427
        %v4168 = vunpack.c.h.b16 %v3427
        %v4169 = vunpack.c.l.b16 %v3428
        %v4170 = vunpack.c.h.b16 %v3428
        %v4171 = vunpack.c.l.b16 %v3429
        %v4172 = vunpack.c.h.b16 %v3429
        %v4173 = vunpack.c.l.b16 %v3430
        %v4174 = vunpack.c.h.b16 %v3430
        %v4175 = vunpack.c.l.b16 %v3431
        %v4176 = vunpack.c.h.b16 %v3431
        %v4177 = vunpack.c.l.b16 %v3432
        %v4178 = vunpack.c.h.b16 %v3432
        %v4179 = vunpack.c.l.b16 %v3433
        %v4180 = vunpack.c.h.b16 %v3433
        %v4181 = vunpack.c.l.b16 %v3434
        %v4182 = vunpack.c.h.b16 %v3434
        %v4183 = vunpack.c.l.b16 %v3435
        %v4184 = vunpack.c.h.b16 %v3435
        %v4185 = vunpack.c.l.b16 %v3436
        %v4186 = vunpack.c.h.b16 %v3436
        %v4187 = vunpack.c.l.b16 %v3437
        %v4188 = vunpack.c.h.b16 %v3437
        %v4189 = vunpack.c.l.b16 %v3438
        %v4190 = vunpack.c.h.b16 %v3438
        %v4191 = vunpack.c.l.b16 %v3439
        %v4192 = vunpack.c.h.b16 %v3439
        %v4193 = vunpack.c.l.b16 %v3440
        %v4194 = vunpack.c.h.b16 %v3440
        %v4195 = vunpack.c.l.b16 %v3441
        %v4196 = vunpack.c.h.b16 %v3441
        %v4197 = vunpack.c.l.b16 %v3442
        %v4198 = vunpack.c.h.b16 %v3442
        %v4199 = vunpack.c.l.b16 %v3443
        %v4200 = vunpack.c.h.b16 %v3443
        %v4201 = vunpack.c.l.b16 %v3444
        %v4202 = vunpack.c.h.b16 %v3444
        %v4203 = vunpack.c.l.b16 %v3445
        %v4204 = vunpack.c.h.b16 %v3445
        %v4205 = vunpack.c.l.b16 %v3446
        %v4206 = vunpack.c.h.b16 %v3446
        %v4207 = vunpack.c.l.b16 %v3447
        %v4208 = vunpack.c.h.b16 %v3447
        %v4209 = vunpack.c.l.b16 %v3448
        %v4210 = vunpack.c.h.b16 %v3448
        %v4211 = vunpack.c.l.b16 %v3449
        %v4212 = vunpack.c.h.b16 %v3449
        %v4213 = vunpack.c.l.b16 %v3450
        %v4214 = vunpack.c.h.b16 %v3450
        %v4215 = vunpack.c.l.b16 %v3451
        %v4216 = vunpack.c.h.b16 %v3451
        %v4217 = vunpack.c.l.b16 %v3452
        %v4218 = vunpack.c.h.b16 %v3452
        %v4219 = vunpack.c.l.b16 %v3453
        %v4220 = vunpack.c.h.b16 %v3453
        %v4221 = vunpack.c.l.b16 %v3454
        %v4222 = vunpack.c.h.b16 %v3454
        %v4223 = vunpack.c.l.b16 %v3455
        %v4224 = vunpack.c.h.b16 %v3455
        %v4225 = vunpack.c.l.b16 %v3456
        %v4226 = vunpack.c.h.b16 %v3456
        %v4227 = vunpack.c.l.b16 %v3457
        %v4228 = vunpack.c.h.b16 %v3457
        %v4229 = vunpack.c.l.b16 %v3458
        %v4230 = vunpack.c.h.b16 %v3458
        %v4231 = vunpack.c.l.b16 %v3459
        %v4232 = vunpack.c.h.b16 %v3459
        %v4233 = vunpack.c.l.b16 %v3460
        %v4234 = vunpack.c.h.b16 %v3460
        %v4235 = vunpack.c.l.b16 %v3461
        %v4236 = vunpack.c.h.b16 %v3461
        %v4237 = vunpack.c.l.b16 %v3462
        %v4238 = vunpack.c.h.b16 %v3462
        %v4239 = vunpack.c.l.b16 %v3463
        %v4240 = vunpack.c.h.b16 %v3463
        %v4241 = vunpack.c.l.b16 %v3464
        %v4242 = vunpack.c.h.b16 %v3464
        %v4243 = vunpack.c.l.b16 %v3465
        %v4244 = vunpack.c.h.b16 %v3465
        %v4245 = vunpack.c.l.b16 %v3466
        %v4246 = vunpack.c.h.b16 %v3466
        %v4247 = vunpack.c.l.b16 %v3467
        %v4248 = vunpack.c.h.b16 %v3467
        %v4249 = vunpack.c.l.b16 %v3468
        %v4250 = vunpack.c.h.b16 %v3468
        %v4251 = vunpack.c.l.b16 %v3469
        %v4252 = vunpack.c.h.b16 %v3469
        %v4253 = vunpack.c.l.b16 %v3470
        %v4254 = vunpack.c.h.b16 %v3470
        %v4255 = vunpack.c.l.b16 %v3471
        %v4256 = vunpack.c.h.b16 %v3471
        %v4257 = vunpack.c.l.b16 %v3472
        %v4258 = vunpack.c.h.b16 %v3472
        %v4259 = vunpack.c.l.b16 %v3473
        %v4260 = vunpack.c.h.b16 %v3473
        %v4261 = vunpack.c.l.b16 %v3474
        %v4262 = vunpack.c.h.b16 %v3474
        %v4263 = vunpack.c.l.b16 %v3475
        %v4264 = vunpack.c.h.b16 %v3475
        %v4265 = vunpack.c.l.b16 %v3476
        %v4266 = vunpack.c.h.b16 %v3476
        %v4267 = vunpack.c.l.b16 %v3477
        %v4268 = vunpack.c.h.b16 %v3477
        %v4269 = vunpack.c.l.b16 %v3478
        %v4270 = vunpack.c.h.b16 %v3478
        %v4271 = vunpack.c.l.b16 %v3479
        %v4272 = vunpack.c.h.b16 %v3479
        %v4273 = vunpack.c.l.b16 %v3480
        %v4274 = vunpack.c.h.b16 %v3480
        %v4275 = vunpack.c.l.b16 %v3481
        %v4276 = vunpack.c.h.b16 %v3481
        %v4277 = vunpack.c.l.b16 %v3482
        %v4278 = vunpack.c.h.b16 %v3482
        %v4279 = vunpack.c.l.b16 %v3483
        %v4280 = vunpack.c.h.b16 %v3483
        %v4281 = vunpack.c.l.b16 %v3484
        %v4282 = vunpack.c.h.b16 %v3484
        %v4283 = vunpack.c.l.b16 %v3485
        %v4284 = vunpack.c.h.b16 %v3485
        %v4285 = vunpack.c.l.b16 %v3486
        %v4286 = vunpack.c.h.b16 %v3486
        %v4287 = vunpack.c.l.b16 %v3487
        %v4288 = vunpack.c.h.b16 %v3487
        %v4289 = vunpack.c.l.b16 %v3488
        %v4290 = vunpack.c.h.b16 %v3488
        %v4291 = vunpack.c.l.b16 %v3489
        %v4292 = vunpack.c.h.b16 %v3489
        %v4293 = vunpack.c.l.b16 %v3490
        %v4294 = vunpack.c.h.b16 %v3490
        %v4295 = vunpack.c.l.b16 %v3491
        %v4296 = vunpack.c.h.b16 %v3491
        %v4297 = vunpack.c.l.b16 %v3492
        %v4298 = vunpack.c.h.b16 %v3492
        %v4299 = vunpack.c.l.b16 %v3493
        %v4300 = vunpack.c.h.b16 %v3493
        %v4301 = vunpack.c.l.b16 %v3494
        %v4302 = vunpack.c.h.b16 %v3494
        %v4303 = vunpack.c.l.b16 %v3495
        %v4304 = vunpack.c.h.b16 %v3495
        %v4305 = vunpack.c.l.b16 %v3496
        %v4306 = vunpack.c.h.b16 %v3496
        %v4307 = vunpack.c.l.b16 %v3497
        %v4308 = vunpack.c.h.b16 %v3497
        %v4309 = vunpack.c.l.b16 %v3498
        %v4310 = vunpack.c.h.b16 %v3498
        %v4311 = vunpack.c.l.b16 %v3499
        %v4312 = vunpack.c.h.b16 %v3499
        %v4313 = vunpack.c.l.b16 %v3500
        %v4314 = vunpack.c.h.b16 %v3500
        %v4315 = vunpack.c.l.b16 %v3501
        %v4316 = vunpack.c.h.b16 %v3501
        %v4317 = vunpack.c.l.b16 %v3502
        %v4318 = vunpack.c.h.b16 %v3502
        %v4319 = vunpack.c.l.b16 %v3503
        %v4320 = vunpack.c.h.b16 %v3503
        %v4321 = vunpack.c.l.b16 %v3504
        %v4322 = vunpack.c.h.b16 %v3504
        %v4323 = vunpack.c.l.b16 %v3505
        %v4324 = vunpack.c.h.b16 %v3505
        %v4325 = vunpack.c.l.b16 %v3506
        %v4326 = vunpack.c.h.b16 %v3506
        %v4327 = vunpack.c.l.b16 %v3507
        %v4328 = vunpack.c.h.b16 %v3507
        %v4329 = vunpack.c.l.b16 %v3508
        %v4330 = vunpack.c.h.b16 %v3508
        %v4331 = vunpack.c.l.b16 %v3509
        %v4332 = vunpack.c.h.b16 %v3509
        %v4333 = vunpack.c.l.b16 %v3510
        %v4334 = vunpack.c.h.b16 %v3510
        %v4335 = vunpack.c.l.b16 %v3511
        %v4336 = vunpack.c.h.b16 %v3511
        %v4337 = vunpack.c.l.b16 %v3512
        %v4338 = vunpack.c.h.b16 %v3512
        %v4339 = vunpack.c.l.b16 %v3513
        %v4340 = vunpack.c.h.b16 %v3513
        %v4341 = vunpack.c.l.b16 %v3514
        %v4342 = vunpack.c.h.b16 %v3514
        %v4343 = vunpack.c.l.b16 %v3515
        %v4344 = vunpack.c.h.b16 %v3515
        %v4345 = vunpack.c.l.b16 %v3516
        %v4346 = vunpack.c.h.b16 %v3516
        %v4347 = vunpack.c.l.b16 %v3517
        %v4348 = vunpack.c.h.b16 %v3517
        %v4349 = vunpack.c.l.b16 %v3518
        %v4350 = vunpack.c.h.b16 %v3518
        %v4351 = vunpack.c.l.b16 %v3519
        %v4352 = vunpack.c.h.b16 %v3519
        %v4353 = vunpack.c.l.b16 %v3520
        %v4354 = vunpack.c.h.b16 %v3520
        %v4355 = vunpack.c.l.b16 %v3521
        %v4356 = vunpack.c.h.b16 %v3521
        %v4357 = vunpack.c.l.b16 %v3522
        %v4358 = vunpack.c.h.b16 %v3522
        %v4359 = vunpack.c.l.b16 %v3523
        %v4360 = vunpack.c.h.b16 %v3523
        %v4361 = vunpack.c.l.b16 %v3524
        %v4362 = vunpack.c.h.b16 %v3524
        %v4363 = vunpack.c.l.b16 %v3525
        %v4364 = vunpack.c.h.b16 %v3525
        %v4365 = vunpack.c.l.b16 %v3526
        %v4366 = vunpack.c.h.b16 %v3526
        %v4367 = vunpack.c.l.b16 %v3527
        %v4368 = vunpack.c.h.b16 %v3527
        %v4369 = vunpack.c.l.b16 %v3528
        %v4370 = vunpack.c.h.b16 %v3528
        %v4371 = vunpack.c.l.b16 %v3529
        %v4372 = vunpack.c.h.b16 %v3529
        %v4373 = vunpack.c.l.b16 %v3530
        %v4374 = vunpack.c.h.b16 %v3530
        %v4375 = vunpack.c.l.b16 %v3531
        %v4376 = vunpack.c.h.b16 %v3531
        %v4377 = vunpack.c.l.b16 %v3532
        %v4378 = vunpack.c.h.b16 %v3532
        %v4379 = vunpack.c.l.b16 %v3533
        %v4380 = vunpack.c.h.b16 %v3533
        %v4381 = vunpack.c.l.b16 %v3534
        %v4382 = vunpack.c.h.b16 %v3534
        %v4383 = vunpack.c.l.b16 %v3535
        %v4384 = vunpack.c.h.b16 %v3535
        %v4385 = vunpack.c.l.b16 %v3536
        %v4386 = vunpack.c.h.b16 %v3536
        %v4387 = vunpack.c.l.b16 %v3537
        %v4388 = vunpack.c.h.b16 %v3537
        %v4389 = vunpack.c.l.b16 %v3538
        %v4390 = vunpack.c.h.b16 %v3538
        %v4391 = vunpack.c.l.b16 %v3539
        %v4392 = vunpack.c.h.b16 %v3539
        %v4393 = vunpack.c.l.b16 %v3540
        %v4394 = vunpack.c.h.b16 %v3540
        %v4395 = vunpack.c.l.b16 %v3541
        %v4396 = vunpack.c.h.b16 %v3541
        %v4397 = vunpack.c.l.b16 %v3542
        %v4398 = vunpack.c.h.b16 %v3542
        %v4399 = vunpack.c.l.b16 %v3543
        %v4400 = vunpack.c.h.b16 %v3543
        %v4401 = vunpack.c.l.b16 %v3544
        %v4402 = vunpack.c.h.b16 %v3544
        %v4403 = vunpack.c.l.b16 %v3545
        %v4404 = vunpack.c.h.b16 %v3545
        %v4405 = vunpack.c.l.b16 %v3546
        %v4406 = vunpack.c.h.b16 %v3546
        %v4407 = vunpack.c.l.b16 %v3547
        %v4408 = vunpack.c.h.b16 %v3547
        %v4409 = vunpack.c.l.b16 %v3548
        %v4410 = vunpack.c.h.b16 %v3548
        %v4411 = vunpack.c.l.b16 %v3549
        %v4412 = vunpack.c.h.b16 %v3549
        %v4413 = vunpack.c.l.b16 %v3550
        %v4414 = vunpack.c.h.b16 %v3550
        %v4415 = vunpack.c.l.b16 %v3551
        %v4416 = vunpack.c.h.b16 %v3551
        %v4417 = vunpack.c.l.b16 %v3552
        %v4418 = vunpack.c.h.b16 %v3552
        %v4419 = vunpack.c.l.b16 %v3553
        %v4420 = vunpack.c.h.b16 %v3553
        %v4421 = vunpack.c.l.b16 %v3554
        %v4422 = vunpack.c.h.b16 %v3554
        %v4423 = vunpack.c.l.b16 %v3555
        %v4424 = vunpack.c.h.b16 %v3555
        %v4425 = vunpack.c.l.b16 %v3556
        %v4426 = vunpack.c.h.b16 %v3556
        %v4427 = vunpack.c.l.b16 %v3557
        %v4428 = vunpack.c.h.b16 %v3557
        %v4429 = vunpack.c.l.b16 %v3558
        %v4430 = vunpack.c.h.b16 %v3558
        %v4431 = vunpack.c.l.b16 %v3559
        %v4432 = vunpack.c.h.b16 %v3559
        %v4433 = vunpack.c.l.b16 %v3560
        %v4434 = vunpack.c.h.b16 %v3560
        %v4435 = vunpack.c.l.b16 %v3561
        %v4436 = vunpack.c.h.b16 %v3561
        %v4437 = vunpack.c.l.b16 %v3562
        %v4438 = vunpack.c.h.b16 %v3562
        %v4439 = vunpack.c.l.b16 %v3563
        %v4440 = vunpack.c.h.b16 %v3563
        %v4441 = vunpack.c.l.b16 %v3564
        %v4442 = vunpack.c.h.b16 %v3564
        %v4443 = vunpack.c.l.b16 %v3565
        %v4444 = vunpack.c.h.b16 %v3565
        %v4445 = vunpack.c.l.b16 %v3566
        %v4446 = vunpack.c.h.b16 %v3566
        %v4447 = vunpack.c.l.b16 %v3567
        %v4448 = vunpack.c.h.b16 %v3567
        %v4449 = vunpack.c.l.b16 %v3568
        %v4450 = vunpack.c.h.b16 %v3568
        %v4451 = vunpack.c.l.b16 %v3569
        %v4452 = vunpack.c.h.b16 %v3569
        %v4453 = vunpack.c.l.b16 %v3570
        %v4454 = vunpack.c.h.b16 %v3570
        %v4455 = vunpack.c.l.b16 %v3571
        %v4456 = vunpack.c.h.b16 %v3571
        %v4457 = vunpack.c.l.b16 %v3572
        %v4458 = vunpack.c.h.b16 %v3572
        %v4459 = vunpack.c.l.b16 %v3573
        %v4460 = vunpack.c.h.b16 %v3573
        %v4461 = vunpack.c.l.b16 %v3574
        %v4462 = vunpack.c.h.b16 %v3574
        %v4463 = vunpack.c.l.b16 %v3575
        %v4464 = vunpack.c.h.b16 %v3575
        %v4465 = vunpack.c.l.b16 %v3576
        %v4466 = vunpack.c.h.b16 %v3576
        %v4467 = vunpack.c.l.b16 %v3577
        %v4468 = vunpack.c.h.b16 %v3577
        %v4469 = vunpack.c.l.b16 %v3578
        %v4470 = vunpack.c.h.b16 %v3578
        %v4471 = vunpack.c.l.b16 %v3579
        %v4472 = vunpack.c.h.b16 %v3579
        %v4473 = vunpack.c.l.b16 %v3580
        %v4474 = vunpack.c.h.b16 %v3580
        %v4475 = vunpack.c.l.b16 %v3581
        %v4476 = vunpack.c.h.b16 %v3581
        %v4477 = vunpack.c.l.b16 %v3582
        %v4478 = vunpack.c.h.b16 %v3582
        %v4479 = vunpack.c.l.b16 %v3583
        %v4480 = vunpack.c.h.b16 %v3583
        %v4481 = vunpack.c.l.b16 %v3584
        %v4482 = vunpack.c.h.b16 %v3584
        %v4483 = vunpack.c.l.b16 %v3585
        %v4484 = vunpack.c.h.b16 %v3585
        %v4485 = vunpack.c.l.b16 %v3586
        %v4486 = vunpack.c.h.b16 %v3586
        %v4487 = vunpack.c.l.b16 %v3587
        %v4488 = vunpack.c.h.b16 %v3587
        %v4489 = vunpack.c.l.b16 %v3588
        %v4490 = vunpack.c.h.b16 %v3588
        %v4491 = vunpack.c.l.b16 %v3589
        %v4492 = vunpack.c.h.b16 %v3589
        %v4493 = vunpack.c.l.b16 %v3590
        %v4494 = vunpack.c.h.b16 %v3590
        %v4495 = vunpack.c.l.b16 %v3591
        %v4496 = vunpack.c.h.b16 %v3591
        %v4497 = vunpack.c.l.b16 %v3592
        %v4498 = vunpack.c.h.b16 %v3592
        %v4499 = vunpack.c.l.b16 %v3593
        %v4500 = vunpack.c.h.b16 %v3593
        %v4501 = vunpack.c.l.b16 %v3594
        %v4502 = vunpack.c.h.b16 %v3594
        %v4503 = vunpack.c.l.b16 %v3595
        %v4504 = vunpack.c.h.b16 %v3595
        %v4505 = vunpack.c.l.b16 %v3596
        %v4506 = vunpack.c.h.b16 %v3596
        %v4507 = vunpack.c.l.b16 %v3597
        %v4508 = vunpack.c.h.b16 %v3597
        %v4509 = vunpack.c.l.b16 %v3598
        %v4510 = vunpack.c.h.b16 %v3598
        %v4511 = vunpack.c.l.b16 %v3599
        %v4512 = vunpack.c.h.b16 %v3599
        %v4513 = vunpack.c.l.b16 %v3600
        %v4514 = vunpack.c.h.b16 %v3600
        %v4515 = vunpack.c.l.b16 %v3601
        %v4516 = vunpack.c.h.b16 %v3601
        %v4517 = vunpack.c.l.b16 %v3602
        %v4518 = vunpack.c.h.b16 %v3602
        %v4519 = vunpack.c.l.b16 %v3603
        %v4520 = vunpack.c.h.b16 %v3603
        %v4521 = vunpack.c.l.b16 %v3604
        %v4522 = vunpack.c.h.b16 %v3604
        %v4523 = vunpack.c.l.b16 %v3605
        %v4524 = vunpack.c.h.b16 %v3605
        %v4525 = vunpack.c.l.b16 %v3606
        %v4526 = vunpack.c.h.b16 %v3606
        %v4527 = vunpack.c.l.b16 %v3607
        %v4528 = vunpack.c.h.b16 %v3607
        %v4529 = vunpack.c.l.b16 %v3608
        %v4530 = vunpack.c.h.b16 %v3608
        %v4531 = vunpack.c.l.b16 %v3609
        %v4532 = vunpack.c.h.b16 %v3609
        %v4533 = vunpack.c.l.b16 %v3610
        %v4534 = vunpack.c.h.b16 %v3610
        %v4535 = vunpack.c.l.b16 %v3611
        %v4536 = vunpack.c.h.b16 %v3611
        %v4537 = vunpack.c.l.b16 %v3612
        %v4538 = vunpack.c.h.b16 %v3612
        %v4539 = vunpack.c.l.b16 %v3613
        %v4540 = vunpack.c.h.b16 %v3613
        %v4541 = vunpack.c.l.b16 %v3614
        %v4542 = vunpack.c.h.b16 %v3614
        %v4543 = vunpack.c.l.b16 %v3615
        %v4544 = vunpack.c.h.b16 %v3615
        %v4545 = vunpack.c.l.b16 %v3616
        %v4546 = vunpack.c.h.b16 %v3616
        %v4547 = vunpack.c.l.b16 %v3617
        %v4548 = vunpack.c.h.b16 %v3617
        %v4549 = vunpack.c.l.b16 %v3618
        %v4550 = vunpack.c.h.b16 %v3618
        %v4551 = vunpack.c.l.b16 %v3619
        %v4552 = vunpack.c.h.b16 %v3619
        %v4553 = vunpack.c.l.b16 %v3620
        %v4554 = vunpack.c.h.b16 %v3620
        %v4555 = vunpack.c.l.b16 %v3621
        %v4556 = vunpack.c.h.b16 %v3621
        %v4557 = vunpack.c.l.b16 %v3622
        %v4558 = vunpack.c.h.b16 %v3622
        %v4559 = vunpack.c.l.b16 %v3623
        %v4560 = vunpack.c.h.b16 %v3623
        %v4561 = vunpack.c.l.b16 %v3624
        %v4562 = vunpack.c.h.b16 %v3624
        %v4563 = vunpack.c.l.b16 %v3625
        %v4564 = vunpack.c.h.b16 %v3625
        %v4565 = vunpack.c.l.b16 %v3626
        %v4566 = vunpack.c.h.b16 %v3626
        %v4567 = vunpack.c.l.b16 %v3627
        %v4568 = vunpack.c.h.b16 %v3627
        %v4569 = vunpack.c.l.b16 %v3628
        %v4570 = vunpack.c.h.b16 %v3628
        %v4571 = vunpack.c.l.b16 %v3629
        %v4572 = vunpack.c.h.b16 %v3629
        %v4573 = vunpack.c.l.b16 %v3630
        %v4574 = vunpack.c.h.b16 %v3630
        %v4575 = vunpack.c.l.b16 %v3631
        %v4576 = vunpack.c.h.b16 %v3631
        %v4577 = vunpack.c.l.b16 %v3632
        %v4578 = vunpack.c.h.b16 %v3632
        %v4579 = vunpack.c.l.b16 %v3633
        %v4580 = vunpack.c.h.b16 %v3633
        %v4581 = vunpack.c.l.b16 %v3634
        %v4582 = vunpack.c.h.b16 %v3634
        %v4583 = vunpack.c.l.b16 %v3635
        %v4584 = vunpack.c.h.b16 %v3635
        %v4585 = vunpack.c.l.b16 %v3636
        %v4586 = vunpack.c.h.b16 %v3636
        %v4587 = vunpack.c.l.b16 %v3637
        %v4588 = vunpack.c.h.b16 %v3637
        %v4589 = vunpack.c.l.b16 %v3638
        %v4590 = vunpack.c.h.b16 %v3638
        %v4591 = vunpack.c.l.b16 %v3639
        %v4592 = vunpack.c.h.b16 %v3639
        %v4593 = vunpack.c.l.b16 %v3640
        %v4594 = vunpack.c.h.b16 %v3640
        %v4595 = vunpack.c.l.b16 %v3641
        %v4596 = vunpack.c.h.b16 %v3641
        %v4597 = vunpack.c.l.b16 %v3642
        %v4598 = vunpack.c.h.b16 %v3642
        %v4599 = vunpack.c.l.b16 %v3643
        %v4600 = vunpack.c.h.b16 %v3643
        %v4601 = vunpack.c.l.b16 %v3644
        %v4602 = vunpack.c.h.b16 %v3644
        %v4603 = vunpack.c.l.b16 %v3645
        %v4604 = vunpack.c.h.b16 %v3645
        %v4605 = vunpack.c.l.b16 %v3646
        %v4606 = vunpack.c.h.b16 %v3646
        %v4607 = vunpack.c.l.b16 %v3647
        %v4608 = vunpack.c.h.b16 %v3647
        %v4609 = vunpack.c.l.b16 %v3648
        %v4610 = vunpack.c.h.b16 %v3648
        %v4611 = vunpack.c.l.b16 %v3649
        %v4612 = vunpack.c.h.b16 %v3649
        %v4613 = vunpack.c.l.b16 %v3650
        %v4614 = vunpack.c.h.b16 %v3650
        %v4615 = vunpack.c.l.b16 %v3651
        %v4616 = vunpack.c.h.b16 %v3651
        %v4617 = vunpack.c.l.b16 %v3652
        %v4618 = vunpack.c.h.b16 %v3652
        %v4619 = vunpack.c.l.b16 %v3653
        %v4620 = vunpack.c.h.b16 %v3653
        %v4621 = vunpack.c.l.b16 %v3654
        %v4622 = vunpack.c.h.b16 %v3654
        %v4623 = vunpack.c.l.b16 %v3655
        %v4624 = vunpack.c.h.b16 %v3655
        %v4625 = vunpack.c.l.b16 %v3656
        %v4626 = vunpack.c.h.b16 %v3656
        %v4627 = vunpack.c.l.b16 %v3657
        %v4628 = vunpack.c.h.b16 %v3657
        %v4629 = vunpack.c.l.b16 %v3658
        %v4630 = vunpack.c.h.b16 %v3658
        %v4631 = vunpack.c.l.b16 %v3659
        %v4632 = vunpack.c.h.b16 %v3659
        %v4633 = vunpack.c.l.b16 %v3660
        %v4634 = vunpack.c.h.b16 %v3660
        %v4635 = vunpack.c.l.b16 %v3661
        %v4636 = vunpack.c.h.b16 %v3661
        %v4637 = vunpack.c.l.b16 %v3662
        %v4638 = vunpack.c.h.b16 %v3662
        %v4639 = vunpack.c.l.b16 %v3663
        %v4640 = vunpack.c.h.b16 %v3663
        %v4641 = vunpack.c.l.b16 %v3664
        %v4642 = vunpack.c.h.b16 %v3664
        %v4643 = vunpack.c.l.b16 %v3665
        %v4644 = vunpack.c.h.b16 %v3665
        %v4645 = vunpack.c.l.b16 %v3666
        %v4646 = vunpack.c.h.b16 %v3666
        %v4647 = vunpack.c.l.b16 %v3667
        %v4648 = vunpack.c.h.b16 %v3667
        %v4649 = vunpack.c.l.b16 %v3668
        %v4650 = vunpack.c.h.b16 %v3668
        %v4651 = vunpack.c.l.b16 %v3669
        %v4652 = vunpack.c.h.b16 %v3669
        %v4653 = vunpack.c.l.b16 %v3670
        %v4654 = vunpack.c.h.b16 %v3670
        %v4655 = vunpack.c.l.b16 %v3671
        %v4656 = vunpack.c.h.b16 %v3671
        %v4657 = vunpack.c.l.b16 %v3672
        %v4658 = vunpack.c.h.b16 %v3672
        %v4659 = vunpack.c.l.b16 %v3673
        %v4660 = vunpack.c.h.b16 %v3673
        %v4661 = vunpack.c.l.b16 %v3674
        %v4662 = vunpack.c.h.b16 %v3674
        %v4663 = vunpack.c.l.b16 %v3675
        %v4664 = vunpack.c.h.b16 %v3675
        %v4665 = vunpack.c.l.b16 %v3676
        %v4666 = vunpack.c.h.b16 %v3676
        %v4667 = vunpack.c.l.b16 %v3677
        %v4668 = vunpack.c.h.b16 %v3677
        %v4669 = vunpack.c.l.b16 %v3678
        %v4670 = vunpack.c.h.b16 %v3678
        %v4671 = vunpack.c.l.b16 %v3679
        %v4672 = vunpack.c.h.b16 %v3679
        %v4673 = vunpack.c.l.b16 %v3680
        %v4674 = vunpack.c.h.b16 %v3680
        %v4675 = vunpack.c.l.b16 %v3681
        %v4676 = vunpack.c.h.b16 %v3681
        %v4677 = vunpack.c.l.b16 %v3682
        %v4678 = vunpack.c.h.b16 %v3682
        %v4679 = vunpack.c.l.b16 %v3683
        %v4680 = vunpack.c.h.b16 %v3683
        %v4681 = vunpack.c.l.b16 %v3684
        %v4682 = vunpack.c.h.b16 %v3684
        %v4683 = vunpack.c.l.b16 %v3685
        %v4684 = vunpack.c.h.b16 %v3685
        %v4685 = vunpack.c.l.b16 %v3686
        %v4686 = vunpack.c.h.b16 %v3686
        %v4687 = vunpack.c.l.b16 %v3687
        %v4688 = vunpack.c.h.b16 %v3687
        %v4689 = vunpack.c.l.b16 %v3688
        %v4690 = vunpack.c.h.b16 %v3688
        %v4691 = vunpack.c.l.b16 %v3689
        %v4692 = vunpack.c.h.b16 %v3689
        %v4693 = vunpack.c.l.b16 %v3690
        %v4694 = vunpack.c.h.b16 %v3690
        %v4695 = vunpack.c.l.b16 %v3691
        %v4696 = vunpack.c.h.b16 %v3691
        %v4697 = vunpack.c.l.b16 %v3692
        %v4698 = vunpack.c.h.b16 %v3692
        %v4699 = vunpack.c.l.b16 %v3693
        %v4700 = vunpack.c.h.b16 %v3693
        %v4701 = vunpack.c.l.b16 %v3694
        %v4702 = vunpack.c.h.b16 %v3694
        %v4703 = vunpack.c.l.b16 %v3695
        %v4704 = vunpack.c.h.b16 %v3695
        %v4705 = vunpack.c.l.b16 %v3696
        %v4706 = vunpack.c.h.b16 %v3696
        %v4707 = vunpack.c.l.b16 %v3697
        %v4708 = vunpack.c.h.b16 %v3697
        %v4709 = vunpack.c.l.b16 %v3698
        %v4710 = vunpack.c.h.b16 %v3698
        %v4711 = vunpack.c.l.b16 %v3699
        %v4712 = vunpack.c.h.b16 %v3699
        %v4713 = vunpack.c.l.b16 %v3700
        %v4714 = vunpack.c.h.b16 %v3700
        %v4715 = vpack.c.b16 %v4085, %v4075
        %v4716 = vpack.c.b16 %v4086, %v4076
        %v4717 = vpack.c.b16 %v4087, %v4077
        %v4718 = vpack.c.b16 %v4088, %v4078
        %v4719 = vpack.c.b16 %v4089, %v4079
        %v4720 = vpack.c.b16 %v4090, %v4080
        %v4721 = vpack.c.b16 %v4091, %v4081
        %v4722 = vpack.c.b16 %v4092, %v4082
        %v4723 = vpack.c.b16 %v4093, %v4083
        %v4724 = vpack.c.b16 %v4094, %v4084
        %v4725 = vpack.c.b16 %v4105, %v4095
        %v4726 = vpack.c.b16 %v4106, %v4096
        %v4727 = vpack.c.b16 %v4107, %v4097
        %v4728 = vpack.c.b16 %v4108, %v4098
        %v4729 = vpack.c.b16 %v4109, %v4099
        %v4730 = vpack.c.b16 %v4110, %v4100
        %v4731 = vpack.c.b16 %v4111, %v4101
        %v4732 = vpack.c.b16 %v4112, %v4102
        %v4733 = vpack.c.b16 %v4113, %v4103
        %v4734 = vpack.c.b16 %v4114, %v4104
        %v4735 = vpack.c.b16 %v4125, %v4115
        %v4736 = vpack.c.b16 %v4126, %v4116
        %v4737 = vpack.c.b16 %v4127, %v4117
        %v4738 = vpack.c.b16 %v4128, %v4118
        %v4739 = vpack.c.b16 %v4129, %v4119
        %v4740 = vpack.c.b16 %v4130, %v4120
        %v4741 = vpack.c.b16 %v4131, %v4121
        %v4742 = vpack.c.b16 %v4132, %v4122
        %v4743 = vpack.c.b16 %v4133, %v4123
        %v4744 = vpack.c.b16 %v4134, %v4124
        %v4745 = vpack.c.b16 %v4145, %v4135
        %v4746 = vpack.c.b16 %v4146, %v4136
        %v4747 = vpack.c.b16 %v4147, %v4137
        %v4748 = vpack.c.b16 %v4148, %v4138
        %v4749 = vpack.c.b16 %v4149, %v4139
        %v4750 = vpack.c.b16 %v4150, %v4140
        %v4751 = vpack.c.b16 %v4151, %v4141
        %v4752 = vpack.c.b16 %v4152, %v4142
        %v4753 = vpack.c.b16 %v4153, %v4143
        %v4754 = vpack.c.b16 %v4154, %v4144
        %v4755 = vpack.c.b16 %v4165, %v4155
        %v4756 = vpack.c.b16 %v4166, %v4156
        %v4757 = vpack.c.b16 %v4167, %v4157
        %v4758 = vpack.c.b16 %v4168, %v4158
        %v4759 = vpack.c.b16 %v4169, %v4159
        %v4760 = vpack.c.b16 %v4170, %v4160
        %v4761 = vpack.c.b16 %v4171, %v4161
        %v4762 = vpack.c.b16 %v4172, %v4162
        %v4763 = vpack.c.b16 %v4173, %v4163
        %v4764 = vpack.c.b16 %v4174, %v4164
        %v4765 = vpack.c.b16 %v4185, %v4175
        %v4766 = vpack.c.b16 %v4186, %v4176
        %v4767 = vpack.c.b16 %v4187, %v4177
        %v4768 = vpack.c.b16 %v4188, %v4178
        %v4769 = vpack.c.b16 %v4189, %v4179
        %v4770 = vpack.c.b16 %v4190, %v4180
        %v4771 = vpack.c.b16 %v4191, %v4181
        %v4772 = vpack.c.b16 %v4192, %v4182
        %v4773 = vpack.c.b16 %v4193, %v4183
        %v4774 = vpack.c.b16 %v4194, %v4184
        %v4775 = vpack.c.b16 %v4205, %v4195
        %v4776 = vpack.c.b16 %v4206, %v4196
        %v4777 = vpack.c.b16 %v4207, %v4197
        %v4778 = vpack.c.b16 %v4208, %v4198
        %v4779 = vpack.c.b16 %v4209, %v4199
        %v4780 = vpack.c.b16 %v4210, %v4200
        %v4781 = vpack.c.b16 %v4211, %v4201
        %v4782 = vpack.c.b16 %v4212, %v4202
        %v4783 = vpack.c.b16 %v4213, %v4203
        %v4784 = vpack.c.b16 %v4214, %v4204
        %v4785 = vpack.c.b16 %v4225, %v4215
        %v4786 = vpack.c.b16 %v4226, %v4216
        %v4787 = vpack.c.b16 %v4227, %v4217
        %v4788 = vpack.c.b16 %v4228, %v4218
        %v4789 = vpack.c.b16 %v4229, %v4219
        %v4790 = vpack.c.b16 %v4230, %v4220
        %v4791 = vpack.c.b16 %v4231, %v4221
        %v4792 = vpack.c.b16 %v4232, %v4222
        %v4793 = vpack.c.b16 %v4233, %v4223
        %v4794 = vpack.c.b16 %v4234, %v4224
        %v4795 = vpack.c.b16 %v4245, %v4235
        %v4796 = vpack.c.b16 %v4246, %v4236
        %v4797 = vpack.c.b16 %v4247, %v4237
        %v4798 = vpack.c.b16 %v4248, %v4238
        %v4799 = vpack.c.b16 %v4249, %v4239
        %v4800 = vpack.c.b16 %v4250, %v4240
        %v4801 = vpack.c.b16 %v4251, %v4241
        %v4802 = vpack.c.b16 %v4252, %v4242
        %v4803 = vpack.c.b16 %v4253, %v4243
        %v4804 = vpack.c.b16 %v4254, %v4244
        %v4805 = vpack.c.b16 %v4265, %v4255
        %v4806 = vpack.c.b16 %v4266, %v4256
        %v4807 = vpack.c.b16 %v4267, %v4257
        %v4808 = vpack.c.b16 %v4268, %v4258
        %v4809 = vpack.c.b16 %v4269, %v4259
        %v4810 = vpack.c.b16 %v4270, %v4260
        %v4811 = vpack.c.b16 %v4271, %v4261
        %v4812 = vpack.c.b16 %v4272, %v4262
        %v4813 = vpack.c.b16 %v4273, %v4263
        %v4814 = vpack.c.b16 %v4274, %v4264
        %v4815 = vpack.c.b16 %v4285, %v4275
        %v4816 = vpack.c.b16 %v4286, %v4276
        %v4817 = vpack.c.b16 %v4287, %v4277
        %v4818 = vpack.c.b16 %v4288, %v4278
        %v4819 = vpack.c.b16 %v4289, %v4279
        %v4820 = vpack.c.b16 %v4290, %v4280
        %v4821 = vpack.c.b16 %v4291, %v4281
        %v4822 = vpack.c.b16 %v4292, %v4282
        %v4823 = vpack.c.b16 %v4293, %v4283
        %v4824 = vpack.c.b16 %v4294, %v4284
        %v4825 = vpack.c.b16 %v4305, %v4295
        %v4826 = vpack.c.b16 %v4306, %v4296
        %v4827 = vpack.c.b16 %v4307, %v4297
        %v4828 = vpack.c.b16 %v4308, %v4298
        %v4829 = vpack.c.b16 %v4309, %v4299
        %v4830 = vpack.c.b16 %v4310, %v4300
        %v4831 = vpack.c.b16 %v4311, %v4301
        %v4832 = vpack.c.b16 %v4312, %v4302
        %v4833 = vpack.c.b16 %v4313, %v4303
        %v4834 = vpack.c.b16 %v4314, %v4304
        %v4835 = vpack.c.b16 %v4325, %v4315
        %v4836 = vpack.c.b16 %v4326, %v4316
        %v4837 = vpack.c.b16 %v4327, %v4317
        %v4838 = vpack.c.b16 %v4328, %v4318
        %v4839 = vpack.c.b16 %v4329, %v4319
        %v4840 = vpack.c.b16 %v4330, %v4320
        %v4841 = vpack.c.b16 %v4331, %v4321
        %v4842 = vpack.c.b16 %v4332, %v4322
        %v4843 = vpack.c.b16 %v4333, %v4323
        %v4844 = vpack.c.b16 %v4334, %v4324
        %v4845 = vpack.c.b16 %v4345, %v4335
        %v4846 = vpack.c.b16 %v4346, %v4336
        %v4847 = vpack.c.b16 %v4347, %v4337
        %v4848 = vpack.c.b16 %v4348, %v4338
        %v4849 = vpack.c.b16 %v4349, %v4339
        %v4850 = vpack.c.b16 %v4350, %v4340
        %v4851 = vpack.c.b16 %v4351, %v4341
        %v4852 = vpack.c.b16 %v4352, %v4342
        %v4853 = vpack.c.b16 %v4353, %v4343
        %v4854 = vpack.c.b16 %v4354, %v4344
        %v4855 = vpack.c.b16 %v4365, %v4355
        %v4856 = vpack.c.b16 %v4366, %v4356
        %v4857 = vpack.c.b16 %v4367, %v4357
        %v4858 = vpack.c.b16 %v4368, %v4358
        %v4859 = vpack.c.b16 %v4369, %v4359
        %v4860 = vpack.c.b16 %v4370, %v4360
        %v4861 = vpack.c.b16 %v4371, %v4361
        %v4862 = vpack.c.b16 %v4372, %v4362
        %v4863 = vpack.c.b16 %v4373, %v4363
        %v4864 = vpack.c.b16 %v4374, %v4364
        %v4865 = vpack.c.b16 %v4385, %v4375
        %v4866 = vpack.c.b16 %v4386, %v4376
        %v4867 = vpack.c.b16 %v4387, %v4377
        %v4868 = vpack.c.b16 %v4388, %v4378
        %v4869 = vpack.c.b16 %v4389, %v4379
        %v4870 = vpack.c.b16 %v4390, %v4380
        %v4871 = vpack.c.b16 %v4391, %v4381
        %v4872 = vpack.c.b16 %v4392, %v4382
        %v4873 = vpack.c.b16 %v4393, %v4383
        %v4874 = vpack.c.b16 %v4394, %v4384
        %v4875 = vpack.c.b16 %v4405, %v4395
        %v4876 = vpack.c.b16 %v4406, %v4396
        %v4877 = vpack.c.b16 %v4407, %v4397
        %v4878 = vpack.c.b16 %v4408, %v4398
        %v4879 = vpack.c.b16 %v4409, %v4399
        %v4880 = vpack.c.b16 %v4410, %v4400
        %v4881 = vpack.c.b16 %v4411, %v4401
        %v4882 = vpack.c.b16 %v4412, %v4402
        %v4883 = vpack.c.b16 %v4413, %v4403
        %v4884 = vpack.c.b16 %v4414, %v4404
        %v4885 = vpack.c.b16 %v4425, %v4415
        %v4886 = vpack.c.b16 %v4426, %v4416
        %v4887 = vpack.c.b16 %v4427, %v4417
        %v4888 = vpack.c.b16 %v4428, %v4418
        %v4889 = vpack.c.b16 %v4429, %v4419
        %v4890 = vpack.c.b16 %v4430, %v4420
        %v4891 = vpack.c.b16 %v4431, %v4421
        %v4892 = vpack.c.b16 %v4432, %v4422
        %v4893 = vpack.c.b16 %v4433, %v4423
        %v4894 = vpack.c.b16 %v4434, %v4424
        %v4895 = vpack.c.b16 %v4445, %v4435
        %v4896 = vpack.c.b16 %v4446, %v4436
        %v4897 = vpack.c.b16 %v4447, %v4437
        %v4898 = vpack.c.b16 %v4448, %v4438
        %v4899 = vpack.c.b16 %v4449, %v4439
        %v4900 = vpack.c.b16 %v4450, %v4440
        %v4901 = vpack.c.b16 %v4451, %v4441
        %v4902 = vpack.c.b16 %v4452, %v4442
        %v4903 = vpack.c.b16 %v4453, %v4443
        %v4904 = vpack.c.b16 %v4454, %v4444
        %v4905 = vpack.c.b16 %v4465, %v4455
        %v4906 = vpack.c.b16 %v4466, %v4456
        %v4907 = vpack.c.b16 %v4467, %v4457
        %v4908 = vpack.c.b16 %v4468, %v4458
        %v4909 = vpack.c.b16 %v4469, %v4459
        %v4910 = vpack.c.b16 %v4470, %v4460
        %v4911 = vpack.c.b16 %v4471, %v4461
        %v4912 = vpack.c.b16 %v4472, %v4462
        %v4913 = vpack.c.b16 %v4473, %v4463
        %v4914 = vpack.c.b16 %v4474, %v4464
        %v4915 = vpack.c.b16 %v4485, %v4475
        %v4916 = vpack.c.b16 %v4486, %v4476
        %v4917 = vpack.c.b16 %v4487, %v4477
        %v4918 = vpack.c.b16 %v4488, %v4478
        %v4919 = vpack.c.b16 %v4489, %v4479
        %v4920 = vpack.c.b16 %v4490, %v4480
        %v4921 = vpack.c.b16 %v4491, %v4481
        %v4922 = vpack.c.b16 %v4492, %v4482
        %v4923 = vpack.c.b16 %v4493, %v4483
        %v4924 = vpack.c.b16 %v4494, %v4484
        %v4925 = vpack.c.b16 %v4505, %v4495
        %v4926 = vpack.c.b16 %v4506, %v4496
        %v4927 = vpack.c.b16 %v4507, %v4497
        %v4928 = vpack.c.b16 %v4508, %v4498
        %v4929 = vpack.c.b16 %v4509, %v4499
        %v4930 = vpack.c.b16 %v4510, %v4500
        %v4931 = vpack.c.b16 %v4511, %v4501
        %v4932 = vpack.c.b16 %v4512, %v4502
        %v4933 = vpack.c.b16 %v4513, %v4503
        %v4934 = vpack.c.b16 %v4514, %v4504
        %v4935 = vpack.c.b16 %v4525, %v4515
        %v4936 = vpack.c.b16 %v4526, %v4516
        %v4937 = vpack.c.b16 %v4527, %v4517
        %v4938 = vpack.c.b16 %v4528, %v4518
        %v4939 = vpack.c.b16 %v4529, %v4519
        %v4940 = vpack.c.b16 %v4530, %v4520
        %v4941 = vpack.c.b16 %v4531, %v4521
        %v4942 = vpack.c.b16 %v4532, %v4522
        %v4943 = vpack.c.b16 %v4533, %v4523
        %v4944 = vpack.c.b16 %v4534, %v4524
        %v4945 = vpack.c.b16 %v4545, %v4535
        %v4946 = vpack.c.b16 %v4546, %v4536
        %v4947 = vpack.c.b16 %v4547, %v4537
        %v4948 = vpack.c.b16 %v4548, %v4538
        %v4949 = vpack.c.b16 %v4549, %v4539
        %v4950 = vpack.c.b16 %v4550, %v4540
        %v4951 = vpack.c.b16 %v4551, %v4541
        %v4952 = vpack.c.b16 %v4552, %v4542
        %v4953 = vpack.c.b16 %v4553, %v4543
        %v4954 = vpack.c.b16 %v4554, %v4544
        %v4955 = vpack.c.b16 %v4565, %v4555
        %v4956 = vpack.c.b16 %v4566, %v4556
        %v4957 = vpack.c.b16 %v4567, %v4557
        %v4958 = vpack.c.b16 %v4568, %v4558
        %v4959 = vpack.c.b16 %v4569, %v4559
        %v4960 = vpack.c.b16 %v4570, %v4560
        %v4961 = vpack.c.b16 %v4571, %v4561
        %v4962 = vpack.c.b16 %v4572, %v4562
        %v4963 = vpack.c.b16 %v4573, %v4563
        %v4964 = vpack.c.b16 %v4574, %v4564
        %v4965 = vpack.c.b16 %v4585, %v4575
        %v4966 = vpack.c.b16 %v4586, %v4576
        %v4967 = vpack.c.b16 %v4587, %v4577
        %v4968 = vpack.c.b16 %v4588, %v4578
        %v4969 = vpack.c.b16 %v4589, %v4579
        %v4970 = vpack.c.b16 %v4590, %v4580
        %v4971 = vpack.c.b16 %v4591, %v4581
        %v4972 = vpack.c.b16 %v4592, %v4582
        %v4973 = vpack.c.b16 %v4593, %v4583
        %v4974 = vpack.c.b16 %v4594, %v4584
        %v4975 = vpack.c.b16 %v4605, %v4595
        %v4976 = vpack.c.b16 %v4606, %v4596
        %v4977 = vpack.c.b16 %v4607, %v4597
        %v4978 = vpack.c.b16 %v4608, %v4598
        %v4979 = vpack.c.b16 %v4609, %v4599
        %v4980 = vpack.c.b16 %v4610, %v4600
        %v4981 = vpack.c.b16 %v4611, %v4601
        %v4982 = vpack.c.b16 %v4612, %v4602
        %v4983 = vpack.c.b16 %v4613, %v4603
        %v4984 = vpack.c.b16 %v4614, %v4604
        %v4985 = vpack.c.b16 %v4625, %v4615
        %v4986 = vpack.c.b16 %v4626, %v4616
        %v4987 = vpack.c.b16 %v4627, %v4617
        %v4988 = vpack.c.b16 %v4628, %v4618
        %v4989 = vpack.c.b16 %v4629, %v4619
        %v4990 = vpack.c.b16 %v4630, %v4620
        %v4991 = vpack.c.b16 %v4631, %v4621
        %v4992 = vpack.c.b16 %v4632, %v4622
        %v4993 = vpack.c.b16 %v4633, %v4623
        %v4994 = vpack.c.b16 %v4634, %v4624
        %v4995 = vpack.c.b16 %v4645, %v4635
        %v4996 = vpack.c.b16 %v4646, %v4636
        %v4997 = vpack.c.b16 %v4647, %v4637
        %v4998 = vpack.c.b16 %v4648, %v4638
        %v4999 = vpack.c.b16 %v4649, %v4639
        %v5000 = vpack.c.b16 %v4650, %v4640
        %v5001 = vpack.c.b16 %v4651, %v4641
        %v5002 = vpack.c.b16 %v4652, %v4642
        %v5003 = vpack.c.b16 %v4653, %v4643
        %v5004 = vpack.c.b16 %v4654, %v4644
        %v5005 = vpack.c.b16 %v4665, %v4655
        %v5006 = vpack.c.b16 %v4666, %v4656
        %v5007 = vpack.c.b16 %v4667, %v4657
        %v5008 = vpack.c.b16 %v4668, %v4658
        %v5009 = vpack.c.b16 %v4669, %v4659
        %v5010 = vpack.c.b16 %v4670, %v4660
        %v5011 = vpack.c.b16 %v4671, %v4661
        %v5012 = vpack.c.b16 %v4672, %v4662
        %v5013 = vpack.c.b16 %v4673, %v4663
        %v5014 = vpack.c.b16 %v4674, %v4664
        %v5015 = vpack.c.b16 %v4685, %v4675
        %v5016 = vpack.c.b16 %v4686, %v4676
        %v5017 = vpack.c.b16 %v4687, %v4677
        %v5018 = vpack.c.b16 %v4688, %v4678
        %v5019 = vpack.c.b16 %v4689, %v4679
        %v5020 = vpack.c.b16 %v4690, %v4680
        %v5021 = vpack.c.b16 %v4691, %v4681
        %v5022 = vpack.c.b16 %v4692, %v4682
        %v5023 = vpack.c.b16 %v4693, %v4683
        %v5024 = vpack.c.b16 %v4694, %v4684
        %v5025 = vpack.c.b16 %v4705, %v4695
        %v5026 = vpack.c.b16 %v4706, %v4696
        %v5027 = vpack.c.b16 %v4707, %v4697
        %v5028 = vpack.c.b16 %v4708, %v4698
        %v5029 = vpack.c.b16 %v4709, %v4699
        %v5030 = vpack.c.b16 %v4710, %v4700
        %v5031 = vpack.c.b16 %v4711, %v4701
        %v5032 = vpack.c.b16 %v4712, %v4702
        %v5033 = vpack.c.b16 %v4713, %v4703
        %v5034 = vpack.c.b16 %v4714, %v4704
        %5355 = vmatprep.subr.bf16.mxu0 %v4786
        %5356 = vmatpush1.bf16.msra.mxu0 %v4785
        %5357 = vmatprep.subr.bf16.mxu0 %v4776
        %5358 = vmatpush1.bf16.msra.mxu0 %v4775
        %5359 = vmatprep.subr.bf16.mxu0 %v4766
        %5360 = vmatpush1.bf16.msra.mxu0 %v4765
        %5361 = vmatprep.subr.bf16.mxu0 %v4756
        %5362 = vmatpush1.bf16.msra.mxu0 %v4755
        %5363 = vmatprep.subr.bf16.mxu0 %v4746
        %5364 = vmatpush1.bf16.msra.mxu0 %v4745
        %5365 = vmatprep.subr.bf16.mxu0 %v4736
        %5366 = vmatpush1.bf16.msra.mxu0 %v4735
        %5367 = vmatprep.subr.bf16.mxu0 %v4726
        %5368 = vmatpush1.bf16.msra.mxu0 %v4725
        %5369 = vmatprep.subr.bf16.mxu0 %v4716
        %5370 = vmatpush1.bf16.msra.mxu0 %v4715
        %5371 = vmatprep.subr.bf16.mxu0 %v4866
        %5372 = vmatpush2.bf16.msra.mxu0 %v4865
        %5373 = vmatprep.subr.bf16.mxu0 %v4856
        %5374 = vmatpush2.bf16.msra.mxu0 %v4855
        %5375 = vmatprep.subr.bf16.mxu0 %v4846
        %5376 = vmatpush2.bf16.msra.mxu0 %v4845
        %5377 = vmatprep.subr.bf16.mxu0 %v4836
        %5378 = vmatpush2.bf16.msra.mxu0 %v4835
        %5379 = vmatprep.subr.bf16.mxu0 %v4826
        %5380 = vmatpush2.bf16.msra.mxu0 %v4825
        %5381 = vmatprep.subr.bf16.mxu0 %v4816
        %5382 = vmatpush2.bf16.msra.mxu0 %v4815
        %5383 = vmatprep.subr.bf16.mxu0 %v4806
        %5384 = vmatpush2.bf16.msra.mxu0 %v4805
        %5385 = vmatprep.subr.bf16.mxu0 %v4796
        %5386 = vmatpush2.bf16.msra.mxu0 %v4795
        %5387 = vmatprep.mubr.bf16.mxu0 %v3374
        %5388 = vmatmul.mubr.bf16.gmra.mxu0 %v3373
        %v5389 = vpop.f32.mrf.mxu0
        %v5390 = vadd.f32 %v3708, %v5389
        %v5391 = vpop.f32.mrf.mxu0
        %v5392 = vadd.f32 %v3712, %v5391
        %v5393 = vpop.f32.mrf.mxu0
        %v5394 = vadd.f32 %v3708, %v5393
        %v5395 = vpop.f32.mrf.mxu0
        %v5396 = vadd.f32 %v3712, %v5395
        %5397 = vmatprep.mubr.bf16.mxu0 %v3378
        %5398 = vmatmul.mubr.bf16.gmra.mxu0 %v3377
        %v5399 = vpop.f32.mrf.mxu0
        %v5400 = vadd.f32 %v3708, %v5399
        %v5401 = vpop.f32.mrf.mxu0
        %v5402 = vadd.f32 %v3712, %v5401
        %v5403 = vpop.f32.mrf.mxu0
        %v5404 = vadd.f32 %v3708, %v5403
        %v5405 = vpop.f32.mrf.mxu0
        %v5406 = vadd.f32 %v3712, %v5405
        %5407 = vdwg.mxu0
        %5408 = vmatprep.subr.bf16.mxu0 %v4946
        %5409 = vmatpush1.bf16.msra.mxu0 %v4945
        %5410 = vmatprep.subr.bf16.mxu0 %v4936
        %5411 = vmatpush1.bf16.msra.mxu0 %v4935
        %5412 = vmatprep.subr.bf16.mxu0 %v4926
        %5413 = vmatpush1.bf16.msra.mxu0 %v4925
        %5414 = vmatprep.subr.bf16.mxu0 %v4916
        %5415 = vmatpush1.bf16.msra.mxu0 %v4915
        %5416 = vmatprep.subr.bf16.mxu0 %v4906
        %5417 = vmatpush1.bf16.msra.mxu0 %v4905
        %5418 = vmatprep.subr.bf16.mxu0 %v4896
        %5419 = vmatpush1.bf16.msra.mxu0 %v4895
        %5420 = vmatprep.subr.bf16.mxu0 %v4886
        %5421 = vmatpush1.bf16.msra.mxu0 %v4885
        %5422 = vmatprep.subr.bf16.mxu0 %v4876
        %5423 = vmatpush1.bf16.msra.mxu0 %v4875
        %5424 = vmatprep.subr.bf16.mxu0 %v5026
        %5425 = vmatpush2.bf16.msra.mxu0 %v5025
        %5426 = vmatprep.subr.bf16.mxu0 %v5016
        %5427 = vmatpush2.bf16.msra.mxu0 %v5015
        %5428 = vmatprep.subr.bf16.mxu0 %v5006
        %5429 = vmatpush2.bf16.msra.mxu0 %v5005
        %5430 = vmatprep.subr.bf16.mxu0 %v4996
        %5431 = vmatpush2.bf16.msra.mxu0 %v4995
        %5432 = vmatprep.subr.bf16.mxu0 %v4986
        %5433 = vmatpush2.bf16.msra.mxu0 %v4985
        %5434 = vmatprep.subr.bf16.mxu0 %v4976
        %5435 = vmatpush2.bf16.msra.mxu0 %v4975
        %5436 = vmatprep.subr.bf16.mxu0 %v4966
        %5437 = vmatpush2.bf16.msra.mxu0 %v4965
        %5438 = vmatprep.subr.bf16.mxu0 %v4956
        %5439 = vmatpush2.bf16.msra.mxu0 %v4955
        %5440 = vmatprep.mubr.bf16.mxu0 %v3376
        %5441 = vmatmul.mubr.bf16.gmra.mxu0 %v3375
        %v5442 = vpop.f32.mrf.mxu0
        %v5443 = vadd.f32 %v5390, %v5442
        %v5444 = vpop.f32.mrf.mxu0
        %v5445 = vadd.f32 %v5392, %v5444
        %v5446 = vpop.f32.mrf.mxu0
        %v5447 = vadd.f32 %v5394, %v5446
        %v5448 = vpop.f32.mrf.mxu0
        %v5449 = vadd.f32 %v5396, %v5448
        %5450 = vmatprep.mubr.bf16.mxu0 %v3380
        %5451 = vmatmul.mubr.bf16.gmra.mxu0 %v3379
        %v5452 = vpop.f32.mrf.mxu0
        %v5453 = vadd.f32 %v5400, %v5452
        %v5454 = vpop.f32.mrf.mxu0
        %v5455 = vadd.f32 %v5402, %v5454
        %v5456 = vpop.f32.mrf.mxu0
        %v5457 = vadd.f32 %v5404, %v5456
        %v5458 = vpop.f32.mrf.mxu0
        %v5459 = vadd.f32 %v5406, %v5458
        %5460 = vdwg.mxu0
        %5461 = vmatprep.subr.bf16.mxu0 %v4788
        %5462 = vmatpush1.bf16.msra.mxu0 %v4787
        %5463 = vmatprep.subr.bf16.mxu0 %v4778
        %5464 = vmatpush1.bf16.msra.mxu0 %v4777
        %5465 = vmatprep.subr.bf16.mxu0 %v4768
        %5466 = vmatpush1.bf16.msra.mxu0 %v4767
        %5467 = vmatprep.subr.bf16.mxu0 %v4758
        %5468 = vmatpush1.bf16.msra.mxu0 %v4757
        %5469 = vmatprep.subr.bf16.mxu0 %v4748
        %5470 = vmatpush1.bf16.msra.mxu0 %v4747
        %5471 = vmatprep.subr.bf16.mxu0 %v4738
        %5472 = vmatpush1.bf16.msra.mxu0 %v4737
        %5473 = vmatprep.subr.bf16.mxu0 %v4728
        %5474 = vmatpush1.bf16.msra.mxu0 %v4727
        %5475 = vmatprep.subr.bf16.mxu0 %v4718
        %5476 = vmatpush1.bf16.msra.mxu0 %v4717
        %5477 = vmatprep.subr.bf16.mxu0 %v4868
        %5478 = vmatpush2.bf16.msra.mxu0 %v4867
        %5479 = vmatprep.subr.bf16.mxu0 %v4858
        %5480 = vmatpush2.bf16.msra.mxu0 %v4857
        %5481 = vmatprep.subr.bf16.mxu0 %v4848
        %5482 = vmatpush2.bf16.msra.mxu0 %v4847
        %5483 = vmatprep.subr.bf16.mxu0 %v4838
        %5484 = vmatpush2.bf16.msra.mxu0 %v4837
        %5485 = vmatprep.subr.bf16.mxu0 %v4828
        %5486 = vmatpush2.bf16.msra.mxu0 %v4827
        %5487 = vmatprep.subr.bf16.mxu0 %v4818
        %5488 = vmatpush2.bf16.msra.mxu0 %v4817
        %5489 = vmatprep.subr.bf16.mxu0 %v4808
        %5490 = vmatpush2.bf16.msra.mxu0 %v4807
        %5491 = vmatprep.subr.bf16.mxu0 %v4798
        %5492 = vmatpush2.bf16.msra.mxu0 %v4797
        %5493 = vmatprep.mubr.bf16.mxu0 %v3374
        %5494 = vmatmul.mubr.bf16.gmra.mxu0 %v3373
        %v5495 = vpop.f32.mrf.mxu0
        %v5496 = vadd.f32 %v3716, %v5495
        %v5497 = vpop.f32.mrf.mxu0
        %v5498 = vadd.f32 %v3720, %v5497
        %v5499 = vpop.f32.mrf.mxu0
        %v5500 = vadd.f32 %v3716, %v5499
        %v5501 = vpop.f32.mrf.mxu0
        %v5502 = vadd.f32 %v3720, %v5501
        %5503 = vmatprep.mubr.bf16.mxu0 %v3378
        %5504 = vmatmul.mubr.bf16.gmra.mxu0 %v3377
        %v5505 = vpop.f32.mrf.mxu0
        %v5506 = vadd.f32 %v3716, %v5505
        %v5507 = vpop.f32.mrf.mxu0
        %v5508 = vadd.f32 %v3720, %v5507
        %v5509 = vpop.f32.mrf.mxu0
        %v5510 = vadd.f32 %v3716, %v5509
        %v5511 = vpop.f32.mrf.mxu0
        %v5512 = vadd.f32 %v3720, %v5511
        %5513 = vdwg.mxu0
        %5514 = vmatprep.subr.bf16.mxu0 %v4948
        %5515 = vmatpush1.bf16.msra.mxu0 %v4947
        %5516 = vmatprep.subr.bf16.mxu0 %v4938
        %5517 = vmatpush1.bf16.msra.mxu0 %v4937
        %5518 = vmatprep.subr.bf16.mxu0 %v4928
        %5519 = vmatpush1.bf16.msra.mxu0 %v4927
        %5520 = vmatprep.subr.bf16.mxu0 %v4918
        %5521 = vmatpush1.bf16.msra.mxu0 %v4917
        %5522 = vmatprep.subr.bf16.mxu0 %v4908
        %5523 = vmatpush1.bf16.msra.mxu0 %v4907
        %5524 = vmatprep.subr.bf16.mxu0 %v4898
        %5525 = vmatpush1.bf16.msra.mxu0 %v4897
        %5526 = vmatprep.subr.bf16.mxu0 %v4888
        %5527 = vmatpush1.bf16.msra.mxu0 %v4887
        %5528 = vmatprep.subr.bf16.mxu0 %v4878
        %5529 = vmatpush1.bf16.msra.mxu0 %v4877
        %5530 = vmatprep.subr.bf16.mxu0 %v5028
        %5531 = vmatpush2.bf16.msra.mxu0 %v5027
        %5532 = vmatprep.subr.bf16.mxu0 %v5018
        %5533 = vmatpush2.bf16.msra.mxu0 %v5017
        %5534 = vmatprep.subr.bf16.mxu0 %v5008
        %5535 = vmatpush2.bf16.msra.mxu0 %v5007
        %5536 = vmatprep.subr.bf16.mxu0 %v4998
        %5537 = vmatpush2.bf16.msra.mxu0 %v4997
        %5538 = vmatprep.subr.bf16.mxu0 %v4988
        %5539 = vmatpush2.bf16.msra.mxu0 %v4987
        %5540 = vmatprep.subr.bf16.mxu0 %v4978
        %5541 = vmatpush2.bf16.msra.mxu0 %v4977
        %5542 = vmatprep.subr.bf16.mxu0 %v4968
        %5543 = vmatpush2.bf16.msra.mxu0 %v4967
        %5544 = vmatprep.subr.bf16.mxu0 %v4958
        %5545 = vmatpush2.bf16.msra.mxu0 %v4957
        %5546 = vmatprep.mubr.bf16.mxu0 %v3376
        %5547 = vmatmul.mubr.bf16.gmra.mxu0 %v3375
        %v5548 = vpop.f32.mrf.mxu0
        %v5549 = vadd.f32 %v5496, %v5548
        %v5550 = vpop.f32.mrf.mxu0
        %v5551 = vadd.f32 %v5498, %v5550
        %v5552 = vpop.f32.mrf.mxu0
        %v5553 = vadd.f32 %v5500, %v5552
        %v5554 = vpop.f32.mrf.mxu0
        %v5555 = vadd.f32 %v5502, %v5554
        %5556 = vmatprep.mubr.bf16.mxu0 %v3380
        %5557 = vmatmul.mubr.bf16.gmra.mxu0 %v3379
        %v5558 = vpop.f32.mrf.mxu0
        %v5559 = vadd.f32 %v5506, %v5558
        %v5560 = vpop.f32.mrf.mxu0
        %v5561 = vadd.f32 %v5508, %v5560
        %v5562 = vpop.f32.mrf.mxu0
        %v5563 = vadd.f32 %v5510, %v5562
        %v5564 = vpop.f32.mrf.mxu0
        %v5565 = vadd.f32 %v5512, %v5564
        %5566 = vdwg.mxu0
        %5567 = vmatprep.subr.bf16.mxu0 %v4790
        %5568 = vmatpush1.bf16.msra.mxu0 %v4789
        %5569 = vmatprep.subr.bf16.mxu0 %v4780
        %5570 = vmatpush1.bf16.msra.mxu0 %v4779
        %5571 = vmatprep.subr.bf16.mxu0 %v4770
        %5572 = vmatpush1.bf16.msra.mxu0 %v4769
        %5573 = vmatprep.subr.bf16.mxu0 %v4760
        %5574 = vmatpush1.bf16.msra.mxu0 %v4759
        %5575 = vmatprep.subr.bf16.mxu0 %v4750
        %5576 = vmatpush1.bf16.msra.mxu0 %v4749
        %5577 = vmatprep.subr.bf16.mxu0 %v4740
        %5578 = vmatpush1.bf16.msra.mxu0 %v4739
        %5579 = vmatprep.subr.bf16.mxu0 %v4730
        %5580 = vmatpush1.bf16.msra.mxu0 %v4729
        %5581 = vmatprep.subr.bf16.mxu0 %v4720
        %5582 = vmatpush1.bf16.msra.mxu0 %v4719
        %5583 = vmatprep.subr.bf16.mxu0 %v4870
        %5584 = vmatpush2.bf16.msra.mxu0 %v4869
        %5585 = vmatprep.subr.bf16.mxu0 %v4860
        %5586 = vmatpush2.bf16.msra.mxu0 %v4859
        %5587 = vmatprep.subr.bf16.mxu0 %v4850
        %5588 = vmatpush2.bf16.msra.mxu0 %v4849
        %5589 = vmatprep.subr.bf16.mxu0 %v4840
        %5590 = vmatpush2.bf16.msra.mxu0 %v4839
        %5591 = vmatprep.subr.bf16.mxu0 %v4830
        %5592 = vmatpush2.bf16.msra.mxu0 %v4829
        %5593 = vmatprep.subr.bf16.mxu0 %v4820
        %5594 = vmatpush2.bf16.msra.mxu0 %v4819
        %5595 = vmatprep.subr.bf16.mxu0 %v4810
        %5596 = vmatpush2.bf16.msra.mxu0 %v4809
        %5597 = vmatprep.subr.bf16.mxu0 %v4800
        %5598 = vmatpush2.bf16.msra.mxu0 %v4799
        %5599 = vmatprep.mubr.bf16.mxu0 %v3374
        %5600 = vmatmul.mubr.bf16.gmra.mxu0 %v3373
        %v5601 = vpop.f32.mrf.mxu0
        %v5602 = vadd.f32 %v3724, %v5601
        %v5603 = vpop.f32.mrf.mxu0
        %v5604 = vadd.f32 %v3728, %v5603
        %v5605 = vpop.f32.mrf.mxu0
        %v5606 = vadd.f32 %v3724, %v5605
        %v5607 = vpop.f32.mrf.mxu0
        %v5608 = vadd.f32 %v3728, %v5607
        %5609 = vmatprep.mubr.bf16.mxu0 %v3378
        %5610 = vmatmul.mubr.bf16.gmra.mxu0 %v3377
        %v5611 = vpop.f32.mrf.mxu0
        %v5612 = vadd.f32 %v3724, %v5611
        %v5613 = vpop.f32.mrf.mxu0
        %v5614 = vadd.f32 %v3728, %v5613
        %v5615 = vpop.f32.mrf.mxu0
        %v5616 = vadd.f32 %v3724, %v5615
        %v5617 = vpop.f32.mrf.mxu0
        %v5618 = vadd.f32 %v3728, %v5617
        %5619 = vdwg.mxu0
        %5620 = vmatprep.subr.bf16.mxu0 %v4950
        %5621 = vmatpush1.bf16.msra.mxu0 %v4949
        %5622 = vmatprep.subr.bf16.mxu0 %v4940
        %5623 = vmatpush1.bf16.msra.mxu0 %v4939
        %5624 = vmatprep.subr.bf16.mxu0 %v4930
        %5625 = vmatpush1.bf16.msra.mxu0 %v4929
        %5626 = vmatprep.subr.bf16.mxu0 %v4920
        %5627 = vmatpush1.bf16.msra.mxu0 %v4919
        %5628 = vmatprep.subr.bf16.mxu0 %v4910
        %5629 = vmatpush1.bf16.msra.mxu0 %v4909
        %5630 = vmatprep.subr.bf16.mxu0 %v4900
        %5631 = vmatpush1.bf16.msra.mxu0 %v4899
        %5632 = vmatprep.subr.bf16.mxu0 %v4890
        %5633 = vmatpush1.bf16.msra.mxu0 %v4889
        %5634 = vmatprep.subr.bf16.mxu0 %v4880
        %5635 = vmatpush1.bf16.msra.mxu0 %v4879
        %5636 = vmatprep.subr.bf16.mxu0 %v5030
        %5637 = vmatpush2.bf16.msra.mxu0 %v5029
        %5638 = vmatprep.subr.bf16.mxu0 %v5020
        %5639 = vmatpush2.bf16.msra.mxu0 %v5019
        %5640 = vmatprep.subr.bf16.mxu0 %v5010
        %5641 = vmatpush2.bf16.msra.mxu0 %v5009
        %5642 = vmatprep.subr.bf16.mxu0 %v5000
        %5643 = vmatpush2.bf16.msra.mxu0 %v4999
        %5644 = vmatprep.subr.bf16.mxu0 %v4990
        %5645 = vmatpush2.bf16.msra.mxu0 %v4989
        %5646 = vmatprep.subr.bf16.mxu0 %v4980
        %5647 = vmatpush2.bf16.msra.mxu0 %v4979
        %5648 = vmatprep.subr.bf16.mxu0 %v4970
        %5649 = vmatpush2.bf16.msra.mxu0 %v4969
        %5650 = vmatprep.subr.bf16.mxu0 %v4960
        %5651 = vmatpush2.bf16.msra.mxu0 %v4959
        %5652 = vmatprep.mubr.bf16.mxu0 %v3376
        %5653 = vmatmul.mubr.bf16.gmra.mxu0 %v3375
        %v5654 = vpop.f32.mrf.mxu0
        %v5655 = vadd.f32 %v5602, %v5654
        %v5656 = vpop.f32.mrf.mxu0
        %v5657 = vadd.f32 %v5604, %v5656
        %v5658 = vpop.f32.mrf.mxu0
        %v5659 = vadd.f32 %v5606, %v5658
        %v5660 = vpop.f32.mrf.mxu0
        %v5661 = vadd.f32 %v5608, %v5660
        %5662 = vmatprep.mubr.bf16.mxu0 %v3380
        %5663 = vmatmul.mubr.bf16.gmra.mxu0 %v3379
        %v5664 = vpop.f32.mrf.mxu0
        %v5665 = vadd.f32 %v5612, %v5664
        %v5666 = vpop.f32.mrf.mxu0
        %v5667 = vadd.f32 %v5614, %v5666
        %v5668 = vpop.f32.mrf.mxu0
        %v5669 = vadd.f32 %v5616, %v5668
        %v5670 = vpop.f32.mrf.mxu0
        %v5671 = vadd.f32 %v5618, %v5670
        %5672 = vdwg.mxu0
        %5673 = vmatprep.subr.bf16.mxu0 %v4792
        %5674 = vmatpush1.bf16.msra.mxu0 %v4791
        %5675 = vmatprep.subr.bf16.mxu0 %v4782
        %5676 = vmatpush1.bf16.msra.mxu0 %v4781
        %5677 = vmatprep.subr.bf16.mxu0 %v4772
        %5678 = vmatpush1.bf16.msra.mxu0 %v4771
        %5679 = vmatprep.subr.bf16.mxu0 %v4762
        %5680 = vmatpush1.bf16.msra.mxu0 %v4761
        %5681 = vmatprep.subr.bf16.mxu0 %v4752
        %5682 = vmatpush1.bf16.msra.mxu0 %v4751
        %5683 = vmatprep.subr.bf16.mxu0 %v4742
        %5684 = vmatpush1.bf16.msra.mxu0 %v4741
        %5685 = vmatprep.subr.bf16.mxu0 %v4732
        %5686 = vmatpush1.bf16.msra.mxu0 %v4731
        %5687 = vmatprep.subr.bf16.mxu0 %v4722
        %5688 = vmatpush1.bf16.msra.mxu0 %v4721
        %5689 = vmatprep.subr.bf16.mxu0 %v4872
        %5690 = vmatpush2.bf16.msra.mxu0 %v4871
        %5691 = vmatprep.subr.bf16.mxu0 %v4862
        %5692 = vmatpush2.bf16.msra.mxu0 %v4861
        %5693 = vmatprep.subr.bf16.mxu0 %v4852
        %5694 = vmatpush2.bf16.msra.mxu0 %v4851
        %5695 = vmatprep.subr.bf16.mxu0 %v4842
        %5696 = vmatpush2.bf16.msra.mxu0 %v4841
        %5697 = vmatprep.subr.bf16.mxu0 %v4832
        %5698 = vmatpush2.bf16.msra.mxu0 %v4831
        %5699 = vmatprep.subr.bf16.mxu0 %v4822
        %5700 = vmatpush2.bf16.msra.mxu0 %v4821
        %5701 = vmatprep.subr.bf16.mxu0 %v4812
        %5702 = vmatpush2.bf16.msra.mxu0 %v4811
        %5703 = vmatprep.subr.bf16.mxu0 %v4802
        %5704 = vmatpush2.bf16.msra.mxu0 %v4801
        %5705 = vmatprep.mubr.bf16.mxu0 %v3374
        %5706 = vmatmul.mubr.bf16.gmra.mxu0 %v3373
        %v5707 = vpop.f32.mrf.mxu0
        %v5708 = vadd.f32 %v3732, %v5707
        %v5709 = vpop.f32.mrf.mxu0
        %v5710 = vadd.f32 %v3736, %v5709
        %v5711 = vpop.f32.mrf.mxu0
        %v5712 = vadd.f32 %v3732, %v5711
        %v5713 = vpop.f32.mrf.mxu0
        %v5714 = vadd.f32 %v3736, %v5713
        %5715 = vmatprep.mubr.bf16.mxu0 %v3378
        %5716 = vmatmul.mubr.bf16.gmra.mxu0 %v3377
        %v5717 = vpop.f32.mrf.mxu0
        %v5718 = vadd.f32 %v3732, %v5717
        %v5719 = vpop.f32.mrf.mxu0
        %v5720 = vadd.f32 %v3736, %v5719
        %v5721 = vpop.f32.mrf.mxu0
        %v5722 = vadd.f32 %v3732, %v5721
        %v5723 = vpop.f32.mrf.mxu0
        %v5724 = vadd.f32 %v3736, %v5723
        %5725 = vdwg.mxu0
        %5726 = vmatprep.subr.bf16.mxu0 %v4952
        %5727 = vmatpush1.bf16.msra.mxu0 %v4951
        %5728 = vmatprep.subr.bf16.mxu0 %v4942
        %5729 = vmatpush1.bf16.msra.mxu0 %v4941
        %5730 = vmatprep.subr.bf16.mxu0 %v4932
        %5731 = vmatpush1.bf16.msra.mxu0 %v4931
        %5732 = vmatprep.subr.bf16.mxu0 %v4922
        %5733 = vmatpush1.bf16.msra.mxu0 %v4921
        %5734 = vmatprep.subr.bf16.mxu0 %v4912
        %5735 = vmatpush1.bf16.msra.mxu0 %v4911
        %5736 = vmatprep.subr.bf16.mxu0 %v4902
        %5737 = vmatpush1.bf16.msra.mxu0 %v4901
        %5738 = vmatprep.subr.bf16.mxu0 %v4892
        %5739 = vmatpush1.bf16.msra.mxu0 %v4891
        %5740 = vmatprep.subr.bf16.mxu0 %v4882
        %5741 = vmatpush1.bf16.msra.mxu0 %v4881
        %5742 = vmatprep.subr.bf16.mxu0 %v5032
        %5743 = vmatpush2.bf16.msra.mxu0 %v5031
        %5744 = vmatprep.subr.bf16.mxu0 %v5022
        %5745 = vmatpush2.bf16.msra.mxu0 %v5021
        %5746 = vmatprep.subr.bf16.mxu0 %v5012
        %5747 = vmatpush2.bf16.msra.mxu0 %v5011
        %5748 = vmatprep.subr.bf16.mxu0 %v5002
        %5749 = vmatpush2.bf16.msra.mxu0 %v5001
        %5750 = vmatprep.subr.bf16.mxu0 %v4992
        %5751 = vmatpush2.bf16.msra.mxu0 %v4991
        %5752 = vmatprep.subr.bf16.mxu0 %v4982
        %5753 = vmatpush2.bf16.msra.mxu0 %v4981
        %5754 = vmatprep.subr.bf16.mxu0 %v4972
        %5755 = vmatpush2.bf16.msra.mxu0 %v4971
        %5756 = vmatprep.subr.bf16.mxu0 %v4962
        %5757 = vmatpush2.bf16.msra.mxu0 %v4961
        %5758 = vmatprep.mubr.bf16.mxu0 %v3376
        %5759 = vmatmul.mubr.bf16.gmra.mxu0 %v3375
        %v5760 = vpop.f32.mrf.mxu0
        %v5761 = vadd.f32 %v5708, %v5760
        %v5762 = vpop.f32.mrf.mxu0
        %v5763 = vadd.f32 %v5710, %v5762
        %v5764 = vpop.f32.mrf.mxu0
        %v5765 = vadd.f32 %v5712, %v5764
        %v5766 = vpop.f32.mrf.mxu0
        %v5767 = vadd.f32 %v5714, %v5766
        %5768 = vmatprep.mubr.bf16.mxu0 %v3380
        %5769 = vmatmul.mubr.bf16.gmra.mxu0 %v3379
        %v5770 = vpop.f32.mrf.mxu0
        %v5771 = vadd.f32 %v5718, %v5770
        %v5772 = vpop.f32.mrf.mxu0
        %v5773 = vadd.f32 %v5720, %v5772
        %v5774 = vpop.f32.mrf.mxu0
        %v5775 = vadd.f32 %v5722, %v5774
        %v5776 = vpop.f32.mrf.mxu0
        %v5777 = vadd.f32 %v5724, %v5776
        %5778 = vdwg.mxu0
        %5779 = vmatprep.subr.bf16.mxu0 %v4794
        %5780 = vmatpush1.bf16.msra.mxu0 %v4793
        %5781 = vmatprep.subr.bf16.mxu0 %v4784
        %5782 = vmatpush1.bf16.msra.mxu0 %v4783
        %5783 = vmatprep.subr.bf16.mxu0 %v4774
        %5784 = vmatpush1.bf16.msra.mxu0 %v4773
        %5785 = vmatprep.subr.bf16.mxu0 %v4764
        %5786 = vmatpush1.bf16.msra.mxu0 %v4763
        %5787 = vmatprep.subr.bf16.mxu0 %v4754
        %5788 = vmatpush1.bf16.msra.mxu0 %v4753
        %5789 = vmatprep.subr.bf16.mxu0 %v4744
        %5790 = vmatpush1.bf16.msra.mxu0 %v4743
        %5791 = vmatprep.subr.bf16.mxu0 %v4734
        %5792 = vmatpush1.bf16.msra.mxu0 %v4733
        %5793 = vmatprep.subr.bf16.mxu0 %v4724
        %5794 = vmatpush1.bf16.msra.mxu0 %v4723
        %5795 = vmatprep.subr.bf16.mxu0 %v4874
        %5796 = vmatpush2.bf16.msra.mxu0 %v4873
        %5797 = vmatprep.subr.bf16.mxu0 %v4864
        %5798 = vmatpush2.bf16.msra.mxu0 %v4863
        %5799 = vmatprep.subr.bf16.mxu0 %v4854
        %5800 = vmatpush2.bf16.msra.mxu0 %v4853
        %5801 = vmatprep.subr.bf16.mxu0 %v4844
        %5802 = vmatpush2.bf16.msra.mxu0 %v4843
        %5803 = vmatprep.subr.bf16.mxu0 %v4834
        %5804 = vmatpush2.bf16.msra.mxu0 %v4833
        %5805 = vmatprep.subr.bf16.mxu0 %v4824
        %5806 = vmatpush2.bf16.msra.mxu0 %v4823
        %5807 = vmatprep.subr.bf16.mxu0 %v4814
        %5808 = vmatpush2.bf16.msra.mxu0 %v4813
        %5809 = vmatprep.subr.bf16.mxu0 %v4804
        %5810 = vmatpush2.bf16.msra.mxu0 %v4803
        %5811 = vmatprep.mubr.bf16.mxu0 %v3374
        %5812 = vmatmul.mubr.bf16.gmra.mxu0 %v3373
        %v5813 = vpop.f32.mrf.mxu0
        %v5814 = vadd.f32 %v3740, %v5813
        %v5815 = vpop.f32.mrf.mxu0
        %v5816 = vadd.f32 %v3744, %v5815
        %v5817 = vpop.f32.mrf.mxu0
        %v5818 = vadd.f32 %v3740, %v5817
        %v5819 = vpop.f32.mrf.mxu0
        %v5820 = vadd.f32 %v3744, %v5819
        %5821 = vmatprep.mubr.bf16.mxu0 %v3378
        %5822 = vmatmul.mubr.bf16.gmra.mxu0 %v3377
        %v5823 = vpop.f32.mrf.mxu0
        %v5824 = vadd.f32 %v3740, %v5823
        %v5825 = vpop.f32.mrf.mxu0
        %v5826 = vadd.f32 %v3744, %v5825
        %v5827 = vpop.f32.mrf.mxu0
        %v5828 = vadd.f32 %v3740, %v5827
        %v5829 = vpop.f32.mrf.mxu0
        %v5830 = vadd.f32 %v3744, %v5829
        %5831 = vdwg.mxu0
        %5832 = vmatprep.subr.bf16.mxu0 %v4954
        %5833 = vmatpush1.bf16.msra.mxu0 %v4953
        %5834 = vmatprep.subr.bf16.mxu0 %v4944
        %5835 = vmatpush1.bf16.msra.mxu0 %v4943
        %5836 = vmatprep.subr.bf16.mxu0 %v4934
        %5837 = vmatpush1.bf16.msra.mxu0 %v4933
        %5838 = vmatprep.subr.bf16.mxu0 %v4924
        %5839 = vmatpush1.bf16.msra.mxu0 %v4923
        %5840 = vmatprep.subr.bf16.mxu0 %v4914
        %5841 = vmatpush1.bf16.msra.mxu0 %v4913
        %5842 = vmatprep.subr.bf16.mxu0 %v4904
        %5843 = vmatpush1.bf16.msra.mxu0 %v4903
        %5844 = vmatprep.subr.bf16.mxu0 %v4894
        %5845 = vmatpush1.bf16.msra.mxu0 %v4893
        %5846 = vmatprep.subr.bf16.mxu0 %v4884
        %5847 = vmatpush1.bf16.msra.mxu0 %v4883
        %5848 = vmatprep.subr.bf16.mxu0 %v5034
        %5849 = vmatpush2.bf16.msra.mxu0 %v5033
        %5850 = vmatprep.subr.bf16.mxu0 %v5024
        %5851 = vmatpush2.bf16.msra.mxu0 %v5023
        %5852 = vmatprep.subr.bf16.mxu0 %v5014
        %5853 = vmatpush2.bf16.msra.mxu0 %v5013
        %5854 = vmatprep.subr.bf16.mxu0 %v5004
        %5855 = vmatpush2.bf16.msra.mxu0 %v5003
        %5856 = vmatprep.subr.bf16.mxu0 %v4994
        %5857 = vmatpush2.bf16.msra.mxu0 %v4993
        %5858 = vmatprep.subr.bf16.mxu0 %v4984
        %5859 = vmatpush2.bf16.msra.mxu0 %v4983
        %5860 = vmatprep.subr.bf16.mxu0 %v4974
        %5861 = vmatpush2.bf16.msra.mxu0 %v4973
        %5862 = vmatprep.subr.bf16.mxu0 %v4964
        %5863 = vmatpush2.bf16.msra.mxu0 %v4963
        %5864 = vmatprep.mubr.bf16.mxu0 %v3376
        %5865 = vmatmul.mubr.bf16.gmra.mxu0 %v3375
        %v5866 = vpop.f32.mrf.mxu0
        %v5867 = vadd.f32 %v5814, %v5866
        %v5868 = vpop.f32.mrf.mxu0
        %v5869 = vadd.f32 %v5816, %v5868
        %v5870 = vpop.f32.mrf.mxu0
        %v5871 = vadd.f32 %v5818, %v5870
        %v5872 = vpop.f32.mrf.mxu0
        %v5873 = vadd.f32 %v5820, %v5872
        %5874 = vmatprep.mubr.bf16.mxu0 %v3380
        %5875 = vmatmul.mubr.bf16.gmra.mxu0 %v3379
        %v5876 = vpop.f32.mrf.mxu0
        %v5877 = vadd.f32 %v5824, %v5876
        %v5878 = vpop.f32.mrf.mxu0
        %v5879 = vadd.f32 %v5826, %v5878
        %v5880 = vpop.f32.mrf.mxu0
        %v5881 = vadd.f32 %v5828, %v5880
        %v5882 = vpop.f32.mrf.mxu0
        %v5883 = vadd.f32 %v5830, %v5882
        %5884 = vdwg.mxu0
        %v5885 = vmul.f32 %v5443, 0.5
        %v5886 = vmul.f32 %v5445, 0.5
        %v5887 = vmul.f32 %v5549, 0.5
        %v5888 = vmul.f32 %v5551, 0.5
        %v5889 = vmul.f32 %v5655, 0.5
        %v5890 = vmul.f32 %v5657, 0.5
        %v5891 = vmul.f32 %v5761, 0.5
        %v5892 = vmul.f32 %v5763, 0.5
        %v5893 = vmul.f32 %v5867, 0.5
        %v5894 = vmul.f32 %v5869, 0.5
        %v5895 = vmul.f32 %v5447, 0.5
        %v5896 = vmul.f32 %v5449, 0.5
        %v5897 = vmul.f32 %v5553, 0.5
        %v5898 = vmul.f32 %v5555, 0.5
        %v5899 = vmul.f32 %v5659, 0.5
        %v5900 = vmul.f32 %v5661, 0.5
        %v5901 = vmul.f32 %v5765, 0.5
        %v5902 = vmul.f32 %v5767, 0.5
        %v5903 = vmul.f32 %v5871, 0.5
        %v5904 = vmul.f32 %v5873, 0.5
        %v5905 = vmul.f32 %v5453, 0.5
        %v5906 = vmul.f32 %v5455, 0.5
        %v5907 = vmul.f32 %v5559, 0.5
        %v5908 = vmul.f32 %v5561, 0.5
        %v5909 = vmul.f32 %v5665, 0.5
        %v5910 = vmul.f32 %v5667, 0.5
        %v5911 = vmul.f32 %v5771, 0.5
        %v5912 = vmul.f32 %v5773, 0.5
        %v5913 = vmul.f32 %v5877, 0.5
        %v5914 = vmul.f32 %v5879, 0.5
        %v5915 = vmul.f32 %v5457, 0.5
        %v5916 = vmul.f32 %v5459, 0.5
        %v5917 = vmul.f32 %v5563, 0.5
        %v5918 = vmul.f32 %v5565, 0.5
        %v5919 = vmul.f32 %v5669, 0.5
        %v5920 = vmul.f32 %v5671, 0.5
        %v5921 = vmul.f32 %v5775, 0.5
        %v5922 = vmul.f32 %v5777, 0.5
        %v5923 = vmul.f32 %v5881, 0.5
        %v5924 = vmul.f32 %v5883, 0.5
        %v5925 = vtanh.pop %v5885
        %v5926 = vtanh.pop %v5886
        %v5927 = vtanh.pop %v5887
        %v5928 = vtanh.pop %v5888
        %v5929 = vtanh.pop %v5889
        %v5930 = vtanh.pop %v5890
        %v5931 = vtanh.pop %v5891
        %v5932 = vtanh.pop %v5892
        %v5933 = vtanh.pop %v5893
        %v5934 = vtanh.pop %v5894
        %v5935 = vtanh.pop %v5895
        %v5936 = vtanh.pop %v5896
        %v5937 = vtanh.pop %v5897
        %v5938 = vtanh.pop %v5898
        %v5939 = vtanh.pop %v5899
        %v5940 = vtanh.pop %v5900
        %v5941 = vtanh.pop %v5901
        %v5942 = vtanh.pop %v5902
        %v5943 = vtanh.pop %v5903
        %v5944 = vtanh.pop %v5904
        %v5945 = vtanh.pop %v5905
        %v5946 = vtanh.pop %v5906
        %v5947 = vtanh.pop %v5907
        %v5948 = vtanh.pop %v5908
        %v5949 = vtanh.pop %v5909
        %v5950 = vtanh.pop %v5910
        %v5951 = vtanh.pop %v5911
        %v5952 = vtanh.pop %v5912
        %v5953 = vtanh.pop %v5913
        %v5954 = vtanh.pop %v5914
        %v5955 = vtanh.pop %v5915
        %v5956 = vtanh.pop %v5916
        %v5957 = vtanh.pop %v5917
        %v5958 = vtanh.pop %v5918
        %v5959 = vtanh.pop %v5919
        %v5960 = vtanh.pop %v5920
        %v5961 = vtanh.pop %v5921
        %v5962 = vtanh.pop %v5922
        %v5963 = vtanh.pop %v5923
        %v5964 = vtanh.pop %v5924
        %v5965 = vadd.f32 %v5925, 1.0
        %v5966 = vadd.f32 %v5926, 1.0
        %v5967 = vadd.f32 %v5927, 1.0
        %v5968 = vadd.f32 %v5928, 1.0
        %v5969 = vadd.f32 %v5929, 1.0
        %v5970 = vadd.f32 %v5930, 1.0
        %v5971 = vadd.f32 %v5931, 1.0
        %v5972 = vadd.f32 %v5932, 1.0
        %v5973 = vadd.f32 %v5933, 1.0
        %v5974 = vadd.f32 %v5934, 1.0
        %v5975 = vadd.f32 %v5935, 1.0
        %v5976 = vadd.f32 %v5936, 1.0
        %v5977 = vadd.f32 %v5937, 1.0
        %v5978 = vadd.f32 %v5938, 1.0
        %v5979 = vadd.f32 %v5939, 1.0
        %v5980 = vadd.f32 %v5940, 1.0
        %v5981 = vadd.f32 %v5941, 1.0
        %v5982 = vadd.f32 %v5942, 1.0
        %v5983 = vadd.f32 %v5943, 1.0
        %v5984 = vadd.f32 %v5944, 1.0
        %v5985 = vadd.f32 %v5945, 1.0
        %v5986 = vadd.f32 %v5946, 1.0
        %v5987 = vadd.f32 %v5947, 1.0
        %v5988 = vadd.f32 %v5948, 1.0
        %v5989 = vadd.f32 %v5949, 1.0
        %v5990 = vadd.f32 %v5950, 1.0
        %v5991 = vadd.f32 %v5951, 1.0
        %v5992 = vadd.f32 %v5952, 1.0
        %v5993 = vadd.f32 %v5953, 1.0
        %v5994 = vadd.f32 %v5954, 1.0
        %v5995 = vadd.f32 %v5955, 1.0
        %v5996 = vadd.f32 %v5956, 1.0
        %v5997 = vadd.f32 %v5957, 1.0
        %v5998 = vadd.f32 %v5958, 1.0
        %v5999 = vadd.f32 %v5959, 1.0
        %v6000 = vadd.f32 %v5960, 1.0
        %v6001 = vadd.f32 %v5961, 1.0
        %v6002 = vadd.f32 %v5962, 1.0
        %v6003 = vadd.f32 %v5963, 1.0
        %v6004 = vadd.f32 %v5964, 1.0
        %v6005 = vmul.f32 %v5965, 0.5
        %v6006 = vmul.f32 %v5966, 0.5
        %v6007 = vmul.f32 %v5967, 0.5
        %v6008 = vmul.f32 %v5968, 0.5
        %v6009 = vmul.f32 %v5969, 0.5
        %v6010 = vmul.f32 %v5970, 0.5
        %v6011 = vmul.f32 %v5971, 0.5
        %v6012 = vmul.f32 %v5972, 0.5
        %v6013 = vmul.f32 %v5973, 0.5
        %v6014 = vmul.f32 %v5974, 0.5
        %v6015 = vmul.f32 %v5975, 0.5
        %v6016 = vmul.f32 %v5976, 0.5
        %v6017 = vmul.f32 %v5977, 0.5
        %v6018 = vmul.f32 %v5978, 0.5
        %v6019 = vmul.f32 %v5979, 0.5
        %v6020 = vmul.f32 %v5980, 0.5
        %v6021 = vmul.f32 %v5981, 0.5
        %v6022 = vmul.f32 %v5982, 0.5
        %v6023 = vmul.f32 %v5983, 0.5
        %v6024 = vmul.f32 %v5984, 0.5
        %v6025 = vmul.f32 %v5985, 0.5
        %v6026 = vmul.f32 %v5986, 0.5
        %v6027 = vmul.f32 %v5987, 0.5
        %v6028 = vmul.f32 %v5988, 0.5
        %v6029 = vmul.f32 %v5989, 0.5
        %v6030 = vmul.f32 %v5990, 0.5
        %v6031 = vmul.f32 %v5991, 0.5
        %v6032 = vmul.f32 %v5992, 0.5
        %v6033 = vmul.f32 %v5993, 0.5
        %v6034 = vmul.f32 %v5994, 0.5
        %v6035 = vmul.f32 %v5995, 0.5
        %v6036 = vmul.f32 %v5996, 0.5
        %v6037 = vmul.f32 %v5997, 0.5
        %v6038 = vmul.f32 %v5998, 0.5
        %v6039 = vmul.f32 %v5999, 0.5
        %v6040 = vmul.f32 %v6000, 0.5
        %v6041 = vmul.f32 %v6001, 0.5
        %v6042 = vmul.f32 %v6002, 0.5
        %v6043 = vmul.f32 %v6003, 0.5
        %v6044 = vmul.f32 %v6004, 0.5
        %6045 = vst [vmem:[%s343] sm:$0xff] %v6005
        %6046 = vst [vmem:[%s343 + $0x8] sm:$0xff] %v6006
        %6047 = vst [vmem:[%s343 + $0x10] sm:$0xff] %v6007
        %6048 = vst [vmem:[%s343 + $0x18] sm:$0xff] %v6008
        %6049 = vst [vmem:[%s343 + $0x20] sm:$0xff] %v6009
        %6050 = vst [vmem:[%s343 + $0x28] sm:$0xff] %v6010
        %6051 = vst [vmem:[%s343 + $0x30] sm:$0xff] %v6011
        %6052 = vst [vmem:[%s343 + $0x38] sm:$0xff] %v6012
        %6053 = vst [vmem:[%s343 + $0x40] sm:$0xff] %v6013
        %6054 = vst.msk [vmem:[%s343 + $0x48] sm:$0xff] %vm2250, %v6014
        %6055 = vst [vmem:[%s343 + $0x50] sm:$0xff] %v6015
        %6056 = vst [vmem:[%s343 + $0x58] sm:$0xff] %v6016
        %6057 = vst [vmem:[%s343 + $0x60] sm:$0xff] %v6017
        %6058 = vst [vmem:[%s343 + $0x68] sm:$0xff] %v6018
        %6059 = vst [vmem:[%s343 + $0x70] sm:$0xff] %v6019
        %6060 = vst [vmem:[%s343 + $0x78] sm:$0xff] %v6020
        %6061 = vst [vmem:[%s343 + $0x80] sm:$0xff] %v6021
        %6062 = vst [vmem:[%s343 + $0x88] sm:$0xff] %v6022
        %6063 = vst [vmem:[%s343 + $0x90] sm:$0xff] %v6023
        %6064 = vst.msk [vmem:[%s343 + $0x98] sm:$0xff] %vm2250, %v6024
        %6065 = vst [vmem:[%s343 + $0xa0] sm:$0xff] %v6025
        %6066 = vst [vmem:[%s343 + $0xa8] sm:$0xff] %v6026
        %6067 = vst [vmem:[%s343 + $0xb0] sm:$0xff] %v6027
        %6068 = vst [vmem:[%s343 + $0xb8] sm:$0xff] %v6028
        %6069 = vst [vmem:[%s343 + $0xc0] sm:$0xff] %v6029
        %6070 = vst [vmem:[%s343 + $0xc8] sm:$0xff] %v6030
        %6071 = vst [vmem:[%s343 + $0xd0] sm:$0xff] %v6031
        %6072 = vst [vmem:[%s343 + $0xd8] sm:$0xff] %v6032
        %6073 = vst [vmem:[%s343 + $0xe0] sm:$0xff] %v6033
        %6074 = vst.msk [vmem:[%s343 + $0xe8] sm:$0xff] %vm2250, %v6034
        %6075 = vst [vmem:[%s343 + $0xf0] sm:$0xff] %v6035
        %6076 = vst [vmem:[%s343 + $0xf8] sm:$0xff] %v6036
        %6077 = vst [vmem:[%s343 + $0x100] sm:$0xff] %v6037
        %6078 = vst [vmem:[%s343 + $0x108] sm:$0xff] %v6038
        %6079 = vst [vmem:[%s343 + $0x110] sm:$0xff] %v6039
        %6080 = vst [vmem:[%s343 + $0x118] sm:$0xff] %v6040
        %6081 = vst [vmem:[%s343 + $0x120] sm:$0xff] %v6041
        %6082 = vst [vmem:[%s343 + $0x128] sm:$0xff] %v6042
        %6083 = vst [vmem:[%s343 + $0x130] sm:$0xff] %v6043
        %6084 = vst.msk [vmem:[%s343 + $0x138] sm:$0xff] %vm2250, %v6044
        %s6085 = sand.u32 %s225, 1
        %s6086 = scalar_lea.sflag [#allocation3], %s6085
        %s6087 = sand.u32 %s225, 1
        %s6088 = smul.addr %s6087, 320
        %s6089 = scalar_lea.vmem [#allocation2], %s6088
        // Predicated region
        $region57: #{tpu_custom_call.1} parent=55 // pred_check
          %p6090 = pneg %p235
        $region58: #{tpu_custom_call.1} parent=55 // pred_check_branch
          %6092 = sbr.rel (%p6090) target = $region60
        $region59: #{tpu_custom_call.1} parent=55 // pred_region
          %s6093 = smul.u32 4, %s23
          %s6094 = ssub.s32 13, %s6093
          %p6095 = scmp.lt.s32.totalorder %s6094, 4
          %s6096 = scalar_select %p6095, %s6094, 4
          %s6097 = smul.u32 128, %s6096
          %s6098 = smul.u32 %s6097, 10
          %s6100 = ssub.s32 5120, %s6098
          %6101 = vsyncadd %s6086, %s6100
          %p6102 = scmp.ne.s32.totalorder 0, %s6098
          %s6103 = smul.addr %s6093, 10
          %s6104 = smul.addr %s6103, 128
          %s6105 = scalar_lea.hbm %s9, %s6104
          %s6106 = smul.u32 80, %s6096
          %s6107 = sshll.u32 %s6089, 4
          %s6108 = int_to_ptr.vmem [resolvable:$true] %s6107
          %s6109 = sshll.u32 %s6106, 4
          %6113 = dma.vmem_to_hbm [thread:$0]  (%p6102), %s6108, %s6109, %s6105, %s6086, 1280, 1280, 80
        $region60: #{tpu_custom_call.1} parent=55 // pred_fallthru
          _
      $region56: #{tpu_custom_call.1} parent=5 // pred_fallthru
        _
      %p6114 = scmp.le.s32.totalorder 2, %s18
      // Predicated region
      $region61: #{tpu_custom_call.1} parent=5 // pred_check
        %p6115 = pneg %p6114
      $region62: #{tpu_custom_call.1} parent=5 // pred_check_branch
        %6117 = sbr.rel (%p6115) target = $region64
      $region63: #{tpu_custom_call.1} parent=5 // pred_region
        %s6118 = ssub.s32 %s18, 2
        // Predicated region
        $region65: #{tpu_custom_call.1} parent=63 // pred_check
          %p6119 = pneg %p241
        $region66: #{tpu_custom_call.1} parent=63 // pred_check_branch
          %6121 = sbr.rel (%p6119) target = $region68
        $region67: #{tpu_custom_call.1} parent=63 // pred_region
          %s6122 = sand.u32 %s226, 1
          %s6123 = scalar_lea.sflag [#allocation3], %s6122
          %s6124 = sand.u32 %s226, 1
          %s6125 = smul.addr %s6124, 320
          %s6126 = scalar_lea.vmem [#allocation2], %s6125
          %6127 = dma.done %s6123, 5120
        $region68: #{tpu_custom_call.1} parent=63 // pred_fallthru
          _
      $region64: #{tpu_custom_call.1} parent=5 // pred_fallthru
        _
    $region6: #{tpu_custom_call.1} parent=1 // loop_footer
      %s22 = sadd.s32 1, %s18
    $region7: #{tpu_custom_call.1} parent=1 // loop_footer_branch
      %17 = sbr.rel target = $region3
    $region8: #{tpu_custom_call.1} parent=1 // loop_exit
      _
    %6128 = vsyncpa [#allocation3], 1
    %s6129 = scalar_lea.sflag [#allocation3], 1
    %6130 = vsyncpa %s6129, 1

</llo_original>
